<compile_context>
chip_gen: v6e
topology: v6e:2x2x1
jax: 0.10.0
libtpu: 0.0.40
codegen_flags: <defaults>
</compile_context>

<pallas_src>
import jax
import jax.numpy as jnp
from jax.experimental import pallas as pl
from jax.experimental.pallas import tpu as pltpu

# ----------------------------- config (small) ------------------------------
B = 2            # batch
C_IN = 3         # image channels
IMG = 16         # image spatial size
P = 8            # patch size  -> (IMG//P)^2 = 4 patches
N_PATCH = (IMG // P) ** 2
CPP = C_IN * P * P
PROMPT_LEN = 6   # " what does the image describe?" (synthetic ids)
T_ENC = N_PATCH + PROMPT_LEN
T_DEC = 8        # decoder (caption) length
D = 32           # d_model
NH = 4           # heads
HD = D // NH     # head dim
FFN = 64
VOCAB = 128
N_ENC_LAYERS = 2
N_DEC_LAYERS = 2

VEC_W = 3 * D          # width of the bias/LN vector slabs
NEG_INF = -1.0e9       # plain Python float (NOT a jax array -> no captured constant)


# ------------------------- in-kernel helper functions -----------------------
def _mm(a, b):
    """a[M,K] @ b[K,N] with bf16 MXU inputs, f32 accumulation."""
    return jax.lax.dot_general(
        a.astype(jnp.bfloat16), b.astype(jnp.bfloat16),
        dimension_numbers=(((1,), (0,)), ((), ())),
        preferred_element_type=jnp.float32)


def _layernorm(x, g, bias):
    x = x.astype(jnp.float32)
    mu = jnp.mean(x, axis=-1, keepdims=True)
    var = jnp.mean((x - mu) * (x - mu), axis=-1, keepdims=True)
    return (x - mu) * jax.lax.rsqrt(var + 1e-5) * g + bias


def _gelu(h):
    # tanh-approx GELU (EUP-friendly), f32
    return 0.5 * h * (1.0 + jnp.tanh(0.7978845608028654 * (h + 0.044715 * h * h * h)))


def _ffn(x, w1, b1, w2, b2):
    h = _mm(x, w1) + b1
    h = _gelu(h)
    return _mm(h, w2) + b2


def _attn(q, k, v, wo, bo, mask):
    """Multi-head attention on [Tq,D]/[Tk,D]; all heads batched (no per-head loop).

    Heads are stacked along a leading batch axis and processed with two 3-D einsums and
    a single softmax; the head outputs are re-merged with a lane concat so the output
    projection is one [Tq,D]@[D,D] matmul.
    """
    qh = jnp.stack([q[:, i * HD:(i + 1) * HD] for i in range(NH)], axis=0)  # [NH,Tq,HD]
    kh = jnp.stack([k[:, i * HD:(i + 1) * HD] for i in range(NH)], axis=0)  # [NH,Tk,HD]
    vh = jnp.stack([v[:, i * HD:(i + 1) * HD] for i in range(NH)], axis=0)  # [NH,Tk,HD]

    s = jnp.einsum("hqd,hkd->hqk",
                   qh.astype(jnp.bfloat16), kh.astype(jnp.bfloat16),
                   preferred_element_type=jnp.float32) * (1.0 / (HD ** 0.5))
    if mask is not None:
        s = s + mask[None]                                   # broadcast over heads
    m = jnp.max(s, axis=-1, keepdims=True)
    p = jnp.exp(s - m)                                        # one softmax for all heads
    l = jnp.sum(p, axis=-1, keepdims=True)
    oh = jnp.einsum("hqk,hkd->hqd",
                    p.astype(jnp.bfloat16), vh.astype(jnp.bfloat16),
                    preferred_element_type=jnp.float32)
    oh = oh * pl.reciprocal(l, approx=True)                   # EUP slot
    o = jnp.concatenate([oh[i] for i in range(NH)], axis=-1)  # [Tq, D]
    return _mm(o, wo) + bo


# ----------------------------- fused OFA kernel ------------------------------
# Weight slab layouts (built on the host by pack_params):
#   enc_w  [L, D, 3D+D+FFN]       bf16 : wqkv | wo | w1
#   enc_w2 [L, FFN, D]            bf16 : w2
#   enc_v  [L, 8, VEC_W]          f32  : bqkv, bo, b1, b2, ln1g, ln1b, ln2g, ln2b
#   dec_w  [L, D, 8D+FFN]         bf16 : swqkv | swo | cwq | cwkv | cwo | w1
#   dec_w2 [L, FFN, D]            bf16 : w2
#   dec_v  [L, 13, VEC_W]         f32  : sbqkv,sbo,cbq,cbkv,cbo,ln1g,ln1b,ln2g,ln2b,
#                                        ln3g,ln3b,b1,b2
#   gvec   [5, VOCAB]             f32  : enc_lnf_g, enc_lnf_b, dec_lnf_g, dec_lnf_b, out_b
def _ofa_kernel(patches_ref, base_ref, dec_ref, amask_ref,
                pw_ref, enc_w_ref, enc_w2_ref, enc_v_ref,
                dec_w_ref, dec_w2_ref, dec_v_ref, gvec_ref, out_w_ref,
                o_ref):
    f32 = jnp.float32

    # ------------------------------ encoder ------------------------------
    # Patch embedding: rows >= N_PATCH of `patches` are zero; `base` already carries
    # (patch bias | prompt token embedding) + positional embedding for every row.
    x = _mm(patches_ref[0], pw_ref[...]) + base_ref[...].astype(f32)      # [T_ENC, D]

    for l in range(N_ENC_LAYERS):
        W = enc_w_ref[l]                                                  # [D, 192] bf16
        V = enc_v_ref[l]                                                  # [8, 96]  f32
        h = _layernorm(x, V[4:5, :D], V[5:6, :D])
        qkv = _mm(h, W[:, 0:3 * D]) + V[0:1, 0:3 * D]                     # fused QKV
        x = x + _attn(qkv[:, :D], qkv[:, D:2 * D], qkv[:, 2 * D:],
                      W[:, 3 * D:4 * D], V[1:2, :D], None)                # fully visible
        h = _layernorm(x, V[6:7, :D], V[7:8, :D])
        x = x + _ffn(h, W[:, 4 * D:4 * D + FFN], V[2:3, :FFN],
                     enc_w2_ref[l], V[3:4, :D])

    g = gvec_ref[...]                                                     # [5, VOCAB]
    enc = _layernorm(x, g[0:1, :D], g[1:2, :D])                           # stays in VMEM

    # ------------------------------ decoder ------------------------------
    y = dec_ref[0].astype(f32)                                            # [T_DEC, D]

    # causal + key-padding mask built in-kernel (never materialized in HBM)
    r = jax.lax.broadcasted_iota(jnp.int32, (T_DEC, T_DEC), 0)
    c = jax.lax.broadcasted_iota(jnp.int32, (T_DEC, T_DEC), 1)
    causal = jnp.where(c > r, NEG_INF, 0.0).astype(f32)                   # [T, T]
    pad = (1.0 - amask_ref[0].astype(f32)) * NEG_INF                      # [1, T]
    self_mask = causal + pad                                              # [T, T]

    for l in range(N_DEC_LAYERS):
        W = dec_w_ref[l]                                                  # [D, 320] bf16
        V = dec_v_ref[l]                                                  # [13, 96] f32
        # causal self-attention (fused QKV)
        h = _layernorm(y, V[5:6, :D], V[6:7, :D])
        qkv = _mm(h, W[:, 0:3 * D]) + V[0:1, 0:3 * D]
        y = y + _attn(qkv[:, :D], qkv[:, D:2 * D], qkv[:, 2 * D:],
                      W[:, 3 * D:4 * D], V[1:2, :D], self_mask)
        # cross-attention over the (fully visible) encoder output, fused KV
        h = _layernorm(y, V[7:8, :D], V[8:9, :D])
        q = _mm(h, W[:, 4 * D:5 * D]) + V[2:3, :D]
        kv = _mm(enc, W[:, 5 * D:7 * D]) + V[3:4, 0:2 * D]
        y = y + _attn(q, kv[:, :D], kv[:, D:],
                      W[:, 7 * D:8 * D], V[4:5, :D], None)
        # FFN
        h = _layernorm(y, V[9:10, :D], V[10:11, :D])
        y = y + _ffn(h, W[:, 8 * D:8 * D + FFN], V[11:12, :FFN],
                     dec_w2_ref[l], V[12:13, :D])

    # final LN fused with the LM head (lane-dense VOCAB=128 output -> unmasked stores)
    h = _layernorm(y, g[2:3, :D], g[3:4, :D])
    o_ref[0] = (_mm(h, out_w_ref[...]) + g[4:5, :]).astype(o_ref.dtype)


# ----------------------------- pallas_call wrapper ---------------------------
def _bspec(shape):
    nd = len(shape)
    return pl.BlockSpec((1,) + tuple(shape[1:]),
                        lambda i, nd=nd: (i,) + (0,) * (nd - 1))


def _wspec(shape):
    nd = len(shape)
    return pl.BlockSpec(tuple(shape), lambda i, nd=nd: (0,) * nd)


def _ofa_pallas(pp, patches, base, dec_in, amask):
    b = patches.shape[0]
    weights = (pp["patch_w"], pp["enc_w"], pp["enc_w2"], pp["enc_v"],
               pp["dec_w"], pp["dec_w2"], pp["dec_v"], pp["gvec"], pp["out_w"])
    in_specs = ([_bspec(patches.shape), _wspec(base.shape),
                 _bspec(dec_in.shape), _bspec(amask.shape)]
                + [_wspec(w.shape) for w in weights])
    return pl.pallas_call(
        _ofa_kernel,
        grid=(b,),
        out_shape=jax.ShapeDtypeStruct((b, T_DEC, VOCAB), jnp.float32),
        in_specs=in_specs,
        out_specs=_bspec((b, T_DEC, VOCAB)),
        compiler_params=pltpu.CompilerParams(
            dimension_semantics=("parallel",)),
    )(patches, base, dec_in, amask, *weights)


# ----------------------------- forward --------------------------------------
def ofa_forward(pp, patch_img, cap, att_mask, cap_len=None):
    b = patch_img.shape[0]

    # im2col of NCHW image into non-overlapping PxP patches (pure layout op in XLA).
    nh, nw = IMG // P, IMG // P
    patches = patch_img.reshape(b, C_IN, nh, P, nw, P)
    patches = patches.transpose(0, 2, 4, 1, 3, 5).reshape(b, N_PATCH, CPP)
    # rows >= N_PATCH are zeros so the in-kernel patch matmul leaves them untouched;
    # patches only feed the bf16 MXU, so ship them as bf16.
    patches = jnp.concatenate(
        [patches, jnp.zeros((b, PROMPT_LEN, CPP), patches.dtype)],
        axis=1).astype(jnp.bfloat16)                                     # [B, T_ENC, CPP]

    # token-embedding gather done in XLA (no efficient tiny-gather in Pallas here);
    # `base` is identical across the batch so it is shipped un-batched.
    txt = jnp.take(pp["tok_emb"], pp["prompt_ids"], axis=0)              # [PROMPT_LEN, D]
    base = jnp.concatenate(
        [jnp.broadcast_to(pp["patch_b"], (N_PATCH, D)), txt], axis=0)
    base = base + pp["enc_pos"]                                          # [T_ENC, D]

    t = cap.shape[1]
    dec_in = jnp.take(pp["tok_emb"], cap, axis=0) + pp["dec_pos"][None, :t]
    amask = att_mask.astype(jnp.float32).reshape(b, 1, t)                # 1=keep, 0=pad

    return _ofa_pallas(pp, patches, base, dec_in, amask)                 # [B, T_DEC, VOCAB]


# ----------------------------- param init & packing --------------------------
def init_params(key):
    keys = iter(jax.random.split(key, 256))

    def dense(din, dout):
        w = jax.random.normal(next(keys), (din, dout), jnp.float32) * 0.02
        return w, jnp.zeros((1, dout), jnp.float32)

    def qkv_fused():
        wq, bq = dense(D, D)
        wk, bk = dense(D, D)
        wv, bv = dense(D, D)
        return (jnp.concatenate([wq, wk, wv], axis=1),
                jnp.concatenate([bq, bk, bv], axis=1))

    def ln():
        return jnp.ones((1, D), jnp.float32), jnp.zeros((1, D), jnp.float32)

    params = {}
    params["tok_emb"] = jax.random.normal(next(keys), (VOCAB, D), jnp.float32) * 0.02
    params["enc_pos"] = jax.random.normal(next(keys), (T_ENC, D), jnp.float32) * 0.02
    params["dec_pos"] = jax.random.normal(next(keys), (T_DEC, D), jnp.float32) * 0.02
    params["patch_w"], params["patch_b"] = dense(CPP, D)
    params["prompt_ids"] = jnp.array([3, 17, 42, 9, 101, 2], dtype=jnp.int32)

    enc_layers = []
    for _ in range(N_ENC_LAYERS):
        wqkv, bqkv = qkv_fused()
        wo, bo = dense(D, D)
        w1, b1 = dense(D, FFN)
        w2, b2 = dense(FFN, D)
        ln1g, ln1b = ln()
        ln2g, ln2b = ln()
        enc_layers.append(dict(wqkv=wqkv, bqkv=bqkv, wo=wo, bo=bo,
                               w1=w1, b1=b1, w2=w2, b2=b2,
                               ln1_g=ln1g, ln1_b=ln1b, ln2_g=ln2g, ln2_b=ln2b))
    params["enc"] = {k: jnp.stack([lyr[k] for lyr in enc_layers])
                     for k in enc_layers[0]}

    dec_layers = []
    for _ in range(N_DEC_LAYERS):
        swqkv, sbqkv = qkv_fused()
        swo, sbo = dense(D, D)
        cwq, cbq = dense(D, D)
        cwk, cbk = dense(D, D)
        cwv, cbv = dense(D, D)
        cwkv = jnp.concatenate([cwk, cwv], axis=1)
        cbkv = jnp.concatenate([cbk, cbv], axis=1)
        cwo, cbo = dense(D, D)
        w1, b1 = dense(D, FFN)
        w2, b2 = dense(FFN, D)
        ln1g, ln1b = ln()
        ln2g, ln2b = ln()
        ln3g, ln3b = ln()
        dec_layers.append(dict(swqkv=swqkv, sbqkv=sbqkv, swo=swo, sbo=sbo,
                               cwq=cwq, cbq=cbq, cwkv=cwkv, cbkv=cbkv,
                               cwo=cwo, cbo=cbo,
                               w1=w1, b1=b1, w2=w2, b2=b2,
                               ln1_g=ln1g, ln1_b=ln1b, ln2_g=ln2g, ln2_b=ln2b,
                               ln3_g=ln3g, ln3_b=ln3b))
    params["dec"] = {k: jnp.stack([lyr[k] for lyr in dec_layers])
                     for k in dec_layers[0]}

    params["enc_lnf_g"], params["enc_lnf_b"] = ln()
    params["dec_lnf_g"], params["dec_lnf_b"] = ln()
    params["out_w"], params["out_b"] = dense(D, VOCAB)
    return params


def _pad_cols(x, width):
    return jnp.pad(x, [(0, 0)] * (x.ndim - 1) + [(0, width - x.shape[-1])])


def pack_params(params):
    """Pack per-tensor params into a few flat slabs (bf16 matrices, f32 vector slabs)."""
    enc, dec = params["enc"], params["dec"]
    bf = jnp.bfloat16
    packed = {
        # host-side (XLA) pieces: embeddings / positions stay f32
        "tok_emb": params["tok_emb"],
        "prompt_ids": params["prompt_ids"],
        "patch_b": params["patch_b"],
        "enc_pos": params["enc_pos"],
        "dec_pos": params["dec_pos"],
        # kernel-side slabs
        "patch_w": params["patch_w"].astype(bf),
        "out_w": params["out_w"].astype(bf),
        "enc_w": jnp.concatenate([enc["wqkv"], enc["wo"], enc["w1"]],
                                 axis=-1).astype(bf),                    # [L, D, 192]
        "enc_w2": enc["w2"].astype(bf),                                  # [L, FFN, D]
        "enc_v": jnp.concatenate(
            [_pad_cols(enc[k], VEC_W) for k in
             ("bqkv", "bo", "b1", "b2", "ln1_g", "ln1_b", "ln2_g", "ln2_b")],
            axis=1),                                                     # [L, 8, 96]
        "dec_w": jnp.concatenate([dec["swqkv"], dec["swo"], dec["cwq"],
                                  dec["cwkv"], dec["cwo"], dec["w1"]],
                                 axis=-1).astype(bf),                    # [L, D, 320]
        "dec_w2": dec["w2"].astype(bf),                                  # [L, FFN, D]
        "dec_v": jnp.concatenate(
            [_pad_cols(dec[k], VEC_W) for k in
             ("sbqkv", "sbo", "cbq", "cbkv", "cbo",
              "ln1_g", "ln1_b", "ln2_g", "ln2_b", "ln3_g", "ln3_b", "b1", "b2")],
            axis=1),                                                     # [L, 13, 96]
        "gvec": jnp.concatenate(
            [_pad_cols(v, VOCAB) for v in
             (params["enc_lnf_g"], params["enc_lnf_b"],
              params["dec_lnf_g"], params["dec_lnf_b"], params["out_b"])],
            axis=0),                                                     # [5, 128]
    }
    return packed


# ----------------------------- main -----------------------------------------
if __name__ == "__main__":
    key = jax.random.PRNGKey(0)
    k_param, k_img, k_cap = jax.random.split(key, 3)

    params = init_params(k_param)
    packed = pack_params(params)

    patch_img = jax.random.normal(k_img, (B, C_IN, IMG, IMG), jnp.float32)   # NCHW
    cap = jax.random.randint(k_cap, (B, T_DEC), 0, VOCAB, dtype=jnp.int32)   # decoder ids
    att_mask = jnp.ones((B, T_DEC), dtype=jnp.int32)                         # padding mask
    cap_len = jnp.full((B,), T_DEC, dtype=jnp.int32)                         # unused in forward

    logits = jax.jit(ofa_forward)(packed, patch_img, cap, att_mask, cap_len)
    logits = jax.block_until_ready(logits)

    assert logits.shape == (B, T_DEC, VOCAB), logits.shape
    assert bool(jnp.all(jnp.isfinite(logits)))
    print("KERNEL_OK")
</pallas_src>

<mosaic_0001>
module attributes {stable_mosaic.version = 11 : i64} {
  func.func @_ofa_kernel(%arg0: i32, %arg1: memref<1x10x192xbf16, #tpu.memory_space<vmem>>, %arg2: memref<10x32xf32, #tpu.memory_space<vmem>>, %arg3: memref<1x8x32xf32, #tpu.memory_space<vmem>>, %arg4: memref<1x1x8xf32, #tpu.memory_space<vmem>>, %arg5: memref<192x32xbf16, #tpu.memory_space<vmem>>, %arg6: memref<2x32x192xbf16, #tpu.memory_space<vmem>>, %arg7: memref<2x64x32xbf16, #tpu.memory_space<vmem>>, %arg8: memref<2x8x96xf32, #tpu.memory_space<vmem>>, %arg9: memref<2x32x320xbf16, #tpu.memory_space<vmem>>, %arg10: memref<2x64x32xbf16, #tpu.memory_space<vmem>>, %arg11: memref<2x13x96xf32, #tpu.memory_space<vmem>>, %arg12: memref<5x128xf32, #tpu.memory_space<vmem>>, %arg13: memref<32x128xbf16, #tpu.memory_space<vmem>>, %arg14: memref<1x8x128xf32, #tpu.memory_space<vmem>>) attributes {dimension_semantics = [#tpu.dimension_semantics<parallel>], iteration_bounds = array<i64: 2>, scalar_prefetch = 0 : i64, scratch_operands = 0 : i64, tpu.core_type = #tpu.core_type<tc>, window_params = [{transform_indices = @transform_0, window_bounds = array<i64: 1, 10, 192>}, {pipeline_mode = #tpu.pipeline_mode<synchronous>, transform_indices = @transform_1, window_bounds = array<i64: 10, 32>}, {transform_indices = @transform_2, window_bounds = array<i64: 1, 8, 32>}, {transform_indices = @transform_3, window_bounds = array<i64: 1, 1, 8>}, {pipeline_mode = #tpu.pipeline_mode<synchronous>, transform_indices = @transform_4, window_bounds = array<i64: 192, 32>}, {pipeline_mode = #tpu.pipeline_mode<synchronous>, transform_indices = @transform_5, window_bounds = array<i64: 2, 32, 192>}, {pipeline_mode = #tpu.pipeline_mode<synchronous>, transform_indices = @transform_6, window_bounds = array<i64: 2, 64, 32>}, {pipeline_mode = #tpu.pipeline_mode<synchronous>, transform_indices = @transform_7, window_bounds = array<i64: 2, 8, 96>}, {pipeline_mode = #tpu.pipeline_mode<synchronous>, transform_indices = @transform_8, window_bounds = array<i64: 2, 32, 320>}, {pipeline_mode = #tpu.pipeline_mode<synchronous>, transform_indices = @transform_9, window_bounds = array<i64: 2, 64, 32>}, {pipeline_mode = #tpu.pipeline_mode<synchronous>, transform_indices = @transform_10, window_bounds = array<i64: 2, 13, 96>}, {pipeline_mode = #tpu.pipeline_mode<synchronous>, transform_indices = @transform_11, window_bounds = array<i64: 5, 128>}, {pipeline_mode = #tpu.pipeline_mode<synchronous>, transform_indices = @transform_12, window_bounds = array<i64: 32, 128>}, {transform_indices = @transform_13, window_bounds = array<i64: 1, 8, 128>}]} {
    %c0 = arith.constant 0 : index
    %c0_0 = arith.constant 0 : index
    %c0_1 = arith.constant 0 : index
    %0 = vector.load %arg1[%c0, %c0_0, %c0_1] : memref<1x10x192xbf16, #tpu.memory_space<vmem>>, vector<1x10x192xbf16>
    %1 = vector.shape_cast %0 : vector<1x10x192xbf16> to vector<10x192xbf16>
    %c0_2 = arith.constant 0 : index
    %c0_3 = arith.constant 0 : index
    %2 = vector.load %arg5[%c0_2, %c0_3] : memref<192x32xbf16, #tpu.memory_space<vmem>>, vector<192x32xbf16>
    %cst = arith.constant dense<0.000000e+00> : vector<10x32xf32>
    %3 = tpu.matmul %1, %2, %cst {dimension_numbers = #tpu.dot_dimension_numbers<[1], [0], [0], [1], [0, 0, 1, 1], [], []>} : vector<10x192xbf16>, vector<192x32xbf16>, vector<10x32xf32> -> vector<10x32xf32>
    %c0_4 = arith.constant 0 : index
    %c0_5 = arith.constant 0 : index
    %4 = vector.load %arg2[%c0_4, %c0_5] : memref<10x32xf32, #tpu.memory_space<vmem>>, vector<10x32xf32>
    %5 = arith.addf %3, %4 : vector<10x32xf32>
    %c0_6 = arith.constant 0 : index
    %c0_7 = arith.constant 0 : index
    %c0_8 = arith.constant 0 : index
    %6 = vector.load %arg6[%c0_6, %c0_7, %c0_8] : memref<2x32x192xbf16, #tpu.memory_space<vmem>>, vector<1x32x192xbf16>
    %7 = vector.shape_cast %6 : vector<1x32x192xbf16> to vector<32x192xbf16>
    %c0_9 = arith.constant 0 : index
    %c0_10 = arith.constant 0 : index
    %c0_11 = arith.constant 0 : index
    %8 = vector.load %arg8[%c0_9, %c0_10, %c0_11] : memref<2x8x96xf32, #tpu.memory_space<vmem>>, vector<1x8x96xf32>
    %9 = vector.shape_cast %8 : vector<1x8x96xf32> to vector<8x96xf32>
    %10 = vector.extract_strided_slice %9 {offsets = [4, 0], sizes = [1, 32], strides = [1, 1]} : vector<8x96xf32> to vector<1x32xf32>
    %11 = vector.extract_strided_slice %9 {offsets = [5, 0], sizes = [1, 32], strides = [1, 1]} : vector<8x96xf32> to vector<1x32xf32>
    %cst_12 = arith.constant dense<0.000000e+00> : vector<10xf32>
    %12 = vector.multi_reduction <add>, %5, %cst_12 [1] : vector<10x32xf32> to vector<10xf32>
    %13 = vector.shape_cast %12 : vector<10xf32> to vector<10x1xf32>
    %cst_13 = arith.constant 3.200000e+01 : f32
    %14 = vector.broadcast %cst_13 : f32 to vector<10x1xf32>
    %15 = arith.divf %13, %14 : vector<10x1xf32>
    %16 = vector.broadcast %15 : vector<10x1xf32> to vector<10x32xf32>
    %17 = arith.subf %5, %16 : vector<10x32xf32>
    %18 = vector.broadcast %15 : vector<10x1xf32> to vector<10x32xf32>
    %19 = arith.subf %5, %18 : vector<10x32xf32>
    %20 = arith.mulf %17, %19 : vector<10x32xf32>
    %cst_14 = arith.constant dense<0.000000e+00> : vector<10xf32>
    %21 = vector.multi_reduction <add>, %20, %cst_14 [1] : vector<10x32xf32> to vector<10xf32>
    %22 = vector.shape_cast %21 : vector<10xf32> to vector<10x1xf32>
    %cst_15 = arith.constant 3.200000e+01 : f32
    %23 = vector.broadcast %cst_15 : f32 to vector<10x1xf32>
    %24 = arith.divf %22, %23 : vector<10x1xf32>
    %25 = vector.broadcast %15 : vector<10x1xf32> to vector<10x32xf32>
    %26 = arith.subf %5, %25 : vector<10x32xf32>
    %cst_16 = arith.constant 9.99999974E-6 : f32
    %27 = vector.broadcast %cst_16 : f32 to vector<10x1xf32>
    %28 = arith.addf %24, %27 : vector<10x1xf32>
    %29 = math.rsqrt %28 : vector<10x1xf32>
    %30 = vector.broadcast %29 : vector<10x1xf32> to vector<10x32xf32>
    %31 = arith.mulf %26, %30 : vector<10x32xf32>
    %32 = vector.broadcast %10 : vector<1x32xf32> to vector<10x32xf32>
    %33 = arith.mulf %31, %32 : vector<10x32xf32>
    %34 = vector.broadcast %11 : vector<1x32xf32> to vector<10x32xf32>
    %35 = arith.addf %33, %34 : vector<10x32xf32>
    %36 = vector.extract_strided_slice %7 {offsets = [0, 0], sizes = [32, 96], strides = [1, 1]} : vector<32x192xbf16> to vector<32x96xbf16>
    %37 = arith.truncf %35 : vector<10x32xf32> to vector<10x32xbf16>
    %cst_17 = arith.constant dense<0.000000e+00> : vector<10x96xf32>
    %38 = tpu.matmul %37, %36, %cst_17 {dimension_numbers = #tpu.dot_dimension_numbers<[1], [0], [0], [1], [0, 0, 1, 1], [], []>} : vector<10x32xbf16>, vector<32x96xbf16>, vector<10x96xf32> -> vector<10x96xf32>
    %39 = vector.extract_strided_slice %9 {offsets = [0, 0], sizes = [1, 96], strides = [1, 1]} : vector<8x96xf32> to vector<1x96xf32>
    %40 = vector.broadcast %39 : vector<1x96xf32> to vector<10x96xf32>
    %41 = arith.addf %38, %40 : vector<10x96xf32>
    %42 = vector.extract_strided_slice %41 {offsets = [0, 0], sizes = [10, 32], strides = [1, 1]} : vector<10x96xf32> to vector<10x32xf32>
    %43 = vector.extract_strided_slice %41 {offsets = [0, 32], sizes = [10, 32], strides = [1, 1]} : vector<10x96xf32> to vector<10x32xf32>
    %44 = vector.extract_strided_slice %41 {offsets = [0, 64], sizes = [10, 32], strides = [1, 1]} : vector<10x96xf32> to vector<10x32xf32>
    %45 = vector.extract_strided_slice %7 {offsets = [0, 96], sizes = [32, 32], strides = [1, 1]} : vector<32x192xbf16> to vector<32x32xbf16>
    %46 = vector.extract_strided_slice %9 {offsets = [1, 0], sizes = [1, 32], strides = [1, 1]} : vector<8x96xf32> to vector<1x32xf32>
    %47 = vector.extract_strided_slice %42 {offsets = [0, 0], sizes = [10, 8], strides = [1, 1]} : vector<10x32xf32> to vector<10x8xf32>
    %48 = vector.extract_strided_slice %42 {offsets = [0, 8], sizes = [10, 8], strides = [1, 1]} : vector<10x32xf32> to vector<10x8xf32>
    %49 = vector.extract_strided_slice %42 {offsets = [0, 16], sizes = [10, 8], strides = [1, 1]} : vector<10x32xf32> to vector<10x8xf32>
    %50 = vector.extract_strided_slice %42 {offsets = [0, 24], sizes = [10, 8], strides = [1, 1]} : vector<10x32xf32> to vector<10x8xf32>
    %51 = vector.shape_cast %47 : vector<10x8xf32> to vector<1x10x8xf32>
    %52 = vector.shape_cast %48 : vector<10x8xf32> to vector<1x10x8xf32>
    %53 = vector.shape_cast %49 : vector<10x8xf32> to vector<1x10x8xf32>
    %54 = vector.shape_cast %50 : vector<10x8xf32> to vector<1x10x8xf32>
    %55 = tpu.concatenate %51, %52, %53, %54 in 0 : vector<1x10x8xf32>, vector<1x10x8xf32>, vector<1x10x8xf32>, vector<1x10x8xf32> -> vector<4x10x8xf32>
    %56 = vector.extract_strided_slice %43 {offsets = [0, 0], sizes = [10, 8], strides = [1, 1]} : vector<10x32xf32> to vector<10x8xf32>
    %57 = vector.extract_strided_slice %43 {offsets = [0, 8], sizes = [10, 8], strides = [1, 1]} : vector<10x32xf32> to vector<10x8xf32>
    %58 = vector.extract_strided_slice %43 {offsets = [0, 16], sizes = [10, 8], strides = [1, 1]} : vector<10x32xf32> to vector<10x8xf32>
    %59 = vector.extract_strided_slice %43 {offsets = [0, 24], sizes = [10, 8], strides = [1, 1]} : vector<10x32xf32> to vector<10x8xf32>
    %60 = vector.shape_cast %56 : vector<10x8xf32> to vector<1x10x8xf32>
    %61 = vector.shape_cast %57 : vector<10x8xf32> to vector<1x10x8xf32>
    %62 = vector.shape_cast %58 : vector<10x8xf32> to vector<1x10x8xf32>
    %63 = vector.shape_cast %59 : vector<10x8xf32> to vector<1x10x8xf32>
    %64 = tpu.concatenate %60, %61, %62, %63 in 0 : vector<1x10x8xf32>, vector<1x10x8xf32>, vector<1x10x8xf32>, vector<1x10x8xf32> -> vector<4x10x8xf32>
    %65 = vector.extract_strided_slice %44 {offsets = [0, 0], sizes = [10, 8], strides = [1, 1]} : vector<10x32xf32> to vector<10x8xf32>
    %66 = vector.extract_strided_slice %44 {offsets = [0, 8], sizes = [10, 8], strides = [1, 1]} : vector<10x32xf32> to vector<10x8xf32>
    %67 = vector.extract_strided_slice %44 {offsets = [0, 16], sizes = [10, 8], strides = [1, 1]} : vector<10x32xf32> to vector<10x8xf32>
    %68 = vector.extract_strided_slice %44 {offsets = [0, 24], sizes = [10, 8], strides = [1, 1]} : vector<10x32xf32> to vector<10x8xf32>
    %69 = vector.shape_cast %65 : vector<10x8xf32> to vector<1x10x8xf32>
    %70 = vector.shape_cast %66 : vector<10x8xf32> to vector<1x10x8xf32>
    %71 = vector.shape_cast %67 : vector<10x8xf32> to vector<1x10x8xf32>
    %72 = vector.shape_cast %68 : vector<10x8xf32> to vector<1x10x8xf32>
    %73 = tpu.concatenate %69, %70, %71, %72 in 0 : vector<1x10x8xf32>, vector<1x10x8xf32>, vector<1x10x8xf32>, vector<1x10x8xf32> -> vector<4x10x8xf32>
    %74 = arith.truncf %55 : vector<4x10x8xf32> to vector<4x10x8xbf16>
    %75 = arith.truncf %64 : vector<4x10x8xf32> to vector<4x10x8xbf16>
    "tpu.trace_start"() <{level = 10 : i32, message = "hqd,hkd->hqk"}> : () -> ()
    %cst_18 = arith.constant dense<0.000000e+00> : vector<4x10x10xf32>
    %76 = tpu.matmul %74, %75, %cst_18 {dimension_numbers = #tpu.dot_dimension_numbers<[2], [2], [1], [1], [0, 0, 0, 1, 1, 1], [0], [0]>} : vector<4x10x8xbf16>, vector<4x10x8xbf16>, vector<4x10x10xf32> -> vector<4x10x10xf32>
    "tpu.trace_stop"() : () -> ()
    %cst_19 = arith.constant 0.353553385 : f32
    %77 = vector.broadcast %cst_19 : f32 to vector<4x10x10xf32>
    %78 = arith.mulf %76, %77 : vector<4x10x10xf32>
    %cst_20 = arith.constant dense<0xFF800000> : vector<4x10xf32>
    %79 = vector.multi_reduction <maximumf>, %78, %cst_20 [2] : vector<4x10x10xf32> to vector<4x10xf32>
    %80 = vector.shape_cast %79 : vector<4x10xf32> to vector<4x10x1xf32>
    %81 = vector.broadcast %80 : vector<4x10x1xf32> to vector<4x10x10xf32>
    %82 = arith.subf %78, %81 : vector<4x10x10xf32>
    %83 = math.exp %82 : vector<4x10x10xf32>
    %cst_21 = arith.constant dense<0.000000e+00> : vector<4x10xf32>
    %84 = vector.multi_reduction <add>, %83, %cst_21 [2] : vector<4x10x10xf32> to vector<4x10xf32>
    %85 = vector.shape_cast %84 : vector<4x10xf32> to vector<4x10x1xf32>
    %86 = arith.truncf %83 : vector<4x10x10xf32> to vector<4x10x10xbf16>
    %87 = arith.truncf %73 : vector<4x10x8xf32> to vector<4x10x8xbf16>
    "tpu.trace_start"() <{level = 10 : i32, message = "hqk,hkd->hqd"}> : () -> ()
    %cst_22 = arith.constant dense<0.000000e+00> : vector<4x10x8xf32>
    %88 = tpu.matmul %86, %87, %cst_22 {dimension_numbers = #tpu.dot_dimension_numbers<[2], [1], [1], [2], [0, 0, 0, 1, 1, 2], [0], [0]>} : vector<4x10x10xbf16>, vector<4x10x8xbf16>, vector<4x10x8xf32> -> vector<4x10x8xf32>
    "tpu.trace_stop"() : () -> ()
    %89 = tpu.reciprocal %85 {approx = true} : vector<4x10x1xf32> -> vector<4x10x1xf32>
    %90 = vector.broadcast %89 : vector<4x10x1xf32> to vector<4x10x8xf32>
    %91 = arith.mulf %88, %90 : vector<4x10x8xf32>
    %92 = vector.extract_strided_slice %91 {offsets = [0, 0, 0], sizes = [1, 10, 8], strides = [1, 1, 1]} : vector<4x10x8xf32> to vector<1x10x8xf32>
    %93 = vector.shape_cast %92 : vector<1x10x8xf32> to vector<10x8xf32>
    %94 = vector.extract_strided_slice %91 {offsets = [1, 0, 0], sizes = [1, 10, 8], strides = [1, 1, 1]} : vector<4x10x8xf32> to vector<1x10x8xf32>
    %95 = vector.shape_cast %94 : vector<1x10x8xf32> to vector<10x8xf32>
    %96 = vector.extract_strided_slice %91 {offsets = [2, 0, 0], sizes = [1, 10, 8], strides = [1, 1, 1]} : vector<4x10x8xf32> to vector<1x10x8xf32>
    %97 = vector.shape_cast %96 : vector<1x10x8xf32> to vector<10x8xf32>
    %98 = vector.extract_strided_slice %91 {offsets = [3, 0, 0], sizes = [1, 10, 8], strides = [1, 1, 1]} : vector<4x10x8xf32> to vector<1x10x8xf32>
    %99 = vector.shape_cast %98 : vector<1x10x8xf32> to vector<10x8xf32>
    %100 = tpu.concatenate %93, %95, %97, %99 in 1 : vector<10x8xf32>, vector<10x8xf32>, vector<10x8xf32>, vector<10x8xf32> -> vector<10x32xf32>
    %101 = arith.truncf %100 : vector<10x32xf32> to vector<10x32xbf16>
    %cst_23 = arith.constant dense<0.000000e+00> : vector<10x32xf32>
    %102 = tpu.matmul %101, %45, %cst_23 {dimension_numbers = #tpu.dot_dimension_numbers<[1], [0], [0], [1], [0, 0, 1, 1], [], []>} : vector<10x32xbf16>, vector<32x32xbf16>, vector<10x32xf32> -> vector<10x32xf32>
    %103 = vector.broadcast %46 : vector<1x32xf32> to vector<10x32xf32>
    %104 = arith.addf %102, %103 : vector<10x32xf32>
    %105 = arith.addf %5, %104 : vector<10x32xf32>
    %106 = vector.extract_strided_slice %9 {offsets = [6, 0], sizes = [1, 32], strides = [1, 1]} : vector<8x96xf32> to vector<1x32xf32>
    %107 = vector.extract_strided_slice %9 {offsets = [7, 0], sizes = [1, 32], strides = [1, 1]} : vector<8x96xf32> to vector<1x32xf32>
    %cst_24 = arith.constant dense<0.000000e+00> : vector<10xf32>
    %108 = vector.multi_reduction <add>, %105, %cst_24 [1] : vector<10x32xf32> to vector<10xf32>
    %109 = vector.shape_cast %108 : vector<10xf32> to vector<10x1xf32>
    %cst_25 = arith.constant 3.200000e+01 : f32
    %110 = vector.broadcast %cst_25 : f32 to vector<10x1xf32>
    %111 = arith.divf %109, %110 : vector<10x1xf32>
    %112 = vector.broadcast %111 : vector<10x1xf32> to vector<10x32xf32>
    %113 = arith.subf %105, %112 : vector<10x32xf32>
    %114 = vector.broadcast %111 : vector<10x1xf32> to vector<10x32xf32>
    %115 = arith.subf %105, %114 : vector<10x32xf32>
    %116 = arith.mulf %113, %115 : vector<10x32xf32>
    %cst_26 = arith.constant dense<0.000000e+00> : vector<10xf32>
    %117 = vector.multi_reduction <add>, %116, %cst_26 [1] : vector<10x32xf32> to vector<10xf32>
    %118 = vector.shape_cast %117 : vector<10xf32> to vector<10x1xf32>
    %cst_27 = arith.constant 3.200000e+01 : f32
    %119 = vector.broadcast %cst_27 : f32 to vector<10x1xf32>
    %120 = arith.divf %118, %119 : vector<10x1xf32>
    %121 = vector.broadcast %111 : vector<10x1xf32> to vector<10x32xf32>
    %122 = arith.subf %105, %121 : vector<10x32xf32>
    %cst_28 = arith.constant 9.99999974E-6 : f32
    %123 = vector.broadcast %cst_28 : f32 to vector<10x1xf32>
    %124 = arith.addf %120, %123 : vector<10x1xf32>
    %125 = math.rsqrt %124 : vector<10x1xf32>
    %126 = vector.broadcast %125 : vector<10x1xf32> to vector<10x32xf32>
    %127 = arith.mulf %122, %126 : vector<10x32xf32>
    %128 = vector.broadcast %106 : vector<1x32xf32> to vector<10x32xf32>
    %129 = arith.mulf %127, %128 : vector<10x32xf32>
    %130 = vector.broadcast %107 : vector<1x32xf32> to vector<10x32xf32>
    %131 = arith.addf %129, %130 : vector<10x32xf32>
    %132 = vector.extract_strided_slice %7 {offsets = [0, 128], sizes = [32, 64], strides = [1, 1]} : vector<32x192xbf16> to vector<32x64xbf16>
    %133 = vector.extract_strided_slice %9 {offsets = [2, 0], sizes = [1, 64], strides = [1, 1]} : vector<8x96xf32> to vector<1x64xf32>
    %c0_29 = arith.constant 0 : index
    %c0_30 = arith.constant 0 : index
    %c0_31 = arith.constant 0 : index
    %134 = vector.load %arg7[%c0_29, %c0_30, %c0_31] : memref<2x64x32xbf16, #tpu.memory_space<vmem>>, vector<1x64x32xbf16>
    %135 = vector.shape_cast %134 : vector<1x64x32xbf16> to vector<64x32xbf16>
    %136 = vector.extract_strided_slice %9 {offsets = [3, 0], sizes = [1, 32], strides = [1, 1]} : vector<8x96xf32> to vector<1x32xf32>
    %137 = arith.truncf %131 : vector<10x32xf32> to vector<10x32xbf16>
    %cst_32 = arith.constant dense<0.000000e+00> : vector<10x64xf32>
    %138 = tpu.matmul %137, %132, %cst_32 {dimension_numbers = #tpu.dot_dimension_numbers<[1], [0], [0], [1], [0, 0, 1, 1], [], []>} : vector<10x32xbf16>, vector<32x64xbf16>, vector<10x64xf32> -> vector<10x64xf32>
    %139 = vector.broadcast %133 : vector<1x64xf32> to vector<10x64xf32>
    %140 = arith.addf %138, %139 : vector<10x64xf32>
    %cst_33 = arith.constant 5.000000e-01 : f32
    %141 = vector.broadcast %cst_33 : f32 to vector<10x64xf32>
    %142 = arith.mulf %141, %140 : vector<10x64xf32>
    %cst_34 = arith.constant 4.471500e-02 : f32
    %143 = vector.broadcast %cst_34 : f32 to vector<10x64xf32>
    %144 = arith.mulf %143, %140 : vector<10x64xf32>
    %145 = arith.mulf %144, %140 : vector<10x64xf32>
    %146 = arith.mulf %145, %140 : vector<10x64xf32>
    %147 = arith.addf %140, %146 : vector<10x64xf32>
    %cst_35 = arith.constant 0.797884583 : f32
    %148 = vector.broadcast %cst_35 : f32 to vector<10x64xf32>
    %149 = arith.mulf %148, %147 : vector<10x64xf32>
    %150 = math.tanh %149 : vector<10x64xf32>
    %cst_36 = arith.constant 1.000000e+00 : f32
    %151 = vector.broadcast %cst_36 : f32 to vector<10x64xf32>
    %152 = arith.addf %151, %150 : vector<10x64xf32>
    %153 = arith.mulf %142, %152 : vector<10x64xf32>
    %154 = arith.truncf %153 : vector<10x64xf32> to vector<10x64xbf16>
    %cst_37 = arith.constant dense<0.000000e+00> : vector<10x32xf32>
    %155 = tpu.matmul %154, %135, %cst_37 {dimension_numbers = #tpu.dot_dimension_numbers<[1], [0], [0], [1], [0, 0, 1, 1], [], []>} : vector<10x64xbf16>, vector<64x32xbf16>, vector<10x32xf32> -> vector<10x32xf32>
    %156 = vector.broadcast %136 : vector<1x32xf32> to vector<10x32xf32>
    %157 = arith.addf %155, %156 : vector<10x32xf32>
    %158 = arith.addf %105, %157 : vector<10x32xf32>
    %c1 = arith.constant 1 : index
    %c0_38 = arith.constant 0 : index
    %c0_39 = arith.constant 0 : index
    %159 = vector.load %arg6[%c1, %c0_38, %c0_39] : memref<2x32x192xbf16, #tpu.memory_space<vmem>>, vector<1x32x192xbf16>
    %160 = vector.shape_cast %159 : vector<1x32x192xbf16> to vector<32x192xbf16>
    %c1_40 = arith.constant 1 : index
    %c0_41 = arith.constant 0 : index
    %c0_42 = arith.constant 0 : index
    %161 = vector.load %arg8[%c1_40, %c0_41, %c0_42] : memref<2x8x96xf32, #tpu.memory_space<vmem>>, vector<1x8x96xf32>
    %162 = vector.shape_cast %161 : vector<1x8x96xf32> to vector<8x96xf32>
    %163 = vector.extract_strided_slice %162 {offsets = [4, 0], sizes = [1, 32], strides = [1, 1]} : vector<8x96xf32> to vector<1x32xf32>
    %164 = vector.extract_strided_slice %162 {offsets = [5, 0], sizes = [1, 32], strides = [1, 1]} : vector<8x96xf32> to vector<1x32xf32>
    %cst_43 = arith.constant dense<0.000000e+00> : vector<10xf32>
    %165 = vector.multi_reduction <add>, %158, %cst_43 [1] : vector<10x32xf32> to vector<10xf32>
    %166 = vector.shape_cast %165 : vector<10xf32> to vector<10x1xf32>
    %cst_44 = arith.constant 3.200000e+01 : f32
    %167 = vector.broadcast %cst_44 : f32 to vector<10x1xf32>
    %168 = arith.divf %166, %167 : vector<10x1xf32>
    %169 = vector.broadcast %168 : vector<10x1xf32> to vector<10x32xf32>
    %170 = arith.subf %158, %169 : vector<10x32xf32>
    %171 = vector.broadcast %168 : vector<10x1xf32> to vector<10x32xf32>
    %172 = arith.subf %158, %171 : vector<10x32xf32>
    %173 = arith.mulf %170, %172 : vector<10x32xf32>
    %cst_45 = arith.constant dense<0.000000e+00> : vector<10xf32>
    %174 = vector.multi_reduction <add>, %173, %cst_45 [1] : vector<10x32xf32> to vector<10xf32>
    %175 = vector.shape_cast %174 : vector<10xf32> to vector<10x1xf32>
    %cst_46 = arith.constant 3.200000e+01 : f32
    %176 = vector.broadcast %cst_46 : f32 to vector<10x1xf32>
    %177 = arith.divf %175, %176 : vector<10x1xf32>
    %178 = vector.broadcast %168 : vector<10x1xf32> to vector<10x32xf32>
    %179 = arith.subf %158, %178 : vector<10x32xf32>
    %cst_47 = arith.constant 9.99999974E-6 : f32
    %180 = vector.broadcast %cst_47 : f32 to vector<10x1xf32>
    %181 = arith.addf %177, %180 : vector<10x1xf32>
    %182 = math.rsqrt %181 : vector<10x1xf32>
    %183 = vector.broadcast %182 : vector<10x1xf32> to vector<10x32xf32>
    %184 = arith.mulf %179, %183 : vector<10x32xf32>
    %185 = vector.broadcast %163 : vector<1x32xf32> to vector<10x32xf32>
    %186 = arith.mulf %184, %185 : vector<10x32xf32>
    %187 = vector.broadcast %164 : vector<1x32xf32> to vector<10x32xf32>
    %188 = arith.addf %186, %187 : vector<10x32xf32>
    %189 = vector.extract_strided_slice %160 {offsets = [0, 0], sizes = [32, 96], strides = [1, 1]} : vector<32x192xbf16> to vector<32x96xbf16>
    %190 = arith.truncf %188 : vector<10x32xf32> to vector<10x32xbf16>
    %cst_48 = arith.constant dense<0.000000e+00> : vector<10x96xf32>
    %191 = tpu.matmul %190, %189, %cst_48 {dimension_numbers = #tpu.dot_dimension_numbers<[1], [0], [0], [1], [0, 0, 1, 1], [], []>} : vector<10x32xbf16>, vector<32x96xbf16>, vector<10x96xf32> -> vector<10x96xf32>
    %192 = vector.extract_strided_slice %162 {offsets = [0, 0], sizes = [1, 96], strides = [1, 1]} : vector<8x96xf32> to vector<1x96xf32>
    %193 = vector.broadcast %192 : vector<1x96xf32> to vector<10x96xf32>
    %194 = arith.addf %191, %193 : vector<10x96xf32>
    %195 = vector.extract_strided_slice %194 {offsets = [0, 0], sizes = [10, 32], strides = [1, 1]} : vector<10x96xf32> to vector<10x32xf32>
    %196 = vector.extract_strided_slice %194 {offsets = [0, 32], sizes = [10, 32], strides = [1, 1]} : vector<10x96xf32> to vector<10x32xf32>
    %197 = vector.extract_strided_slice %194 {offsets = [0, 64], sizes = [10, 32], strides = [1, 1]} : vector<10x96xf32> to vector<10x32xf32>
    %198 = vector.extract_strided_slice %160 {offsets = [0, 96], sizes = [32, 32], strides = [1, 1]} : vector<32x192xbf16> to vector<32x32xbf16>
    %199 = vector.extract_strided_slice %162 {offsets = [1, 0], sizes = [1, 32], strides = [1, 1]} : vector<8x96xf32> to vector<1x32xf32>
    %200 = vector.extract_strided_slice %195 {offsets = [0, 0], sizes = [10, 8], strides = [1, 1]} : vector<10x32xf32> to vector<10x8xf32>
    %201 = vector.extract_strided_slice %195 {offsets = [0, 8], sizes = [10, 8], strides = [1, 1]} : vector<10x32xf32> to vector<10x8xf32>
    %202 = vector.extract_strided_slice %195 {offsets = [0, 16], sizes = [10, 8], strides = [1, 1]} : vector<10x32xf32> to vector<10x8xf32>
    %203 = vector.extract_strided_slice %195 {offsets = [0, 24], sizes = [10, 8], strides = [1, 1]} : vector<10x32xf32> to vector<10x8xf32>
    %204 = vector.shape_cast %200 : vector<10x8xf32> to vector<1x10x8xf32>
    %205 = vector.shape_cast %201 : vector<10x8xf32> to vector<1x10x8xf32>
    %206 = vector.shape_cast %202 : vector<10x8xf32> to vector<1x10x8xf32>
    %207 = vector.shape_cast %203 : vector<10x8xf32> to vector<1x10x8xf32>
    %208 = tpu.concatenate %204, %205, %206, %207 in 0 : vector<1x10x8xf32>, vector<1x10x8xf32>, vector<1x10x8xf32>, vector<1x10x8xf32> -> vector<4x10x8xf32>
    %209 = vector.extract_strided_slice %196 {offsets = [0, 0], sizes = [10, 8], strides = [1, 1]} : vector<10x32xf32> to vector<10x8xf32>
    %210 = vector.extract_strided_slice %196 {offsets = [0, 8], sizes = [10, 8], strides = [1, 1]} : vector<10x32xf32> to vector<10x8xf32>
    %211 = vector.extract_strided_slice %196 {offsets = [0, 16], sizes = [10, 8], strides = [1, 1]} : vector<10x32xf32> to vector<10x8xf32>
    %212 = vector.extract_strided_slice %196 {offsets = [0, 24], sizes = [10, 8], strides = [1, 1]} : vector<10x32xf32> to vector<10x8xf32>
    %213 = vector.shape_cast %209 : vector<10x8xf32> to vector<1x10x8xf32>
    %214 = vector.shape_cast %210 : vector<10x8xf32> to vector<1x10x8xf32>
    %215 = vector.shape_cast %211 : vector<10x8xf32> to vector<1x10x8xf32>
    %216 = vector.shape_cast %212 : vector<10x8xf32> to vector<1x10x8xf32>
    %217 = tpu.concatenate %213, %214, %215, %216 in 0 : vector<1x10x8xf32>, vector<1x10x8xf32>, vector<1x10x8xf32>, vector<1x10x8xf32> -> vector<4x10x8xf32>
    %218 = vector.extract_strided_slice %197 {offsets = [0, 0], sizes = [10, 8], strides = [1, 1]} : vector<10x32xf32> to vector<10x8xf32>
    %219 = vector.extract_strided_slice %197 {offsets = [0, 8], sizes = [10, 8], strides = [1, 1]} : vector<10x32xf32> to vector<10x8xf32>
    %220 = vector.extract_strided_slice %197 {offsets = [0, 16], sizes = [10, 8], strides = [1, 1]} : vector<10x32xf32> to vector<10x8xf32>
    %221 = vector.extract_strided_slice %197 {offsets = [0, 24], sizes = [10, 8], strides = [1, 1]} : vector<10x32xf32> to vector<10x8xf32>
    %222 = vector.shape_cast %218 : vector<10x8xf32> to vector<1x10x8xf32>
    %223 = vector.shape_cast %219 : vector<10x8xf32> to vector<1x10x8xf32>
    %224 = vector.shape_cast %220 : vector<10x8xf32> to vector<1x10x8xf32>
    %225 = vector.shape_cast %221 : vector<10x8xf32> to vector<1x10x8xf32>
    %226 = tpu.concatenate %222, %223, %224, %225 in 0 : vector<1x10x8xf32>, vector<1x10x8xf32>, vector<1x10x8xf32>, vector<1x10x8xf32> -> vector<4x10x8xf32>
    %227 = arith.truncf %208 : vector<4x10x8xf32> to vector<4x10x8xbf16>
    %228 = arith.truncf %217 : vector<4x10x8xf32> to vector<4x10x8xbf16>
    "tpu.trace_start"() <{level = 10 : i32, message = "hqd,hkd->hqk"}> : () -> ()
    %cst_49 = arith.constant dense<0.000000e+00> : vector<4x10x10xf32>
    %229 = tpu.matmul %227, %228, %cst_49 {dimension_numbers = #tpu.dot_dimension_numbers<[2], [2], [1], [1], [0, 0, 0, 1, 1, 1], [0], [0]>} : vector<4x10x8xbf16>, vector<4x10x8xbf16>, vector<4x10x10xf32> -> vector<4x10x10xf32>
    "tpu.trace_stop"() : () -> ()
    %cst_50 = arith.constant 0.353553385 : f32
    %230 = vector.broadcast %cst_50 : f32 to vector<4x10x10xf32>
    %231 = arith.mulf %229, %230 : vector<4x10x10xf32>
    %cst_51 = arith.constant dense<0xFF800000> : vector<4x10xf32>
    %232 = vector.multi_reduction <maximumf>, %231, %cst_51 [2] : vector<4x10x10xf32> to vector<4x10xf32>
    %233 = vector.shape_cast %232 : vector<4x10xf32> to vector<4x10x1xf32>
    %234 = vector.broadcast %233 : vector<4x10x1xf32> to vector<4x10x10xf32>
    %235 = arith.subf %231, %234 : vector<4x10x10xf32>
    %236 = math.exp %235 : vector<4x10x10xf32>
    %cst_52 = arith.constant dense<0.000000e+00> : vector<4x10xf32>
    %237 = vector.multi_reduction <add>, %236, %cst_52 [2] : vector<4x10x10xf32> to vector<4x10xf32>
    %238 = vector.shape_cast %237 : vector<4x10xf32> to vector<4x10x1xf32>
    %239 = arith.truncf %236 : vector<4x10x10xf32> to vector<4x10x10xbf16>
    %240 = arith.truncf %226 : vector<4x10x8xf32> to vector<4x10x8xbf16>
    "tpu.trace_start"() <{level = 10 : i32, message = "hqk,hkd->hqd"}> : () -> ()
    %cst_53 = arith.constant dense<0.000000e+00> : vector<4x10x8xf32>
    %241 = tpu.matmul %239, %240, %cst_53 {dimension_numbers = #tpu.dot_dimension_numbers<[2], [1], [1], [2], [0, 0, 0, 1, 1, 2], [0], [0]>} : vector<4x10x10xbf16>, vector<4x10x8xbf16>, vector<4x10x8xf32> -> vector<4x10x8xf32>
    "tpu.trace_stop"() : () -> ()
    %242 = tpu.reciprocal %238 {approx = true} : vector<4x10x1xf32> -> vector<4x10x1xf32>
    %243 = vector.broadcast %242 : vector<4x10x1xf32> to vector<4x10x8xf32>
    %244 = arith.mulf %241, %243 : vector<4x10x8xf32>
    %245 = vector.extract_strided_slice %244 {offsets = [0, 0, 0], sizes = [1, 10, 8], strides = [1, 1, 1]} : vector<4x10x8xf32> to vector<1x10x8xf32>
    %246 = vector.shape_cast %245 : vector<1x10x8xf32> to vector<10x8xf32>
    %247 = vector.extract_strided_slice %244 {offsets = [1, 0, 0], sizes = [1, 10, 8], strides = [1, 1, 1]} : vector<4x10x8xf32> to vector<1x10x8xf32>
    %248 = vector.shape_cast %247 : vector<1x10x8xf32> to vector<10x8xf32>
    %249 = vector.extract_strided_slice %244 {offsets = [2, 0, 0], sizes = [1, 10, 8], strides = [1, 1, 1]} : vector<4x10x8xf32> to vector<1x10x8xf32>
    %250 = vector.shape_cast %249 : vector<1x10x8xf32> to vector<10x8xf32>
    %251 = vector.extract_strided_slice %244 {offsets = [3, 0, 0], sizes = [1, 10, 8], strides = [1, 1, 1]} : vector<4x10x8xf32> to vector<1x10x8xf32>
    %252 = vector.shape_cast %251 : vector<1x10x8xf32> to vector<10x8xf32>
    %253 = tpu.concatenate %246, %248, %250, %252 in 1 : vector<10x8xf32>, vector<10x8xf32>, vector<10x8xf32>, vector<10x8xf32> -> vector<10x32xf32>
    %254 = arith.truncf %253 : vector<10x32xf32> to vector<10x32xbf16>
    %cst_54 = arith.constant dense<0.000000e+00> : vector<10x32xf32>
    %255 = tpu.matmul %254, %198, %cst_54 {dimension_numbers = #tpu.dot_dimension_numbers<[1], [0], [0], [1], [0, 0, 1, 1], [], []>} : vector<10x32xbf16>, vector<32x32xbf16>, vector<10x32xf32> -> vector<10x32xf32>
    %256 = vector.broadcast %199 : vector<1x32xf32> to vector<10x32xf32>
    %257 = arith.addf %255, %256 : vector<10x32xf32>
    %258 = arith.addf %158, %257 : vector<10x32xf32>
    %259 = vector.extract_strided_slice %162 {offsets = [6, 0], sizes = [1, 32], strides = [1, 1]} : vector<8x96xf32> to vector<1x32xf32>
    %260 = vector.extract_strided_slice %162 {offsets = [7, 0], sizes = [1, 32], strides = [1, 1]} : vector<8x96xf32> to vector<1x32xf32>
    %cst_55 = arith.constant dense<0.000000e+00> : vector<10xf32>
    %261 = vector.multi_reduction <add>, %258, %cst_55 [1] : vector<10x32xf32> to vector<10xf32>
    %262 = vector.shape_cast %261 : vector<10xf32> to vector<10x1xf32>
    %cst_56 = arith.constant 3.200000e+01 : f32
    %263 = vector.broadcast %cst_56 : f32 to vector<10x1xf32>
    %264 = arith.divf %262, %263 : vector<10x1xf32>
    %265 = vector.broadcast %264 : vector<10x1xf32> to vector<10x32xf32>
    %266 = arith.subf %258, %265 : vector<10x32xf32>
    %267 = vector.broadcast %264 : vector<10x1xf32> to vector<10x32xf32>
    %268 = arith.subf %258, %267 : vector<10x32xf32>
    %269 = arith.mulf %266, %268 : vector<10x32xf32>
    %cst_57 = arith.constant dense<0.000000e+00> : vector<10xf32>
    %270 = vector.multi_reduction <add>, %269, %cst_57 [1] : vector<10x32xf32> to vector<10xf32>
    %271 = vector.shape_cast %270 : vector<10xf32> to vector<10x1xf32>
    %cst_58 = arith.constant 3.200000e+01 : f32
    %272 = vector.broadcast %cst_58 : f32 to vector<10x1xf32>
    %273 = arith.divf %271, %272 : vector<10x1xf32>
    %274 = vector.broadcast %264 : vector<10x1xf32> to vector<10x32xf32>
    %275 = arith.subf %258, %274 : vector<10x32xf32>
    %cst_59 = arith.constant 9.99999974E-6 : f32
    %276 = vector.broadcast %cst_59 : f32 to vector<10x1xf32>
    %277 = arith.addf %273, %276 : vector<10x1xf32>
    %278 = math.rsqrt %277 : vector<10x1xf32>
    %279 = vector.broadcast %278 : vector<10x1xf32> to vector<10x32xf32>
    %280 = arith.mulf %275, %279 : vector<10x32xf32>
    %281 = vector.broadcast %259 : vector<1x32xf32> to vector<10x32xf32>
    %282 = arith.mulf %280, %281 : vector<10x32xf32>
    %283 = vector.broadcast %260 : vector<1x32xf32> to vector<10x32xf32>
    %284 = arith.addf %282, %283 : vector<10x32xf32>
    %285 = vector.extract_strided_slice %160 {offsets = [0, 128], sizes = [32, 64], strides = [1, 1]} : vector<32x192xbf16> to vector<32x64xbf16>
    %286 = vector.extract_strided_slice %162 {offsets = [2, 0], sizes = [1, 64], strides = [1, 1]} : vector<8x96xf32> to vector<1x64xf32>
    %c1_60 = arith.constant 1 : index
    %c0_61 = arith.constant 0 : index
    %c0_62 = arith.constant 0 : index
    %287 = vector.load %arg7[%c1_60, %c0_61, %c0_62] : memref<2x64x32xbf16, #tpu.memory_space<vmem>>, vector<1x64x32xbf16>
    %288 = vector.shape_cast %287 : vector<1x64x32xbf16> to vector<64x32xbf16>
    %289 = vector.extract_strided_slice %162 {offsets = [3, 0], sizes = [1, 32], strides = [1, 1]} : vector<8x96xf32> to vector<1x32xf32>
    %290 = arith.truncf %284 : vector<10x32xf32> to vector<10x32xbf16>
    %cst_63 = arith.constant dense<0.000000e+00> : vector<10x64xf32>
    %291 = tpu.matmul %290, %285, %cst_63 {dimension_numbers = #tpu.dot_dimension_numbers<[1], [0], [0], [1], [0, 0, 1, 1], [], []>} : vector<10x32xbf16>, vector<32x64xbf16>, vector<10x64xf32> -> vector<10x64xf32>
    %292 = vector.broadcast %286 : vector<1x64xf32> to vector<10x64xf32>
    %293 = arith.addf %291, %292 : vector<10x64xf32>
    %cst_64 = arith.constant 5.000000e-01 : f32
    %294 = vector.broadcast %cst_64 : f32 to vector<10x64xf32>
    %295 = arith.mulf %294, %293 : vector<10x64xf32>
    %cst_65 = arith.constant 4.471500e-02 : f32
    %296 = vector.broadcast %cst_65 : f32 to vector<10x64xf32>
    %297 = arith.mulf %296, %293 : vector<10x64xf32>
    %298 = arith.mulf %297, %293 : vector<10x64xf32>
    %299 = arith.mulf %298, %293 : vector<10x64xf32>
    %300 = arith.addf %293, %299 : vector<10x64xf32>
    %cst_66 = arith.constant 0.797884583 : f32
    %301 = vector.broadcast %cst_66 : f32 to vector<10x64xf32>
    %302 = arith.mulf %301, %300 : vector<10x64xf32>
    %303 = math.tanh %302 : vector<10x64xf32>
    %cst_67 = arith.constant 1.000000e+00 : f32
    %304 = vector.broadcast %cst_67 : f32 to vector<10x64xf32>
    %305 = arith.addf %304, %303 : vector<10x64xf32>
    %306 = arith.mulf %295, %305 : vector<10x64xf32>
    %307 = arith.truncf %306 : vector<10x64xf32> to vector<10x64xbf16>
    %cst_68 = arith.constant dense<0.000000e+00> : vector<10x32xf32>
    %308 = tpu.matmul %307, %288, %cst_68 {dimension_numbers = #tpu.dot_dimension_numbers<[1], [0], [0], [1], [0, 0, 1, 1], [], []>} : vector<10x64xbf16>, vector<64x32xbf16>, vector<10x32xf32> -> vector<10x32xf32>
    %309 = vector.broadcast %289 : vector<1x32xf32> to vector<10x32xf32>
    %310 = arith.addf %308, %309 : vector<10x32xf32>
    %311 = arith.addf %258, %310 : vector<10x32xf32>
    %c0_69 = arith.constant 0 : index
    %c0_70 = arith.constant 0 : index
    %312 = vector.load %arg12[%c0_69, %c0_70] : memref<5x128xf32, #tpu.memory_space<vmem>>, vector<5x128xf32>
    %313 = vector.extract_strided_slice %312 {offsets = [0, 0], sizes = [1, 32], strides = [1, 1]} : vector<5x128xf32> to vector<1x32xf32>
    %314 = vector.extract_strided_slice %312 {offsets = [1, 0], sizes = [1, 32], strides = [1, 1]} : vector<5x128xf32> to vector<1x32xf32>
    %cst_71 = arith.constant dense<0.000000e+00> : vector<10xf32>
    %315 = vector.multi_reduction <add>, %311, %cst_71 [1] : vector<10x32xf32> to vector<10xf32>
    %316 = vector.shape_cast %315 : vector<10xf32> to vector<10x1xf32>
    %cst_72 = arith.constant 3.200000e+01 : f32
    %317 = vector.broadcast %cst_72 : f32 to vector<10x1xf32>
    %318 = arith.divf %316, %317 : vector<10x1xf32>
    %319 = vector.broadcast %318 : vector<10x1xf32> to vector<10x32xf32>
    %320 = arith.subf %311, %319 : vector<10x32xf32>
    %321 = vector.broadcast %318 : vector<10x1xf32> to vector<10x32xf32>
    %322 = arith.subf %311, %321 : vector<10x32xf32>
    %323 = arith.mulf %320, %322 : vector<10x32xf32>
    %cst_73 = arith.constant dense<0.000000e+00> : vector<10xf32>
    %324 = vector.multi_reduction <add>, %323, %cst_73 [1] : vector<10x32xf32> to vector<10xf32>
    %325 = vector.shape_cast %324 : vector<10xf32> to vector<10x1xf32>
    %cst_74 = arith.constant 3.200000e+01 : f32
    %326 = vector.broadcast %cst_74 : f32 to vector<10x1xf32>
    %327 = arith.divf %325, %326 : vector<10x1xf32>
    %328 = vector.broadcast %318 : vector<10x1xf32> to vector<10x32xf32>
    %329 = arith.subf %311, %328 : vector<10x32xf32>
    %cst_75 = arith.constant 9.99999974E-6 : f32
    %330 = vector.broadcast %cst_75 : f32 to vector<10x1xf32>
    %331 = arith.addf %327, %330 : vector<10x1xf32>
    %332 = math.rsqrt %331 : vector<10x1xf32>
    %333 = vector.broadcast %332 : vector<10x1xf32> to vector<10x32xf32>
    %334 = arith.mulf %329, %333 : vector<10x32xf32>
    %335 = vector.broadcast %313 : vector<1x32xf32> to vector<10x32xf32>
    %336 = arith.mulf %334, %335 : vector<10x32xf32>
    %337 = vector.broadcast %314 : vector<1x32xf32> to vector<10x32xf32>
    %338 = arith.addf %336, %337 : vector<10x32xf32>
    %c0_76 = arith.constant 0 : index
    %c0_77 = arith.constant 0 : index
    %c0_78 = arith.constant 0 : index
    %339 = vector.load %arg3[%c0_76, %c0_77, %c0_78] : memref<1x8x32xf32, #tpu.memory_space<vmem>>, vector<1x8x32xf32>
    %340 = vector.shape_cast %339 : vector<1x8x32xf32> to vector<8x32xf32>
    %341 = tpu.iota {dimensions = array<i32: 0>} : vector<8x8xi32>
    %342 = tpu.iota {dimensions = array<i32: 1>} : vector<8x8xi32>
    %343 = arith.cmpi sgt, %342, %341 : vector<8x8xi32>
    %cst_79 = arith.constant -1.000000e+09 : f32
    %cst_80 = arith.constant 0.000000e+00 : f32
    %344 = vector.broadcast %cst_79 : f32 to vector<8x8xf32>
    %345 = vector.broadcast %cst_80 : f32 to vector<8x8xf32>
    %346 = arith.select %343, %344, %345 : vector<8x8xi1>, vector<8x8xf32>
    %c0_81 = arith.constant 0 : index
    %c0_82 = arith.constant 0 : index
    %c0_83 = arith.constant 0 : index
    %347 = vector.load %arg4[%c0_81, %c0_82, %c0_83] : memref<1x1x8xf32, #tpu.memory_space<vmem>>, vector<1x1x8xf32>
    %348 = vector.shape_cast %347 : vector<1x1x8xf32> to vector<1x8xf32>
    %cst_84 = arith.constant 1.000000e+00 : f32
    %349 = vector.broadcast %cst_84 : f32 to vector<1x8xf32>
    %350 = arith.subf %349, %348 : vector<1x8xf32>
    %cst_85 = arith.constant -1.000000e+09 : f32
    %351 = vector.broadcast %cst_85 : f32 to vector<1x8xf32>
    %352 = arith.mulf %350, %351 : vector<1x8xf32>
    %353 = vector.broadcast %352 : vector<1x8xf32> to vector<8x8xf32>
    %354 = arith.addf %346, %353 : vector<8x8xf32>
    %c0_86 = arith.constant 0 : index
    %c0_87 = arith.constant 0 : index
    %c0_88 = arith.constant 0 : index
    %355 = vector.load %arg9[%c0_86, %c0_87, %c0_88] : memref<2x32x320xbf16, #tpu.memory_space<vmem>>, vector<1x32x320xbf16>
    %356 = vector.shape_cast %355 : vector<1x32x320xbf16> to vector<32x320xbf16>
    %c0_89 = arith.constant 0 : index
    %c0_90 = arith.constant 0 : index
    %c0_91 = arith.constant 0 : index
    %357 = vector.load %arg11[%c0_89, %c0_90, %c0_91] : memref<2x13x96xf32, #tpu.memory_space<vmem>>, vector<1x13x96xf32>
    %358 = vector.shape_cast %357 : vector<1x13x96xf32> to vector<13x96xf32>
    %359 = vector.extract_strided_slice %358 {offsets = [5, 0], sizes = [1, 32], strides = [1, 1]} : vector<13x96xf32> to vector<1x32xf32>
    %360 = vector.extract_strided_slice %358 {offsets = [6, 0], sizes = [1, 32], strides = [1, 1]} : vector<13x96xf32> to vector<1x32xf32>
    %cst_92 = arith.constant dense<0.000000e+00> : vector<8xf32>
    %361 = vector.multi_reduction <add>, %340, %cst_92 [1] : vector<8x32xf32> to vector<8xf32>
    %362 = vector.shape_cast %361 : vector<8xf32> to vector<8x1xf32>
    %cst_93 = arith.constant 3.200000e+01 : f32
    %363 = vector.broadcast %cst_93 : f32 to vector<8x1xf32>
    %364 = arith.divf %362, %363 : vector<8x1xf32>
    %365 = vector.broadcast %364 : vector<8x1xf32> to vector<8x32xf32>
    %366 = arith.subf %340, %365 : vector<8x32xf32>
    %367 = vector.broadcast %364 : vector<8x1xf32> to vector<8x32xf32>
    %368 = arith.subf %340, %367 : vector<8x32xf32>
    %369 = arith.mulf %366, %368 : vector<8x32xf32>
    %cst_94 = arith.constant dense<0.000000e+00> : vector<8xf32>
    %370 = vector.multi_reduction <add>, %369, %cst_94 [1] : vector<8x32xf32> to vector<8xf32>
    %371 = vector.shape_cast %370 : vector<8xf32> to vector<8x1xf32>
    %cst_95 = arith.constant 3.200000e+01 : f32
    %372 = vector.broadcast %cst_95 : f32 to vector<8x1xf32>
    %373 = arith.divf %371, %372 : vector<8x1xf32>
    %374 = vector.broadcast %364 : vector<8x1xf32> to vector<8x32xf32>
    %375 = arith.subf %340, %374 : vector<8x32xf32>
    %cst_96 = arith.constant 9.99999974E-6 : f32
    %376 = vector.broadcast %cst_96 : f32 to vector<8x1xf32>
    %377 = arith.addf %373, %376 : vector<8x1xf32>
    %378 = math.rsqrt %377 : vector<8x1xf32>
    %379 = vector.broadcast %378 : vector<8x1xf32> to vector<8x32xf32>
    %380 = arith.mulf %375, %379 : vector<8x32xf32>
    %381 = vector.broadcast %359 : vector<1x32xf32> to vector<8x32xf32>
    %382 = arith.mulf %380, %381 : vector<8x32xf32>
    %383 = vector.broadcast %360 : vector<1x32xf32> to vector<8x32xf32>
    %384 = arith.addf %382, %383 : vector<8x32xf32>
    %385 = vector.extract_strided_slice %356 {offsets = [0, 0], sizes = [32, 96], strides = [1, 1]} : vector<32x320xbf16> to vector<32x96xbf16>
    %386 = arith.truncf %384 : vector<8x32xf32> to vector<8x32xbf16>
    %cst_97 = arith.constant dense<0.000000e+00> : vector<8x96xf32>
    %387 = tpu.matmul %386, %385, %cst_97 {dimension_numbers = #tpu.dot_dimension_numbers<[1], [0], [0], [1], [0, 0, 1, 1], [], []>} : vector<8x32xbf16>, vector<32x96xbf16>, vector<8x96xf32> -> vector<8x96xf32>
    %388 = vector.extract_strided_slice %358 {offsets = [0, 0], sizes = [1, 96], strides = [1, 1]} : vector<13x96xf32> to vector<1x96xf32>
    %389 = vector.broadcast %388 : vector<1x96xf32> to vector<8x96xf32>
    %390 = arith.addf %387, %389 : vector<8x96xf32>
    %391 = vector.extract_strided_slice %390 {offsets = [0, 0], sizes = [8, 32], strides = [1, 1]} : vector<8x96xf32> to vector<8x32xf32>
    %392 = vector.extract_strided_slice %390 {offsets = [0, 32], sizes = [8, 32], strides = [1, 1]} : vector<8x96xf32> to vector<8x32xf32>
    %393 = vector.extract_strided_slice %390 {offsets = [0, 64], sizes = [8, 32], strides = [1, 1]} : vector<8x96xf32> to vector<8x32xf32>
    %394 = vector.extract_strided_slice %356 {offsets = [0, 96], sizes = [32, 32], strides = [1, 1]} : vector<32x320xbf16> to vector<32x32xbf16>
    %395 = vector.extract_strided_slice %358 {offsets = [1, 0], sizes = [1, 32], strides = [1, 1]} : vector<13x96xf32> to vector<1x32xf32>
    %396 = vector.extract_strided_slice %391 {offsets = [0, 0], sizes = [8, 8], strides = [1, 1]} : vector<8x32xf32> to vector<8x8xf32>
    %397 = vector.extract_strided_slice %391 {offsets = [0, 8], sizes = [8, 8], strides = [1, 1]} : vector<8x32xf32> to vector<8x8xf32>
    %398 = vector.extract_strided_slice %391 {offsets = [0, 16], sizes = [8, 8], strides = [1, 1]} : vector<8x32xf32> to vector<8x8xf32>
    %399 = vector.extract_strided_slice %391 {offsets = [0, 24], sizes = [8, 8], strides = [1, 1]} : vector<8x32xf32> to vector<8x8xf32>
    %400 = vector.shape_cast %396 : vector<8x8xf32> to vector<1x8x8xf32>
    %401 = vector.shape_cast %397 : vector<8x8xf32> to vector<1x8x8xf32>
    %402 = vector.shape_cast %398 : vector<8x8xf32> to vector<1x8x8xf32>
    %403 = vector.shape_cast %399 : vector<8x8xf32> to vector<1x8x8xf32>
    %404 = tpu.concatenate %400, %401, %402, %403 in 0 : vector<1x8x8xf32>, vector<1x8x8xf32>, vector<1x8x8xf32>, vector<1x8x8xf32> -> vector<4x8x8xf32>
    %405 = vector.extract_strided_slice %392 {offsets = [0, 0], sizes = [8, 8], strides = [1, 1]} : vector<8x32xf32> to vector<8x8xf32>
    %406 = vector.extract_strided_slice %392 {offsets = [0, 8], sizes = [8, 8], strides = [1, 1]} : vector<8x32xf32> to vector<8x8xf32>
    %407 = vector.extract_strided_slice %392 {offsets = [0, 16], sizes = [8, 8], strides = [1, 1]} : vector<8x32xf32> to vector<8x8xf32>
    %408 = vector.extract_strided_slice %392 {offsets = [0, 24], sizes = [8, 8], strides = [1, 1]} : vector<8x32xf32> to vector<8x8xf32>
    %409 = vector.shape_cast %405 : vector<8x8xf32> to vector<1x8x8xf32>
    %410 = vector.shape_cast %406 : vector<8x8xf32> to vector<1x8x8xf32>
    %411 = vector.shape_cast %407 : vector<8x8xf32> to vector<1x8x8xf32>
    %412 = vector.shape_cast %408 : vector<8x8xf32> to vector<1x8x8xf32>
    %413 = tpu.concatenate %409, %410, %411, %412 in 0 : vector<1x8x8xf32>, vector<1x8x8xf32>, vector<1x8x8xf32>, vector<1x8x8xf32> -> vector<4x8x8xf32>
    %414 = vector.extract_strided_slice %393 {offsets = [0, 0], sizes = [8, 8], strides = [1, 1]} : vector<8x32xf32> to vector<8x8xf32>
    %415 = vector.extract_strided_slice %393 {offsets = [0, 8], sizes = [8, 8], strides = [1, 1]} : vector<8x32xf32> to vector<8x8xf32>
    %416 = vector.extract_strided_slice %393 {offsets = [0, 16], sizes = [8, 8], strides = [1, 1]} : vector<8x32xf32> to vector<8x8xf32>
    %417 = vector.extract_strided_slice %393 {offsets = [0, 24], sizes = [8, 8], strides = [1, 1]} : vector<8x32xf32> to vector<8x8xf32>
    %418 = vector.shape_cast %414 : vector<8x8xf32> to vector<1x8x8xf32>
    %419 = vector.shape_cast %415 : vector<8x8xf32> to vector<1x8x8xf32>
    %420 = vector.shape_cast %416 : vector<8x8xf32> to vector<1x8x8xf32>
    %421 = vector.shape_cast %417 : vector<8x8xf32> to vector<1x8x8xf32>
    %422 = tpu.concatenate %418, %419, %420, %421 in 0 : vector<1x8x8xf32>, vector<1x8x8xf32>, vector<1x8x8xf32>, vector<1x8x8xf32> -> vector<4x8x8xf32>
    %423 = arith.truncf %404 : vector<4x8x8xf32> to vector<4x8x8xbf16>
    %424 = arith.truncf %413 : vector<4x8x8xf32> to vector<4x8x8xbf16>
    "tpu.trace_start"() <{level = 10 : i32, message = "hqd,hkd->hqk"}> : () -> ()
    %cst_98 = arith.constant dense<0.000000e+00> : vector<4x8x8xf32>
    %425 = tpu.matmul %423, %424, %cst_98 {dimension_numbers = #tpu.dot_dimension_numbers<[2], [2], [1], [1], [0, 0, 0, 1, 1, 1], [0], [0]>} : vector<4x8x8xbf16>, vector<4x8x8xbf16>, vector<4x8x8xf32> -> vector<4x8x8xf32>
    "tpu.trace_stop"() : () -> ()
    %cst_99 = arith.constant 0.353553385 : f32
    %426 = vector.broadcast %cst_99 : f32 to vector<4x8x8xf32>
    %427 = arith.mulf %425, %426 : vector<4x8x8xf32>
    %428 = vector.shape_cast %354 : vector<8x8xf32> to vector<1x8x8xf32>
    %429 = vector.broadcast %428 : vector<1x8x8xf32> to vector<4x8x8xf32>
    %430 = arith.addf %427, %429 : vector<4x8x8xf32>
    %cst_100 = arith.constant dense<0xFF800000> : vector<4x8xf32>
    %431 = vector.multi_reduction <maximumf>, %430, %cst_100 [2] : vector<4x8x8xf32> to vector<4x8xf32>
    %432 = vector.shape_cast %431 : vector<4x8xf32> to vector<4x8x1xf32>
    %433 = vector.broadcast %432 : vector<4x8x1xf32> to vector<4x8x8xf32>
    %434 = arith.subf %430, %433 : vector<4x8x8xf32>
    %435 = math.exp %434 : vector<4x8x8xf32>
    %cst_101 = arith.constant dense<0.000000e+00> : vector<4x8xf32>
    %436 = vector.multi_reduction <add>, %435, %cst_101 [2] : vector<4x8x8xf32> to vector<4x8xf32>
    %437 = vector.shape_cast %436 : vector<4x8xf32> to vector<4x8x1xf32>
    %438 = arith.truncf %435 : vector<4x8x8xf32> to vector<4x8x8xbf16>
    %439 = arith.truncf %422 : vector<4x8x8xf32> to vector<4x8x8xbf16>
    "tpu.trace_start"() <{level = 10 : i32, message = "hqk,hkd->hqd"}> : () -> ()
    %cst_102 = arith.constant dense<0.000000e+00> : vector<4x8x8xf32>
    %440 = tpu.matmul %438, %439, %cst_102 {dimension_numbers = #tpu.dot_dimension_numbers<[2], [1], [1], [2], [0, 0, 0, 1, 1, 2], [0], [0]>} : vector<4x8x8xbf16>, vector<4x8x8xbf16>, vector<4x8x8xf32> -> vector<4x8x8xf32>
    "tpu.trace_stop"() : () -> ()
    %441 = tpu.reciprocal %437 {approx = true} : vector<4x8x1xf32> -> vector<4x8x1xf32>
    %442 = vector.broadcast %441 : vector<4x8x1xf32> to vector<4x8x8xf32>
    %443 = arith.mulf %440, %442 : vector<4x8x8xf32>
    %444 = vector.extract_strided_slice %443 {offsets = [0, 0, 0], sizes = [1, 8, 8], strides = [1, 1, 1]} : vector<4x8x8xf32> to vector<1x8x8xf32>
    %445 = vector.shape_cast %444 : vector<1x8x8xf32> to vector<8x8xf32>
    %446 = vector.extract_strided_slice %443 {offsets = [1, 0, 0], sizes = [1, 8, 8], strides = [1, 1, 1]} : vector<4x8x8xf32> to vector<1x8x8xf32>
    %447 = vector.shape_cast %446 : vector<1x8x8xf32> to vector<8x8xf32>
    %448 = vector.extract_strided_slice %443 {offsets = [2, 0, 0], sizes = [1, 8, 8], strides = [1, 1, 1]} : vector<4x8x8xf32> to vector<1x8x8xf32>
    %449 = vector.shape_cast %448 : vector<1x8x8xf32> to vector<8x8xf32>
    %450 = vector.extract_strided_slice %443 {offsets = [3, 0, 0], sizes = [1, 8, 8], strides = [1, 1, 1]} : vector<4x8x8xf32> to vector<1x8x8xf32>
    %451 = vector.shape_cast %450 : vector<1x8x8xf32> to vector<8x8xf32>
    %452 = tpu.concatenate %445, %447, %449, %451 in 1 : vector<8x8xf32>, vector<8x8xf32>, vector<8x8xf32>, vector<8x8xf32> -> vector<8x32xf32>
    %453 = arith.truncf %452 : vector<8x32xf32> to vector<8x32xbf16>
    %cst_103 = arith.constant dense<0.000000e+00> : vector<8x32xf32>
    %454 = tpu.matmul %453, %394, %cst_103 {dimension_numbers = #tpu.dot_dimension_numbers<[1], [0], [0], [1], [0, 0, 1, 1], [], []>} : vector<8x32xbf16>, vector<32x32xbf16>, vector<8x32xf32> -> vector<8x32xf32>
    %455 = vector.broadcast %395 : vector<1x32xf32> to vector<8x32xf32>
    %456 = arith.addf %454, %455 : vector<8x32xf32>
    %457 = arith.addf %340, %456 : vector<8x32xf32>
    %458 = vector.extract_strided_slice %358 {offsets = [7, 0], sizes = [1, 32], strides = [1, 1]} : vector<13x96xf32> to vector<1x32xf32>
    %459 = vector.extract_strided_slice %358 {offsets = [8, 0], sizes = [1, 32], strides = [1, 1]} : vector<13x96xf32> to vector<1x32xf32>
    %cst_104 = arith.constant dense<0.000000e+00> : vector<8xf32>
    %460 = vector.multi_reduction <add>, %457, %cst_104 [1] : vector<8x32xf32> to vector<8xf32>
    %461 = vector.shape_cast %460 : vector<8xf32> to vector<8x1xf32>
    %cst_105 = arith.constant 3.200000e+01 : f32
    %462 = vector.broadcast %cst_105 : f32 to vector<8x1xf32>
    %463 = arith.divf %461, %462 : vector<8x1xf32>
    %464 = vector.broadcast %463 : vector<8x1xf32> to vector<8x32xf32>
    %465 = arith.subf %457, %464 : vector<8x32xf32>
    %466 = vector.broadcast %463 : vector<8x1xf32> to vector<8x32xf32>
    %467 = arith.subf %457, %466 : vector<8x32xf32>
    %468 = arith.mulf %465, %467 : vector<8x32xf32>
    %cst_106 = arith.constant dense<0.000000e+00> : vector<8xf32>
    %469 = vector.multi_reduction <add>, %468, %cst_106 [1] : vector<8x32xf32> to vector<8xf32>
    %470 = vector.shape_cast %469 : vector<8xf32> to vector<8x1xf32>
    %cst_107 = arith.constant 3.200000e+01 : f32
    %471 = vector.broadcast %cst_107 : f32 to vector<8x1xf32>
    %472 = arith.divf %470, %471 : vector<8x1xf32>
    %473 = vector.broadcast %463 : vector<8x1xf32> to vector<8x32xf32>
    %474 = arith.subf %457, %473 : vector<8x32xf32>
    %cst_108 = arith.constant 9.99999974E-6 : f32
    %475 = vector.broadcast %cst_108 : f32 to vector<8x1xf32>
    %476 = arith.addf %472, %475 : vector<8x1xf32>
    %477 = math.rsqrt %476 : vector<8x1xf32>
    %478 = vector.broadcast %477 : vector<8x1xf32> to vector<8x32xf32>
    %479 = arith.mulf %474, %478 : vector<8x32xf32>
    %480 = vector.broadcast %458 : vector<1x32xf32> to vector<8x32xf32>
    %481 = arith.mulf %479, %480 : vector<8x32xf32>
    %482 = vector.broadcast %459 : vector<1x32xf32> to vector<8x32xf32>
    %483 = arith.addf %481, %482 : vector<8x32xf32>
    %484 = vector.extract_strided_slice %356 {offsets = [0, 128], sizes = [32, 32], strides = [1, 1]} : vector<32x320xbf16> to vector<32x32xbf16>
    %485 = arith.truncf %483 : vector<8x32xf32> to vector<8x32xbf16>
    %cst_109 = arith.constant dense<0.000000e+00> : vector<8x32xf32>
    %486 = tpu.matmul %485, %484, %cst_109 {dimension_numbers = #tpu.dot_dimension_numbers<[1], [0], [0], [1], [0, 0, 1, 1], [], []>} : vector<8x32xbf16>, vector<32x32xbf16>, vector<8x32xf32> -> vector<8x32xf32>
    %487 = vector.extract_strided_slice %358 {offsets = [2, 0], sizes = [1, 32], strides = [1, 1]} : vector<13x96xf32> to vector<1x32xf32>
    %488 = vector.broadcast %487 : vector<1x32xf32> to vector<8x32xf32>
    %489 = arith.addf %486, %488 : vector<8x32xf32>
    %490 = vector.extract_strided_slice %356 {offsets = [0, 160], sizes = [32, 64], strides = [1, 1]} : vector<32x320xbf16> to vector<32x64xbf16>
    %491 = arith.truncf %338 : vector<10x32xf32> to vector<10x32xbf16>
    %cst_110 = arith.constant dense<0.000000e+00> : vector<10x64xf32>
    %492 = tpu.matmul %491, %490, %cst_110 {dimension_numbers = #tpu.dot_dimension_numbers<[1], [0], [0], [1], [0, 0, 1, 1], [], []>} : vector<10x32xbf16>, vector<32x64xbf16>, vector<10x64xf32> -> vector<10x64xf32>
    %493 = vector.extract_strided_slice %358 {offsets = [3, 0], sizes = [1, 64], strides = [1, 1]} : vector<13x96xf32> to vector<1x64xf32>
    %494 = vector.broadcast %493 : vector<1x64xf32> to vector<10x64xf32>
    %495 = arith.addf %492, %494 : vector<10x64xf32>
    %496 = vector.extract_strided_slice %495 {offsets = [0, 0], sizes = [10, 32], strides = [1, 1]} : vector<10x64xf32> to vector<10x32xf32>
    %497 = vector.extract_strided_slice %495 {offsets = [0, 32], sizes = [10, 32], strides = [1, 1]} : vector<10x64xf32> to vector<10x32xf32>
    %498 = vector.extract_strided_slice %356 {offsets = [0, 224], sizes = [32, 32], strides = [1, 1]} : vector<32x320xbf16> to vector<32x32xbf16>
    %499 = vector.extract_strided_slice %358 {offsets = [4, 0], sizes = [1, 32], strides = [1, 1]} : vector<13x96xf32> to vector<1x32xf32>
    %500 = vector.extract_strided_slice %489 {offsets = [0, 0], sizes = [8, 8], strides = [1, 1]} : vector<8x32xf32> to vector<8x8xf32>
    %501 = vector.extract_strided_slice %489 {offsets = [0, 8], sizes = [8, 8], strides = [1, 1]} : vector<8x32xf32> to vector<8x8xf32>
    %502 = vector.extract_strided_slice %489 {offsets = [0, 16], sizes = [8, 8], strides = [1, 1]} : vector<8x32xf32> to vector<8x8xf32>
    %503 = vector.extract_strided_slice %489 {offsets = [0, 24], sizes = [8, 8], strides = [1, 1]} : vector<8x32xf32> to vector<8x8xf32>
    %504 = vector.shape_cast %500 : vector<8x8xf32> to vector<1x8x8xf32>
    %505 = vector.shape_cast %501 : vector<8x8xf32> to vector<1x8x8xf32>
    %506 = vector.shape_cast %502 : vector<8x8xf32> to vector<1x8x8xf32>
    %507 = vector.shape_cast %503 : vector<8x8xf32> to vector<1x8x8xf32>
    %508 = tpu.concatenate %504, %505, %506, %507 in 0 : vector<1x8x8xf32>, vector<1x8x8xf32>, vector<1x8x8xf32>, vector<1x8x8xf32> -> vector<4x8x8xf32>
    %509 = vector.extract_strided_slice %496 {offsets = [0, 0], sizes = [10, 8], strides = [1, 1]} : vector<10x32xf32> to vector<10x8xf32>
    %510 = vector.extract_strided_slice %496 {offsets = [0, 8], sizes = [10, 8], strides = [1, 1]} : vector<10x32xf32> to vector<10x8xf32>
    %511 = vector.extract_strided_slice %496 {offsets = [0, 16], sizes = [10, 8], strides = [1, 1]} : vector<10x32xf32> to vector<10x8xf32>
    %512 = vector.extract_strided_slice %496 {offsets = [0, 24], sizes = [10, 8], strides = [1, 1]} : vector<10x32xf32> to vector<10x8xf32>
    %513 = vector.shape_cast %509 : vector<10x8xf32> to vector<1x10x8xf32>
    %514 = vector.shape_cast %510 : vector<10x8xf32> to vector<1x10x8xf32>
    %515 = vector.shape_cast %511 : vector<10x8xf32> to vector<1x10x8xf32>
    %516 = vector.shape_cast %512 : vector<10x8xf32> to vector<1x10x8xf32>
    %517 = tpu.concatenate %513, %514, %515, %516 in 0 : vector<1x10x8xf32>, vector<1x10x8xf32>, vector<1x10x8xf32>, vector<1x10x8xf32> -> vector<4x10x8xf32>
    %518 = vector.extract_strided_slice %497 {offsets = [0, 0], sizes = [10, 8], strides = [1, 1]} : vector<10x32xf32> to vector<10x8xf32>
    %519 = vector.extract_strided_slice %497 {offsets = [0, 8], sizes = [10, 8], strides = [1, 1]} : vector<10x32xf32> to vector<10x8xf32>
    %520 = vector.extract_strided_slice %497 {offsets = [0, 16], sizes = [10, 8], strides = [1, 1]} : vector<10x32xf32> to vector<10x8xf32>
    %521 = vector.extract_strided_slice %497 {offsets = [0, 24], sizes = [10, 8], strides = [1, 1]} : vector<10x32xf32> to vector<10x8xf32>
    %522 = vector.shape_cast %518 : vector<10x8xf32> to vector<1x10x8xf32>
    %523 = vector.shape_cast %519 : vector<10x8xf32> to vector<1x10x8xf32>
    %524 = vector.shape_cast %520 : vector<10x8xf32> to vector<1x10x8xf32>
    %525 = vector.shape_cast %521 : vector<10x8xf32> to vector<1x10x8xf32>
    %526 = tpu.concatenate %522, %523, %524, %525 in 0 : vector<1x10x8xf32>, vector<1x10x8xf32>, vector<1x10x8xf32>, vector<1x10x8xf32> -> vector<4x10x8xf32>
    %527 = arith.truncf %508 : vector<4x8x8xf32> to vector<4x8x8xbf16>
    %528 = arith.truncf %517 : vector<4x10x8xf32> to vector<4x10x8xbf16>
    "tpu.trace_start"() <{level = 10 : i32, message = "hqd,hkd->hqk"}> : () -> ()
    %cst_111 = arith.constant dense<0.000000e+00> : vector<4x8x10xf32>
    %529 = tpu.matmul %527, %528, %cst_111 {dimension_numbers = #tpu.dot_dimension_numbers<[2], [2], [1], [1], [0, 0, 0, 1, 1, 1], [0], [0]>} : vector<4x8x8xbf16>, vector<4x10x8xbf16>, vector<4x8x10xf32> -> vector<4x8x10xf32>
    "tpu.trace_stop"() : () -> ()
    %cst_112 = arith.constant 0.353553385 : f32
    %530 = vector.broadcast %cst_112 : f32 to vector<4x8x10xf32>
    %531 = arith.mulf %529, %530 : vector<4x8x10xf32>
    %cst_113 = arith.constant dense<0xFF800000> : vector<4x8xf32>
    %532 = vector.multi_reduction <maximumf>, %531, %cst_113 [2] : vector<4x8x10xf32> to vector<4x8xf32>
    %533 = vector.shape_cast %532 : vector<4x8xf32> to vector<4x8x1xf32>
    %534 = vector.broadcast %533 : vector<4x8x1xf32> to vector<4x8x10xf32>
    %535 = arith.subf %531, %534 : vector<4x8x10xf32>
    %536 = math.exp %535 : vector<4x8x10xf32>
    %cst_114 = arith.constant dense<0.000000e+00> : vector<4x8xf32>
    %537 = vector.multi_reduction <add>, %536, %cst_114 [2] : vector<4x8x10xf32> to vector<4x8xf32>
    %538 = vector.shape_cast %537 : vector<4x8xf32> to vector<4x8x1xf32>
    %539 = arith.truncf %536 : vector<4x8x10xf32> to vector<4x8x10xbf16>
    %540 = arith.truncf %526 : vector<4x10x8xf32> to vector<4x10x8xbf16>
    "tpu.trace_start"() <{level = 10 : i32, message = "hqk,hkd->hqd"}> : () -> ()
    %cst_115 = arith.constant dense<0.000000e+00> : vector<4x8x8xf32>
    %541 = tpu.matmul %539, %540, %cst_115 {dimension_numbers = #tpu.dot_dimension_numbers<[2], [1], [1], [2], [0, 0, 0, 1, 1, 2], [0], [0]>} : vector<4x8x10xbf16>, vector<4x10x8xbf16>, vector<4x8x8xf32> -> vector<4x8x8xf32>
    "tpu.trace_stop"() : () -> ()
    %542 = tpu.reciprocal %538 {approx = true} : vector<4x8x1xf32> -> vector<4x8x1xf32>
    %543 = vector.broadcast %542 : vector<4x8x1xf32> to vector<4x8x8xf32>
    %544 = arith.mulf %541, %543 : vector<4x8x8xf32>
    %545 = vector.extract_strided_slice %544 {offsets = [0, 0, 0], sizes = [1, 8, 8], strides = [1, 1, 1]} : vector<4x8x8xf32> to vector<1x8x8xf32>
    %546 = vector.shape_cast %545 : vector<1x8x8xf32> to vector<8x8xf32>
    %547 = vector.extract_strided_slice %544 {offsets = [1, 0, 0], sizes = [1, 8, 8], strides = [1, 1, 1]} : vector<4x8x8xf32> to vector<1x8x8xf32>
    %548 = vector.shape_cast %547 : vector<1x8x8xf32> to vector<8x8xf32>
    %549 = vector.extract_strided_slice %544 {offsets = [2, 0, 0], sizes = [1, 8, 8], strides = [1, 1, 1]} : vector<4x8x8xf32> to vector<1x8x8xf32>
    %550 = vector.shape_cast %549 : vector<1x8x8xf32> to vector<8x8xf32>
    %551 = vector.extract_strided_slice %544 {offsets = [3, 0, 0], sizes = [1, 8, 8], strides = [1, 1, 1]} : vector<4x8x8xf32> to vector<1x8x8xf32>
    %552 = vector.shape_cast %551 : vector<1x8x8xf32> to vector<8x8xf32>
    %553 = tpu.concatenate %546, %548, %550, %552 in 1 : vector<8x8xf32>, vector<8x8xf32>, vector<8x8xf32>, vector<8x8xf32> -> vector<8x32xf32>
    %554 = arith.truncf %553 : vector<8x32xf32> to vector<8x32xbf16>
    %cst_116 = arith.constant dense<0.000000e+00> : vector<8x32xf32>
    %555 = tpu.matmul %554, %498, %cst_116 {dimension_numbers = #tpu.dot_dimension_numbers<[1], [0], [0], [1], [0, 0, 1, 1], [], []>} : vector<8x32xbf16>, vector<32x32xbf16>, vector<8x32xf32> -> vector<8x32xf32>
    %556 = vector.broadcast %499 : vector<1x32xf32> to vector<8x32xf32>
    %557 = arith.addf %555, %556 : vector<8x32xf32>
    %558 = arith.addf %457, %557 : vector<8x32xf32>
    %559 = vector.extract_strided_slice %358 {offsets = [9, 0], sizes = [1, 32], strides = [1, 1]} : vector<13x96xf32> to vector<1x32xf32>
    %560 = vector.extract_strided_slice %358 {offsets = [10, 0], sizes = [1, 32], strides = [1, 1]} : vector<13x96xf32> to vector<1x32xf32>
    %cst_117 = arith.constant dense<0.000000e+00> : vector<8xf32>
    %561 = vector.multi_reduction <add>, %558, %cst_117 [1] : vector<8x32xf32> to vector<8xf32>
    %562 = vector.shape_cast %561 : vector<8xf32> to vector<8x1xf32>
    %cst_118 = arith.constant 3.200000e+01 : f32
    %563 = vector.broadcast %cst_118 : f32 to vector<8x1xf32>
    %564 = arith.divf %562, %563 : vector<8x1xf32>
    %565 = vector.broadcast %564 : vector<8x1xf32> to vector<8x32xf32>
    %566 = arith.subf %558, %565 : vector<8x32xf32>
    %567 = vector.broadcast %564 : vector<8x1xf32> to vector<8x32xf32>
    %568 = arith.subf %558, %567 : vector<8x32xf32>
    %569 = arith.mulf %566, %568 : vector<8x32xf32>
    %cst_119 = arith.constant dense<0.000000e+00> : vector<8xf32>
    %570 = vector.multi_reduction <add>, %569, %cst_119 [1] : vector<8x32xf32> to vector<8xf32>
    %571 = vector.shape_cast %570 : vector<8xf32> to vector<8x1xf32>
    %cst_120 = arith.constant 3.200000e+01 : f32
    %572 = vector.broadcast %cst_120 : f32 to vector<8x1xf32>
    %573 = arith.divf %571, %572 : vector<8x1xf32>
    %574 = vector.broadcast %564 : vector<8x1xf32> to vector<8x32xf32>
    %575 = arith.subf %558, %574 : vector<8x32xf32>
    %cst_121 = arith.constant 9.99999974E-6 : f32
    %576 = vector.broadcast %cst_121 : f32 to vector<8x1xf32>
    %577 = arith.addf %573, %576 : vector<8x1xf32>
    %578 = math.rsqrt %577 : vector<8x1xf32>
    %579 = vector.broadcast %578 : vector<8x1xf32> to vector<8x32xf32>
    %580 = arith.mulf %575, %579 : vector<8x32xf32>
    %581 = vector.broadcast %559 : vector<1x32xf32> to vector<8x32xf32>
    %582 = arith.mulf %580, %581 : vector<8x32xf32>
    %583 = vector.broadcast %560 : vector<1x32xf32> to vector<8x32xf32>
    %584 = arith.addf %582, %583 : vector<8x32xf32>
    %585 = vector.extract_strided_slice %356 {offsets = [0, 256], sizes = [32, 64], strides = [1, 1]} : vector<32x320xbf16> to vector<32x64xbf16>
    %586 = vector.extract_strided_slice %358 {offsets = [11, 0], sizes = [1, 64], strides = [1, 1]} : vector<13x96xf32> to vector<1x64xf32>
    %c0_122 = arith.constant 0 : index
    %c0_123 = arith.constant 0 : index
    %c0_124 = arith.constant 0 : index
    %587 = vector.load %arg10[%c0_122, %c0_123, %c0_124] : memref<2x64x32xbf16, #tpu.memory_space<vmem>>, vector<1x64x32xbf16>
    %588 = vector.shape_cast %587 : vector<1x64x32xbf16> to vector<64x32xbf16>
    %589 = vector.extract_strided_slice %358 {offsets = [12, 0], sizes = [1, 32], strides = [1, 1]} : vector<13x96xf32> to vector<1x32xf32>
    %590 = arith.truncf %584 : vector<8x32xf32> to vector<8x32xbf16>
    %cst_125 = arith.constant dense<0.000000e+00> : vector<8x64xf32>
    %591 = tpu.matmul %590, %585, %cst_125 {dimension_numbers = #tpu.dot_dimension_numbers<[1], [0], [0], [1], [0, 0, 1, 1], [], []>} : vector<8x32xbf16>, vector<32x64xbf16>, vector<8x64xf32> -> vector<8x64xf32>
    %592 = vector.broadcast %586 : vector<1x64xf32> to vector<8x64xf32>
    %593 = arith.addf %591, %592 : vector<8x64xf32>
    %cst_126 = arith.constant 5.000000e-01 : f32
    %594 = vector.broadcast %cst_126 : f32 to vector<8x64xf32>
    %595 = arith.mulf %594, %593 : vector<8x64xf32>
    %cst_127 = arith.constant 4.471500e-02 : f32
    %596 = vector.broadcast %cst_127 : f32 to vector<8x64xf32>
    %597 = arith.mulf %596, %593 : vector<8x64xf32>
    %598 = arith.mulf %597, %593 : vector<8x64xf32>
    %599 = arith.mulf %598, %593 : vector<8x64xf32>
    %600 = arith.addf %593, %599 : vector<8x64xf32>
    %cst_128 = arith.constant 0.797884583 : f32
    %601 = vector.broadcast %cst_128 : f32 to vector<8x64xf32>
    %602 = arith.mulf %601, %600 : vector<8x64xf32>
    %603 = math.tanh %602 : vector<8x64xf32>
    %cst_129 = arith.constant 1.000000e+00 : f32
    %604 = vector.broadcast %cst_129 : f32 to vector<8x64xf32>
    %605 = arith.addf %604, %603 : vector<8x64xf32>
    %606 = arith.mulf %595, %605 : vector<8x64xf32>
    %607 = arith.truncf %606 : vector<8x64xf32> to vector<8x64xbf16>
    %cst_130 = arith.constant dense<0.000000e+00> : vector<8x32xf32>
    %608 = tpu.matmul %607, %588, %cst_130 {dimension_numbers = #tpu.dot_dimension_numbers<[1], [0], [0], [1], [0, 0, 1, 1], [], []>} : vector<8x64xbf16>, vector<64x32xbf16>, vector<8x32xf32> -> vector<8x32xf32>
    %609 = vector.broadcast %589 : vector<1x32xf32> to vector<8x32xf32>
    %610 = arith.addf %608, %609 : vector<8x32xf32>
    %611 = arith.addf %558, %610 : vector<8x32xf32>
    %c1_131 = arith.constant 1 : index
    %c0_132 = arith.constant 0 : index
    %c0_133 = arith.constant 0 : index
    %612 = vector.load %arg9[%c1_131, %c0_132, %c0_133] : memref<2x32x320xbf16, #tpu.memory_space<vmem>>, vector<1x32x320xbf16>
    %613 = vector.shape_cast %612 : vector<1x32x320xbf16> to vector<32x320xbf16>
    %c1_134 = arith.constant 1 : index
    %c0_135 = arith.constant 0 : index
    %c0_136 = arith.constant 0 : index
    %614 = vector.load %arg11[%c1_134, %c0_135, %c0_136] : memref<2x13x96xf32, #tpu.memory_space<vmem>>, vector<1x13x96xf32>
    %615 = vector.shape_cast %614 : vector<1x13x96xf32> to vector<13x96xf32>
    %616 = vector.extract_strided_slice %615 {offsets = [5, 0], sizes = [1, 32], strides = [1, 1]} : vector<13x96xf32> to vector<1x32xf32>
    %617 = vector.extract_strided_slice %615 {offsets = [6, 0], sizes = [1, 32], strides = [1, 1]} : vector<13x96xf32> to vector<1x32xf32>
    %cst_137 = arith.constant dense<0.000000e+00> : vector<8xf32>
    %618 = vector.multi_reduction <add>, %611, %cst_137 [1] : vector<8x32xf32> to vector<8xf32>
    %619 = vector.shape_cast %618 : vector<8xf32> to vector<8x1xf32>
    %cst_138 = arith.constant 3.200000e+01 : f32
    %620 = vector.broadcast %cst_138 : f32 to vector<8x1xf32>
    %621 = arith.divf %619, %620 : vector<8x1xf32>
    %622 = vector.broadcast %621 : vector<8x1xf32> to vector<8x32xf32>
    %623 = arith.subf %611, %622 : vector<8x32xf32>
    %624 = vector.broadcast %621 : vector<8x1xf32> to vector<8x32xf32>
    %625 = arith.subf %611, %624 : vector<8x32xf32>
    %626 = arith.mulf %623, %625 : vector<8x32xf32>
    %cst_139 = arith.constant dense<0.000000e+00> : vector<8xf32>
    %627 = vector.multi_reduction <add>, %626, %cst_139 [1] : vector<8x32xf32> to vector<8xf32>
    %628 = vector.shape_cast %627 : vector<8xf32> to vector<8x1xf32>
    %cst_140 = arith.constant 3.200000e+01 : f32
    %629 = vector.broadcast %cst_140 : f32 to vector<8x1xf32>
    %630 = arith.divf %628, %629 : vector<8x1xf32>
    %631 = vector.broadcast %621 : vector<8x1xf32> to vector<8x32xf32>
    %632 = arith.subf %611, %631 : vector<8x32xf32>
    %cst_141 = arith.constant 9.99999974E-6 : f32
    %633 = vector.broadcast %cst_141 : f32 to vector<8x1xf32>
    %634 = arith.addf %630, %633 : vector<8x1xf32>
    %635 = math.rsqrt %634 : vector<8x1xf32>
    %636 = vector.broadcast %635 : vector<8x1xf32> to vector<8x32xf32>
    %637 = arith.mulf %632, %636 : vector<8x32xf32>
    %638 = vector.broadcast %616 : vector<1x32xf32> to vector<8x32xf32>
    %639 = arith.mulf %637, %638 : vector<8x32xf32>
    %640 = vector.broadcast %617 : vector<1x32xf32> to vector<8x32xf32>
    %641 = arith.addf %639, %640 : vector<8x32xf32>
    %642 = vector.extract_strided_slice %613 {offsets = [0, 0], sizes = [32, 96], strides = [1, 1]} : vector<32x320xbf16> to vector<32x96xbf16>
    %643 = arith.truncf %641 : vector<8x32xf32> to vector<8x32xbf16>
    %cst_142 = arith.constant dense<0.000000e+00> : vector<8x96xf32>
    %644 = tpu.matmul %643, %642, %cst_142 {dimension_numbers = #tpu.dot_dimension_numbers<[1], [0], [0], [1], [0, 0, 1, 1], [], []>} : vector<8x32xbf16>, vector<32x96xbf16>, vector<8x96xf32> -> vector<8x96xf32>
    %645 = vector.extract_strided_slice %615 {offsets = [0, 0], sizes = [1, 96], strides = [1, 1]} : vector<13x96xf32> to vector<1x96xf32>
    %646 = vector.broadcast %645 : vector<1x96xf32> to vector<8x96xf32>
    %647 = arith.addf %644, %646 : vector<8x96xf32>
    %648 = vector.extract_strided_slice %647 {offsets = [0, 0], sizes = [8, 32], strides = [1, 1]} : vector<8x96xf32> to vector<8x32xf32>
    %649 = vector.extract_strided_slice %647 {offsets = [0, 32], sizes = [8, 32], strides = [1, 1]} : vector<8x96xf32> to vector<8x32xf32>
    %650 = vector.extract_strided_slice %647 {offsets = [0, 64], sizes = [8, 32], strides = [1, 1]} : vector<8x96xf32> to vector<8x32xf32>
    %651 = vector.extract_strided_slice %613 {offsets = [0, 96], sizes = [32, 32], strides = [1, 1]} : vector<32x320xbf16> to vector<32x32xbf16>
    %652 = vector.extract_strided_slice %615 {offsets = [1, 0], sizes = [1, 32], strides = [1, 1]} : vector<13x96xf32> to vector<1x32xf32>
    %653 = vector.extract_strided_slice %648 {offsets = [0, 0], sizes = [8, 8], strides = [1, 1]} : vector<8x32xf32> to vector<8x8xf32>
    %654 = vector.extract_strided_slice %648 {offsets = [0, 8], sizes = [8, 8], strides = [1, 1]} : vector<8x32xf32> to vector<8x8xf32>
    %655 = vector.extract_strided_slice %648 {offsets = [0, 16], sizes = [8, 8], strides = [1, 1]} : vector<8x32xf32> to vector<8x8xf32>
    %656 = vector.extract_strided_slice %648 {offsets = [0, 24], sizes = [8, 8], strides = [1, 1]} : vector<8x32xf32> to vector<8x8xf32>
    %657 = vector.shape_cast %653 : vector<8x8xf32> to vector<1x8x8xf32>
    %658 = vector.shape_cast %654 : vector<8x8xf32> to vector<1x8x8xf32>
    %659 = vector.shape_cast %655 : vector<8x8xf32> to vector<1x8x8xf32>
    %660 = vector.shape_cast %656 : vector<8x8xf32> to vector<1x8x8xf32>
    %661 = tpu.concatenate %657, %658, %659, %660 in 0 : vector<1x8x8xf32>, vector<1x8x8xf32>, vector<1x8x8xf32>, vector<1x8x8xf32> -> vector<4x8x8xf32>
    %662 = vector.extract_strided_slice %649 {offsets = [0, 0], sizes = [8, 8], strides = [1, 1]} : vector<8x32xf32> to vector<8x8xf32>
    %663 = vector.extract_strided_slice %649 {offsets = [0, 8], sizes = [8, 8], strides = [1, 1]} : vector<8x32xf32> to vector<8x8xf32>
    %664 = vector.extract_strided_slice %649 {offsets = [0, 16], sizes = [8, 8], strides = [1, 1]} : vector<8x32xf32> to vector<8x8xf32>
    %665 = vector.extract_strided_slice %649 {offsets = [0, 24], sizes = [8, 8], strides = [1, 1]} : vector<8x32xf32> to vector<8x8xf32>
    %666 = vector.shape_cast %662 : vector<8x8xf32> to vector<1x8x8xf32>
    %667 = vector.shape_cast %663 : vector<8x8xf32> to vector<1x8x8xf32>
    %668 = vector.shape_cast %664 : vector<8x8xf32> to vector<1x8x8xf32>
    %669 = vector.shape_cast %665 : vector<8x8xf32> to vector<1x8x8xf32>
    %670 = tpu.concatenate %666, %667, %668, %669 in 0 : vector<1x8x8xf32>, vector<1x8x8xf32>, vector<1x8x8xf32>, vector<1x8x8xf32> -> vector<4x8x8xf32>
    %671 = vector.extract_strided_slice %650 {offsets = [0, 0], sizes = [8, 8], strides = [1, 1]} : vector<8x32xf32> to vector<8x8xf32>
    %672 = vector.extract_strided_slice %650 {offsets = [0, 8], sizes = [8, 8], strides = [1, 1]} : vector<8x32xf32> to vector<8x8xf32>
    %673 = vector.extract_strided_slice %650 {offsets = [0, 16], sizes = [8, 8], strides = [1, 1]} : vector<8x32xf32> to vector<8x8xf32>
    %674 = vector.extract_strided_slice %650 {offsets = [0, 24], sizes = [8, 8], strides = [1, 1]} : vector<8x32xf32> to vector<8x8xf32>
    %675 = vector.shape_cast %671 : vector<8x8xf32> to vector<1x8x8xf32>
    %676 = vector.shape_cast %672 : vector<8x8xf32> to vector<1x8x8xf32>
    %677 = vector.shape_cast %673 : vector<8x8xf32> to vector<1x8x8xf32>
    %678 = vector.shape_cast %674 : vector<8x8xf32> to vector<1x8x8xf32>
    %679 = tpu.concatenate %675, %676, %677, %678 in 0 : vector<1x8x8xf32>, vector<1x8x8xf32>, vector<1x8x8xf32>, vector<1x8x8xf32> -> vector<4x8x8xf32>
    %680 = arith.truncf %661 : vector<4x8x8xf32> to vector<4x8x8xbf16>
    %681 = arith.truncf %670 : vector<4x8x8xf32> to vector<4x8x8xbf16>
    "tpu.trace_start"() <{level = 10 : i32, message = "hqd,hkd->hqk"}> : () -> ()
    %cst_143 = arith.constant dense<0.000000e+00> : vector<4x8x8xf32>
    %682 = tpu.matmul %680, %681, %cst_143 {dimension_numbers = #tpu.dot_dimension_numbers<[2], [2], [1], [1], [0, 0, 0, 1, 1, 1], [0], [0]>} : vector<4x8x8xbf16>, vector<4x8x8xbf16>, vector<4x8x8xf32> -> vector<4x8x8xf32>
    "tpu.trace_stop"() : () -> ()
    %cst_144 = arith.constant 0.353553385 : f32
    %683 = vector.broadcast %cst_144 : f32 to vector<4x8x8xf32>
    %684 = arith.mulf %682, %683 : vector<4x8x8xf32>
    %685 = vector.shape_cast %354 : vector<8x8xf32> to vector<1x8x8xf32>
    %686 = vector.broadcast %685 : vector<1x8x8xf32> to vector<4x8x8xf32>
    %687 = arith.addf %684, %686 : vector<4x8x8xf32>
    %cst_145 = arith.constant dense<0xFF800000> : vector<4x8xf32>
    %688 = vector.multi_reduction <maximumf>, %687, %cst_145 [2] : vector<4x8x8xf32> to vector<4x8xf32>
    %689 = vector.shape_cast %688 : vector<4x8xf32> to vector<4x8x1xf32>
    %690 = vector.broadcast %689 : vector<4x8x1xf32> to vector<4x8x8xf32>
    %691 = arith.subf %687, %690 : vector<4x8x8xf32>
    %692 = math.exp %691 : vector<4x8x8xf32>
    %cst_146 = arith.constant dense<0.000000e+00> : vector<4x8xf32>
    %693 = vector.multi_reduction <add>, %692, %cst_146 [2] : vector<4x8x8xf32> to vector<4x8xf32>
    %694 = vector.shape_cast %693 : vector<4x8xf32> to vector<4x8x1xf32>
    %695 = arith.truncf %692 : vector<4x8x8xf32> to vector<4x8x8xbf16>
    %696 = arith.truncf %679 : vector<4x8x8xf32> to vector<4x8x8xbf16>
    "tpu.trace_start"() <{level = 10 : i32, message = "hqk,hkd->hqd"}> : () -> ()
    %cst_147 = arith.constant dense<0.000000e+00> : vector<4x8x8xf32>
    %697 = tpu.matmul %695, %696, %cst_147 {dimension_numbers = #tpu.dot_dimension_numbers<[2], [1], [1], [2], [0, 0, 0, 1, 1, 2], [0], [0]>} : vector<4x8x8xbf16>, vector<4x8x8xbf16>, vector<4x8x8xf32> -> vector<4x8x8xf32>
    "tpu.trace_stop"() : () -> ()
    %698 = tpu.reciprocal %694 {approx = true} : vector<4x8x1xf32> -> vector<4x8x1xf32>
    %699 = vector.broadcast %698 : vector<4x8x1xf32> to vector<4x8x8xf32>
    %700 = arith.mulf %697, %699 : vector<4x8x8xf32>
    %701 = vector.extract_strided_slice %700 {offsets = [0, 0, 0], sizes = [1, 8, 8], strides = [1, 1, 1]} : vector<4x8x8xf32> to vector<1x8x8xf32>
    %702 = vector.shape_cast %701 : vector<1x8x8xf32> to vector<8x8xf32>
    %703 = vector.extract_strided_slice %700 {offsets = [1, 0, 0], sizes = [1, 8, 8], strides = [1, 1, 1]} : vector<4x8x8xf32> to vector<1x8x8xf32>
    %704 = vector.shape_cast %703 : vector<1x8x8xf32> to vector<8x8xf32>
    %705 = vector.extract_strided_slice %700 {offsets = [2, 0, 0], sizes = [1, 8, 8], strides = [1, 1, 1]} : vector<4x8x8xf32> to vector<1x8x8xf32>
    %706 = vector.shape_cast %705 : vector<1x8x8xf32> to vector<8x8xf32>
    %707 = vector.extract_strided_slice %700 {offsets = [3, 0, 0], sizes = [1, 8, 8], strides = [1, 1, 1]} : vector<4x8x8xf32> to vector<1x8x8xf32>
    %708 = vector.shape_cast %707 : vector<1x8x8xf32> to vector<8x8xf32>
    %709 = tpu.concatenate %702, %704, %706, %708 in 1 : vector<8x8xf32>, vector<8x8xf32>, vector<8x8xf32>, vector<8x8xf32> -> vector<8x32xf32>
    %710 = arith.truncf %709 : vector<8x32xf32> to vector<8x32xbf16>
    %cst_148 = arith.constant dense<0.000000e+00> : vector<8x32xf32>
    %711 = tpu.matmul %710, %651, %cst_148 {dimension_numbers = #tpu.dot_dimension_numbers<[1], [0], [0], [1], [0, 0, 1, 1], [], []>} : vector<8x32xbf16>, vector<32x32xbf16>, vector<8x32xf32> -> vector<8x32xf32>
    %712 = vector.broadcast %652 : vector<1x32xf32> to vector<8x32xf32>
    %713 = arith.addf %711, %712 : vector<8x32xf32>
    %714 = arith.addf %611, %713 : vector<8x32xf32>
    %715 = vector.extract_strided_slice %615 {offsets = [7, 0], sizes = [1, 32], strides = [1, 1]} : vector<13x96xf32> to vector<1x32xf32>
    %716 = vector.extract_strided_slice %615 {offsets = [8, 0], sizes = [1, 32], strides = [1, 1]} : vector<13x96xf32> to vector<1x32xf32>
    %cst_149 = arith.constant dense<0.000000e+00> : vector<8xf32>
    %717 = vector.multi_reduction <add>, %714, %cst_149 [1] : vector<8x32xf32> to vector<8xf32>
    %718 = vector.shape_cast %717 : vector<8xf32> to vector<8x1xf32>
    %cst_150 = arith.constant 3.200000e+01 : f32
    %719 = vector.broadcast %cst_150 : f32 to vector<8x1xf32>
    %720 = arith.divf %718, %719 : vector<8x1xf32>
    %721 = vector.broadcast %720 : vector<8x1xf32> to vector<8x32xf32>
    %722 = arith.subf %714, %721 : vector<8x32xf32>
    %723 = vector.broadcast %720 : vector<8x1xf32> to vector<8x32xf32>
    %724 = arith.subf %714, %723 : vector<8x32xf32>
    %725 = arith.mulf %722, %724 : vector<8x32xf32>
    %cst_151 = arith.constant dense<0.000000e+00> : vector<8xf32>
    %726 = vector.multi_reduction <add>, %725, %cst_151 [1] : vector<8x32xf32> to vector<8xf32>
    %727 = vector.shape_cast %726 : vector<8xf32> to vector<8x1xf32>
    %cst_152 = arith.constant 3.200000e+01 : f32
    %728 = vector.broadcast %cst_152 : f32 to vector<8x1xf32>
    %729 = arith.divf %727, %728 : vector<8x1xf32>
    %730 = vector.broadcast %720 : vector<8x1xf32> to vector<8x32xf32>
    %731 = arith.subf %714, %730 : vector<8x32xf32>
    %cst_153 = arith.constant 9.99999974E-6 : f32
    %732 = vector.broadcast %cst_153 : f32 to vector<8x1xf32>
    %733 = arith.addf %729, %732 : vector<8x1xf32>
    %734 = math.rsqrt %733 : vector<8x1xf32>
    %735 = vector.broadcast %734 : vector<8x1xf32> to vector<8x32xf32>
    %736 = arith.mulf %731, %735 : vector<8x32xf32>
    %737 = vector.broadcast %715 : vector<1x32xf32> to vector<8x32xf32>
    %738 = arith.mulf %736, %737 : vector<8x32xf32>
    %739 = vector.broadcast %716 : vector<1x32xf32> to vector<8x32xf32>
    %740 = arith.addf %738, %739 : vector<8x32xf32>
    %741 = vector.extract_strided_slice %613 {offsets = [0, 128], sizes = [32, 32], strides = [1, 1]} : vector<32x320xbf16> to vector<32x32xbf16>
    %742 = arith.truncf %740 : vector<8x32xf32> to vector<8x32xbf16>
    %cst_154 = arith.constant dense<0.000000e+00> : vector<8x32xf32>
    %743 = tpu.matmul %742, %741, %cst_154 {dimension_numbers = #tpu.dot_dimension_numbers<[1], [0], [0], [1], [0, 0, 1, 1], [], []>} : vector<8x32xbf16>, vector<32x32xbf16>, vector<8x32xf32> -> vector<8x32xf32>
    %744 = vector.extract_strided_slice %615 {offsets = [2, 0], sizes = [1, 32], strides = [1, 1]} : vector<13x96xf32> to vector<1x32xf32>
    %745 = vector.broadcast %744 : vector<1x32xf32> to vector<8x32xf32>
    %746 = arith.addf %743, %745 : vector<8x32xf32>
    %747 = vector.extract_strided_slice %613 {offsets = [0, 160], sizes = [32, 64], strides = [1, 1]} : vector<32x320xbf16> to vector<32x64xbf16>
    %748 = arith.truncf %338 : vector<10x32xf32> to vector<10x32xbf16>
    %cst_155 = arith.constant dense<0.000000e+00> : vector<10x64xf32>
    %749 = tpu.matmul %748, %747, %cst_155 {dimension_numbers = #tpu.dot_dimension_numbers<[1], [0], [0], [1], [0, 0, 1, 1], [], []>} : vector<10x32xbf16>, vector<32x64xbf16>, vector<10x64xf32> -> vector<10x64xf32>
    %750 = vector.extract_strided_slice %615 {offsets = [3, 0], sizes = [1, 64], strides = [1, 1]} : vector<13x96xf32> to vector<1x64xf32>
    %751 = vector.broadcast %750 : vector<1x64xf32> to vector<10x64xf32>
    %752 = arith.addf %749, %751 : vector<10x64xf32>
    %753 = vector.extract_strided_slice %752 {offsets = [0, 0], sizes = [10, 32], strides = [1, 1]} : vector<10x64xf32> to vector<10x32xf32>
    %754 = vector.extract_strided_slice %752 {offsets = [0, 32], sizes = [10, 32], strides = [1, 1]} : vector<10x64xf32> to vector<10x32xf32>
    %755 = vector.extract_strided_slice %613 {offsets = [0, 224], sizes = [32, 32], strides = [1, 1]} : vector<32x320xbf16> to vector<32x32xbf16>
    %756 = vector.extract_strided_slice %615 {offsets = [4, 0], sizes = [1, 32], strides = [1, 1]} : vector<13x96xf32> to vector<1x32xf32>
    %757 = vector.extract_strided_slice %746 {offsets = [0, 0], sizes = [8, 8], strides = [1, 1]} : vector<8x32xf32> to vector<8x8xf32>
    %758 = vector.extract_strided_slice %746 {offsets = [0, 8], sizes = [8, 8], strides = [1, 1]} : vector<8x32xf32> to vector<8x8xf32>
    %759 = vector.extract_strided_slice %746 {offsets = [0, 16], sizes = [8, 8], strides = [1, 1]} : vector<8x32xf32> to vector<8x8xf32>
    %760 = vector.extract_strided_slice %746 {offsets = [0, 24], sizes = [8, 8], strides = [1, 1]} : vector<8x32xf32> to vector<8x8xf32>
    %761 = vector.shape_cast %757 : vector<8x8xf32> to vector<1x8x8xf32>
    %762 = vector.shape_cast %758 : vector<8x8xf32> to vector<1x8x8xf32>
    %763 = vector.shape_cast %759 : vector<8x8xf32> to vector<1x8x8xf32>
    %764 = vector.shape_cast %760 : vector<8x8xf32> to vector<1x8x8xf32>
    %765 = tpu.concatenate %761, %762, %763, %764 in 0 : vector<1x8x8xf32>, vector<1x8x8xf32>, vector<1x8x8xf32>, vector<1x8x8xf32> -> vector<4x8x8xf32>
    %766 = vector.extract_strided_slice %753 {offsets = [0, 0], sizes = [10, 8], strides = [1, 1]} : vector<10x32xf32> to vector<10x8xf32>
    %767 = vector.extract_strided_slice %753 {offsets = [0, 8], sizes = [10, 8], strides = [1, 1]} : vector<10x32xf32> to vector<10x8xf32>
    %768 = vector.extract_strided_slice %753 {offsets = [0, 16], sizes = [10, 8], strides = [1, 1]} : vector<10x32xf32> to vector<10x8xf32>
    %769 = vector.extract_strided_slice %753 {offsets = [0, 24], sizes = [10, 8], strides = [1, 1]} : vector<10x32xf32> to vector<10x8xf32>
    %770 = vector.shape_cast %766 : vector<10x8xf32> to vector<1x10x8xf32>
    %771 = vector.shape_cast %767 : vector<10x8xf32> to vector<1x10x8xf32>
    %772 = vector.shape_cast %768 : vector<10x8xf32> to vector<1x10x8xf32>
    %773 = vector.shape_cast %769 : vector<10x8xf32> to vector<1x10x8xf32>
    %774 = tpu.concatenate %770, %771, %772, %773 in 0 : vector<1x10x8xf32>, vector<1x10x8xf32>, vector<1x10x8xf32>, vector<1x10x8xf32> -> vector<4x10x8xf32>
    %775 = vector.extract_strided_slice %754 {offsets = [0, 0], sizes = [10, 8], strides = [1, 1]} : vector<10x32xf32> to vector<10x8xf32>
    %776 = vector.extract_strided_slice %754 {offsets = [0, 8], sizes = [10, 8], strides = [1, 1]} : vector<10x32xf32> to vector<10x8xf32>
    %777 = vector.extract_strided_slice %754 {offsets = [0, 16], sizes = [10, 8], strides = [1, 1]} : vector<10x32xf32> to vector<10x8xf32>
    %778 = vector.extract_strided_slice %754 {offsets = [0, 24], sizes = [10, 8], strides = [1, 1]} : vector<10x32xf32> to vector<10x8xf32>
    %779 = vector.shape_cast %775 : vector<10x8xf32> to vector<1x10x8xf32>
    %780 = vector.shape_cast %776 : vector<10x8xf32> to vector<1x10x8xf32>
    %781 = vector.shape_cast %777 : vector<10x8xf32> to vector<1x10x8xf32>
    %782 = vector.shape_cast %778 : vector<10x8xf32> to vector<1x10x8xf32>
    %783 = tpu.concatenate %779, %780, %781, %782 in 0 : vector<1x10x8xf32>, vector<1x10x8xf32>, vector<1x10x8xf32>, vector<1x10x8xf32> -> vector<4x10x8xf32>
    %784 = arith.truncf %765 : vector<4x8x8xf32> to vector<4x8x8xbf16>
    %785 = arith.truncf %774 : vector<4x10x8xf32> to vector<4x10x8xbf16>
    "tpu.trace_start"() <{level = 10 : i32, message = "hqd,hkd->hqk"}> : () -> ()
    %cst_156 = arith.constant dense<0.000000e+00> : vector<4x8x10xf32>
    %786 = tpu.matmul %784, %785, %cst_156 {dimension_numbers = #tpu.dot_dimension_numbers<[2], [2], [1], [1], [0, 0, 0, 1, 1, 1], [0], [0]>} : vector<4x8x8xbf16>, vector<4x10x8xbf16>, vector<4x8x10xf32> -> vector<4x8x10xf32>
    "tpu.trace_stop"() : () -> ()
    %cst_157 = arith.constant 0.353553385 : f32
    %787 = vector.broadcast %cst_157 : f32 to vector<4x8x10xf32>
    %788 = arith.mulf %786, %787 : vector<4x8x10xf32>
    %cst_158 = arith.constant dense<0xFF800000> : vector<4x8xf32>
    %789 = vector.multi_reduction <maximumf>, %788, %cst_158 [2] : vector<4x8x10xf32> to vector<4x8xf32>
    %790 = vector.shape_cast %789 : vector<4x8xf32> to vector<4x8x1xf32>
    %791 = vector.broadcast %790 : vector<4x8x1xf32> to vector<4x8x10xf32>
    %792 = arith.subf %788, %791 : vector<4x8x10xf32>
    %793 = math.exp %792 : vector<4x8x10xf32>
    %cst_159 = arith.constant dense<0.000000e+00> : vector<4x8xf32>
    %794 = vector.multi_reduction <add>, %793, %cst_159 [2] : vector<4x8x10xf32> to vector<4x8xf32>
    %795 = vector.shape_cast %794 : vector<4x8xf32> to vector<4x8x1xf32>
    %796 = arith.truncf %793 : vector<4x8x10xf32> to vector<4x8x10xbf16>
    %797 = arith.truncf %783 : vector<4x10x8xf32> to vector<4x10x8xbf16>
    "tpu.trace_start"() <{level = 10 : i32, message = "hqk,hkd->hqd"}> : () -> ()
    %cst_160 = arith.constant dense<0.000000e+00> : vector<4x8x8xf32>
    %798 = tpu.matmul %796, %797, %cst_160 {dimension_numbers = #tpu.dot_dimension_numbers<[2], [1], [1], [2], [0, 0, 0, 1, 1, 2], [0], [0]>} : vector<4x8x10xbf16>, vector<4x10x8xbf16>, vector<4x8x8xf32> -> vector<4x8x8xf32>
    "tpu.trace_stop"() : () -> ()
    %799 = tpu.reciprocal %795 {approx = true} : vector<4x8x1xf32> -> vector<4x8x1xf32>
    %800 = vector.broadcast %799 : vector<4x8x1xf32> to vector<4x8x8xf32>
    %801 = arith.mulf %798, %800 : vector<4x8x8xf32>
    %802 = vector.extract_strided_slice %801 {offsets = [0, 0, 0], sizes = [1, 8, 8], strides = [1, 1, 1]} : vector<4x8x8xf32> to vector<1x8x8xf32>
    %803 = vector.shape_cast %802 : vector<1x8x8xf32> to vector<8x8xf32>
    %804 = vector.extract_strided_slice %801 {offsets = [1, 0, 0], sizes = [1, 8, 8], strides = [1, 1, 1]} : vector<4x8x8xf32> to vector<1x8x8xf32>
    %805 = vector.shape_cast %804 : vector<1x8x8xf32> to vector<8x8xf32>
    %806 = vector.extract_strided_slice %801 {offsets = [2, 0, 0], sizes = [1, 8, 8], strides = [1, 1, 1]} : vector<4x8x8xf32> to vector<1x8x8xf32>
    %807 = vector.shape_cast %806 : vector<1x8x8xf32> to vector<8x8xf32>
    %808 = vector.extract_strided_slice %801 {offsets = [3, 0, 0], sizes = [1, 8, 8], strides = [1, 1, 1]} : vector<4x8x8xf32> to vector<1x8x8xf32>
    %809 = vector.shape_cast %808 : vector<1x8x8xf32> to vector<8x8xf32>
    %810 = tpu.concatenate %803, %805, %807, %809 in 1 : vector<8x8xf32>, vector<8x8xf32>, vector<8x8xf32>, vector<8x8xf32> -> vector<8x32xf32>
    %811 = arith.truncf %810 : vector<8x32xf32> to vector<8x32xbf16>
    %cst_161 = arith.constant dense<0.000000e+00> : vector<8x32xf32>
    %812 = tpu.matmul %811, %755, %cst_161 {dimension_numbers = #tpu.dot_dimension_numbers<[1], [0], [0], [1], [0, 0, 1, 1], [], []>} : vector<8x32xbf16>, vector<32x32xbf16>, vector<8x32xf32> -> vector<8x32xf32>
    %813 = vector.broadcast %756 : vector<1x32xf32> to vector<8x32xf32>
    %814 = arith.addf %812, %813 : vector<8x32xf32>
    %815 = arith.addf %714, %814 : vector<8x32xf32>
    %816 = vector.extract_strided_slice %615 {offsets = [9, 0], sizes = [1, 32], strides = [1, 1]} : vector<13x96xf32> to vector<1x32xf32>
    %817 = vector.extract_strided_slice %615 {offsets = [10, 0], sizes = [1, 32], strides = [1, 1]} : vector<13x96xf32> to vector<1x32xf32>
    %cst_162 = arith.constant dense<0.000000e+00> : vector<8xf32>
    %818 = vector.multi_reduction <add>, %815, %cst_162 [1] : vector<8x32xf32> to vector<8xf32>
    %819 = vector.shape_cast %818 : vector<8xf32> to vector<8x1xf32>
    %cst_163 = arith.constant 3.200000e+01 : f32
    %820 = vector.broadcast %cst_163 : f32 to vector<8x1xf32>
    %821 = arith.divf %819, %820 : vector<8x1xf32>
    %822 = vector.broadcast %821 : vector<8x1xf32> to vector<8x32xf32>
    %823 = arith.subf %815, %822 : vector<8x32xf32>
    %824 = vector.broadcast %821 : vector<8x1xf32> to vector<8x32xf32>
    %825 = arith.subf %815, %824 : vector<8x32xf32>
    %826 = arith.mulf %823, %825 : vector<8x32xf32>
    %cst_164 = arith.constant dense<0.000000e+00> : vector<8xf32>
    %827 = vector.multi_reduction <add>, %826, %cst_164 [1] : vector<8x32xf32> to vector<8xf32>
    %828 = vector.shape_cast %827 : vector<8xf32> to vector<8x1xf32>
    %cst_165 = arith.constant 3.200000e+01 : f32
    %829 = vector.broadcast %cst_165 : f32 to vector<8x1xf32>
    %830 = arith.divf %828, %829 : vector<8x1xf32>
    %831 = vector.broadcast %821 : vector<8x1xf32> to vector<8x32xf32>
    %832 = arith.subf %815, %831 : vector<8x32xf32>
    %cst_166 = arith.constant 9.99999974E-6 : f32
    %833 = vector.broadcast %cst_166 : f32 to vector<8x1xf32>
    %834 = arith.addf %830, %833 : vector<8x1xf32>
    %835 = math.rsqrt %834 : vector<8x1xf32>
    %836 = vector.broadcast %835 : vector<8x1xf32> to vector<8x32xf32>
    %837 = arith.mulf %832, %836 : vector<8x32xf32>
    %838 = vector.broadcast %816 : vector<1x32xf32> to vector<8x32xf32>
    %839 = arith.mulf %837, %838 : vector<8x32xf32>
    %840 = vector.broadcast %817 : vector<1x32xf32> to vector<8x32xf32>
    %841 = arith.addf %839, %840 : vector<8x32xf32>
    %842 = vector.extract_strided_slice %613 {offsets = [0, 256], sizes = [32, 64], strides = [1, 1]} : vector<32x320xbf16> to vector<32x64xbf16>
    %843 = vector.extract_strided_slice %615 {offsets = [11, 0], sizes = [1, 64], strides = [1, 1]} : vector<13x96xf32> to vector<1x64xf32>
    %c1_167 = arith.constant 1 : index
    %c0_168 = arith.constant 0 : index
    %c0_169 = arith.constant 0 : index
    %844 = vector.load %arg10[%c1_167, %c0_168, %c0_169] : memref<2x64x32xbf16, #tpu.memory_space<vmem>>, vector<1x64x32xbf16>
    %845 = vector.shape_cast %844 : vector<1x64x32xbf16> to vector<64x32xbf16>
    %846 = vector.extract_strided_slice %615 {offsets = [12, 0], sizes = [1, 32], strides = [1, 1]} : vector<13x96xf32> to vector<1x32xf32>
    %847 = arith.truncf %841 : vector<8x32xf32> to vector<8x32xbf16>
    %cst_170 = arith.constant dense<0.000000e+00> : vector<8x64xf32>
    %848 = tpu.matmul %847, %842, %cst_170 {dimension_numbers = #tpu.dot_dimension_numbers<[1], [0], [0], [1], [0, 0, 1, 1], [], []>} : vector<8x32xbf16>, vector<32x64xbf16>, vector<8x64xf32> -> vector<8x64xf32>
    %849 = vector.broadcast %843 : vector<1x64xf32> to vector<8x64xf32>
    %850 = arith.addf %848, %849 : vector<8x64xf32>
    %cst_171 = arith.constant 5.000000e-01 : f32
    %851 = vector.broadcast %cst_171 : f32 to vector<8x64xf32>
    %852 = arith.mulf %851, %850 : vector<8x64xf32>
    %cst_172 = arith.constant 4.471500e-02 : f32
    %853 = vector.broadcast %cst_172 : f32 to vector<8x64xf32>
    %854 = arith.mulf %853, %850 : vector<8x64xf32>
    %855 = arith.mulf %854, %850 : vector<8x64xf32>
    %856 = arith.mulf %855, %850 : vector<8x64xf32>
    %857 = arith.addf %850, %856 : vector<8x64xf32>
    %cst_173 = arith.constant 0.797884583 : f32
    %858 = vector.broadcast %cst_173 : f32 to vector<8x64xf32>
    %859 = arith.mulf %858, %857 : vector<8x64xf32>
    %860 = math.tanh %859 : vector<8x64xf32>
    %cst_174 = arith.constant 1.000000e+00 : f32
    %861 = vector.broadcast %cst_174 : f32 to vector<8x64xf32>
    %862 = arith.addf %861, %860 : vector<8x64xf32>
    %863 = arith.mulf %852, %862 : vector<8x64xf32>
    %864 = arith.truncf %863 : vector<8x64xf32> to vector<8x64xbf16>
    %cst_175 = arith.constant dense<0.000000e+00> : vector<8x32xf32>
    %865 = tpu.matmul %864, %845, %cst_175 {dimension_numbers = #tpu.dot_dimension_numbers<[1], [0], [0], [1], [0, 0, 1, 1], [], []>} : vector<8x64xbf16>, vector<64x32xbf16>, vector<8x32xf32> -> vector<8x32xf32>
    %866 = vector.broadcast %846 : vector<1x32xf32> to vector<8x32xf32>
    %867 = arith.addf %865, %866 : vector<8x32xf32>
    %868 = arith.addf %815, %867 : vector<8x32xf32>
    %869 = vector.extract_strided_slice %312 {offsets = [2, 0], sizes = [1, 32], strides = [1, 1]} : vector<5x128xf32> to vector<1x32xf32>
    %870 = vector.extract_strided_slice %312 {offsets = [3, 0], sizes = [1, 32], strides = [1, 1]} : vector<5x128xf32> to vector<1x32xf32>
    %cst_176 = arith.constant dense<0.000000e+00> : vector<8xf32>
    %871 = vector.multi_reduction <add>, %868, %cst_176 [1] : vector<8x32xf32> to vector<8xf32>
    %872 = vector.shape_cast %871 : vector<8xf32> to vector<8x1xf32>
    %cst_177 = arith.constant 3.200000e+01 : f32
    %873 = vector.broadcast %cst_177 : f32 to vector<8x1xf32>
    %874 = arith.divf %872, %873 : vector<8x1xf32>
    %875 = vector.broadcast %874 : vector<8x1xf32> to vector<8x32xf32>
    %876 = arith.subf %868, %875 : vector<8x32xf32>
    %877 = vector.broadcast %874 : vector<8x1xf32> to vector<8x32xf32>
    %878 = arith.subf %868, %877 : vector<8x32xf32>
    %879 = arith.mulf %876, %878 : vector<8x32xf32>
    %cst_178 = arith.constant dense<0.000000e+00> : vector<8xf32>
    %880 = vector.multi_reduction <add>, %879, %cst_178 [1] : vector<8x32xf32> to vector<8xf32>
    %881 = vector.shape_cast %880 : vector<8xf32> to vector<8x1xf32>
    %cst_179 = arith.constant 3.200000e+01 : f32
    %882 = vector.broadcast %cst_179 : f32 to vector<8x1xf32>
    %883 = arith.divf %881, %882 : vector<8x1xf32>
    %884 = vector.broadcast %874 : vector<8x1xf32> to vector<8x32xf32>
    %885 = arith.subf %868, %884 : vector<8x32xf32>
    %cst_180 = arith.constant 9.99999974E-6 : f32
    %886 = vector.broadcast %cst_180 : f32 to vector<8x1xf32>
    %887 = arith.addf %883, %886 : vector<8x1xf32>
    %888 = math.rsqrt %887 : vector<8x1xf32>
    %889 = vector.broadcast %888 : vector<8x1xf32> to vector<8x32xf32>
    %890 = arith.mulf %885, %889 : vector<8x32xf32>
    %891 = vector.broadcast %869 : vector<1x32xf32> to vector<8x32xf32>
    %892 = arith.mulf %890, %891 : vector<8x32xf32>
    %893 = vector.broadcast %870 : vector<1x32xf32> to vector<8x32xf32>
    %894 = arith.addf %892, %893 : vector<8x32xf32>
    %c0_181 = arith.constant 0 : index
    %c0_182 = arith.constant 0 : index
    %895 = vector.load %arg13[%c0_181, %c0_182] : memref<32x128xbf16, #tpu.memory_space<vmem>>, vector<32x128xbf16>
    %896 = arith.truncf %894 : vector<8x32xf32> to vector<8x32xbf16>
    %cst_183 = arith.constant dense<0.000000e+00> : vector<8x128xf32>
    %897 = tpu.matmul %896, %895, %cst_183 {dimension_numbers = #tpu.dot_dimension_numbers<[1], [0], [0], [1], [0, 0, 1, 1], [], []>} : vector<8x32xbf16>, vector<32x128xbf16>, vector<8x128xf32> -> vector<8x128xf32>
    %898 = vector.extract_strided_slice %312 {offsets = [4, 0], sizes = [1, 128], strides = [1, 1]} : vector<5x128xf32> to vector<1x128xf32>
    %899 = vector.broadcast %898 : vector<1x128xf32> to vector<8x128xf32>
    %900 = arith.addf %897, %899 : vector<8x128xf32>
    %c0_184 = arith.constant 0 : index
    %c0_185 = arith.constant 0 : index
    %c0_186 = arith.constant 0 : index
    %901 = vector.load %arg14[%c0_184, %c0_185, %c0_186] : memref<1x8x128xf32, #tpu.memory_space<vmem>>, vector<1x8x128xf32>
    %902 = vector.shape_cast %901 : vector<1x8x128xf32> to vector<8x128xf32>
    %903 = vector.shape_cast %900 : vector<8x128xf32> to vector<1x8x128xf32>
    tpu.vector_store %arg14[%c0_184, %c0_185, %c0_186], %903 {strides = array<i32>} : memref<1x8x128xf32, #tpu.memory_space<vmem>>, vector<1x8x128xf32>,
    return
  }
  func.func @transform_0(%arg0: i32) -> (i32, i32, i32) {
    %c0_i32 = arith.constant 0 : i32
    %c0_i32_0 = arith.constant 0 : i32
    %c0_i32_1 = arith.constant 0 : i32
    return %arg0, %c0_i32, %c0_i32_0 : i32, i32, i32
  }
  func.func @transform_1(%arg0: i32) -> (i32, i32) {
    %c0_i32 = arith.constant 0 : i32
    %c0_i32_0 = arith.constant 0 : i32
    %c0_i32_1 = arith.constant 0 : i32
    return %c0_i32, %c0_i32_0 : i32, i32
  }
  func.func @transform_2(%arg0: i32) -> (i32, i32, i32) {
    %c0_i32 = arith.constant 0 : i32
    %c0_i32_0 = arith.constant 0 : i32
    %c0_i32_1 = arith.constant 0 : i32
    return %arg0, %c0_i32, %c0_i32_0 : i32, i32, i32
  }
  func.func @transform_3(%arg0: i32) -> (i32, i32, i32) {
    %c0_i32 = arith.constant 0 : i32
    %c0_i32_0 = arith.constant 0 : i32
    %c0_i32_1 = arith.constant 0 : i32
    return %arg0, %c0_i32, %c0_i32_0 : i32, i32, i32
  }
  func.func @transform_4(%arg0: i32) -> (i32, i32) {
    %c0_i32 = arith.constant 0 : i32
    %c0_i32_0 = arith.constant 0 : i32
    %c0_i32_1 = arith.constant 0 : i32
    return %c0_i32, %c0_i32_0 : i32, i32
  }
  func.func @transform_5(%arg0: i32) -> (i32, i32, i32) {
    %c0_i32 = arith.constant 0 : i32
    %c0_i32_0 = arith.constant 0 : i32
    %c0_i32_1 = arith.constant 0 : i32
    %c0_i32_2 = arith.constant 0 : i32
    return %c0_i32, %c0_i32_0, %c0_i32_1 : i32, i32, i32
  }
  func.func @transform_6(%arg0: i32) -> (i32, i32, i32) {
    %c0_i32 = arith.constant 0 : i32
    %c0_i32_0 = arith.constant 0 : i32
    %c0_i32_1 = arith.constant 0 : i32
    %c0_i32_2 = arith.constant 0 : i32
    return %c0_i32, %c0_i32_0, %c0_i32_1 : i32, i32, i32
  }
  func.func @transform_7(%arg0: i32) -> (i32, i32, i32) {
    %c0_i32 = arith.constant 0 : i32
    %c0_i32_0 = arith.constant 0 : i32
    %c0_i32_1 = arith.constant 0 : i32
    %c0_i32_2 = arith.constant 0 : i32
    return %c0_i32, %c0_i32_0, %c0_i32_1 : i32, i32, i32
  }
  func.func @transform_8(%arg0: i32) -> (i32, i32, i32) {
    %c0_i32 = arith.constant 0 : i32
    %c0_i32_0 = arith.constant 0 : i32
    %c0_i32_1 = arith.constant 0 : i32
    %c0_i32_2 = arith.constant 0 : i32
    return %c0_i32, %c0_i32_0, %c0_i32_1 : i32, i32, i32
  }
  func.func @transform_9(%arg0: i32) -> (i32, i32, i32) {
    %c0_i32 = arith.constant 0 : i32
    %c0_i32_0 = arith.constant 0 : i32
    %c0_i32_1 = arith.constant 0 : i32
    %c0_i32_2 = arith.constant 0 : i32
    return %c0_i32, %c0_i32_0, %c0_i32_1 : i32, i32, i32
  }
  func.func @transform_10(%arg0: i32) -> (i32, i32, i32) {
    %c0_i32 = arith.constant 0 : i32
    %c0_i32_0 = arith.constant 0 : i32
    %c0_i32_1 = arith.constant 0 : i32
    %c0_i32_2 = arith.constant 0 : i32
    return %c0_i32, %c0_i32_0, %c0_i32_1 : i32, i32, i32
  }
  func.func @transform_11(%arg0: i32) -> (i32, i32) {
    %c0_i32 = arith.constant 0 : i32
    %c0_i32_0 = arith.constant 0 : i32
    %c0_i32_1 = arith.constant 0 : i32
    return %c0_i32, %c0_i32_0 : i32, i32
  }
  func.func @transform_12(%arg0: i32) -> (i32, i32) {
    %c0_i32 = arith.constant 0 : i32
    %c0_i32_0 = arith.constant 0 : i32
    %c0_i32_1 = arith.constant 0 : i32
    return %c0_i32, %c0_i32_0 : i32, i32
  }
  func.func @transform_13(%arg0: i32) -> (i32, i32, i32) {
    %c0_i32 = arith.constant 0 : i32
    %c0_i32_0 = arith.constant 0 : i32
    %c0_i32_1 = arith.constant 0 : i32
    return %arg0, %c0_i32, %c0_i32_0 : i32, i32, i32
  }
}

</mosaic_0001>

<llo_original>
// kernel: ofa_forward.1
$region0: #{ofa_forward.1}
  #allocation0 [shape = 'u32[]', space=smem, size = 0x4, offset = 0x4, fixed_abs, tag = 'smem constant byte address 0x4 - core index']
  #allocation1 [shape = 'u32[144,128]{1,0:T(1,128)}', space=vmem, size = 0x12000, scoped, tag = 'internal scratch']
  %s0 = inlined_call_operand.vmem [shape: bf16[2,10,192], index: 0, kind: input, shape index: {}]
  %s1 = inlined_call_operand.vmem [shape: f32[10,32], index: 1, kind: input, shape index: {}]
  %s2 = inlined_call_operand.vmem [shape: f32[2,8,32], index: 2, kind: input, shape index: {}]
  %s3 = inlined_call_operand.vmem [shape: f32[2,1,8], index: 3, kind: input, shape index: {}]
  %s4 = inlined_call_operand.vmem [shape: bf16[192,32], index: 4, kind: input, shape index: {}]
  %s5 = inlined_call_operand.vmem [shape: bf16[2,32,192], index: 5, kind: input, shape index: {}]
  %s6 = inlined_call_operand.vmem [shape: bf16[2,64,32], index: 6, kind: input, shape index: {}]
  %s7 = inlined_call_operand.vmem [shape: f32[2,8,96], index: 7, kind: input, shape index: {}]
  %s8 = inlined_call_operand.vmem [shape: bf16[2,32,320], index: 8, kind: input, shape index: {}]
  %s9 = inlined_call_operand.vmem [shape: bf16[2,64,32], index: 9, kind: input, shape index: {}]
  %s10 = inlined_call_operand.vmem [shape: f32[2,13,96], index: 10, kind: input, shape index: {}]
  %s11 = inlined_call_operand.vmem [shape: f32[5,128], index: 11, kind: input, shape index: {}]
  %s12 = inlined_call_operand.vmem [shape: bf16[32,128], index: 12, kind: input, shape index: {}]
  %s13 = inlined_call_operand.hbm [shape: f32[2,8,128], index: 13, kind: output, shape index: {}]
  %s14 = sld [smem:[#allocation0]]
  $region85: #{ofa_forward.1} parent=0
    _
  %s16 = ssub.s32 1, %s14
  %s17 = scalar_select 0, %s16, %s14
  $region1: #{ofa_forward.1} parent=0
    #allocation2 [shape = 'u8[8192]{0}', space=vmem, size = 0x2000, scoped, tag = 'output window, operand 0']
    #allocation3 [shape = 's32[2]{0}', space=sflag, size = 0x8, scoped, tag = 'scoped memory for ofa_forward.1']
    %18 = vsyncpa [#allocation3], 0
    %s19 = scalar_lea.sflag [#allocation3], 1
    %20 = vsyncpa %s19, 0
    loop: start=0, step=1, limit=4
    $region2: #{ofa_forward.1} parent=1 // loop_pre_header
      _
    $region3: #{ofa_forward.1} parent=1 // loop_header
      %s22 = sphi 0, %s26
      %p23 = scmp.ge.s32.totalorder %s22, 4
      %s32 = sphi 0, %s34
      %s35 = sphi 0, %s32
      %s36 = sphi 0, %s35
      %s52 = sphi 0, %s36
      %s56 = sphi 0, %s56
      %s58 = sphi 0, %s56
      %s59 = sphi 0, %s58
      %s73 = sphi 0, %s59
      %s79 = sphi 0, %s81
      %s82 = sphi 0, %s79
      %s83 = sphi 0, %s82
      %s99 = sphi 0, %s83
      %s105 = sphi 0, %s107
      %s108 = sphi 0, %s105
      %s109 = sphi 0, %s108
      %s125 = sphi 0, %s109
      %s129 = sphi 0, %s129
      %s131 = sphi 0, %s129
      %s132 = sphi 0, %s131
      %s146 = sphi 0, %s132
      %s150 = sphi 0, %s150
      %s152 = sphi 0, %s150
      %s153 = sphi 0, %s152
      %s167 = sphi 0, %s153
      %s171 = sphi 0, %s171
      %s173 = sphi 0, %s171
      %s174 = sphi 0, %s173
      %s188 = sphi 0, %s174
      %s192 = sphi 0, %s192
      %s194 = sphi 0, %s192
      %s195 = sphi 0, %s194
      %s209 = sphi 0, %s195
      %s213 = sphi 0, %s213
      %s215 = sphi 0, %s213
      %s216 = sphi 0, %s215
      %s230 = sphi 0, %s216
      %s234 = sphi 0, %s234
      %s236 = sphi 0, %s234
      %s237 = sphi 0, %s236
      %s251 = sphi 0, %s237
      %s255 = sphi 0, %s255
      %s257 = sphi 0, %s255
      %s258 = sphi 0, %s257
      %s272 = sphi 0, %s258
      %s276 = sphi 0, %s276
      %s278 = sphi 0, %s276
      %s279 = sphi 0, %s278
      %s293 = sphi 0, %s279
      %s297 = sphi 0, %s297
      %s299 = sphi 0, %s297
      %s300 = sphi 0, %s299
      %s314 = sphi 0, %s300
      %s320 = sphi 0, %s322
      %s323 = sphi 0, %s320
      %s324 = sphi 0, %s323
      %s340 = sphi 0, %s324
    $region4: #{ofa_forward.1} parent=1 // loop_header_branch
      %25 = sbr.rel (%p23) target = $region8
    $region5: #{ofa_forward.1} parent=1 // loop_body
      %s27 = ssub.s32 %s22, 1
      %s28 = ssub.s32 %s22, 2
      %s29 = sadd.s32 %s22, 1
      %s30 = ssub.s32 %s22, %s29
      %p31 = scmp.eq.s32.totalorder %s30, 0
      %s33 = sadd.s32 %s32, 1
      %s34 = scalar_select %p31, %s32, %s33
      %p37 = pneg %p31
      %p38 = scmp.eq.s32.totalorder %s22, 1
      %p39 = por %p37, %p38
      %p40 = scmp.ne.s32.totalorder %s32, %s35
      %p41 = scmp.eq.s32.totalorder %s22, 0
      %p42 = por %p40, %p41
      %p43 = scmp.ne.s32.totalorder %s32, %s35
      %p44 = scmp.eq.s32.totalorder %s27, 1
      %p45 = por %p43, %p44
      %p46 = scmp.ne.s32.totalorder %s35, %s36
      %p47 = scmp.eq.s32.totalorder %s27, 0
      %p48 = por %p46, %p47
      %p49 = scmp.ne.s32.totalorder %s35, %s36
      %p50 = scmp.eq.s32.totalorder %s28, 1
      %p51 = por %p49, %p50
      %p53 = scmp.ne.s32.totalorder %s36, %s52
      %p54 = scmp.eq.s32.totalorder %s28, 0
      %p55 = por %p53, %p54
      %s57 = sadd.s32 %s56, 1
      %p60 = scmp.eq.s32.totalorder %s22, 1
      %p61 = scmp.ne.s32.totalorder %s56, %s58
      %p62 = scmp.eq.s32.totalorder %s22, 0
      %p63 = por %p61, %p62
      %p64 = scmp.ne.s32.totalorder %s56, %s58
      %p65 = scmp.eq.s32.totalorder %s27, 1
      %p66 = por %p64, %p65
      %p67 = scmp.ne.s32.totalorder %s58, %s59
      %p68 = scmp.eq.s32.totalorder %s27, 0
      %p69 = por %p67, %p68
      %p70 = scmp.ne.s32.totalorder %s58, %s59
      %p71 = scmp.eq.s32.totalorder %s28, 1
      %p72 = por %p70, %p71
      %p74 = scmp.ne.s32.totalorder %s59, %s73
      %p75 = scmp.eq.s32.totalorder %s28, 0
      %p76 = por %p74, %p75
      %s77 = ssub.s32 %s22, %s29
      %p78 = scmp.eq.s32.totalorder %s77, 0
      %s80 = sadd.s32 %s79, 1
      %s81 = scalar_select %p78, %s79, %s80
      %p84 = pneg %p78
      %p85 = scmp.eq.s32.totalorder %s22, 1
      %p86 = por %p84, %p85
      %p87 = scmp.ne.s32.totalorder %s79, %s82
      %p88 = scmp.eq.s32.totalorder %s22, 0
      %p89 = por %p87, %p88
      %p90 = scmp.ne.s32.totalorder %s79, %s82
      %p91 = scmp.eq.s32.totalorder %s27, 1
      %p92 = por %p90, %p91
      %p93 = scmp.ne.s32.totalorder %s82, %s83
      %p94 = scmp.eq.s32.totalorder %s27, 0
      %p95 = por %p93, %p94
      %p96 = scmp.ne.s32.totalorder %s82, %s83
      %p97 = scmp.eq.s32.totalorder %s28, 1
      %p98 = por %p96, %p97
      %p100 = scmp.ne.s32.totalorder %s83, %s99
      %p101 = scmp.eq.s32.totalorder %s28, 0
      %p102 = por %p100, %p101
      %s103 = ssub.s32 %s22, %s29
      %p104 = scmp.eq.s32.totalorder %s103, 0
      %s106 = sadd.s32 %s105, 1
      %s107 = scalar_select %p104, %s105, %s106
      %p110 = pneg %p104
      %p111 = scmp.eq.s32.totalorder %s22, 1
      %p112 = por %p110, %p111
      %p113 = scmp.ne.s32.totalorder %s105, %s108
      %p114 = scmp.eq.s32.totalorder %s22, 0
      %p115 = por %p113, %p114
      %p116 = scmp.ne.s32.totalorder %s105, %s108
      %p117 = scmp.eq.s32.totalorder %s27, 1
      %p118 = por %p116, %p117
      %p119 = scmp.ne.s32.totalorder %s108, %s109
      %p120 = scmp.eq.s32.totalorder %s27, 0
      %p121 = por %p119, %p120
      %p122 = scmp.ne.s32.totalorder %s108, %s109
      %p123 = scmp.eq.s32.totalorder %s28, 1
      %p124 = por %p122, %p123
      %p126 = scmp.ne.s32.totalorder %s109, %s125
      %p127 = scmp.eq.s32.totalorder %s28, 0
      %p128 = por %p126, %p127
      %s130 = sadd.s32 %s129, 1
      %p133 = scmp.eq.s32.totalorder %s22, 1
      %p134 = scmp.ne.s32.totalorder %s129, %s131
      %p135 = scmp.eq.s32.totalorder %s22, 0
      %p136 = por %p134, %p135
      %p137 = scmp.ne.s32.totalorder %s129, %s131
      %p138 = scmp.eq.s32.totalorder %s27, 1
      %p139 = por %p137, %p138
      %p140 = scmp.ne.s32.totalorder %s131, %s132
      %p141 = scmp.eq.s32.totalorder %s27, 0
      %p142 = por %p140, %p141
      %p143 = scmp.ne.s32.totalorder %s131, %s132
      %p144 = scmp.eq.s32.totalorder %s28, 1
      %p145 = por %p143, %p144
      %p147 = scmp.ne.s32.totalorder %s132, %s146
      %p148 = scmp.eq.s32.totalorder %s28, 0
      %p149 = por %p147, %p148
      %s151 = sadd.s32 %s150, 1
      %p154 = scmp.eq.s32.totalorder %s22, 1
      %p155 = scmp.ne.s32.totalorder %s150, %s152
      %p156 = scmp.eq.s32.totalorder %s22, 0
      %p157 = por %p155, %p156
      %p158 = scmp.ne.s32.totalorder %s150, %s152
      %p159 = scmp.eq.s32.totalorder %s27, 1
      %p160 = por %p158, %p159
      %p161 = scmp.ne.s32.totalorder %s152, %s153
      %p162 = scmp.eq.s32.totalorder %s27, 0
      %p163 = por %p161, %p162
      %p164 = scmp.ne.s32.totalorder %s152, %s153
      %p165 = scmp.eq.s32.totalorder %s28, 1
      %p166 = por %p164, %p165
      %p168 = scmp.ne.s32.totalorder %s153, %s167
      %p169 = scmp.eq.s32.totalorder %s28, 0
      %p170 = por %p168, %p169
      %s172 = sadd.s32 %s171, 1
      %p175 = scmp.eq.s32.totalorder %s22, 1
      %p176 = scmp.ne.s32.totalorder %s171, %s173
      %p177 = scmp.eq.s32.totalorder %s22, 0
      %p178 = por %p176, %p177
      %p179 = scmp.ne.s32.totalorder %s171, %s173
      %p180 = scmp.eq.s32.totalorder %s27, 1
      %p181 = por %p179, %p180
      %p182 = scmp.ne.s32.totalorder %s173, %s174
      %p183 = scmp.eq.s32.totalorder %s27, 0
      %p184 = por %p182, %p183
      %p185 = scmp.ne.s32.totalorder %s173, %s174
      %p186 = scmp.eq.s32.totalorder %s28, 1
      %p187 = por %p185, %p186
      %p189 = scmp.ne.s32.totalorder %s174, %s188
      %p190 = scmp.eq.s32.totalorder %s28, 0
      %p191 = por %p189, %p190
      %s193 = sadd.s32 %s192, 1
      %p196 = scmp.eq.s32.totalorder %s22, 1
      %p197 = scmp.ne.s32.totalorder %s192, %s194
      %p198 = scmp.eq.s32.totalorder %s22, 0
      %p199 = por %p197, %p198
      %p200 = scmp.ne.s32.totalorder %s192, %s194
      %p201 = scmp.eq.s32.totalorder %s27, 1
      %p202 = por %p200, %p201
      %p203 = scmp.ne.s32.totalorder %s194, %s195
      %p204 = scmp.eq.s32.totalorder %s27, 0
      %p205 = por %p203, %p204
      %p206 = scmp.ne.s32.totalorder %s194, %s195
      %p207 = scmp.eq.s32.totalorder %s28, 1
      %p208 = por %p206, %p207
      %p210 = scmp.ne.s32.totalorder %s195, %s209
      %p211 = scmp.eq.s32.totalorder %s28, 0
      %p212 = por %p210, %p211
      %s214 = sadd.s32 %s213, 1
      %p217 = scmp.eq.s32.totalorder %s22, 1
      %p218 = scmp.ne.s32.totalorder %s213, %s215
      %p219 = scmp.eq.s32.totalorder %s22, 0
      %p220 = por %p218, %p219
      %p221 = scmp.ne.s32.totalorder %s213, %s215
      %p222 = scmp.eq.s32.totalorder %s27, 1
      %p223 = por %p221, %p222
      %p224 = scmp.ne.s32.totalorder %s215, %s216
      %p225 = scmp.eq.s32.totalorder %s27, 0
      %p226 = por %p224, %p225
      %p227 = scmp.ne.s32.totalorder %s215, %s216
      %p228 = scmp.eq.s32.totalorder %s28, 1
      %p229 = por %p227, %p228
      %p231 = scmp.ne.s32.totalorder %s216, %s230
      %p232 = scmp.eq.s32.totalorder %s28, 0
      %p233 = por %p231, %p232
      %s235 = sadd.s32 %s234, 1
      %p238 = scmp.eq.s32.totalorder %s22, 1
      %p239 = scmp.ne.s32.totalorder %s234, %s236
      %p240 = scmp.eq.s32.totalorder %s22, 0
      %p241 = por %p239, %p240
      %p242 = scmp.ne.s32.totalorder %s234, %s236
      %p243 = scmp.eq.s32.totalorder %s27, 1
      %p244 = por %p242, %p243
      %p245 = scmp.ne.s32.totalorder %s236, %s237
      %p246 = scmp.eq.s32.totalorder %s27, 0
      %p247 = por %p245, %p246
      %p248 = scmp.ne.s32.totalorder %s236, %s237
      %p249 = scmp.eq.s32.totalorder %s28, 1
      %p250 = por %p248, %p249
      %p252 = scmp.ne.s32.totalorder %s237, %s251
      %p253 = scmp.eq.s32.totalorder %s28, 0
      %p254 = por %p252, %p253
      %s256 = sadd.s32 %s255, 1
      %p259 = scmp.eq.s32.totalorder %s22, 1
      %p260 = scmp.ne.s32.totalorder %s255, %s257
      %p261 = scmp.eq.s32.totalorder %s22, 0
      %p262 = por %p260, %p261
      %p263 = scmp.ne.s32.totalorder %s255, %s257
      %p264 = scmp.eq.s32.totalorder %s27, 1
      %p265 = por %p263, %p264
      %p266 = scmp.ne.s32.totalorder %s257, %s258
      %p267 = scmp.eq.s32.totalorder %s27, 0
      %p268 = por %p266, %p267
      %p269 = scmp.ne.s32.totalorder %s257, %s258
      %p270 = scmp.eq.s32.totalorder %s28, 1
      %p271 = por %p269, %p270
      %p273 = scmp.ne.s32.totalorder %s258, %s272
      %p274 = scmp.eq.s32.totalorder %s28, 0
      %p275 = por %p273, %p274
      %s277 = sadd.s32 %s276, 1
      %p280 = scmp.eq.s32.totalorder %s22, 1
      %p281 = scmp.ne.s32.totalorder %s276, %s278
      %p282 = scmp.eq.s32.totalorder %s22, 0
      %p283 = por %p281, %p282
      %p284 = scmp.ne.s32.totalorder %s276, %s278
      %p285 = scmp.eq.s32.totalorder %s27, 1
      %p286 = por %p284, %p285
      %p287 = scmp.ne.s32.totalorder %s278, %s279
      %p288 = scmp.eq.s32.totalorder %s27, 0
      %p289 = por %p287, %p288
      %p290 = scmp.ne.s32.totalorder %s278, %s279
      %p291 = scmp.eq.s32.totalorder %s28, 1
      %p292 = por %p290, %p291
      %p294 = scmp.ne.s32.totalorder %s279, %s293
      %p295 = scmp.eq.s32.totalorder %s28, 0
      %p296 = por %p294, %p295
      %s298 = sadd.s32 %s297, 1
      %p301 = scmp.eq.s32.totalorder %s22, 1
      %p302 = scmp.ne.s32.totalorder %s297, %s299
      %p303 = scmp.eq.s32.totalorder %s22, 0
      %p304 = por %p302, %p303
      %p305 = scmp.ne.s32.totalorder %s297, %s299
      %p306 = scmp.eq.s32.totalorder %s27, 1
      %p307 = por %p305, %p306
      %p308 = scmp.ne.s32.totalorder %s299, %s300
      %p309 = scmp.eq.s32.totalorder %s27, 0
      %p310 = por %p308, %p309
      %p311 = scmp.ne.s32.totalorder %s299, %s300
      %p312 = scmp.eq.s32.totalorder %s28, 1
      %p313 = por %p311, %p312
      %p315 = scmp.ne.s32.totalorder %s300, %s314
      %p316 = scmp.eq.s32.totalorder %s28, 0
      %p317 = por %p315, %p316
      %s318 = ssub.s32 %s22, %s29
      %p319 = scmp.eq.s32.totalorder %s318, 0
      %s321 = sadd.s32 %s320, 1
      %s322 = scalar_select %p319, %s320, %s321
      %p325 = pneg %p319
      %p326 = scmp.eq.s32.totalorder %s22, 1
      %p327 = por %p325, %p326
      %p328 = scmp.ne.s32.totalorder %s320, %s323
      %p329 = scmp.eq.s32.totalorder %s22, 0
      %p330 = por %p328, %p329
      %p331 = scmp.ne.s32.totalorder %s320, %s323
      %p332 = scmp.eq.s32.totalorder %s27, 1
      %p333 = por %p331, %p332
      %p334 = scmp.ne.s32.totalorder %s323, %s324
      %p335 = scmp.eq.s32.totalorder %s27, 0
      %p336 = por %p334, %p335
      %p337 = scmp.ne.s32.totalorder %s323, %s324
      %p338 = scmp.eq.s32.totalorder %s28, 1
      %p339 = por %p337, %p338
      %p341 = scmp.ne.s32.totalorder %s324, %s340
      %p342 = scmp.eq.s32.totalorder %s28, 0
      %p343 = por %p341, %p342
      %p344 = scmp.le.s32.totalorder 1, %s22
      %p345 = scmp.lt.s32.totalorder %s22, 3
      %p346 = pnand %p344, %p345
      %p347 = pneg %p346
      // Predicated region
      $region9: #{ofa_forward.1} parent=5 // pred_check
        _
      $region10: #{ofa_forward.1} parent=5 // pred_check_branch
        %349 = sbr.rel (%p346) target = $region12
      $region11: #{ofa_forward.1} parent=5 // pred_region
        %s350 = ssub.s32 %s22, 1
        // Predicated region
        $region13: #{ofa_forward.1} parent=11 // pred_check
          %p351 = pneg %p69
        $region14: #{ofa_forward.1} parent=11 // pred_check_branch
          %353 = sbr.rel (%p351) target = $region16
        $region15: #{ofa_forward.1} parent=11 // pred_region
          _
        $region16: #{ofa_forward.1} parent=11 // pred_fallthru
          _
        // Predicated region
        $region17: #{ofa_forward.1} parent=11 // pred_check
          %p354 = pneg %p142
        $region18: #{ofa_forward.1} parent=11 // pred_check_branch
          %356 = sbr.rel (%p354) target = $region20
        $region19: #{ofa_forward.1} parent=11 // pred_region
          _
        $region20: #{ofa_forward.1} parent=11 // pred_fallthru
          _
        // Predicated region
        $region21: #{ofa_forward.1} parent=11 // pred_check
          %p357 = pneg %p163
        $region22: #{ofa_forward.1} parent=11 // pred_check_branch
          %359 = sbr.rel (%p357) target = $region24
        $region23: #{ofa_forward.1} parent=11 // pred_region
          _
        $region24: #{ofa_forward.1} parent=11 // pred_fallthru
          _
        // Predicated region
        $region25: #{ofa_forward.1} parent=11 // pred_check
          %p360 = pneg %p184
        $region26: #{ofa_forward.1} parent=11 // pred_check_branch
          %362 = sbr.rel (%p360) target = $region28
        $region27: #{ofa_forward.1} parent=11 // pred_region
          _
        $region28: #{ofa_forward.1} parent=11 // pred_fallthru
          _
        // Predicated region
        $region29: #{ofa_forward.1} parent=11 // pred_check
          %p363 = pneg %p205
        $region30: #{ofa_forward.1} parent=11 // pred_check_branch
          %365 = sbr.rel (%p363) target = $region32
        $region31: #{ofa_forward.1} parent=11 // pred_region
          _
        $region32: #{ofa_forward.1} parent=11 // pred_fallthru
          _
        // Predicated region
        $region33: #{ofa_forward.1} parent=11 // pred_check
          %p366 = pneg %p226
        $region34: #{ofa_forward.1} parent=11 // pred_check_branch
          %368 = sbr.rel (%p366) target = $region36
        $region35: #{ofa_forward.1} parent=11 // pred_region
          _
        $region36: #{ofa_forward.1} parent=11 // pred_fallthru
          _
        // Predicated region
        $region37: #{ofa_forward.1} parent=11 // pred_check
          %p369 = pneg %p247
        $region38: #{ofa_forward.1} parent=11 // pred_check_branch
          %371 = sbr.rel (%p369) target = $region40
        $region39: #{ofa_forward.1} parent=11 // pred_region
          _
        $region40: #{ofa_forward.1} parent=11 // pred_fallthru
          _
        // Predicated region
        $region41: #{ofa_forward.1} parent=11 // pred_check
          %p372 = pneg %p268
        $region42: #{ofa_forward.1} parent=11 // pred_check_branch
          %374 = sbr.rel (%p372) target = $region44
        $region43: #{ofa_forward.1} parent=11 // pred_region
          _
        $region44: #{ofa_forward.1} parent=11 // pred_fallthru
          _
        // Predicated region
        $region45: #{ofa_forward.1} parent=11 // pred_check
          %p375 = pneg %p289
        $region46: #{ofa_forward.1} parent=11 // pred_check_branch
          %377 = sbr.rel (%p375) target = $region48
        $region47: #{ofa_forward.1} parent=11 // pred_region
          _
        $region48: #{ofa_forward.1} parent=11 // pred_fallthru
          _
        // Predicated region
        $region49: #{ofa_forward.1} parent=11 // pred_check
          %p378 = pneg %p310
        $region50: #{ofa_forward.1} parent=11 // pred_check_branch
          %380 = sbr.rel (%p378) target = $region52
        $region51: #{ofa_forward.1} parent=11 // pred_region
          _
        $region52: #{ofa_forward.1} parent=11 // pred_fallthru
          _
      $region12: #{ofa_forward.1} parent=5 // pred_fallthru
        _
      %p381 = scmp.lt.s32.totalorder %s22, 2
      // Predicated region
      $region53: #{ofa_forward.1} parent=5 // pred_check
        %p382 = pneg %p381
      $region54: #{ofa_forward.1} parent=5 // pred_check_branch
        %384 = sbr.rel (%p382) target = $region56
      $region55: #{ofa_forward.1} parent=5 // pred_region
        // Predicated region
        $region57: #{ofa_forward.1} parent=55 // pred_check
          %p385 = pneg %p42
        $region58: #{ofa_forward.1} parent=55 // pred_check_branch
          %387 = sbr.rel (%p385) target = $region60
        $region59: #{ofa_forward.1} parent=55 // pred_region
          %p388 = scmp.lt.s32.totalorder %s22, 1
          %s389 = scalar_select %p388, %s22, 1
          %s390 = smul.addr %s389, 4
          %s391 = smul.addr %s390, 4
          %s392 = scalar_lea.vmem %s0, %s391
        $region60: #{ofa_forward.1} parent=55 // pred_fallthru
          _
        // Predicated region
        $region61: #{ofa_forward.1} parent=55 // pred_check
          %p393 = pneg %p89
        $region62: #{ofa_forward.1} parent=55 // pred_check_branch
          %395 = sbr.rel (%p393) target = $region64
        $region63: #{ofa_forward.1} parent=55 // pred_region
          %p396 = scmp.lt.s32.totalorder %s22, 1
          %s397 = scalar_select %p396, %s22, 1
          %s398 = smul.addr %s397, 8
          %s399 = scalar_lea.vmem %s2, %s398
        $region64: #{ofa_forward.1} parent=55 // pred_fallthru
          _
        // Predicated region
        $region65: #{ofa_forward.1} parent=55 // pred_check
          %p400 = pneg %p115
        $region66: #{ofa_forward.1} parent=55 // pred_check_branch
          %402 = sbr.rel (%p400) target = $region68
        $region67: #{ofa_forward.1} parent=55 // pred_region
          %p403 = scmp.lt.s32.totalorder %s22, 1
          %s404 = scalar_select %p403, %s22, 1
          %s405 = scalar_lea.vmem %s3, %s404
        $region68: #{ofa_forward.1} parent=55 // pred_fallthru
          _
      $region56: #{ofa_forward.1} parent=5 // pred_fallthru
        _
      %p406 = scmp.le.s32.totalorder 1, %s22
      %p407 = scmp.lt.s32.totalorder %s22, 3
      %p408 = pnand %p406, %p407
      %p409 = pneg %p408
      // Predicated region
      $region69: #{ofa_forward.1} parent=5 // pred_check
        _
      $region70: #{ofa_forward.1} parent=5 // pred_check_branch
        %411 = sbr.rel (%p408) target = $region72
      $region71: #{ofa_forward.1} parent=5 // pred_region
        %s412 = ssub.s32 %s22, 1
        %p413 = scmp.lt.s32.totalorder %s27, 1
        %s414 = scalar_select %p413, %s27, 1
        %s415 = smul.addr %s414, 4
        %s416 = smul.addr %s415, 4
        %s417 = scalar_lea.vmem %s0, %s416
        %p418 = pneg %p48
        %p419 = pneg %p45
        %p420 = pneg %p69
        %p421 = pneg %p66
        %p422 = scmp.lt.s32.totalorder %s27, 1
        %s423 = scalar_select %p422, %s27, 1
        %s424 = smul.addr %s423, 8
        %s425 = scalar_lea.vmem %s2, %s424
        %p426 = pneg %p95
        %p427 = pneg %p92
        %p428 = scmp.lt.s32.totalorder %s27, 1
        %s429 = scalar_select %p428, %s27, 1
        %s430 = scalar_lea.vmem %s3, %s429
        %p431 = pneg %p121
        %p432 = pneg %p118
        %p433 = pneg %p142
        %p434 = pneg %p139
        %p435 = pneg %p163
        %p436 = pneg %p160
        %p437 = pneg %p184
        %p438 = pneg %p181
        %p439 = pneg %p205
        %p440 = pneg %p202
        %p441 = pneg %p226
        %p442 = pneg %p223
        %p443 = pneg %p247
        %p444 = pneg %p244
        %p445 = pneg %p268
        %p446 = pneg %p265
        %p447 = pneg %p289
        %p448 = pneg %p286
        %p449 = pneg %p310
        %p450 = pneg %p307
        %p451 = pneg %p336
        %p452 = pneg %p333
        %s453 = sand.u32 %s323, 1
        %s454 = scalar_lea.sflag [#allocation3], %s453
        %s455 = sand.u32 %s323, 1
        %s456 = smul.addr %s455, 8
        %s457 = scalar_lea.vmem [#allocation2], %s456
        %p458 = scmp.lt.s32.totalorder %s27, 1
        %s459 = scalar_select %p458, %s27, 1
        %s460 = smul.addr %s459, 4
        %s461 = smul.addr %s460, 4
        %s462 = scalar_lea.vmem %s0, %s461
        %p463 = scmp.lt.s32.totalorder %s27, 1
        %s464 = scalar_select %p463, %s27, 1
        %s465 = smul.addr %s464, 8
        %s466 = scalar_lea.vmem %s2, %s465
        %p467 = scmp.lt.s32.totalorder %s27, 1
        %s468 = scalar_select %p467, %s27, 1
        %s469 = scalar_lea.vmem %s3, %s468
        %v471 = vld [vmem:[%s462] sm:$0xff]
        %v472 = vld [vmem:[%s462 + $0x8] sm:$0x11]
        %v473 = vld [vmem:[%s4] sm:$0xf]
        %v474 = vld [vmem:[%s4 + $0x4] sm:$0xf]
        %v475 = vld [vmem:[%s4 + $0x8] sm:$0xf]
        %v476 = vld [vmem:[%s4 + $0xc] sm:$0xf]
        %v477 = vld [vmem:[%s4 + $0x10] sm:$0xf]
        %v478 = vld [vmem:[%s4 + $0x14] sm:$0xf]
        %v479 = vld [vmem:[%s4 + $0x18] sm:$0xf]
        %v480 = vld [vmem:[%s4 + $0x1c] sm:$0xf]
        %v481 = vld [vmem:[%s4 + $0x20] sm:$0xf]
        %v482 = vld [vmem:[%s4 + $0x24] sm:$0xf]
        %v483 = vld [vmem:[%s4 + $0x28] sm:$0xf]
        %v484 = vld [vmem:[%s4 + $0x2c] sm:$0xf]
        %v485 = vld [vmem:[%s4 + $0x30] sm:$0xf]
        %v486 = vld [vmem:[%s4 + $0x34] sm:$0xf]
        %v487 = vld [vmem:[%s4 + $0x38] sm:$0xf]
        %v488 = vld [vmem:[%s4 + $0x3c] sm:$0xf]
        %v489 = vld [vmem:[%s4 + $0x40] sm:$0xf]
        %v490 = vld [vmem:[%s4 + $0x44] sm:$0xf]
        %v491 = vld [vmem:[%s4 + $0x48] sm:$0xf]
        %v492 = vld [vmem:[%s4 + $0x4c] sm:$0xf]
        %v493 = vld [vmem:[%s4 + $0x50] sm:$0xf]
        %v494 = vld [vmem:[%s4 + $0x54] sm:$0xf]
        %v495 = vld [vmem:[%s4 + $0x58] sm:$0xf]
        %v496 = vld [vmem:[%s4 + $0x5c] sm:$0xf]
        %v497 = vld [vmem:[%s1] sm:$0xff]
        %v498 = vld [vmem:[%s1 + $0x8] sm:$0x3]
        %v501 = vunpack.c.l.b16 %v471
        %v502 = vunpack.c.h.b16 %v471
        %v503 = vunpack.c.l.b16 %v472
        %v504 = vunpack.c.h.b16 %v472
        %v505 = vpack.c.b16 %v503, %v501
        %v506 = vpack.c.b16 %v504, %v502
        %v532 = vunpack.c.l.b16 %v473
        %v533 = vunpack.c.l.b16 %v474
        %v534 = vunpack.c.l.b16 %v475
        %v535 = vunpack.c.l.b16 %v476
        %v536 = vunpack.c.l.b16 %v477
        %v537 = vunpack.c.l.b16 %v478
        %v538 = vunpack.c.l.b16 %v479
        %v539 = vunpack.c.l.b16 %v480
        %v540 = vunpack.c.l.b16 %v481
        %v541 = vunpack.c.l.b16 %v482
        %v542 = vunpack.c.l.b16 %v483
        %v543 = vunpack.c.l.b16 %v484
        %v544 = vunpack.c.l.b16 %v485
        %v545 = vunpack.c.l.b16 %v486
        %v546 = vunpack.c.l.b16 %v487
        %v547 = vunpack.c.l.b16 %v488
        %v548 = vunpack.c.l.b16 %v489
        %v549 = vunpack.c.l.b16 %v490
        %v550 = vunpack.c.l.b16 %v491
        %v551 = vunpack.c.l.b16 %v492
        %v552 = vunpack.c.l.b16 %v493
        %v553 = vunpack.c.l.b16 %v494
        %v554 = vunpack.c.l.b16 %v495
        %v555 = vunpack.c.l.b16 %v496
        %v556 = vpack.c.b16 %v533, %v532
        %v557 = vpack.c.b16 %v535, %v534
        %v558 = vpack.c.b16 %v537, %v536
        %v559 = vpack.c.b16 %v539, %v538
        %v560 = vpack.c.b16 %v541, %v540
        %v561 = vpack.c.b16 %v543, %v542
        %v562 = vpack.c.b16 %v545, %v544
        %v563 = vpack.c.b16 %v547, %v546
        %v564 = vpack.c.b16 %v549, %v548
        %v565 = vpack.c.b16 %v551, %v550
        %v566 = vpack.c.b16 %v553, %v552
        %v567 = vpack.c.b16 %v555, %v554
        %vm580 = vcmask 523264
        %v582 = vsel %vm580, %v506, 0
        %584 = vmatprep.subr.bf16.mxu0 0
        %585 = vmatpush1.bf16.msra.mxu0 %v563
        %586 = vmatprep.subr.bf16.mxu0 0
        %587 = vmatpush1.bf16.msra.mxu0 %v562
        %588 = vmatprep.subr.bf16.mxu0 0
        %589 = vmatpush1.bf16.msra.mxu0 %v561
        %590 = vmatprep.subr.bf16.mxu0 0
        %591 = vmatpush1.bf16.msra.mxu0 %v560
        %592 = vmatprep.subr.bf16.mxu0 0
        %593 = vmatpush1.bf16.msra.mxu0 %v559
        %594 = vmatprep.subr.bf16.mxu0 0
        %595 = vmatpush1.bf16.msra.mxu0 %v558
        %596 = vmatprep.subr.bf16.mxu0 0
        %597 = vmatpush1.bf16.msra.mxu0 %v557
        %598 = vmatprep.subr.bf16.mxu0 0
        %599 = vmatpush1.bf16.msra.mxu0 %v556
        %600 = vmatprep.subr.bf16.mxu0 0
        %601 = vmatpush2.bf16.msra.mxu0 0
        %602 = vmatprep.subr.bf16.mxu0 0
        %603 = vmatpush2.bf16.msra.mxu0 0
        %604 = vmatprep.subr.bf16.mxu0 0
        %605 = vmatpush2.bf16.msra.mxu0 0
        %606 = vmatprep.subr.bf16.mxu0 0
        %607 = vmatpush2.bf16.msra.mxu0 0
        %608 = vmatprep.subr.bf16.mxu0 0
        %609 = vmatpush2.bf16.msra.mxu0 %v567
        %610 = vmatprep.subr.bf16.mxu0 0
        %611 = vmatpush2.bf16.msra.mxu0 %v566
        %612 = vmatprep.subr.bf16.mxu0 0
        %613 = vmatpush2.bf16.msra.mxu0 %v565
        %614 = vmatprep.subr.bf16.mxu0 0
        %615 = vmatpush2.bf16.msra.mxu0 %v564
        %616 = vmatprep.mubr.bf16.mxu0 %v582
        %617 = vmatmul.mubr.bf16.gmra.mxu0 %v505
        %v618 = vpop.f32.mrf.mxu0
        %v619 = vadd.f32 %v497, %v618
        %v620 = vpop.f32.mrf.mxu0
        %v621 = vpop.f32.mrf.mxu0
        %v622 = vadd.f32 %v498, %v621
        %v623 = vpop.f32.mrf.mxu0
        %624 = vdwg.mxu0
        %v625 = vld [vmem:[%s5] sm:$0xff]
        %v626 = vld [vmem:[%s5 + $0x8] sm:$0xff]
        %v627 = vld [vmem:[%s5 + $0x10] sm:$0xff]
        %v628 = vld [vmem:[%s5 + $0x18] sm:$0xff]
        %v629 = vld [vmem:[%s7] sm:$0xff]
        %vm630 = vcmask 261120
        %v631 = vsel %vm630, %v619, 0.0
        %632 = vadd.xlane.f32.xlu0 %v631
        %v633 = vpop.xlane.xlu0 %632
        %vm634 = vcmask 254976
        %v635 = vsel %vm634, %v622, 0.0
        %636 = vadd.xlane.f32.xlu0 %v635
        %v637 = vpop.xlane.xlu0 %636
        %v638 = vrcp.pop 32.0
        %v639 = vmul.f32 %v633, %v638
        %v640 = vmul.f32 %v637, %v638
        %v641 = vsub.f32 %v619, %v639
        %v642 = vsub.f32 %v622, %v640
        %v643 = vmul.f32 %v641, %v641
        %v644 = vmul.f32 %v642, %v642
        %v645 = vsel %vm630, %v643, 0.0
        %646 = vadd.xlane.f32.xlu0 %v645
        %v647 = vpop.xlane.xlu0 %646
        %v648 = vsel %vm634, %v644, 0.0
        %649 = vadd.xlane.f32.xlu0 %v648
        %v650 = vpop.xlane.xlu0 %649
        %v651 = vmul.f32 %v647, %v638
        %v652 = vmul.f32 %v650, %v638
        %v653 = vadd.f32 %v651, 1e-05
        %v654 = vadd.f32 %v652, 1e-05
        %v655 = vrsqrt.pop %v653
        %v656 = vrsqrt.pop %v654
        %v657 = vmul.f32 %v641, %v655
        %v658 = vmul.f32 %v642, %v656
        %v659 = vlaneseq
        %v660 = vshrl.u32 %v659, 7
        %v661 = vsub.s32 4, %v660
        %v662 = vrot.slane %v629, %v661
        %v663 = vmul.f32 %v657, %v662
        %v664 = vmul.f32 %v658, %v662
        %v665 = vlaneseq
        %v666 = vshrl.u32 %v665, 7
        %v667 = vsub.s32 5, %v666
        %v668 = vrot.slane %v629, %v667
        %v669 = vadd.f32 %v663, %v668
        %v670 = vadd.f32 %v664, %v668
        %v671 = vpack.c.bf16 %v670, %v669
        %v672 = vlaneseq
        %v673 = vshrl.u32 %v672, 7
        %v674 = vsub.s32 0, %v673
        %v675 = vrot.slane %v629, %v674
        %v680 = vunpack.c.l.b16 %v625
        %v681 = vunpack.c.l.b16 %v626
        %v682 = vunpack.c.l.b16 %v627
        %v683 = vunpack.c.l.b16 %v628
        %v684 = vpack.c.b16 %v681, %v680
        %v685 = vpack.c.b16 %v683, %v682
        %v689 = vsel %vm630, %v671, 0
        %691 = vmatprep.subr.bf16.mxu0 0
        %692 = vmatpush1.bf16.msra.mxu0 0
        %693 = vmatprep.subr.bf16.mxu0 0
        %694 = vmatpush1.bf16.msra.mxu0 0
        %695 = vmatprep.subr.bf16.mxu0 0
        %696 = vmatpush1.bf16.msra.mxu0 0
        %697 = vmatprep.subr.bf16.mxu0 0
        %698 = vmatpush1.bf16.msra.mxu0 0
        %699 = vmatprep.subr.bf16.mxu0 0
        %700 = vmatpush1.bf16.msra.mxu0 0
        %701 = vmatprep.subr.bf16.mxu0 0
        %702 = vmatpush1.bf16.msra.mxu0 0
        %703 = vmatprep.subr.bf16.mxu0 0
        %704 = vmatpush1.bf16.msra.mxu0 %v685
        %705 = vmatprep.subr.bf16.mxu0 0
        %706 = vmatpush1.bf16.msra.mxu0 %v684
        %707 = vmatprep.subr.bf16.mxu0 0
        %708 = vmatpush2.bf16.msra.mxu0 0
        %709 = vmatprep.subr.bf16.mxu0 0
        %710 = vmatpush2.bf16.msra.mxu0 0
        %711 = vmatprep.subr.bf16.mxu0 0
        %712 = vmatpush2.bf16.msra.mxu0 0
        %713 = vmatprep.subr.bf16.mxu0 0
        %714 = vmatpush2.bf16.msra.mxu0 0
        %715 = vmatprep.subr.bf16.mxu0 0
        %716 = vmatpush2.bf16.msra.mxu0 0
        %717 = vmatprep.subr.bf16.mxu0 0
        %718 = vmatpush2.bf16.msra.mxu0 0
        %719 = vmatprep.subr.bf16.mxu0 0
        %720 = vmatpush2.bf16.msra.mxu0 0
        %721 = vmatprep.subr.bf16.mxu0 0
        %722 = vmatpush2.bf16.msra.mxu0 0
        %723 = vmatprep.mubr.bf16.mxu0 0
        %724 = vmatmul.mubr.bf16.gmra.mxu0 %v689
        %v725 = vpop.f32.mrf.mxu0
        %v726 = vadd.f32 %v675, %v725
        %v727 = vpop.f32.mrf.mxu0
        %v728 = vpop.f32.mrf.mxu0
        %v729 = vadd.f32 %v675, %v728
        %v730 = vpop.f32.mrf.mxu0
        %731 = vdwg.mxu0
        %734 = vrot.lane.b32.xlu0 %v726, 120
        %v735 = vpop.permute.xlu0 %734
        %736 = vrot.lane.b32.xlu0 %v729, 120
        %v737 = vpop.permute.xlu0 %736
        %740 = vrot.lane.b32.xlu0 %v726, 112
        %v741 = vpop.permute.xlu0 %740
        %742 = vrot.lane.b32.xlu0 %v729, 112
        %v743 = vpop.permute.xlu0 %742
        %746 = vrot.lane.b32.xlu0 %v726, 104
        %v747 = vpop.permute.xlu0 %746
        %748 = vrot.lane.b32.xlu0 %v729, 104
        %v749 = vpop.permute.xlu0 %748
        %v752 = vpack.c.bf16 %v729, %v726
        %v753 = vpack.c.bf16 %v737, %v735
        %v754 = vpack.c.bf16 %v743, %v741
        %v755 = vpack.c.bf16 %v749, %v747
        %757 = vrot.lane.b32.xlu0 %v752, 96
        %v758 = vpop.permute.xlu0 %757
        %vm759 = vcmask 64512
        %v761 = vsel %vm759, %v752, 0
        %v764 = vsel %vm759, %v758, 0
        %766 = vmatprep.subr.bf16.mxu0 0
        %767 = vmatpush1.bf16.xpose.msra.mxu0 0
        %768 = vmatprep.subr.bf16.mxu0 0
        %769 = vmatpush1.bf16.xpose.msra.mxu0 0
        %770 = vmatprep.subr.bf16.mxu0 0
        %771 = vmatpush1.bf16.xpose.msra.mxu0 0
        %772 = vmatprep.subr.bf16.mxu0 0
        %773 = vmatpush1.bf16.xpose.msra.mxu0 0
        %774 = vmatprep.subr.bf16.mxu0 0
        %775 = vmatpush1.bf16.xpose.msra.mxu0 0
        %776 = vmatprep.subr.bf16.mxu0 0
        %777 = vmatpush1.bf16.xpose.msra.mxu0 0
        %778 = vmatprep.subr.bf16.mxu0 0
        %779 = vmatpush1.bf16.xpose.msra.mxu0 0
        %780 = vmatprep.subr.bf16.mxu0 0
        %781 = vmatpush1.bf16.xpose.msra.mxu0 %v764
        %782 = vmatprep.subr.bf16.mxu0 0
        %783 = vmatpush2.bf16.xpose.msra.mxu0 0
        %784 = vmatprep.subr.bf16.mxu0 0
        %785 = vmatpush2.bf16.xpose.msra.mxu0 0
        %786 = vmatprep.subr.bf16.mxu0 0
        %787 = vmatpush2.bf16.xpose.msra.mxu0 0
        %788 = vmatprep.subr.bf16.mxu0 0
        %789 = vmatpush2.bf16.xpose.msra.mxu0 0
        %790 = vmatprep.subr.bf16.mxu0 0
        %791 = vmatpush2.bf16.xpose.msra.mxu0 0
        %792 = vmatprep.subr.bf16.mxu0 0
        %793 = vmatpush2.bf16.xpose.msra.mxu0 0
        %794 = vmatprep.subr.bf16.mxu0 0
        %795 = vmatpush2.bf16.xpose.msra.mxu0 0
        %796 = vmatprep.subr.bf16.mxu0 0
        %797 = vmatpush2.bf16.xpose.msra.mxu0 0
        %798 = vmatprep.mubr.bf16.mxu0 0
        %799 = vmatmul.mubr.bf16.gmra.mxu0 %v761
        %v800 = vpop.f32.mrf.mxu0
        %v801 = vadd.f32 0.0, %v800
        %v802 = vpop.f32.mrf.mxu0
        %v803 = vpop.f32.mrf.mxu0
        %v804 = vadd.f32 0.0, %v803
        %v805 = vpop.f32.mrf.mxu0
        %806 = vdwg.mxu0
        %808 = vrot.lane.b32.xlu0 %v753, 96
        %v809 = vpop.permute.xlu0 %808
        %v811 = vsel %vm759, %v753, 0
        %v814 = vsel %vm759, %v809, 0
        %816 = vmatprep.subr.bf16.mxu0 0
        %817 = vmatpush1.bf16.xpose.msra.mxu0 0
        %818 = vmatprep.subr.bf16.mxu0 0
        %819 = vmatpush1.bf16.xpose.msra.mxu0 0
        %820 = vmatprep.subr.bf16.mxu0 0
        %821 = vmatpush1.bf16.xpose.msra.mxu0 0
        %822 = vmatprep.subr.bf16.mxu0 0
        %823 = vmatpush1.bf16.xpose.msra.mxu0 0
        %824 = vmatprep.subr.bf16.mxu0 0
        %825 = vmatpush1.bf16.xpose.msra.mxu0 0
        %826 = vmatprep.subr.bf16.mxu0 0
        %827 = vmatpush1.bf16.xpose.msra.mxu0 0
        %828 = vmatprep.subr.bf16.mxu0 0
        %829 = vmatpush1.bf16.xpose.msra.mxu0 0
        %830 = vmatprep.subr.bf16.mxu0 0
        %831 = vmatpush1.bf16.xpose.msra.mxu0 %v814
        %832 = vmatprep.subr.bf16.mxu0 0
        %833 = vmatpush2.bf16.xpose.msra.mxu0 0
        %834 = vmatprep.subr.bf16.mxu0 0
        %835 = vmatpush2.bf16.xpose.msra.mxu0 0
        %836 = vmatprep.subr.bf16.mxu0 0
        %837 = vmatpush2.bf16.xpose.msra.mxu0 0
        %838 = vmatprep.subr.bf16.mxu0 0
        %839 = vmatpush2.bf16.xpose.msra.mxu0 0
        %840 = vmatprep.subr.bf16.mxu0 0
        %841 = vmatpush2.bf16.xpose.msra.mxu0 0
        %842 = vmatprep.subr.bf16.mxu0 0
        %843 = vmatpush2.bf16.xpose.msra.mxu0 0
        %844 = vmatprep.subr.bf16.mxu0 0
        %845 = vmatpush2.bf16.xpose.msra.mxu0 0
        %846 = vmatprep.subr.bf16.mxu0 0
        %847 = vmatpush2.bf16.xpose.msra.mxu0 0
        %848 = vmatprep.mubr.bf16.mxu0 0
        %849 = vmatmul.mubr.bf16.gmra.mxu0 %v811
        %v850 = vpop.f32.mrf.mxu0
        %v851 = vadd.f32 0.0, %v850
        %v852 = vpop.f32.mrf.mxu0
        %v853 = vpop.f32.mrf.mxu0
        %v854 = vadd.f32 0.0, %v853
        %v855 = vpop.f32.mrf.mxu0
        %856 = vdwg.mxu0
        %858 = vrot.lane.b32.xlu0 %v754, 96
        %v859 = vpop.permute.xlu0 %858
        %v861 = vsel %vm759, %v754, 0
        %v864 = vsel %vm759, %v859, 0
        %866 = vmatprep.subr.bf16.mxu0 0
        %867 = vmatpush1.bf16.xpose.msra.mxu0 0
        %868 = vmatprep.subr.bf16.mxu0 0
        %869 = vmatpush1.bf16.xpose.msra.mxu0 0
        %870 = vmatprep.subr.bf16.mxu0 0
        %871 = vmatpush1.bf16.xpose.msra.mxu0 0
        %872 = vmatprep.subr.bf16.mxu0 0
        %873 = vmatpush1.bf16.xpose.msra.mxu0 0
        %874 = vmatprep.subr.bf16.mxu0 0
        %875 = vmatpush1.bf16.xpose.msra.mxu0 0
        %876 = vmatprep.subr.bf16.mxu0 0
        %877 = vmatpush1.bf16.xpose.msra.mxu0 0
        %878 = vmatprep.subr.bf16.mxu0 0
        %879 = vmatpush1.bf16.xpose.msra.mxu0 0
        %880 = vmatprep.subr.bf16.mxu0 0
        %881 = vmatpush1.bf16.xpose.msra.mxu0 %v864
        %882 = vmatprep.subr.bf16.mxu0 0
        %883 = vmatpush2.bf16.xpose.msra.mxu0 0
        %884 = vmatprep.subr.bf16.mxu0 0
        %885 = vmatpush2.bf16.xpose.msra.mxu0 0
        %886 = vmatprep.subr.bf16.mxu0 0
        %887 = vmatpush2.bf16.xpose.msra.mxu0 0
        %888 = vmatprep.subr.bf16.mxu0 0
        %889 = vmatpush2.bf16.xpose.msra.mxu0 0
        %890 = vmatprep.subr.bf16.mxu0 0
        %891 = vmatpush2.bf16.xpose.msra.mxu0 0
        %892 = vmatprep.subr.bf16.mxu0 0
        %893 = vmatpush2.bf16.xpose.msra.mxu0 0
        %894 = vmatprep.subr.bf16.mxu0 0
        %895 = vmatpush2.bf16.xpose.msra.mxu0 0
        %896 = vmatprep.subr.bf16.mxu0 0
        %897 = vmatpush2.bf16.xpose.msra.mxu0 0
        %898 = vmatprep.mubr.bf16.mxu0 0
        %899 = vmatmul.mubr.bf16.gmra.mxu0 %v861
        %v900 = vpop.f32.mrf.mxu0
        %v901 = vadd.f32 0.0, %v900
        %v902 = vpop.f32.mrf.mxu0
        %v903 = vpop.f32.mrf.mxu0
        %v904 = vadd.f32 0.0, %v903
        %v905 = vpop.f32.mrf.mxu0
        %906 = vdwg.mxu0
        %908 = vrot.lane.b32.xlu0 %v755, 96
        %v909 = vpop.permute.xlu0 %908
        %v911 = vsel %vm759, %v755, 0
        %v914 = vsel %vm759, %v909, 0
        %916 = vmatprep.subr.bf16.mxu0 0
        %917 = vmatpush1.bf16.xpose.msra.mxu0 0
        %918 = vmatprep.subr.bf16.mxu0 0
        %919 = vmatpush1.bf16.xpose.msra.mxu0 0
        %920 = vmatprep.subr.bf16.mxu0 0
        %921 = vmatpush1.bf16.xpose.msra.mxu0 0
        %922 = vmatprep.subr.bf16.mxu0 0
        %923 = vmatpush1.bf16.xpose.msra.mxu0 0
        %924 = vmatprep.subr.bf16.mxu0 0
        %925 = vmatpush1.bf16.xpose.msra.mxu0 0
        %926 = vmatprep.subr.bf16.mxu0 0
        %927 = vmatpush1.bf16.xpose.msra.mxu0 0
        %928 = vmatprep.subr.bf16.mxu0 0
        %929 = vmatpush1.bf16.xpose.msra.mxu0 0
        %930 = vmatprep.subr.bf16.mxu0 0
        %931 = vmatpush1.bf16.xpose.msra.mxu0 %v914
        %932 = vmatprep.subr.bf16.mxu0 0
        %933 = vmatpush2.bf16.xpose.msra.mxu0 0
        %934 = vmatprep.subr.bf16.mxu0 0
        %935 = vmatpush2.bf16.xpose.msra.mxu0 0
        %936 = vmatprep.subr.bf16.mxu0 0
        %937 = vmatpush2.bf16.xpose.msra.mxu0 0
        %938 = vmatprep.subr.bf16.mxu0 0
        %939 = vmatpush2.bf16.xpose.msra.mxu0 0
        %940 = vmatprep.subr.bf16.mxu0 0
        %941 = vmatpush2.bf16.xpose.msra.mxu0 0
        %942 = vmatprep.subr.bf16.mxu0 0
        %943 = vmatpush2.bf16.xpose.msra.mxu0 0
        %944 = vmatprep.subr.bf16.mxu0 0
        %945 = vmatpush2.bf16.xpose.msra.mxu0 0
        %946 = vmatprep.subr.bf16.mxu0 0
        %947 = vmatpush2.bf16.xpose.msra.mxu0 0
        %948 = vmatprep.mubr.bf16.mxu0 0
        %949 = vmatmul.mubr.bf16.gmra.mxu0 %v911
        %v950 = vpop.f32.mrf.mxu0
        %v951 = vadd.f32 0.0, %v950
        %v952 = vpop.f32.mrf.mxu0
        %v953 = vpop.f32.mrf.mxu0
        %v954 = vadd.f32 0.0, %v953
        %v955 = vpop.f32.mrf.mxu0
        %956 = vdwg.mxu0
        %v957 = vmul.f32 %v801, 0.35355338
        %v958 = vmul.f32 %v804, 0.35355338
        %v959 = vmul.f32 %v851, 0.35355338
        %v960 = vmul.f32 %v854, 0.35355338
        %v961 = vmul.f32 %v901, 0.35355338
        %v962 = vmul.f32 %v904, 0.35355338
        %v963 = vmul.f32 %v951, 0.35355338
        %v964 = vmul.f32 %v954, 0.35355338
        %vm965 = vcmask 80896
        %v966 = vsel %vm965, %v957, -inf
        %967 = vmax.xlane.f32.xlu0 %v966
        %v968 = vpop.xlane.xlu0 %967
        %vm969 = vcmask 74752
        %v970 = vsel %vm969, %v958, -inf
        %971 = vmax.xlane.f32.xlu0 %v970
        %v972 = vpop.xlane.xlu0 %971
        %v973 = vsel %vm965, %v959, -inf
        %974 = vmax.xlane.f32.xlu0 %v973
        %v975 = vpop.xlane.xlu0 %974
        %v976 = vsel %vm969, %v960, -inf
        %977 = vmax.xlane.f32.xlu0 %v976
        %v978 = vpop.xlane.xlu0 %977
        %v979 = vsel %vm965, %v961, -inf
        %980 = vmax.xlane.f32.xlu0 %v979
        %v981 = vpop.xlane.xlu0 %980
        %v982 = vsel %vm969, %v962, -inf
        %983 = vmax.xlane.f32.xlu0 %v982
        %v984 = vpop.xlane.xlu0 %983
        %v985 = vsel %vm965, %v963, -inf
        %986 = vmax.xlane.f32.xlu0 %v985
        %v987 = vpop.xlane.xlu0 %986
        %v988 = vsel %vm969, %v964, -inf
        %989 = vmax.xlane.f32.xlu0 %v988
        %v990 = vpop.xlane.xlu0 %989
        %v991 = vsub.f32 %v957, %v968
        %v992 = vsub.f32 %v958, %v972
        %v993 = vsub.f32 %v959, %v975
        %v994 = vsub.f32 %v960, %v978
        %v995 = vsub.f32 %v961, %v981
        %v996 = vsub.f32 %v962, %v984
        %v997 = vsub.f32 %v963, %v987
        %v998 = vsub.f32 %v964, %v990
        %v999 = vmul.f32 %v991, 1.442695
        %v1000 = vpow.pop %v999
        %v1001 = vmul.f32 %v992, 1.442695
        %v1002 = vpow.pop %v1001
        %v1003 = vmul.f32 %v993, 1.442695
        %v1004 = vpow.pop %v1003
        %v1005 = vmul.f32 %v994, 1.442695
        %v1006 = vpow.pop %v1005
        %v1007 = vmul.f32 %v995, 1.442695
        %v1008 = vpow.pop %v1007
        %v1009 = vmul.f32 %v996, 1.442695
        %v1010 = vpow.pop %v1009
        %v1011 = vmul.f32 %v997, 1.442695
        %v1012 = vpow.pop %v1011
        %v1013 = vmul.f32 %v998, 1.442695
        %v1014 = vpow.pop %v1013
        %v1015 = vsel %vm965, %v1000, 0.0
        %1016 = vadd.xlane.f32.xlu0 %v1015
        %v1017 = vpop.xlane.xlu0 %1016
        %v1018 = vsel %vm969, %v1002, 0.0
        %1019 = vadd.xlane.f32.xlu0 %v1018
        %v1020 = vpop.xlane.xlu0 %1019
        %v1021 = vsel %vm965, %v1004, 0.0
        %1022 = vadd.xlane.f32.xlu0 %v1021
        %v1023 = vpop.xlane.xlu0 %1022
        %v1024 = vsel %vm969, %v1006, 0.0
        %1025 = vadd.xlane.f32.xlu0 %v1024
        %v1026 = vpop.xlane.xlu0 %1025
        %v1027 = vsel %vm965, %v1008, 0.0
        %1028 = vadd.xlane.f32.xlu0 %v1027
        %v1029 = vpop.xlane.xlu0 %1028
        %v1030 = vsel %vm969, %v1010, 0.0
        %1031 = vadd.xlane.f32.xlu0 %v1030
        %v1032 = vpop.xlane.xlu0 %1031
        %v1033 = vsel %vm965, %v1012, 0.0
        %1034 = vadd.xlane.f32.xlu0 %v1033
        %v1035 = vpop.xlane.xlu0 %1034
        %v1036 = vsel %vm969, %v1014, 0.0
        %1037 = vadd.xlane.f32.xlu0 %v1036
        %v1038 = vpop.xlane.xlu0 %1037
        %v1039 = vpack.c.bf16 %v1002, %v1000
        %v1040 = vpack.c.bf16 %v1006, %v1004
        %v1041 = vpack.c.bf16 %v1010, %v1008
        %v1042 = vpack.c.bf16 %v1014, %v1012
        %1043 = vrot.lane.b32.xlu0 %v752, 64
        %v1044 = vpop.permute.xlu0 %1043
        %v1046 = vsel %vm965, %v1039, 0
        %vm1048 = vcmask 1044480
        %v1050 = vsel %vm1048, %v1044, 0
        %1052 = vmatprep.subr.bf16.mxu0 0
        %1053 = vmatpush1.bf16.msra.mxu0 0
        %1054 = vmatprep.subr.bf16.mxu0 0
        %1055 = vmatpush1.bf16.msra.mxu0 0
        %1056 = vmatprep.subr.bf16.mxu0 0
        %1057 = vmatpush1.bf16.msra.mxu0 0
        %1058 = vmatprep.subr.bf16.mxu0 0
        %1059 = vmatpush1.bf16.msra.mxu0 0
        %1060 = vmatprep.subr.bf16.mxu0 0
        %1061 = vmatpush1.bf16.msra.mxu0 0
        %1062 = vmatprep.subr.bf16.mxu0 0
        %1063 = vmatpush1.bf16.msra.mxu0 0
        %1064 = vmatprep.subr.bf16.mxu0 0
        %1065 = vmatpush1.bf16.msra.mxu0 0
        %1066 = vmatprep.subr.bf16.mxu0 0
        %1067 = vmatpush1.bf16.msra.mxu0 %v1050
        %1068 = vmatprep.subr.bf16.mxu0 0
        %1069 = vmatpush2.bf16.msra.mxu0 0
        %1070 = vmatprep.subr.bf16.mxu0 0
        %1071 = vmatpush2.bf16.msra.mxu0 0
        %1072 = vmatprep.subr.bf16.mxu0 0
        %1073 = vmatpush2.bf16.msra.mxu0 0
        %1074 = vmatprep.subr.bf16.mxu0 0
        %1075 = vmatpush2.bf16.msra.mxu0 0
        %1076 = vmatprep.subr.bf16.mxu0 0
        %1077 = vmatpush2.bf16.msra.mxu0 0
        %1078 = vmatprep.subr.bf16.mxu0 0
        %1079 = vmatpush2.bf16.msra.mxu0 0
        %1080 = vmatprep.subr.bf16.mxu0 0
        %1081 = vmatpush2.bf16.msra.mxu0 0
        %1082 = vmatprep.subr.bf16.mxu0 0
        %1083 = vmatpush2.bf16.msra.mxu0 0
        %1084 = vmatprep.mubr.bf16.mxu0 0
        %1085 = vmatmul.mubr.bf16.gmra.mxu0 %v1046
        %v1086 = vpop.f32.mrf.mxu0
        %v1087 = vadd.f32 0.0, %v1086
        %v1088 = vpop.f32.mrf.mxu0
        %v1089 = vpop.f32.mrf.mxu0
        %v1090 = vadd.f32 0.0, %v1089
        %v1091 = vpop.f32.mrf.mxu0
        %1092 = vdwg.mxu0
        %1093 = vrot.lane.b32.xlu0 %v753, 64
        %v1094 = vpop.permute.xlu0 %1093
        %v1096 = vsel %vm965, %v1040, 0
        %v1099 = vsel %vm1048, %v1094, 0
        %1101 = vmatprep.subr.bf16.mxu0 0
        %1102 = vmatpush1.bf16.msra.mxu0 0
        %1103 = vmatprep.subr.bf16.mxu0 0
        %1104 = vmatpush1.bf16.msra.mxu0 0
        %1105 = vmatprep.subr.bf16.mxu0 0
        %1106 = vmatpush1.bf16.msra.mxu0 0
        %1107 = vmatprep.subr.bf16.mxu0 0
        %1108 = vmatpush1.bf16.msra.mxu0 0
        %1109 = vmatprep.subr.bf16.mxu0 0
        %1110 = vmatpush1.bf16.msra.mxu0 0
        %1111 = vmatprep.subr.bf16.mxu0 0
        %1112 = vmatpush1.bf16.msra.mxu0 0
        %1113 = vmatprep.subr.bf16.mxu0 0
        %1114 = vmatpush1.bf16.msra.mxu0 0
        %1115 = vmatprep.subr.bf16.mxu0 0
        %1116 = vmatpush1.bf16.msra.mxu0 %v1099
        %1117 = vmatprep.subr.bf16.mxu0 0
        %1118 = vmatpush2.bf16.msra.mxu0 0
        %1119 = vmatprep.subr.bf16.mxu0 0
        %1120 = vmatpush2.bf16.msra.mxu0 0
        %1121 = vmatprep.subr.bf16.mxu0 0
        %1122 = vmatpush2.bf16.msra.mxu0 0
        %1123 = vmatprep.subr.bf16.mxu0 0
        %1124 = vmatpush2.bf16.msra.mxu0 0
        %1125 = vmatprep.subr.bf16.mxu0 0
        %1126 = vmatpush2.bf16.msra.mxu0 0
        %1127 = vmatprep.subr.bf16.mxu0 0
        %1128 = vmatpush2.bf16.msra.mxu0 0
        %1129 = vmatprep.subr.bf16.mxu0 0
        %1130 = vmatpush2.bf16.msra.mxu0 0
        %1131 = vmatprep.subr.bf16.mxu0 0
        %1132 = vmatpush2.bf16.msra.mxu0 0
        %1133 = vmatprep.mubr.bf16.mxu0 0
        %1134 = vmatmul.mubr.bf16.gmra.mxu0 %v1096
        %v1135 = vpop.f32.mrf.mxu0
        %v1136 = vadd.f32 0.0, %v1135
        %v1137 = vpop.f32.mrf.mxu0
        %v1138 = vpop.f32.mrf.mxu0
        %v1139 = vadd.f32 0.0, %v1138
        %v1140 = vpop.f32.mrf.mxu0
        %1141 = vdwg.mxu0
        %1142 = vrot.lane.b32.xlu0 %v754, 64
        %v1143 = vpop.permute.xlu0 %1142
        %v1145 = vsel %vm965, %v1041, 0
        %v1148 = vsel %vm1048, %v1143, 0
        %1150 = vmatprep.subr.bf16.mxu0 0
        %1151 = vmatpush1.bf16.msra.mxu0 0
        %1152 = vmatprep.subr.bf16.mxu0 0
        %1153 = vmatpush1.bf16.msra.mxu0 0
        %1154 = vmatprep.subr.bf16.mxu0 0
        %1155 = vmatpush1.bf16.msra.mxu0 0
        %1156 = vmatprep.subr.bf16.mxu0 0
        %1157 = vmatpush1.bf16.msra.mxu0 0
        %1158 = vmatprep.subr.bf16.mxu0 0
        %1159 = vmatpush1.bf16.msra.mxu0 0
        %1160 = vmatprep.subr.bf16.mxu0 0
        %1161 = vmatpush1.bf16.msra.mxu0 0
        %1162 = vmatprep.subr.bf16.mxu0 0
        %1163 = vmatpush1.bf16.msra.mxu0 0
        %1164 = vmatprep.subr.bf16.mxu0 0
        %1165 = vmatpush1.bf16.msra.mxu0 %v1148
        %1166 = vmatprep.subr.bf16.mxu0 0
        %1167 = vmatpush2.bf16.msra.mxu0 0
        %1168 = vmatprep.subr.bf16.mxu0 0
        %1169 = vmatpush2.bf16.msra.mxu0 0
        %1170 = vmatprep.subr.bf16.mxu0 0
        %1171 = vmatpush2.bf16.msra.mxu0 0
        %1172 = vmatprep.subr.bf16.mxu0 0
        %1173 = vmatpush2.bf16.msra.mxu0 0
        %1174 = vmatprep.subr.bf16.mxu0 0
        %1175 = vmatpush2.bf16.msra.mxu0 0
        %1176 = vmatprep.subr.bf16.mxu0 0
        %1177 = vmatpush2.bf16.msra.mxu0 0
        %1178 = vmatprep.subr.bf16.mxu0 0
        %1179 = vmatpush2.bf16.msra.mxu0 0
        %1180 = vmatprep.subr.bf16.mxu0 0
        %1181 = vmatpush2.bf16.msra.mxu0 0
        %1182 = vmatprep.mubr.bf16.mxu0 0
        %1183 = vmatmul.mubr.bf16.gmra.mxu0 %v1145
        %v1184 = vpop.f32.mrf.mxu0
        %v1185 = vadd.f32 0.0, %v1184
        %v1186 = vpop.f32.mrf.mxu0
        %v1187 = vpop.f32.mrf.mxu0
        %v1188 = vadd.f32 0.0, %v1187
        %v1189 = vpop.f32.mrf.mxu0
        %1190 = vdwg.mxu0
        %1191 = vrot.lane.b32.xlu0 %v755, 64
        %v1192 = vpop.permute.xlu0 %1191
        %v1194 = vsel %vm965, %v1042, 0
        %v1197 = vsel %vm1048, %v1192, 0
        %1199 = vmatprep.subr.bf16.mxu0 0
        %1200 = vmatpush1.bf16.msra.mxu0 0
        %1201 = vmatprep.subr.bf16.mxu0 0
        %1202 = vmatpush1.bf16.msra.mxu0 0
        %1203 = vmatprep.subr.bf16.mxu0 0
        %1204 = vmatpush1.bf16.msra.mxu0 0
        %1205 = vmatprep.subr.bf16.mxu0 0
        %1206 = vmatpush1.bf16.msra.mxu0 0
        %1207 = vmatprep.subr.bf16.mxu0 0
        %1208 = vmatpush1.bf16.msra.mxu0 0
        %1209 = vmatprep.subr.bf16.mxu0 0
        %1210 = vmatpush1.bf16.msra.mxu0 0
        %1211 = vmatprep.subr.bf16.mxu0 0
        %1212 = vmatpush1.bf16.msra.mxu0 0
        %1213 = vmatprep.subr.bf16.mxu0 0
        %1214 = vmatpush1.bf16.msra.mxu0 %v1197
        %1215 = vmatprep.subr.bf16.mxu0 0
        %1216 = vmatpush2.bf16.msra.mxu0 0
        %1217 = vmatprep.subr.bf16.mxu0 0
        %1218 = vmatpush2.bf16.msra.mxu0 0
        %1219 = vmatprep.subr.bf16.mxu0 0
        %1220 = vmatpush2.bf16.msra.mxu0 0
        %1221 = vmatprep.subr.bf16.mxu0 0
        %1222 = vmatpush2.bf16.msra.mxu0 0
        %1223 = vmatprep.subr.bf16.mxu0 0
        %1224 = vmatpush2.bf16.msra.mxu0 0
        %1225 = vmatprep.subr.bf16.mxu0 0
        %1226 = vmatpush2.bf16.msra.mxu0 0
        %1227 = vmatprep.subr.bf16.mxu0 0
        %1228 = vmatpush2.bf16.msra.mxu0 0
        %1229 = vmatprep.subr.bf16.mxu0 0
        %1230 = vmatpush2.bf16.msra.mxu0 0
        %1231 = vmatprep.mubr.bf16.mxu0 0
        %1232 = vmatmul.mubr.bf16.gmra.mxu0 %v1194
        %v1233 = vpop.f32.mrf.mxu0
        %v1234 = vadd.f32 0.0, %v1233
        %v1235 = vpop.f32.mrf.mxu0
        %v1236 = vpop.f32.mrf.mxu0
        %v1237 = vadd.f32 0.0, %v1236
        %v1238 = vpop.f32.mrf.mxu0
        %1239 = vdwg.mxu0
        %v1240 = vrcp.pop %v1017
        %v1241 = vrcp.pop %v1020
        %v1242 = vrcp.pop %v1023
        %v1243 = vrcp.pop %v1026
        %v1244 = vrcp.pop %v1029
        %v1245 = vrcp.pop %v1032
        %v1246 = vrcp.pop %v1035
        %v1247 = vrcp.pop %v1038
        %v1248 = vmul.f32 %v1087, %v1240
        %v1249 = vmul.f32 %v1090, %v1241
        %v1250 = vmul.f32 %v1136, %v1242
        %v1251 = vmul.f32 %v1139, %v1243
        %v1252 = vmul.f32 %v1185, %v1244
        %v1253 = vmul.f32 %v1188, %v1245
        %v1254 = vmul.f32 %v1234, %v1246
        %v1255 = vmul.f32 %v1237, %v1247
        %1258 = vrot.lane.b32.xlu0 %v1250, 8
        %v1259 = vpop.permute.xlu0 %1258
        %1260 = vrot.lane.b32.xlu0 %v1251, 8
        %v1261 = vpop.permute.xlu0 %1260
        %1266 = vrot.lane.b32.xlu0 %v1252, 16
        %v1267 = vpop.permute.xlu0 %1266
        %1268 = vrot.lane.b32.xlu0 %v1253, 16
        %v1269 = vpop.permute.xlu0 %1268
        %1274 = vrot.lane.b32.xlu0 %v1254, 24
        %v1275 = vpop.permute.xlu0 %1274
        %1276 = vrot.lane.b32.xlu0 %v1255, 24
        %v1277 = vpop.permute.xlu0 %1276
        %v1280 = vsel %vm759, %v1248, %v1259
        %v1281 = vsel %vm759, %v1249, %v1261
        %vm1282 = vcmask 130048
        %v1283 = vsel %vm1282, %v1280, %v1267
        %v1284 = vsel %vm1282, %v1281, %v1269
        %vm1285 = vcmask 195584
        %v1286 = vsel %vm1285, %v1283, %v1275
        %v1287 = vsel %vm1285, %v1284, %v1277
        %v1288 = vpack.c.bf16 %v1287, %v1286
        %v1289 = vlaneseq
        %v1290 = vshrl.u32 %v1289, 7
        %v1291 = vsub.s32 1, %v1290
        %v1292 = vrot.slane %v629, %v1291
        %1293 = vrot.lane.b32.xlu0 %v684, 32
        %v1294 = vpop.permute.xlu0 %1293
        %1295 = vrot.lane.b32.xlu0 %v685, 32
        %v1296 = vpop.permute.xlu0 %1295
        %v1300 = vsel %vm630, %v1288, 0
        %1302 = vmatprep.subr.bf16.mxu0 0
        %1303 = vmatpush1.bf16.msra.mxu0 0
        %1304 = vmatprep.subr.bf16.mxu0 0
        %1305 = vmatpush1.bf16.msra.mxu0 0
        %1306 = vmatprep.subr.bf16.mxu0 0
        %1307 = vmatpush1.bf16.msra.mxu0 0
        %1308 = vmatprep.subr.bf16.mxu0 0
        %1309 = vmatpush1.bf16.msra.mxu0 0
        %1310 = vmatprep.subr.bf16.mxu0 0
        %1311 = vmatpush1.bf16.msra.mxu0 0
        %1312 = vmatprep.subr.bf16.mxu0 0
        %1313 = vmatpush1.bf16.msra.mxu0 0
        %1314 = vmatprep.subr.bf16.mxu0 0
        %1315 = vmatpush1.bf16.msra.mxu0 %v1296
        %1316 = vmatprep.subr.bf16.mxu0 0
        %1317 = vmatpush1.bf16.msra.mxu0 %v1294
        %1318 = vmatprep.subr.bf16.mxu0 0
        %1319 = vmatpush2.bf16.msra.mxu0 0
        %1320 = vmatprep.subr.bf16.mxu0 0
        %1321 = vmatpush2.bf16.msra.mxu0 0
        %1322 = vmatprep.subr.bf16.mxu0 0
        %1323 = vmatpush2.bf16.msra.mxu0 0
        %1324 = vmatprep.subr.bf16.mxu0 0
        %1325 = vmatpush2.bf16.msra.mxu0 0
        %1326 = vmatprep.subr.bf16.mxu0 0
        %1327 = vmatpush2.bf16.msra.mxu0 0
        %1328 = vmatprep.subr.bf16.mxu0 0
        %1329 = vmatpush2.bf16.msra.mxu0 0
        %1330 = vmatprep.subr.bf16.mxu0 0
        %1331 = vmatpush2.bf16.msra.mxu0 0
        %1332 = vmatprep.subr.bf16.mxu0 0
        %1333 = vmatpush2.bf16.msra.mxu0 0
        %1334 = vmatprep.mubr.bf16.mxu0 0
        %1335 = vmatmul.mubr.bf16.gmra.mxu0 %v1300
        %v1336 = vpop.f32.mrf.mxu0
        %v1337 = vadd.f32 %v1292, %v1336
        %v1338 = vpop.f32.mrf.mxu0
        %v1339 = vpop.f32.mrf.mxu0
        %v1340 = vadd.f32 %v1292, %v1339
        %v1341 = vpop.f32.mrf.mxu0
        %1342 = vdwg.mxu0
        %v1343 = vadd.f32 %v619, %v1337
        %v1344 = vadd.f32 %v622, %v1340
        %v1345 = vsel %vm630, %v1343, 0.0
        %1346 = vadd.xlane.f32.xlu0 %v1345
        %v1347 = vpop.xlane.xlu0 %1346
        %v1348 = vsel %vm634, %v1344, 0.0
        %1349 = vadd.xlane.f32.xlu0 %v1348
        %v1350 = vpop.xlane.xlu0 %1349
        %v1351 = vmul.f32 %v1347, %v638
        %v1352 = vmul.f32 %v1350, %v638
        %v1353 = vsub.f32 %v1343, %v1351
        %v1354 = vsub.f32 %v1344, %v1352
        %v1355 = vmul.f32 %v1353, %v1353
        %v1356 = vmul.f32 %v1354, %v1354
        %v1357 = vsel %vm630, %v1355, 0.0
        %1358 = vadd.xlane.f32.xlu0 %v1357
        %v1359 = vpop.xlane.xlu0 %1358
        %v1360 = vsel %vm634, %v1356, 0.0
        %1361 = vadd.xlane.f32.xlu0 %v1360
        %v1362 = vpop.xlane.xlu0 %1361
        %v1363 = vmul.f32 %v1359, %v638
        %v1364 = vmul.f32 %v1362, %v638
        %v1365 = vadd.f32 %v1363, 1e-05
        %v1366 = vadd.f32 %v1364, 1e-05
        %v1367 = vrsqrt.pop %v1365
        %v1368 = vrsqrt.pop %v1366
        %v1369 = vmul.f32 %v1353, %v1367
        %v1370 = vmul.f32 %v1354, %v1368
        %v1371 = vlaneseq
        %v1372 = vshrl.u32 %v1371, 7
        %v1373 = vsub.s32 6, %v1372
        %v1374 = vrot.slane %v629, %v1373
        %v1375 = vmul.f32 %v1369, %v1374
        %v1376 = vmul.f32 %v1370, %v1374
        %v1377 = vlaneseq
        %v1378 = vshrl.u32 %v1377, 7
        %v1379 = vsub.s32 7, %v1378
        %v1380 = vrot.slane %v629, %v1379
        %v1381 = vadd.f32 %v1375, %v1380
        %v1382 = vadd.f32 %v1376, %v1380
        %v1383 = vld [vmem:[%s6] sm:$0xf]
        %v1384 = vld [vmem:[%s6 + $0x4] sm:$0xf]
        %v1385 = vld [vmem:[%s6 + $0x8] sm:$0xf]
        %v1386 = vld [vmem:[%s6 + $0xc] sm:$0xf]
        %v1387 = vld [vmem:[%s6 + $0x10] sm:$0xf]
        %v1388 = vld [vmem:[%s6 + $0x14] sm:$0xf]
        %v1389 = vld [vmem:[%s6 + $0x18] sm:$0xf]
        %v1390 = vld [vmem:[%s6 + $0x1c] sm:$0xf]
        %v1391 = vpack.c.bf16 %v1382, %v1381
        %v1392 = vlaneseq
        %v1393 = vshrl.u32 %v1392, 7
        %v1394 = vsub.s32 2, %v1393
        %v1395 = vrot.slane %v629, %v1394
        %v1396 = vunpack.c.h.b16 %v625
        %v1397 = vunpack.c.h.b16 %v626
        %v1398 = vunpack.c.h.b16 %v627
        %v1399 = vunpack.c.h.b16 %v628
        %v1400 = vpack.c.b16 %v1397, %v1396
        %v1401 = vpack.c.b16 %v1399, %v1398
        %v1405 = vsel %vm630, %v1391, 0
        %1407 = vmatprep.subr.bf16.mxu0 0
        %1408 = vmatpush1.bf16.msra.mxu0 0
        %1409 = vmatprep.subr.bf16.mxu0 0
        %1410 = vmatpush1.bf16.msra.mxu0 0
        %1411 = vmatprep.subr.bf16.mxu0 0
        %1412 = vmatpush1.bf16.msra.mxu0 0
        %1413 = vmatprep.subr.bf16.mxu0 0
        %1414 = vmatpush1.bf16.msra.mxu0 0
        %1415 = vmatprep.subr.bf16.mxu0 0
        %1416 = vmatpush1.bf16.msra.mxu0 0
        %1417 = vmatprep.subr.bf16.mxu0 0
        %1418 = vmatpush1.bf16.msra.mxu0 0
        %1419 = vmatprep.subr.bf16.mxu0 0
        %1420 = vmatpush1.bf16.msra.mxu0 %v1401
        %1421 = vmatprep.subr.bf16.mxu0 0
        %1422 = vmatpush1.bf16.msra.mxu0 %v1400
        %1423 = vmatprep.subr.bf16.mxu0 0
        %1424 = vmatpush2.bf16.msra.mxu0 0
        %1425 = vmatprep.subr.bf16.mxu0 0
        %1426 = vmatpush2.bf16.msra.mxu0 0
        %1427 = vmatprep.subr.bf16.mxu0 0
        %1428 = vmatpush2.bf16.msra.mxu0 0
        %1429 = vmatprep.subr.bf16.mxu0 0
        %1430 = vmatpush2.bf16.msra.mxu0 0
        %1431 = vmatprep.subr.bf16.mxu0 0
        %1432 = vmatpush2.bf16.msra.mxu0 0
        %1433 = vmatprep.subr.bf16.mxu0 0
        %1434 = vmatpush2.bf16.msra.mxu0 0
        %1435 = vmatprep.subr.bf16.mxu0 0
        %1436 = vmatpush2.bf16.msra.mxu0 0
        %1437 = vmatprep.subr.bf16.mxu0 0
        %1438 = vmatpush2.bf16.msra.mxu0 0
        %1439 = vmatprep.mubr.bf16.mxu0 0
        %1440 = vmatmul.mubr.bf16.gmra.mxu0 %v1405
        %v1441 = vpop.f32.mrf.mxu0
        %v1442 = vadd.f32 %v1395, %v1441
        %v1443 = vpop.f32.mrf.mxu0
        %v1444 = vpop.f32.mrf.mxu0
        %v1445 = vadd.f32 %v1395, %v1444
        %v1446 = vpop.f32.mrf.mxu0
        %1447 = vdwg.mxu0
        %v1448 = vmul.f32 %v1442, 0.5
        %v1449 = vmul.f32 %v1445, 0.5
        %v1450 = vmul.f32 %v1442, 0.044715
        %v1451 = vmul.f32 %v1445, 0.044715
        %v1452 = vmul.f32 %v1450, %v1442
        %v1453 = vmul.f32 %v1451, %v1445
        %v1454 = vmul.f32 %v1452, %v1442
        %v1455 = vmul.f32 %v1453, %v1445
        %v1456 = vadd.f32 %v1442, %v1454
        %v1457 = vadd.f32 %v1445, %v1455
        %v1458 = vmul.f32 %v1456, 0.7978846
        %v1459 = vmul.f32 %v1457, 0.7978846
        %v1460 = vtanh.pop %v1458
        %v1461 = vtanh.pop %v1459
        %v1462 = vadd.f32 %v1460, 1.0
        %v1463 = vadd.f32 %v1461, 1.0
        %v1464 = vmul.f32 %v1448, %v1462
        %v1465 = vmul.f32 %v1449, %v1463
        %v1466 = vpack.c.bf16 %v1465, %v1464
        %v1467 = vlaneseq
        %v1468 = vshrl.u32 %v1467, 7
        %v1469 = vsub.s32 3, %v1468
        %v1470 = vrot.slane %v629, %v1469
        %v1479 = vunpack.c.l.b16 %v1383
        %v1480 = vunpack.c.l.b16 %v1384
        %v1481 = vunpack.c.l.b16 %v1385
        %v1482 = vunpack.c.l.b16 %v1386
        %v1483 = vunpack.c.l.b16 %v1387
        %v1484 = vunpack.c.l.b16 %v1388
        %v1485 = vunpack.c.l.b16 %v1389
        %v1486 = vunpack.c.l.b16 %v1390
        %v1487 = vpack.c.b16 %v1480, %v1479
        %v1488 = vpack.c.b16 %v1482, %v1481
        %v1489 = vpack.c.b16 %v1484, %v1483
        %v1490 = vpack.c.b16 %v1486, %v1485
        %v1496 = vsel %vm580, %v1466, 0
        %1498 = vmatprep.subr.bf16.mxu0 0
        %1499 = vmatpush1.bf16.msra.mxu0 0
        %1500 = vmatprep.subr.bf16.mxu0 0
        %1501 = vmatpush1.bf16.msra.mxu0 0
        %1502 = vmatprep.subr.bf16.mxu0 0
        %1503 = vmatpush1.bf16.msra.mxu0 0
        %1504 = vmatprep.subr.bf16.mxu0 0
        %1505 = vmatpush1.bf16.msra.mxu0 0
        %1506 = vmatprep.subr.bf16.mxu0 0
        %1507 = vmatpush1.bf16.msra.mxu0 %v1490
        %1508 = vmatprep.subr.bf16.mxu0 0
        %1509 = vmatpush1.bf16.msra.mxu0 %v1489
        %1510 = vmatprep.subr.bf16.mxu0 0
        %1511 = vmatpush1.bf16.msra.mxu0 %v1488
        %1512 = vmatprep.subr.bf16.mxu0 0
        %1513 = vmatpush1.bf16.msra.mxu0 %v1487
        %1514 = vmatprep.subr.bf16.mxu0 0
        %1515 = vmatpush2.bf16.msra.mxu0 0
        %1516 = vmatprep.subr.bf16.mxu0 0
        %1517 = vmatpush2.bf16.msra.mxu0 0
        %1518 = vmatprep.subr.bf16.mxu0 0
        %1519 = vmatpush2.bf16.msra.mxu0 0
        %1520 = vmatprep.subr.bf16.mxu0 0
        %1521 = vmatpush2.bf16.msra.mxu0 0
        %1522 = vmatprep.subr.bf16.mxu0 0
        %1523 = vmatpush2.bf16.msra.mxu0 0
        %1524 = vmatprep.subr.bf16.mxu0 0
        %1525 = vmatpush2.bf16.msra.mxu0 0
        %1526 = vmatprep.subr.bf16.mxu0 0
        %1527 = vmatpush2.bf16.msra.mxu0 0
        %1528 = vmatprep.subr.bf16.mxu0 0
        %1529 = vmatpush2.bf16.msra.mxu0 0
        %1530 = vmatprep.mubr.bf16.mxu0 0
        %1531 = vmatmul.mubr.bf16.gmra.mxu0 %v1496
        %v1532 = vpop.f32.mrf.mxu0
        %v1533 = vadd.f32 %v1470, %v1532
        %v1534 = vpop.f32.mrf.mxu0
        %v1535 = vpop.f32.mrf.mxu0
        %v1536 = vadd.f32 %v1470, %v1535
        %v1537 = vpop.f32.mrf.mxu0
        %1538 = vdwg.mxu0
        %v1539 = vadd.f32 %v1343, %v1533
        %v1540 = vadd.f32 %v1344, %v1536
        %s1541 = scalar_lea.vmem %s5, 32
        %v1542 = vld [vmem:[%s1541] sm:$0xff]
        %v1543 = vld [vmem:[%s1541 + $0x8] sm:$0xff]
        %v1544 = vld [vmem:[%s1541 + $0x10] sm:$0xff]
        %v1545 = vld [vmem:[%s1541 + $0x18] sm:$0xff]
        %s1546 = scalar_lea.vmem %s7, 8
        %v1547 = vld [vmem:[%s1546] sm:$0xff]
        %v1548 = vsel %vm630, %v1539, 0.0
        %1549 = vadd.xlane.f32.xlu0 %v1548
        %v1550 = vpop.xlane.xlu0 %1549
        %v1551 = vsel %vm634, %v1540, 0.0
        %1552 = vadd.xlane.f32.xlu0 %v1551
        %v1553 = vpop.xlane.xlu0 %1552
        %v1554 = vmul.f32 %v1550, %v638
        %v1555 = vmul.f32 %v1553, %v638
        %v1556 = vsub.f32 %v1539, %v1554
        %v1557 = vsub.f32 %v1540, %v1555
        %v1558 = vmul.f32 %v1556, %v1556
        %v1559 = vmul.f32 %v1557, %v1557
        %v1560 = vsel %vm630, %v1558, 0.0
        %1561 = vadd.xlane.f32.xlu0 %v1560
        %v1562 = vpop.xlane.xlu0 %1561
        %v1563 = vsel %vm634, %v1559, 0.0
        %1564 = vadd.xlane.f32.xlu0 %v1563
        %v1565 = vpop.xlane.xlu0 %1564
        %v1566 = vmul.f32 %v1562, %v638
        %v1567 = vmul.f32 %v1565, %v638
        %v1568 = vadd.f32 %v1566, 1e-05
        %v1569 = vadd.f32 %v1567, 1e-05
        %v1570 = vrsqrt.pop %v1568
        %v1571 = vrsqrt.pop %v1569
        %v1572 = vmul.f32 %v1556, %v1570
        %v1573 = vmul.f32 %v1557, %v1571
        %v1574 = vlaneseq
        %v1575 = vshrl.u32 %v1574, 7
        %v1576 = vsub.s32 4, %v1575
        %v1577 = vrot.slane %v1547, %v1576
        %v1578 = vmul.f32 %v1572, %v1577
        %v1579 = vmul.f32 %v1573, %v1577
        %v1580 = vlaneseq
        %v1581 = vshrl.u32 %v1580, 7
        %v1582 = vsub.s32 5, %v1581
        %v1583 = vrot.slane %v1547, %v1582
        %v1584 = vadd.f32 %v1578, %v1583
        %v1585 = vadd.f32 %v1579, %v1583
        %v1586 = vpack.c.bf16 %v1585, %v1584
        %v1587 = vlaneseq
        %v1588 = vshrl.u32 %v1587, 7
        %v1589 = vsub.s32 0, %v1588
        %v1590 = vrot.slane %v1547, %v1589
        %v1595 = vunpack.c.l.b16 %v1542
        %v1596 = vunpack.c.l.b16 %v1543
        %v1597 = vunpack.c.l.b16 %v1544
        %v1598 = vunpack.c.l.b16 %v1545
        %v1599 = vpack.c.b16 %v1596, %v1595
        %v1600 = vpack.c.b16 %v1598, %v1597
        %v1604 = vsel %vm630, %v1586, 0
        %1606 = vmatprep.subr.bf16.mxu0 0
        %1607 = vmatpush1.bf16.msra.mxu0 0
        %1608 = vmatprep.subr.bf16.mxu0 0
        %1609 = vmatpush1.bf16.msra.mxu0 0
        %1610 = vmatprep.subr.bf16.mxu0 0
        %1611 = vmatpush1.bf16.msra.mxu0 0
        %1612 = vmatprep.subr.bf16.mxu0 0
        %1613 = vmatpush1.bf16.msra.mxu0 0
        %1614 = vmatprep.subr.bf16.mxu0 0
        %1615 = vmatpush1.bf16.msra.mxu0 0
        %1616 = vmatprep.subr.bf16.mxu0 0
        %1617 = vmatpush1.bf16.msra.mxu0 0
        %1618 = vmatprep.subr.bf16.mxu0 0
        %1619 = vmatpush1.bf16.msra.mxu0 %v1600
        %1620 = vmatprep.subr.bf16.mxu0 0
        %1621 = vmatpush1.bf16.msra.mxu0 %v1599
        %1622 = vmatprep.subr.bf16.mxu0 0
        %1623 = vmatpush2.bf16.msra.mxu0 0
        %1624 = vmatprep.subr.bf16.mxu0 0
        %1625 = vmatpush2.bf16.msra.mxu0 0
        %1626 = vmatprep.subr.bf16.mxu0 0
        %1627 = vmatpush2.bf16.msra.mxu0 0
        %1628 = vmatprep.subr.bf16.mxu0 0
        %1629 = vmatpush2.bf16.msra.mxu0 0
        %1630 = vmatprep.subr.bf16.mxu0 0
        %1631 = vmatpush2.bf16.msra.mxu0 0
        %1632 = vmatprep.subr.bf16.mxu0 0
        %1633 = vmatpush2.bf16.msra.mxu0 0
        %1634 = vmatprep.subr.bf16.mxu0 0
        %1635 = vmatpush2.bf16.msra.mxu0 0
        %1636 = vmatprep.subr.bf16.mxu0 0
        %1637 = vmatpush2.bf16.msra.mxu0 0
        %1638 = vmatprep.mubr.bf16.mxu0 0
        %1639 = vmatmul.mubr.bf16.gmra.mxu0 %v1604
        %v1640 = vpop.f32.mrf.mxu0
        %v1641 = vadd.f32 %v1590, %v1640
        %v1642 = vpop.f32.mrf.mxu0
        %v1643 = vpop.f32.mrf.mxu0
        %v1644 = vadd.f32 %v1590, %v1643
        %v1645 = vpop.f32.mrf.mxu0
        %1646 = vdwg.mxu0
        %1649 = vrot.lane.b32.xlu0 %v1641, 120
        %v1650 = vpop.permute.xlu0 %1649
        %1651 = vrot.lane.b32.xlu0 %v1644, 120
        %v1652 = vpop.permute.xlu0 %1651
        %1655 = vrot.lane.b32.xlu0 %v1641, 112
        %v1656 = vpop.permute.xlu0 %1655
        %1657 = vrot.lane.b32.xlu0 %v1644, 112
        %v1658 = vpop.permute.xlu0 %1657
        %1661 = vrot.lane.b32.xlu0 %v1641, 104
        %v1662 = vpop.permute.xlu0 %1661
        %1663 = vrot.lane.b32.xlu0 %v1644, 104
        %v1664 = vpop.permute.xlu0 %1663
        %v1667 = vpack.c.bf16 %v1644, %v1641
        %v1668 = vpack.c.bf16 %v1652, %v1650
        %v1669 = vpack.c.bf16 %v1658, %v1656
        %v1670 = vpack.c.bf16 %v1664, %v1662
        %1672 = vrot.lane.b32.xlu0 %v1667, 96
        %v1673 = vpop.permute.xlu0 %1672
        %v1675 = vsel %vm759, %v1667, 0
        %v1678 = vsel %vm759, %v1673, 0
        %1680 = vmatprep.subr.bf16.mxu0 0
        %1681 = vmatpush1.bf16.xpose.msra.mxu0 0
        %1682 = vmatprep.subr.bf16.mxu0 0
        %1683 = vmatpush1.bf16.xpose.msra.mxu0 0
        %1684 = vmatprep.subr.bf16.mxu0 0
        %1685 = vmatpush1.bf16.xpose.msra.mxu0 0
        %1686 = vmatprep.subr.bf16.mxu0 0
        %1687 = vmatpush1.bf16.xpose.msra.mxu0 0
        %1688 = vmatprep.subr.bf16.mxu0 0
        %1689 = vmatpush1.bf16.xpose.msra.mxu0 0
        %1690 = vmatprep.subr.bf16.mxu0 0
        %1691 = vmatpush1.bf16.xpose.msra.mxu0 0
        %1692 = vmatprep.subr.bf16.mxu0 0
        %1693 = vmatpush1.bf16.xpose.msra.mxu0 0
        %1694 = vmatprep.subr.bf16.mxu0 0
        %1695 = vmatpush1.bf16.xpose.msra.mxu0 %v1678
        %1696 = vmatprep.subr.bf16.mxu0 0
        %1697 = vmatpush2.bf16.xpose.msra.mxu0 0
        %1698 = vmatprep.subr.bf16.mxu0 0
        %1699 = vmatpush2.bf16.xpose.msra.mxu0 0
        %1700 = vmatprep.subr.bf16.mxu0 0
        %1701 = vmatpush2.bf16.xpose.msra.mxu0 0
        %1702 = vmatprep.subr.bf16.mxu0 0
        %1703 = vmatpush2.bf16.xpose.msra.mxu0 0
        %1704 = vmatprep.subr.bf16.mxu0 0
        %1705 = vmatpush2.bf16.xpose.msra.mxu0 0
        %1706 = vmatprep.subr.bf16.mxu0 0
        %1707 = vmatpush2.bf16.xpose.msra.mxu0 0
        %1708 = vmatprep.subr.bf16.mxu0 0
        %1709 = vmatpush2.bf16.xpose.msra.mxu0 0
        %1710 = vmatprep.subr.bf16.mxu0 0
        %1711 = vmatpush2.bf16.xpose.msra.mxu0 0
        %1712 = vmatprep.mubr.bf16.mxu0 0
        %1713 = vmatmul.mubr.bf16.gmra.mxu0 %v1675
        %v1714 = vpop.f32.mrf.mxu0
        %v1715 = vadd.f32 0.0, %v1714
        %v1716 = vpop.f32.mrf.mxu0
        %v1717 = vpop.f32.mrf.mxu0
        %v1718 = vadd.f32 0.0, %v1717
        %v1719 = vpop.f32.mrf.mxu0
        %1720 = vdwg.mxu0
        %1722 = vrot.lane.b32.xlu0 %v1668, 96
        %v1723 = vpop.permute.xlu0 %1722
        %v1725 = vsel %vm759, %v1668, 0
        %v1728 = vsel %vm759, %v1723, 0
        %1730 = vmatprep.subr.bf16.mxu0 0
        %1731 = vmatpush1.bf16.xpose.msra.mxu0 0
        %1732 = vmatprep.subr.bf16.mxu0 0
        %1733 = vmatpush1.bf16.xpose.msra.mxu0 0
        %1734 = vmatprep.subr.bf16.mxu0 0
        %1735 = vmatpush1.bf16.xpose.msra.mxu0 0
        %1736 = vmatprep.subr.bf16.mxu0 0
        %1737 = vmatpush1.bf16.xpose.msra.mxu0 0
        %1738 = vmatprep.subr.bf16.mxu0 0
        %1739 = vmatpush1.bf16.xpose.msra.mxu0 0
        %1740 = vmatprep.subr.bf16.mxu0 0
        %1741 = vmatpush1.bf16.xpose.msra.mxu0 0
        %1742 = vmatprep.subr.bf16.mxu0 0
        %1743 = vmatpush1.bf16.xpose.msra.mxu0 0
        %1744 = vmatprep.subr.bf16.mxu0 0
        %1745 = vmatpush1.bf16.xpose.msra.mxu0 %v1728
        %1746 = vmatprep.subr.bf16.mxu0 0
        %1747 = vmatpush2.bf16.xpose.msra.mxu0 0
        %1748 = vmatprep.subr.bf16.mxu0 0
        %1749 = vmatpush2.bf16.xpose.msra.mxu0 0
        %1750 = vmatprep.subr.bf16.mxu0 0
        %1751 = vmatpush2.bf16.xpose.msra.mxu0 0
        %1752 = vmatprep.subr.bf16.mxu0 0
        %1753 = vmatpush2.bf16.xpose.msra.mxu0 0
        %1754 = vmatprep.subr.bf16.mxu0 0
        %1755 = vmatpush2.bf16.xpose.msra.mxu0 0
        %1756 = vmatprep.subr.bf16.mxu0 0
        %1757 = vmatpush2.bf16.xpose.msra.mxu0 0
        %1758 = vmatprep.subr.bf16.mxu0 0
        %1759 = vmatpush2.bf16.xpose.msra.mxu0 0
        %1760 = vmatprep.subr.bf16.mxu0 0
        %1761 = vmatpush2.bf16.xpose.msra.mxu0 0
        %1762 = vmatprep.mubr.bf16.mxu0 0
        %1763 = vmatmul.mubr.bf16.gmra.mxu0 %v1725
        %v1764 = vpop.f32.mrf.mxu0
        %v1765 = vadd.f32 0.0, %v1764
        %v1766 = vpop.f32.mrf.mxu0
        %v1767 = vpop.f32.mrf.mxu0
        %v1768 = vadd.f32 0.0, %v1767
        %v1769 = vpop.f32.mrf.mxu0
        %1770 = vdwg.mxu0
        %1772 = vrot.lane.b32.xlu0 %v1669, 96
        %v1773 = vpop.permute.xlu0 %1772
        %v1775 = vsel %vm759, %v1669, 0
        %v1778 = vsel %vm759, %v1773, 0
        %1780 = vmatprep.subr.bf16.mxu0 0
        %1781 = vmatpush1.bf16.xpose.msra.mxu0 0
        %1782 = vmatprep.subr.bf16.mxu0 0
        %1783 = vmatpush1.bf16.xpose.msra.mxu0 0
        %1784 = vmatprep.subr.bf16.mxu0 0
        %1785 = vmatpush1.bf16.xpose.msra.mxu0 0
        %1786 = vmatprep.subr.bf16.mxu0 0
        %1787 = vmatpush1.bf16.xpose.msra.mxu0 0
        %1788 = vmatprep.subr.bf16.mxu0 0
        %1789 = vmatpush1.bf16.xpose.msra.mxu0 0
        %1790 = vmatprep.subr.bf16.mxu0 0
        %1791 = vmatpush1.bf16.xpose.msra.mxu0 0
        %1792 = vmatprep.subr.bf16.mxu0 0
        %1793 = vmatpush1.bf16.xpose.msra.mxu0 0
        %1794 = vmatprep.subr.bf16.mxu0 0
        %1795 = vmatpush1.bf16.xpose.msra.mxu0 %v1778
        %1796 = vmatprep.subr.bf16.mxu0 0
        %1797 = vmatpush2.bf16.xpose.msra.mxu0 0
        %1798 = vmatprep.subr.bf16.mxu0 0
        %1799 = vmatpush2.bf16.xpose.msra.mxu0 0
        %1800 = vmatprep.subr.bf16.mxu0 0
        %1801 = vmatpush2.bf16.xpose.msra.mxu0 0
        %1802 = vmatprep.subr.bf16.mxu0 0
        %1803 = vmatpush2.bf16.xpose.msra.mxu0 0
        %1804 = vmatprep.subr.bf16.mxu0 0
        %1805 = vmatpush2.bf16.xpose.msra.mxu0 0
        %1806 = vmatprep.subr.bf16.mxu0 0
        %1807 = vmatpush2.bf16.xpose.msra.mxu0 0
        %1808 = vmatprep.subr.bf16.mxu0 0
        %1809 = vmatpush2.bf16.xpose.msra.mxu0 0
        %1810 = vmatprep.subr.bf16.mxu0 0
        %1811 = vmatpush2.bf16.xpose.msra.mxu0 0
        %1812 = vmatprep.mubr.bf16.mxu0 0
        %1813 = vmatmul.mubr.bf16.gmra.mxu0 %v1775
        %v1814 = vpop.f32.mrf.mxu0
        %v1815 = vadd.f32 0.0, %v1814
        %v1816 = vpop.f32.mrf.mxu0
        %v1817 = vpop.f32.mrf.mxu0
        %v1818 = vadd.f32 0.0, %v1817
        %v1819 = vpop.f32.mrf.mxu0
        %1820 = vdwg.mxu0
        %1822 = vrot.lane.b32.xlu0 %v1670, 96
        %v1823 = vpop.permute.xlu0 %1822
        %v1825 = vsel %vm759, %v1670, 0
        %v1828 = vsel %vm759, %v1823, 0
        %1830 = vmatprep.subr.bf16.mxu0 0
        %1831 = vmatpush1.bf16.xpose.msra.mxu0 0
        %1832 = vmatprep.subr.bf16.mxu0 0
        %1833 = vmatpush1.bf16.xpose.msra.mxu0 0
        %1834 = vmatprep.subr.bf16.mxu0 0
        %1835 = vmatpush1.bf16.xpose.msra.mxu0 0
        %1836 = vmatprep.subr.bf16.mxu0 0
        %1837 = vmatpush1.bf16.xpose.msra.mxu0 0
        %1838 = vmatprep.subr.bf16.mxu0 0
        %1839 = vmatpush1.bf16.xpose.msra.mxu0 0
        %1840 = vmatprep.subr.bf16.mxu0 0
        %1841 = vmatpush1.bf16.xpose.msra.mxu0 0
        %1842 = vmatprep.subr.bf16.mxu0 0
        %1843 = vmatpush1.bf16.xpose.msra.mxu0 0
        %1844 = vmatprep.subr.bf16.mxu0 0
        %1845 = vmatpush1.bf16.xpose.msra.mxu0 %v1828
        %1846 = vmatprep.subr.bf16.mxu0 0
        %1847 = vmatpush2.bf16.xpose.msra.mxu0 0
        %1848 = vmatprep.subr.bf16.mxu0 0
        %1849 = vmatpush2.bf16.xpose.msra.mxu0 0
        %1850 = vmatprep.subr.bf16.mxu0 0
        %1851 = vmatpush2.bf16.xpose.msra.mxu0 0
        %1852 = vmatprep.subr.bf16.mxu0 0
        %1853 = vmatpush2.bf16.xpose.msra.mxu0 0
        %1854 = vmatprep.subr.bf16.mxu0 0
        %1855 = vmatpush2.bf16.xpose.msra.mxu0 0
        %1856 = vmatprep.subr.bf16.mxu0 0
        %1857 = vmatpush2.bf16.xpose.msra.mxu0 0
        %1858 = vmatprep.subr.bf16.mxu0 0
        %1859 = vmatpush2.bf16.xpose.msra.mxu0 0
        %1860 = vmatprep.subr.bf16.mxu0 0
        %1861 = vmatpush2.bf16.xpose.msra.mxu0 0
        %1862 = vmatprep.mubr.bf16.mxu0 0
        %1863 = vmatmul.mubr.bf16.gmra.mxu0 %v1825
        %v1864 = vpop.f32.mrf.mxu0
        %v1865 = vadd.f32 0.0, %v1864
        %v1866 = vpop.f32.mrf.mxu0
        %v1867 = vpop.f32.mrf.mxu0
        %v1868 = vadd.f32 0.0, %v1867
        %v1869 = vpop.f32.mrf.mxu0
        %1870 = vdwg.mxu0
        %v1871 = vmul.f32 %v1715, 0.35355338
        %v1872 = vmul.f32 %v1718, 0.35355338
        %v1873 = vmul.f32 %v1765, 0.35355338
        %v1874 = vmul.f32 %v1768, 0.35355338
        %v1875 = vmul.f32 %v1815, 0.35355338
        %v1876 = vmul.f32 %v1818, 0.35355338
        %v1877 = vmul.f32 %v1865, 0.35355338
        %v1878 = vmul.f32 %v1868, 0.35355338
        %v1879 = vsel %vm965, %v1871, -inf
        %1880 = vmax.xlane.f32.xlu0 %v1879
        %v1881 = vpop.xlane.xlu0 %1880
        %v1882 = vsel %vm969, %v1872, -inf
        %1883 = vmax.xlane.f32.xlu0 %v1882
        %v1884 = vpop.xlane.xlu0 %1883
        %v1885 = vsel %vm965, %v1873, -inf
        %1886 = vmax.xlane.f32.xlu0 %v1885
        %v1887 = vpop.xlane.xlu0 %1886
        %v1888 = vsel %vm969, %v1874, -inf
        %1889 = vmax.xlane.f32.xlu0 %v1888
        %v1890 = vpop.xlane.xlu0 %1889
        %v1891 = vsel %vm965, %v1875, -inf
        %1892 = vmax.xlane.f32.xlu0 %v1891
        %v1893 = vpop.xlane.xlu0 %1892
        %v1894 = vsel %vm969, %v1876, -inf
        %1895 = vmax.xlane.f32.xlu0 %v1894
        %v1896 = vpop.xlane.xlu0 %1895
        %v1897 = vsel %vm965, %v1877, -inf
        %1898 = vmax.xlane.f32.xlu0 %v1897
        %v1899 = vpop.xlane.xlu0 %1898
        %v1900 = vsel %vm969, %v1878, -inf
        %1901 = vmax.xlane.f32.xlu0 %v1900
        %v1902 = vpop.xlane.xlu0 %1901
        %v1903 = vsub.f32 %v1871, %v1881
        %v1904 = vsub.f32 %v1872, %v1884
        %v1905 = vsub.f32 %v1873, %v1887
        %v1906 = vsub.f32 %v1874, %v1890
        %v1907 = vsub.f32 %v1875, %v1893
        %v1908 = vsub.f32 %v1876, %v1896
        %v1909 = vsub.f32 %v1877, %v1899
        %v1910 = vsub.f32 %v1878, %v1902
        %v1911 = vmul.f32 %v1903, 1.442695
        %v1912 = vpow.pop %v1911
        %v1913 = vmul.f32 %v1904, 1.442695
        %v1914 = vpow.pop %v1913
        %v1915 = vmul.f32 %v1905, 1.442695
        %v1916 = vpow.pop %v1915
        %v1917 = vmul.f32 %v1906, 1.442695
        %v1918 = vpow.pop %v1917
        %v1919 = vmul.f32 %v1907, 1.442695
        %v1920 = vpow.pop %v1919
        %v1921 = vmul.f32 %v1908, 1.442695
        %v1922 = vpow.pop %v1921
        %v1923 = vmul.f32 %v1909, 1.442695
        %v1924 = vpow.pop %v1923
        %v1925 = vmul.f32 %v1910, 1.442695
        %v1926 = vpow.pop %v1925
        %v1927 = vsel %vm965, %v1912, 0.0
        %1928 = vadd.xlane.f32.xlu0 %v1927
        %v1929 = vpop.xlane.xlu0 %1928
        %v1930 = vsel %vm969, %v1914, 0.0
        %1931 = vadd.xlane.f32.xlu0 %v1930
        %v1932 = vpop.xlane.xlu0 %1931
        %v1933 = vsel %vm965, %v1916, 0.0
        %1934 = vadd.xlane.f32.xlu0 %v1933
        %v1935 = vpop.xlane.xlu0 %1934
        %v1936 = vsel %vm969, %v1918, 0.0
        %1937 = vadd.xlane.f32.xlu0 %v1936
        %v1938 = vpop.xlane.xlu0 %1937
        %v1939 = vsel %vm965, %v1920, 0.0
        %1940 = vadd.xlane.f32.xlu0 %v1939
        %v1941 = vpop.xlane.xlu0 %1940
        %v1942 = vsel %vm969, %v1922, 0.0
        %1943 = vadd.xlane.f32.xlu0 %v1942
        %v1944 = vpop.xlane.xlu0 %1943
        %v1945 = vsel %vm965, %v1924, 0.0
        %1946 = vadd.xlane.f32.xlu0 %v1945
        %v1947 = vpop.xlane.xlu0 %1946
        %v1948 = vsel %vm969, %v1926, 0.0
        %1949 = vadd.xlane.f32.xlu0 %v1948
        %v1950 = vpop.xlane.xlu0 %1949
        %v1951 = vpack.c.bf16 %v1914, %v1912
        %v1952 = vpack.c.bf16 %v1918, %v1916
        %v1953 = vpack.c.bf16 %v1922, %v1920
        %v1954 = vpack.c.bf16 %v1926, %v1924
        %1955 = vrot.lane.b32.xlu0 %v1667, 64
        %v1956 = vpop.permute.xlu0 %1955
        %v1958 = vsel %vm965, %v1951, 0
        %v1961 = vsel %vm1048, %v1956, 0
        %1963 = vmatprep.subr.bf16.mxu0 0
        %1964 = vmatpush1.bf16.msra.mxu0 0
        %1965 = vmatprep.subr.bf16.mxu0 0
        %1966 = vmatpush1.bf16.msra.mxu0 0
        %1967 = vmatprep.subr.bf16.mxu0 0
        %1968 = vmatpush1.bf16.msra.mxu0 0
        %1969 = vmatprep.subr.bf16.mxu0 0
        %1970 = vmatpush1.bf16.msra.mxu0 0
        %1971 = vmatprep.subr.bf16.mxu0 0
        %1972 = vmatpush1.bf16.msra.mxu0 0
        %1973 = vmatprep.subr.bf16.mxu0 0
        %1974 = vmatpush1.bf16.msra.mxu0 0
        %1975 = vmatprep.subr.bf16.mxu0 0
        %1976 = vmatpush1.bf16.msra.mxu0 0
        %1977 = vmatprep.subr.bf16.mxu0 0
        %1978 = vmatpush1.bf16.msra.mxu0 %v1961
        %1979 = vmatprep.subr.bf16.mxu0 0
        %1980 = vmatpush2.bf16.msra.mxu0 0
        %1981 = vmatprep.subr.bf16.mxu0 0
        %1982 = vmatpush2.bf16.msra.mxu0 0
        %1983 = vmatprep.subr.bf16.mxu0 0
        %1984 = vmatpush2.bf16.msra.mxu0 0
        %1985 = vmatprep.subr.bf16.mxu0 0
        %1986 = vmatpush2.bf16.msra.mxu0 0
        %1987 = vmatprep.subr.bf16.mxu0 0
        %1988 = vmatpush2.bf16.msra.mxu0 0
        %1989 = vmatprep.subr.bf16.mxu0 0
        %1990 = vmatpush2.bf16.msra.mxu0 0
        %1991 = vmatprep.subr.bf16.mxu0 0
        %1992 = vmatpush2.bf16.msra.mxu0 0
        %1993 = vmatprep.subr.bf16.mxu0 0
        %1994 = vmatpush2.bf16.msra.mxu0 0
        %1995 = vmatprep.mubr.bf16.mxu0 0
        %1996 = vmatmul.mubr.bf16.gmra.mxu0 %v1958
        %v1997 = vpop.f32.mrf.mxu0
        %v1998 = vadd.f32 0.0, %v1997
        %v1999 = vpop.f32.mrf.mxu0
        %v2000 = vpop.f32.mrf.mxu0
        %v2001 = vadd.f32 0.0, %v2000
        %v2002 = vpop.f32.mrf.mxu0
        %2003 = vdwg.mxu0
        %2004 = vrot.lane.b32.xlu0 %v1668, 64
        %v2005 = vpop.permute.xlu0 %2004
        %v2007 = vsel %vm965, %v1952, 0
        %v2010 = vsel %vm1048, %v2005, 0
        %2012 = vmatprep.subr.bf16.mxu0 0
        %2013 = vmatpush1.bf16.msra.mxu0 0
        %2014 = vmatprep.subr.bf16.mxu0 0
        %2015 = vmatpush1.bf16.msra.mxu0 0
        %2016 = vmatprep.subr.bf16.mxu0 0
        %2017 = vmatpush1.bf16.msra.mxu0 0
        %2018 = vmatprep.subr.bf16.mxu0 0
        %2019 = vmatpush1.bf16.msra.mxu0 0
        %2020 = vmatprep.subr.bf16.mxu0 0
        %2021 = vmatpush1.bf16.msra.mxu0 0
        %2022 = vmatprep.subr.bf16.mxu0 0
        %2023 = vmatpush1.bf16.msra.mxu0 0
        %2024 = vmatprep.subr.bf16.mxu0 0
        %2025 = vmatpush1.bf16.msra.mxu0 0
        %2026 = vmatprep.subr.bf16.mxu0 0
        %2027 = vmatpush1.bf16.msra.mxu0 %v2010
        %2028 = vmatprep.subr.bf16.mxu0 0
        %2029 = vmatpush2.bf16.msra.mxu0 0
        %2030 = vmatprep.subr.bf16.mxu0 0
        %2031 = vmatpush2.bf16.msra.mxu0 0
        %2032 = vmatprep.subr.bf16.mxu0 0
        %2033 = vmatpush2.bf16.msra.mxu0 0
        %2034 = vmatprep.subr.bf16.mxu0 0
        %2035 = vmatpush2.bf16.msra.mxu0 0
        %2036 = vmatprep.subr.bf16.mxu0 0
        %2037 = vmatpush2.bf16.msra.mxu0 0
        %2038 = vmatprep.subr.bf16.mxu0 0
        %2039 = vmatpush2.bf16.msra.mxu0 0
        %2040 = vmatprep.subr.bf16.mxu0 0
        %2041 = vmatpush2.bf16.msra.mxu0 0
        %2042 = vmatprep.subr.bf16.mxu0 0
        %2043 = vmatpush2.bf16.msra.mxu0 0
        %2044 = vmatprep.mubr.bf16.mxu0 0
        %2045 = vmatmul.mubr.bf16.gmra.mxu0 %v2007
        %v2046 = vpop.f32.mrf.mxu0
        %v2047 = vadd.f32 0.0, %v2046
        %v2048 = vpop.f32.mrf.mxu0
        %v2049 = vpop.f32.mrf.mxu0
        %v2050 = vadd.f32 0.0, %v2049
        %v2051 = vpop.f32.mrf.mxu0
        %2052 = vdwg.mxu0
        %2053 = vrot.lane.b32.xlu0 %v1669, 64
        %v2054 = vpop.permute.xlu0 %2053
        %v2056 = vsel %vm965, %v1953, 0
        %v2059 = vsel %vm1048, %v2054, 0
        %2061 = vmatprep.subr.bf16.mxu0 0
        %2062 = vmatpush1.bf16.msra.mxu0 0
        %2063 = vmatprep.subr.bf16.mxu0 0
        %2064 = vmatpush1.bf16.msra.mxu0 0
        %2065 = vmatprep.subr.bf16.mxu0 0
        %2066 = vmatpush1.bf16.msra.mxu0 0
        %2067 = vmatprep.subr.bf16.mxu0 0
        %2068 = vmatpush1.bf16.msra.mxu0 0
        %2069 = vmatprep.subr.bf16.mxu0 0
        %2070 = vmatpush1.bf16.msra.mxu0 0
        %2071 = vmatprep.subr.bf16.mxu0 0
        %2072 = vmatpush1.bf16.msra.mxu0 0
        %2073 = vmatprep.subr.bf16.mxu0 0
        %2074 = vmatpush1.bf16.msra.mxu0 0
        %2075 = vmatprep.subr.bf16.mxu0 0
        %2076 = vmatpush1.bf16.msra.mxu0 %v2059
        %2077 = vmatprep.subr.bf16.mxu0 0
        %2078 = vmatpush2.bf16.msra.mxu0 0
        %2079 = vmatprep.subr.bf16.mxu0 0
        %2080 = vmatpush2.bf16.msra.mxu0 0
        %2081 = vmatprep.subr.bf16.mxu0 0
        %2082 = vmatpush2.bf16.msra.mxu0 0
        %2083 = vmatprep.subr.bf16.mxu0 0
        %2084 = vmatpush2.bf16.msra.mxu0 0
        %2085 = vmatprep.subr.bf16.mxu0 0
        %2086 = vmatpush2.bf16.msra.mxu0 0
        %2087 = vmatprep.subr.bf16.mxu0 0
        %2088 = vmatpush2.bf16.msra.mxu0 0
        %2089 = vmatprep.subr.bf16.mxu0 0
        %2090 = vmatpush2.bf16.msra.mxu0 0
        %2091 = vmatprep.subr.bf16.mxu0 0
        %2092 = vmatpush2.bf16.msra.mxu0 0
        %2093 = vmatprep.mubr.bf16.mxu0 0
        %2094 = vmatmul.mubr.bf16.gmra.mxu0 %v2056
        %v2095 = vpop.f32.mrf.mxu0
        %v2096 = vadd.f32 0.0, %v2095
        %v2097 = vpop.f32.mrf.mxu0
        %v2098 = vpop.f32.mrf.mxu0
        %v2099 = vadd.f32 0.0, %v2098
        %v2100 = vpop.f32.mrf.mxu0
        %2101 = vdwg.mxu0
        %2102 = vrot.lane.b32.xlu0 %v1670, 64
        %v2103 = vpop.permute.xlu0 %2102
        %v2105 = vsel %vm965, %v1954, 0
        %v2108 = vsel %vm1048, %v2103, 0
        %2110 = vmatprep.subr.bf16.mxu0 0
        %2111 = vmatpush1.bf16.msra.mxu0 0
        %2112 = vmatprep.subr.bf16.mxu0 0
        %2113 = vmatpush1.bf16.msra.mxu0 0
        %2114 = vmatprep.subr.bf16.mxu0 0
        %2115 = vmatpush1.bf16.msra.mxu0 0
        %2116 = vmatprep.subr.bf16.mxu0 0
        %2117 = vmatpush1.bf16.msra.mxu0 0
        %2118 = vmatprep.subr.bf16.mxu0 0
        %2119 = vmatpush1.bf16.msra.mxu0 0
        %2120 = vmatprep.subr.bf16.mxu0 0
        %2121 = vmatpush1.bf16.msra.mxu0 0
        %2122 = vmatprep.subr.bf16.mxu0 0
        %2123 = vmatpush1.bf16.msra.mxu0 0
        %2124 = vmatprep.subr.bf16.mxu0 0
        %2125 = vmatpush1.bf16.msra.mxu0 %v2108
        %2126 = vmatprep.subr.bf16.mxu0 0
        %2127 = vmatpush2.bf16.msra.mxu0 0
        %2128 = vmatprep.subr.bf16.mxu0 0
        %2129 = vmatpush2.bf16.msra.mxu0 0
        %2130 = vmatprep.subr.bf16.mxu0 0
        %2131 = vmatpush2.bf16.msra.mxu0 0
        %2132 = vmatprep.subr.bf16.mxu0 0
        %2133 = vmatpush2.bf16.msra.mxu0 0
        %2134 = vmatprep.subr.bf16.mxu0 0
        %2135 = vmatpush2.bf16.msra.mxu0 0
        %2136 = vmatprep.subr.bf16.mxu0 0
        %2137 = vmatpush2.bf16.msra.mxu0 0
        %2138 = vmatprep.subr.bf16.mxu0 0
        %2139 = vmatpush2.bf16.msra.mxu0 0
        %2140 = vmatprep.subr.bf16.mxu0 0
        %2141 = vmatpush2.bf16.msra.mxu0 0
        %2142 = vmatprep.mubr.bf16.mxu0 0
        %2143 = vmatmul.mubr.bf16.gmra.mxu0 %v2105
        %v2144 = vpop.f32.mrf.mxu0
        %v2145 = vadd.f32 0.0, %v2144
        %v2146 = vpop.f32.mrf.mxu0
        %v2147 = vpop.f32.mrf.mxu0
        %v2148 = vadd.f32 0.0, %v2147
        %v2149 = vpop.f32.mrf.mxu0
        %2150 = vdwg.mxu0
        %v2151 = vrcp.pop %v1929
        %v2152 = vrcp.pop %v1932
        %v2153 = vrcp.pop %v1935
        %v2154 = vrcp.pop %v1938
        %v2155 = vrcp.pop %v1941
        %v2156 = vrcp.pop %v1944
        %v2157 = vrcp.pop %v1947
        %v2158 = vrcp.pop %v1950
        %v2159 = vmul.f32 %v1998, %v2151
        %v2160 = vmul.f32 %v2001, %v2152
        %v2161 = vmul.f32 %v2047, %v2153
        %v2162 = vmul.f32 %v2050, %v2154
        %v2163 = vmul.f32 %v2096, %v2155
        %v2164 = vmul.f32 %v2099, %v2156
        %v2165 = vmul.f32 %v2145, %v2157
        %v2166 = vmul.f32 %v2148, %v2158
        %2169 = vrot.lane.b32.xlu0 %v2161, 8
        %v2170 = vpop.permute.xlu0 %2169
        %2171 = vrot.lane.b32.xlu0 %v2162, 8
        %v2172 = vpop.permute.xlu0 %2171
        %2177 = vrot.lane.b32.xlu0 %v2163, 16
        %v2178 = vpop.permute.xlu0 %2177
        %2179 = vrot.lane.b32.xlu0 %v2164, 16
        %v2180 = vpop.permute.xlu0 %2179
        %2185 = vrot.lane.b32.xlu0 %v2165, 24
        %v2186 = vpop.permute.xlu0 %2185
        %2187 = vrot.lane.b32.xlu0 %v2166, 24
        %v2188 = vpop.permute.xlu0 %2187
        %v2191 = vsel %vm759, %v2159, %v2170
        %v2192 = vsel %vm759, %v2160, %v2172
        %v2193 = vsel %vm1282, %v2191, %v2178
        %v2194 = vsel %vm1282, %v2192, %v2180
        %v2195 = vsel %vm1285, %v2193, %v2186
        %v2196 = vsel %vm1285, %v2194, %v2188
        %v2197 = vpack.c.bf16 %v2196, %v2195
        %v2198 = vlaneseq
        %v2199 = vshrl.u32 %v2198, 7
        %v2200 = vsub.s32 1, %v2199
        %v2201 = vrot.slane %v1547, %v2200
        %2202 = vrot.lane.b32.xlu0 %v1599, 32
        %v2203 = vpop.permute.xlu0 %2202
        %2204 = vrot.lane.b32.xlu0 %v1600, 32
        %v2205 = vpop.permute.xlu0 %2204
        %v2209 = vsel %vm630, %v2197, 0
        %2211 = vmatprep.subr.bf16.mxu0 0
        %2212 = vmatpush1.bf16.msra.mxu0 0
        %2213 = vmatprep.subr.bf16.mxu0 0
        %2214 = vmatpush1.bf16.msra.mxu0 0
        %2215 = vmatprep.subr.bf16.mxu0 0
        %2216 = vmatpush1.bf16.msra.mxu0 0
        %2217 = vmatprep.subr.bf16.mxu0 0
        %2218 = vmatpush1.bf16.msra.mxu0 0
        %2219 = vmatprep.subr.bf16.mxu0 0
        %2220 = vmatpush1.bf16.msra.mxu0 0
        %2221 = vmatprep.subr.bf16.mxu0 0
        %2222 = vmatpush1.bf16.msra.mxu0 0
        %2223 = vmatprep.subr.bf16.mxu0 0
        %2224 = vmatpush1.bf16.msra.mxu0 %v2205
        %2225 = vmatprep.subr.bf16.mxu0 0
        %2226 = vmatpush1.bf16.msra.mxu0 %v2203
        %2227 = vmatprep.subr.bf16.mxu0 0
        %2228 = vmatpush2.bf16.msra.mxu0 0
        %2229 = vmatprep.subr.bf16.mxu0 0
        %2230 = vmatpush2.bf16.msra.mxu0 0
        %2231 = vmatprep.subr.bf16.mxu0 0
        %2232 = vmatpush2.bf16.msra.mxu0 0
        %2233 = vmatprep.subr.bf16.mxu0 0
        %2234 = vmatpush2.bf16.msra.mxu0 0
        %2235 = vmatprep.subr.bf16.mxu0 0
        %2236 = vmatpush2.bf16.msra.mxu0 0
        %2237 = vmatprep.subr.bf16.mxu0 0
        %2238 = vmatpush2.bf16.msra.mxu0 0
        %2239 = vmatprep.subr.bf16.mxu0 0
        %2240 = vmatpush2.bf16.msra.mxu0 0
        %2241 = vmatprep.subr.bf16.mxu0 0
        %2242 = vmatpush2.bf16.msra.mxu0 0
        %2243 = vmatprep.mubr.bf16.mxu0 0
        %2244 = vmatmul.mubr.bf16.gmra.mxu0 %v2209
        %v2245 = vpop.f32.mrf.mxu0
        %v2246 = vadd.f32 %v2201, %v2245
        %v2247 = vpop.f32.mrf.mxu0
        %v2248 = vpop.f32.mrf.mxu0
        %v2249 = vadd.f32 %v2201, %v2248
        %v2250 = vpop.f32.mrf.mxu0
        %2251 = vdwg.mxu0
        %v2252 = vadd.f32 %v1539, %v2246
        %v2253 = vadd.f32 %v1540, %v2249
        %v2254 = vsel %vm630, %v2252, 0.0
        %2255 = vadd.xlane.f32.xlu0 %v2254
        %v2256 = vpop.xlane.xlu0 %2255
        %v2257 = vsel %vm634, %v2253, 0.0
        %2258 = vadd.xlane.f32.xlu0 %v2257
        %v2259 = vpop.xlane.xlu0 %2258
        %v2260 = vmul.f32 %v2256, %v638
        %v2261 = vmul.f32 %v2259, %v638
        %v2262 = vsub.f32 %v2252, %v2260
        %v2263 = vsub.f32 %v2253, %v2261
        %v2264 = vmul.f32 %v2262, %v2262
        %v2265 = vmul.f32 %v2263, %v2263
        %v2266 = vsel %vm630, %v2264, 0.0
        %2267 = vadd.xlane.f32.xlu0 %v2266
        %v2268 = vpop.xlane.xlu0 %2267
        %v2269 = vsel %vm634, %v2265, 0.0
        %2270 = vadd.xlane.f32.xlu0 %v2269
        %v2271 = vpop.xlane.xlu0 %2270
        %v2272 = vmul.f32 %v2268, %v638
        %v2273 = vmul.f32 %v2271, %v638
        %v2274 = vadd.f32 %v2272, 1e-05
        %v2275 = vadd.f32 %v2273, 1e-05
        %v2276 = vrsqrt.pop %v2274
        %v2277 = vrsqrt.pop %v2275
        %v2278 = vmul.f32 %v2262, %v2276
        %v2279 = vmul.f32 %v2263, %v2277
        %v2280 = vlaneseq
        %v2281 = vshrl.u32 %v2280, 7
        %v2282 = vsub.s32 6, %v2281
        %v2283 = vrot.slane %v1547, %v2282
        %v2284 = vmul.f32 %v2278, %v2283
        %v2285 = vmul.f32 %v2279, %v2283
        %v2286 = vlaneseq
        %v2287 = vshrl.u32 %v2286, 7
        %v2288 = vsub.s32 7, %v2287
        %v2289 = vrot.slane %v1547, %v2288
        %v2290 = vadd.f32 %v2284, %v2289
        %v2291 = vadd.f32 %v2285, %v2289
        %s2292 = scalar_lea.vmem %s6, 32
        %v2293 = vld [vmem:[%s2292] sm:$0xf]
        %v2294 = vld [vmem:[%s2292 + $0x4] sm:$0xf]
        %v2295 = vld [vmem:[%s2292 + $0x8] sm:$0xf]
        %v2296 = vld [vmem:[%s2292 + $0xc] sm:$0xf]
        %v2297 = vld [vmem:[%s2292 + $0x10] sm:$0xf]
        %v2298 = vld [vmem:[%s2292 + $0x14] sm:$0xf]
        %v2299 = vld [vmem:[%s2292 + $0x18] sm:$0xf]
        %v2300 = vld [vmem:[%s2292 + $0x1c] sm:$0xf]
        %v2301 = vpack.c.bf16 %v2291, %v2290
        %v2302 = vlaneseq
        %v2303 = vshrl.u32 %v2302, 7
        %v2304 = vsub.s32 2, %v2303
        %v2305 = vrot.slane %v1547, %v2304
        %v2306 = vunpack.c.h.b16 %v1542
        %v2307 = vunpack.c.h.b16 %v1543
        %v2308 = vunpack.c.h.b16 %v1544
        %v2309 = vunpack.c.h.b16 %v1545
        %v2310 = vpack.c.b16 %v2307, %v2306
        %v2311 = vpack.c.b16 %v2309, %v2308
        %v2315 = vsel %vm630, %v2301, 0
        %2317 = vmatprep.subr.bf16.mxu0 0
        %2318 = vmatpush1.bf16.msra.mxu0 0
        %2319 = vmatprep.subr.bf16.mxu0 0
        %2320 = vmatpush1.bf16.msra.mxu0 0
        %2321 = vmatprep.subr.bf16.mxu0 0
        %2322 = vmatpush1.bf16.msra.mxu0 0
        %2323 = vmatprep.subr.bf16.mxu0 0
        %2324 = vmatpush1.bf16.msra.mxu0 0
        %2325 = vmatprep.subr.bf16.mxu0 0
        %2326 = vmatpush1.bf16.msra.mxu0 0
        %2327 = vmatprep.subr.bf16.mxu0 0
        %2328 = vmatpush1.bf16.msra.mxu0 0
        %2329 = vmatprep.subr.bf16.mxu0 0
        %2330 = vmatpush1.bf16.msra.mxu0 %v2311
        %2331 = vmatprep.subr.bf16.mxu0 0
        %2332 = vmatpush1.bf16.msra.mxu0 %v2310
        %2333 = vmatprep.subr.bf16.mxu0 0
        %2334 = vmatpush2.bf16.msra.mxu0 0
        %2335 = vmatprep.subr.bf16.mxu0 0
        %2336 = vmatpush2.bf16.msra.mxu0 0
        %2337 = vmatprep.subr.bf16.mxu0 0
        %2338 = vmatpush2.bf16.msra.mxu0 0
        %2339 = vmatprep.subr.bf16.mxu0 0
        %2340 = vmatpush2.bf16.msra.mxu0 0
        %2341 = vmatprep.subr.bf16.mxu0 0
        %2342 = vmatpush2.bf16.msra.mxu0 0
        %2343 = vmatprep.subr.bf16.mxu0 0
        %2344 = vmatpush2.bf16.msra.mxu0 0
        %2345 = vmatprep.subr.bf16.mxu0 0
        %2346 = vmatpush2.bf16.msra.mxu0 0
        %2347 = vmatprep.subr.bf16.mxu0 0
        %2348 = vmatpush2.bf16.msra.mxu0 0
        %2349 = vmatprep.mubr.bf16.mxu0 0
        %2350 = vmatmul.mubr.bf16.gmra.mxu0 %v2315
        %v2351 = vpop.f32.mrf.mxu0
        %v2352 = vadd.f32 %v2305, %v2351
        %v2353 = vpop.f32.mrf.mxu0
        %v2354 = vpop.f32.mrf.mxu0
        %v2355 = vadd.f32 %v2305, %v2354
        %v2356 = vpop.f32.mrf.mxu0
        %2357 = vdwg.mxu0
        %v2358 = vmul.f32 %v2352, 0.5
        %v2359 = vmul.f32 %v2355, 0.5
        %v2360 = vmul.f32 %v2352, 0.044715
        %v2361 = vmul.f32 %v2355, 0.044715
        %v2362 = vmul.f32 %v2360, %v2352
        %v2363 = vmul.f32 %v2361, %v2355
        %v2364 = vmul.f32 %v2362, %v2352
        %v2365 = vmul.f32 %v2363, %v2355
        %v2366 = vadd.f32 %v2352, %v2364
        %v2367 = vadd.f32 %v2355, %v2365
        %v2368 = vmul.f32 %v2366, 0.7978846
        %v2369 = vmul.f32 %v2367, 0.7978846
        %v2370 = vtanh.pop %v2368
        %v2371 = vtanh.pop %v2369
        %v2372 = vadd.f32 %v2370, 1.0
        %v2373 = vadd.f32 %v2371, 1.0
        %v2374 = vmul.f32 %v2358, %v2372
        %v2375 = vmul.f32 %v2359, %v2373
        %v2376 = vpack.c.bf16 %v2375, %v2374
        %v2377 = vlaneseq
        %v2378 = vshrl.u32 %v2377, 7
        %v2379 = vsub.s32 3, %v2378
        %v2380 = vrot.slane %v1547, %v2379
        %v2389 = vunpack.c.l.b16 %v2293
        %v2390 = vunpack.c.l.b16 %v2294
        %v2391 = vunpack.c.l.b16 %v2295
        %v2392 = vunpack.c.l.b16 %v2296
        %v2393 = vunpack.c.l.b16 %v2297
        %v2394 = vunpack.c.l.b16 %v2298
        %v2395 = vunpack.c.l.b16 %v2299
        %v2396 = vunpack.c.l.b16 %v2300
        %v2397 = vpack.c.b16 %v2390, %v2389
        %v2398 = vpack.c.b16 %v2392, %v2391
        %v2399 = vpack.c.b16 %v2394, %v2393
        %v2400 = vpack.c.b16 %v2396, %v2395
        %v2406 = vsel %vm580, %v2376, 0
        %2408 = vmatprep.subr.bf16.mxu0 0
        %2409 = vmatpush1.bf16.msra.mxu0 0
        %2410 = vmatprep.subr.bf16.mxu0 0
        %2411 = vmatpush1.bf16.msra.mxu0 0
        %2412 = vmatprep.subr.bf16.mxu0 0
        %2413 = vmatpush1.bf16.msra.mxu0 0
        %2414 = vmatprep.subr.bf16.mxu0 0
        %2415 = vmatpush1.bf16.msra.mxu0 0
        %2416 = vmatprep.subr.bf16.mxu0 0
        %2417 = vmatpush1.bf16.msra.mxu0 %v2400
        %2418 = vmatprep.subr.bf16.mxu0 0
        %2419 = vmatpush1.bf16.msra.mxu0 %v2399
        %2420 = vmatprep.subr.bf16.mxu0 0
        %2421 = vmatpush1.bf16.msra.mxu0 %v2398
        %2422 = vmatprep.subr.bf16.mxu0 0
        %2423 = vmatpush1.bf16.msra.mxu0 %v2397
        %2424 = vmatprep.subr.bf16.mxu0 0
        %2425 = vmatpush2.bf16.msra.mxu0 0
        %2426 = vmatprep.subr.bf16.mxu0 0
        %2427 = vmatpush2.bf16.msra.mxu0 0
        %2428 = vmatprep.subr.bf16.mxu0 0
        %2429 = vmatpush2.bf16.msra.mxu0 0
        %2430 = vmatprep.subr.bf16.mxu0 0
        %2431 = vmatpush2.bf16.msra.mxu0 0
        %2432 = vmatprep.subr.bf16.mxu0 0
        %2433 = vmatpush2.bf16.msra.mxu0 0
        %2434 = vmatprep.subr.bf16.mxu0 0
        %2435 = vmatpush2.bf16.msra.mxu0 0
        %2436 = vmatprep.subr.bf16.mxu0 0
        %2437 = vmatpush2.bf16.msra.mxu0 0
        %2438 = vmatprep.subr.bf16.mxu0 0
        %2439 = vmatpush2.bf16.msra.mxu0 0
        %2440 = vmatprep.mubr.bf16.mxu0 0
        %2441 = vmatmul.mubr.bf16.gmra.mxu0 %v2406
        %v2442 = vpop.f32.mrf.mxu0
        %v2443 = vadd.f32 %v2380, %v2442
        %v2444 = vpop.f32.mrf.mxu0
        %v2445 = vpop.f32.mrf.mxu0
        %v2446 = vadd.f32 %v2380, %v2445
        %v2447 = vpop.f32.mrf.mxu0
        %2448 = vdwg.mxu0
        %v2449 = vadd.f32 %v2252, %v2443
        %v2450 = vadd.f32 %v2253, %v2446
        %v2451 = vld [vmem:[%s11] sm:$0x1f]
        %v2452 = vsel %vm630, %v2449, 0.0
        %2453 = vadd.xlane.f32.xlu0 %v2452
        %v2454 = vpop.xlane.xlu0 %2453
        %v2455 = vsel %vm634, %v2450, 0.0
        %2456 = vadd.xlane.f32.xlu0 %v2455
        %v2457 = vpop.xlane.xlu0 %2456
        %v2458 = vmul.f32 %v2454, %v638
        %v2459 = vmul.f32 %v2457, %v638
        %v2460 = vsub.f32 %v2449, %v2458
        %v2461 = vsub.f32 %v2450, %v2459
        %v2462 = vmul.f32 %v2460, %v2460
        %v2463 = vmul.f32 %v2461, %v2461
        %v2464 = vsel %vm630, %v2462, 0.0
        %2465 = vadd.xlane.f32.xlu0 %v2464
        %v2466 = vpop.xlane.xlu0 %2465
        %v2467 = vsel %vm634, %v2463, 0.0
        %2468 = vadd.xlane.f32.xlu0 %v2467
        %v2469 = vpop.xlane.xlu0 %2468
        %v2470 = vmul.f32 %v2466, %v638
        %v2471 = vmul.f32 %v2469, %v638
        %v2472 = vadd.f32 %v2470, 1e-05
        %v2473 = vadd.f32 %v2471, 1e-05
        %v2474 = vrsqrt.pop %v2472
        %v2475 = vrsqrt.pop %v2473
        %v2476 = vmul.f32 %v2460, %v2474
        %v2477 = vmul.f32 %v2461, %v2475
        %v2478 = vlaneseq
        %v2479 = vshrl.u32 %v2478, 7
        %v2480 = vsub.s32 0, %v2479
        %v2481 = vrot.slane %v2451, %v2480
        %v2482 = vmul.f32 %v2476, %v2481
        %v2483 = vmul.f32 %v2477, %v2481
        %v2484 = vlaneseq
        %v2485 = vshrl.u32 %v2484, 7
        %v2486 = vsub.s32 1, %v2485
        %v2487 = vrot.slane %v2451, %v2486
        %v2488 = vadd.f32 %v2482, %v2487
        %v2489 = vadd.f32 %v2483, %v2487
        %v2490 = vld [vmem:[%s466] sm:$0xff]
        %v2491 = vlaneseq
        %v2492 = vshrl.u32 %v2491, 7
        %v2493 = vlaneseq
        %v2494 = vand.u32 %v2493, 127
        %vm2495 = vcmp.gt.s32.totalorder %v2494, %v2492
        %v2496 = vsel %vm2495, -1e+09, 0.0
        %v2497 = vld [vmem:[%s469] sm:$0x1]
        %v2498 = vsub.f32 1.0, %v2497
        %v2499 = vmul.f32 %v2498, -1e+09
        %v2501 = vlaneseq
        %v2502 = vshrl.u32 %v2501, 7
        %v2503 = vsub.s32 0, %v2502
        %v2504 = vrot.slane %v2499, %v2503
        %v2506 = vadd.f32 %v2496, %v2504
        %v2507 = vld [vmem:[%s8] sm:$0xff]
        %v2508 = vld [vmem:[%s8 + $0x8] sm:$0xf]
        %v2509 = vld [vmem:[%s8 + $0xc] sm:$0xff]
        %v2510 = vld [vmem:[%s8 + $0x14] sm:$0xf]
        %v2511 = vld [vmem:[%s8 + $0x18] sm:$0xff]
        %v2512 = vld [vmem:[%s8 + $0x20] sm:$0xf]
        %v2513 = vld [vmem:[%s8 + $0x24] sm:$0xff]
        %v2514 = vld [vmem:[%s8 + $0x2c] sm:$0xf]
        %v2515 = vld [vmem:[%s10] sm:$0xff]
        %v2516 = vld [vmem:[%s10 + $0x8] sm:$0x1f]
        %v2517 = vsel %vm630, %v2490, 0.0
        %2518 = vadd.xlane.f32.xlu0 %v2517
        %v2519 = vpop.xlane.xlu0 %2518
        %v2520 = vmul.f32 %v2519, %v638
        %v2521 = vsub.f32 %v2490, %v2520
        %v2522 = vmul.f32 %v2521, %v2521
        %v2523 = vsel %vm630, %v2522, 0.0
        %2524 = vadd.xlane.f32.xlu0 %v2523
        %v2525 = vpop.xlane.xlu0 %2524
        %v2526 = vmul.f32 %v2525, %v638
        %v2527 = vadd.f32 %v2526, 1e-05
        %v2528 = vrsqrt.pop %v2527
        %v2529 = vmul.f32 %v2521, %v2528
        %v2530 = vlaneseq
        %v2531 = vshrl.u32 %v2530, 7
        %v2532 = vsub.s32 5, %v2531
        %v2533 = vrot.slane %v2515, %v2532
        %v2534 = vmul.f32 %v2529, %v2533
        %v2535 = vlaneseq
        %v2536 = vshrl.u32 %v2535, 7
        %v2537 = vsub.s32 6, %v2536
        %v2538 = vrot.slane %v2515, %v2537
        %v2539 = vadd.f32 %v2534, %v2538
        %v2540 = vpack.c.bf16 %v2539, %v2539
        %v2541 = vlaneseq
        %v2542 = vshrl.u32 %v2541, 7
        %v2543 = vsub.s32 0, %v2542
        %v2544 = vrot.slane %v2515, %v2543
        %v2549 = vunpack.c.l.b16 %v2507
        %v2550 = vunpack.c.l.b16 %v2509
        %v2551 = vunpack.c.l.b16 %v2511
        %v2552 = vunpack.c.l.b16 %v2513
        %v2553 = vpack.c.b16 %v2550, %v2549
        %v2554 = vpack.c.b16 %v2552, %v2551
        %v2558 = vsel %vm630, %v2540, 0
        %2560 = vmatprep.subr.bf16.mxu0 0
        %2561 = vmatpush1.bf16.msra.mxu0 0
        %2562 = vmatprep.subr.bf16.mxu0 0
        %2563 = vmatpush1.bf16.msra.mxu0 0
        %2564 = vmatprep.subr.bf16.mxu0 0
        %2565 = vmatpush1.bf16.msra.mxu0 0
        %2566 = vmatprep.subr.bf16.mxu0 0
        %2567 = vmatpush1.bf16.msra.mxu0 0
        %2568 = vmatprep.subr.bf16.mxu0 0
        %2569 = vmatpush1.bf16.msra.mxu0 0
        %2570 = vmatprep.subr.bf16.mxu0 0
        %2571 = vmatpush1.bf16.msra.mxu0 0
        %2572 = vmatprep.subr.bf16.mxu0 0
        %2573 = vmatpush1.bf16.msra.mxu0 %v2554
        %2574 = vmatprep.subr.bf16.mxu0 0
        %2575 = vmatpush1.bf16.msra.mxu0 %v2553
        %2576 = vmatprep.subr.bf16.mxu0 0
        %2577 = vmatpush2.bf16.msra.mxu0 0
        %2578 = vmatprep.subr.bf16.mxu0 0
        %2579 = vmatpush2.bf16.msra.mxu0 0
        %2580 = vmatprep.subr.bf16.mxu0 0
        %2581 = vmatpush2.bf16.msra.mxu0 0
        %2582 = vmatprep.subr.bf16.mxu0 0
        %2583 = vmatpush2.bf16.msra.mxu0 0
        %2584 = vmatprep.subr.bf16.mxu0 0
        %2585 = vmatpush2.bf16.msra.mxu0 0
        %2586 = vmatprep.subr.bf16.mxu0 0
        %2587 = vmatpush2.bf16.msra.mxu0 0
        %2588 = vmatprep.subr.bf16.mxu0 0
        %2589 = vmatpush2.bf16.msra.mxu0 0
        %2590 = vmatprep.subr.bf16.mxu0 0
        %2591 = vmatpush2.bf16.msra.mxu0 0
        %2592 = vmatprep.mubr.bf16.mxu0 0
        %2593 = vmatmul.mubr.bf16.gmra.mxu0 %v2558
        %v2594 = vpop.f32.mrf.mxu0
        %v2595 = vadd.f32 %v2544, %v2594
        %v2596 = vpop.f32.mrf.mxu0
        %v2597 = vpop.f32.mrf.mxu0
        %v2598 = vpop.f32.mrf.mxu0
        %2599 = vdwg.mxu0
        %2601 = vrot.lane.b32.xlu0 %v2595, 120
        %v2602 = vpop.permute.xlu0 %2601
        %2604 = vrot.lane.b32.xlu0 %v2595, 112
        %v2605 = vpop.permute.xlu0 %2604
        %2607 = vrot.lane.b32.xlu0 %v2595, 104
        %v2608 = vpop.permute.xlu0 %2607
        %v2610 = vpack.c.bf16 %v2595, %v2595
        %v2611 = vpack.c.bf16 %v2602, %v2602
        %v2612 = vpack.c.bf16 %v2605, %v2605
        %v2613 = vpack.c.bf16 %v2608, %v2608
        %2615 = vrot.lane.b32.xlu0 %v2610, 96
        %v2616 = vpop.permute.xlu0 %2615
        %v2618 = vsel %vm759, %v2610, 0
        %v2621 = vsel %vm759, %v2616, 0
        %2623 = vmatprep.subr.bf16.mxu0 0
        %2624 = vmatpush1.bf16.xpose.msra.mxu0 0
        %2625 = vmatprep.subr.bf16.mxu0 0
        %2626 = vmatpush1.bf16.xpose.msra.mxu0 0
        %2627 = vmatprep.subr.bf16.mxu0 0
        %2628 = vmatpush1.bf16.xpose.msra.mxu0 0
        %2629 = vmatprep.subr.bf16.mxu0 0
        %2630 = vmatpush1.bf16.xpose.msra.mxu0 0
        %2631 = vmatprep.subr.bf16.mxu0 0
        %2632 = vmatpush1.bf16.xpose.msra.mxu0 0
        %2633 = vmatprep.subr.bf16.mxu0 0
        %2634 = vmatpush1.bf16.xpose.msra.mxu0 0
        %2635 = vmatprep.subr.bf16.mxu0 0
        %2636 = vmatpush1.bf16.xpose.msra.mxu0 0
        %2637 = vmatprep.subr.bf16.mxu0 0
        %2638 = vmatpush1.bf16.xpose.msra.mxu0 %v2621
        %2639 = vmatprep.subr.bf16.mxu0 0
        %2640 = vmatpush2.bf16.xpose.msra.mxu0 0
        %2641 = vmatprep.subr.bf16.mxu0 0
        %2642 = vmatpush2.bf16.xpose.msra.mxu0 0
        %2643 = vmatprep.subr.bf16.mxu0 0
        %2644 = vmatpush2.bf16.xpose.msra.mxu0 0
        %2645 = vmatprep.subr.bf16.mxu0 0
        %2646 = vmatpush2.bf16.xpose.msra.mxu0 0
        %2647 = vmatprep.subr.bf16.mxu0 0
        %2648 = vmatpush2.bf16.xpose.msra.mxu0 0
        %2649 = vmatprep.subr.bf16.mxu0 0
        %2650 = vmatpush2.bf16.xpose.msra.mxu0 0
        %2651 = vmatprep.subr.bf16.mxu0 0
        %2652 = vmatpush2.bf16.xpose.msra.mxu0 0
        %2653 = vmatprep.subr.bf16.mxu0 0
        %2654 = vmatpush2.bf16.xpose.msra.mxu0 0
        %2655 = vmatprep.mubr.bf16.mxu0 0
        %2656 = vmatmul.mubr.bf16.gmra.mxu0 %v2618
        %v2657 = vpop.f32.mrf.mxu0
        %v2658 = vadd.f32 0.0, %v2657
        %v2659 = vpop.f32.mrf.mxu0
        %v2660 = vpop.f32.mrf.mxu0
        %v2661 = vpop.f32.mrf.mxu0
        %2662 = vdwg.mxu0
        %2664 = vrot.lane.b32.xlu0 %v2611, 96
        %v2665 = vpop.permute.xlu0 %2664
        %v2667 = vsel %vm759, %v2611, 0
        %v2670 = vsel %vm759, %v2665, 0
        %2672 = vmatprep.subr.bf16.mxu0 0
        %2673 = vmatpush1.bf16.xpose.msra.mxu0 0
        %2674 = vmatprep.subr.bf16.mxu0 0
        %2675 = vmatpush1.bf16.xpose.msra.mxu0 0
        %2676 = vmatprep.subr.bf16.mxu0 0
        %2677 = vmatpush1.bf16.xpose.msra.mxu0 0
        %2678 = vmatprep.subr.bf16.mxu0 0
        %2679 = vmatpush1.bf16.xpose.msra.mxu0 0
        %2680 = vmatprep.subr.bf16.mxu0 0
        %2681 = vmatpush1.bf16.xpose.msra.mxu0 0
        %2682 = vmatprep.subr.bf16.mxu0 0
        %2683 = vmatpush1.bf16.xpose.msra.mxu0 0
        %2684 = vmatprep.subr.bf16.mxu0 0
        %2685 = vmatpush1.bf16.xpose.msra.mxu0 0
        %2686 = vmatprep.subr.bf16.mxu0 0
        %2687 = vmatpush1.bf16.xpose.msra.mxu0 %v2670
        %2688 = vmatprep.subr.bf16.mxu0 0
        %2689 = vmatpush2.bf16.xpose.msra.mxu0 0
        %2690 = vmatprep.subr.bf16.mxu0 0
        %2691 = vmatpush2.bf16.xpose.msra.mxu0 0
        %2692 = vmatprep.subr.bf16.mxu0 0
        %2693 = vmatpush2.bf16.xpose.msra.mxu0 0
        %2694 = vmatprep.subr.bf16.mxu0 0
        %2695 = vmatpush2.bf16.xpose.msra.mxu0 0
        %2696 = vmatprep.subr.bf16.mxu0 0
        %2697 = vmatpush2.bf16.xpose.msra.mxu0 0
        %2698 = vmatprep.subr.bf16.mxu0 0
        %2699 = vmatpush2.bf16.xpose.msra.mxu0 0
        %2700 = vmatprep.subr.bf16.mxu0 0
        %2701 = vmatpush2.bf16.xpose.msra.mxu0 0
        %2702 = vmatprep.subr.bf16.mxu0 0
        %2703 = vmatpush2.bf16.xpose.msra.mxu0 0
        %2704 = vmatprep.mubr.bf16.mxu0 0
        %2705 = vmatmul.mubr.bf16.gmra.mxu0 %v2667
        %v2706 = vpop.f32.mrf.mxu0
        %v2707 = vadd.f32 0.0, %v2706
        %v2708 = vpop.f32.mrf.mxu0
        %v2709 = vpop.f32.mrf.mxu0
        %v2710 = vpop.f32.mrf.mxu0
        %2711 = vdwg.mxu0
        %2713 = vrot.lane.b32.xlu0 %v2612, 96
        %v2714 = vpop.permute.xlu0 %2713
        %v2716 = vsel %vm759, %v2612, 0
        %v2719 = vsel %vm759, %v2714, 0
        %2721 = vmatprep.subr.bf16.mxu0 0
        %2722 = vmatpush1.bf16.xpose.msra.mxu0 0
        %2723 = vmatprep.subr.bf16.mxu0 0
        %2724 = vmatpush1.bf16.xpose.msra.mxu0 0
        %2725 = vmatprep.subr.bf16.mxu0 0
        %2726 = vmatpush1.bf16.xpose.msra.mxu0 0
        %2727 = vmatprep.subr.bf16.mxu0 0
        %2728 = vmatpush1.bf16.xpose.msra.mxu0 0
        %2729 = vmatprep.subr.bf16.mxu0 0
        %2730 = vmatpush1.bf16.xpose.msra.mxu0 0
        %2731 = vmatprep.subr.bf16.mxu0 0
        %2732 = vmatpush1.bf16.xpose.msra.mxu0 0
        %2733 = vmatprep.subr.bf16.mxu0 0
        %2734 = vmatpush1.bf16.xpose.msra.mxu0 0
        %2735 = vmatprep.subr.bf16.mxu0 0
        %2736 = vmatpush1.bf16.xpose.msra.mxu0 %v2719
        %2737 = vmatprep.subr.bf16.mxu0 0
        %2738 = vmatpush2.bf16.xpose.msra.mxu0 0
        %2739 = vmatprep.subr.bf16.mxu0 0
        %2740 = vmatpush2.bf16.xpose.msra.mxu0 0
        %2741 = vmatprep.subr.bf16.mxu0 0
        %2742 = vmatpush2.bf16.xpose.msra.mxu0 0
        %2743 = vmatprep.subr.bf16.mxu0 0
        %2744 = vmatpush2.bf16.xpose.msra.mxu0 0
        %2745 = vmatprep.subr.bf16.mxu0 0
        %2746 = vmatpush2.bf16.xpose.msra.mxu0 0
        %2747 = vmatprep.subr.bf16.mxu0 0
        %2748 = vmatpush2.bf16.xpose.msra.mxu0 0
        %2749 = vmatprep.subr.bf16.mxu0 0
        %2750 = vmatpush2.bf16.xpose.msra.mxu0 0
        %2751 = vmatprep.subr.bf16.mxu0 0
        %2752 = vmatpush2.bf16.xpose.msra.mxu0 0
        %2753 = vmatprep.mubr.bf16.mxu0 0
        %2754 = vmatmul.mubr.bf16.gmra.mxu0 %v2716
        %v2755 = vpop.f32.mrf.mxu0
        %v2756 = vadd.f32 0.0, %v2755
        %v2757 = vpop.f32.mrf.mxu0
        %v2758 = vpop.f32.mrf.mxu0
        %v2759 = vpop.f32.mrf.mxu0
        %2760 = vdwg.mxu0
        %2762 = vrot.lane.b32.xlu0 %v2613, 96
        %v2763 = vpop.permute.xlu0 %2762
        %v2765 = vsel %vm759, %v2613, 0
        %v2768 = vsel %vm759, %v2763, 0
        %2770 = vmatprep.subr.bf16.mxu0 0
        %2771 = vmatpush1.bf16.xpose.msra.mxu0 0
        %2772 = vmatprep.subr.bf16.mxu0 0
        %2773 = vmatpush1.bf16.xpose.msra.mxu0 0
        %2774 = vmatprep.subr.bf16.mxu0 0
        %2775 = vmatpush1.bf16.xpose.msra.mxu0 0
        %2776 = vmatprep.subr.bf16.mxu0 0
        %2777 = vmatpush1.bf16.xpose.msra.mxu0 0
        %2778 = vmatprep.subr.bf16.mxu0 0
        %2779 = vmatpush1.bf16.xpose.msra.mxu0 0
        %2780 = vmatprep.subr.bf16.mxu0 0
        %2781 = vmatpush1.bf16.xpose.msra.mxu0 0
        %2782 = vmatprep.subr.bf16.mxu0 0
        %2783 = vmatpush1.bf16.xpose.msra.mxu0 0
        %2784 = vmatprep.subr.bf16.mxu0 0
        %2785 = vmatpush1.bf16.xpose.msra.mxu0 %v2768
        %2786 = vmatprep.subr.bf16.mxu0 0
        %2787 = vmatpush2.bf16.xpose.msra.mxu0 0
        %2788 = vmatprep.subr.bf16.mxu0 0
        %2789 = vmatpush2.bf16.xpose.msra.mxu0 0
        %2790 = vmatprep.subr.bf16.mxu0 0
        %2791 = vmatpush2.bf16.xpose.msra.mxu0 0
        %2792 = vmatprep.subr.bf16.mxu0 0
        %2793 = vmatpush2.bf16.xpose.msra.mxu0 0
        %2794 = vmatprep.subr.bf16.mxu0 0
        %2795 = vmatpush2.bf16.xpose.msra.mxu0 0
        %2796 = vmatprep.subr.bf16.mxu0 0
        %2797 = vmatpush2.bf16.xpose.msra.mxu0 0
        %2798 = vmatprep.subr.bf16.mxu0 0
        %2799 = vmatpush2.bf16.xpose.msra.mxu0 0
        %2800 = vmatprep.subr.bf16.mxu0 0
        %2801 = vmatpush2.bf16.xpose.msra.mxu0 0
        %2802 = vmatprep.mubr.bf16.mxu0 0
        %2803 = vmatmul.mubr.bf16.gmra.mxu0 %v2765
        %v2804 = vpop.f32.mrf.mxu0
        %v2805 = vadd.f32 0.0, %v2804
        %v2806 = vpop.f32.mrf.mxu0
        %v2807 = vpop.f32.mrf.mxu0
        %v2808 = vpop.f32.mrf.mxu0
        %2809 = vdwg.mxu0
        %v2810 = vmul.f32 %v2658, 0.35355338
        %v2811 = vmul.f32 %v2707, 0.35355338
        %v2812 = vmul.f32 %v2756, 0.35355338
        %v2813 = vmul.f32 %v2805, 0.35355338
        %v2814 = vadd.f32 %v2810, %v2506
        %v2815 = vadd.f32 %v2811, %v2506
        %v2816 = vadd.f32 %v2812, %v2506
        %v2817 = vadd.f32 %v2813, %v2506
        %v2818 = vsel %vm759, %v2814, -inf
        %2819 = vmax.xlane.f32.xlu0 %v2818
        %v2820 = vpop.xlane.xlu0 %2819
        %v2821 = vsel %vm759, %v2815, -inf
        %2822 = vmax.xlane.f32.xlu0 %v2821
        %v2823 = vpop.xlane.xlu0 %2822
        %v2824 = vsel %vm759, %v2816, -inf
        %2825 = vmax.xlane.f32.xlu0 %v2824
        %v2826 = vpop.xlane.xlu0 %2825
        %v2827 = vsel %vm759, %v2817, -inf
        %2828 = vmax.xlane.f32.xlu0 %v2827
        %v2829 = vpop.xlane.xlu0 %2828
        %v2830 = vsub.f32 %v2814, %v2820
        %v2831 = vsub.f32 %v2815, %v2823
        %v2832 = vsub.f32 %v2816, %v2826
        %v2833 = vsub.f32 %v2817, %v2829
        %v2834 = vmul.f32 %v2830, 1.442695
        %v2835 = vpow.pop %v2834
        %v2836 = vmul.f32 %v2831, 1.442695
        %v2837 = vpow.pop %v2836
        %v2838 = vmul.f32 %v2832, 1.442695
        %v2839 = vpow.pop %v2838
        %v2840 = vmul.f32 %v2833, 1.442695
        %v2841 = vpow.pop %v2840
        %v2842 = vsel %vm759, %v2835, 0.0
        %2843 = vadd.xlane.f32.xlu0 %v2842
        %v2844 = vpop.xlane.xlu0 %2843
        %v2845 = vsel %vm759, %v2837, 0.0
        %2846 = vadd.xlane.f32.xlu0 %v2845
        %v2847 = vpop.xlane.xlu0 %2846
        %v2848 = vsel %vm759, %v2839, 0.0
        %2849 = vadd.xlane.f32.xlu0 %v2848
        %v2850 = vpop.xlane.xlu0 %2849
        %v2851 = vsel %vm759, %v2841, 0.0
        %2852 = vadd.xlane.f32.xlu0 %v2851
        %v2853 = vpop.xlane.xlu0 %2852
        %v2854 = vpack.c.bf16 %v2835, %v2835
        %v2855 = vpack.c.bf16 %v2837, %v2837
        %v2856 = vpack.c.bf16 %v2839, %v2839
        %v2857 = vpack.c.bf16 %v2841, %v2841
        %2858 = vrot.lane.b32.xlu0 %v2610, 64
        %v2859 = vpop.permute.xlu0 %2858
        %v2861 = vsel %vm759, %v2854, 0
        %vm2863 = vcmask 1043456
        %v2865 = vsel %vm2863, %v2859, 0
        %2867 = vmatprep.subr.bf16.mxu0 0
        %2868 = vmatpush1.bf16.msra.mxu0 0
        %2869 = vmatprep.subr.bf16.mxu0 0
        %2870 = vmatpush1.bf16.msra.mxu0 0
        %2871 = vmatprep.subr.bf16.mxu0 0
        %2872 = vmatpush1.bf16.msra.mxu0 0
        %2873 = vmatprep.subr.bf16.mxu0 0
        %2874 = vmatpush1.bf16.msra.mxu0 0
        %2875 = vmatprep.subr.bf16.mxu0 0
        %2876 = vmatpush1.bf16.msra.mxu0 0
        %2877 = vmatprep.subr.bf16.mxu0 0
        %2878 = vmatpush1.bf16.msra.mxu0 0
        %2879 = vmatprep.subr.bf16.mxu0 0
        %2880 = vmatpush1.bf16.msra.mxu0 0
        %2881 = vmatprep.subr.bf16.mxu0 0
        %2882 = vmatpush1.bf16.msra.mxu0 %v2865
        %2883 = vmatprep.subr.bf16.mxu0 0
        %2884 = vmatpush2.bf16.msra.mxu0 0
        %2885 = vmatprep.subr.bf16.mxu0 0
        %2886 = vmatpush2.bf16.msra.mxu0 0
        %2887 = vmatprep.subr.bf16.mxu0 0
        %2888 = vmatpush2.bf16.msra.mxu0 0
        %2889 = vmatprep.subr.bf16.mxu0 0
        %2890 = vmatpush2.bf16.msra.mxu0 0
        %2891 = vmatprep.subr.bf16.mxu0 0
        %2892 = vmatpush2.bf16.msra.mxu0 0
        %2893 = vmatprep.subr.bf16.mxu0 0
        %2894 = vmatpush2.bf16.msra.mxu0 0
        %2895 = vmatprep.subr.bf16.mxu0 0
        %2896 = vmatpush2.bf16.msra.mxu0 0
        %2897 = vmatprep.subr.bf16.mxu0 0
        %2898 = vmatpush2.bf16.msra.mxu0 0
        %2899 = vmatprep.mubr.bf16.mxu0 0
        %2900 = vmatmul.mubr.bf16.gmra.mxu0 %v2861
        %v2901 = vpop.f32.mrf.mxu0
        %v2902 = vadd.f32 0.0, %v2901
        %v2903 = vpop.f32.mrf.mxu0
        %v2904 = vpop.f32.mrf.mxu0
        %v2905 = vpop.f32.mrf.mxu0
        %2906 = vdwg.mxu0
        %2907 = vrot.lane.b32.xlu0 %v2611, 64
        %v2908 = vpop.permute.xlu0 %2907
        %v2910 = vsel %vm759, %v2855, 0
        %v2913 = vsel %vm2863, %v2908, 0
        %2915 = vmatprep.subr.bf16.mxu0 0
        %2916 = vmatpush1.bf16.msra.mxu0 0
        %2917 = vmatprep.subr.bf16.mxu0 0
        %2918 = vmatpush1.bf16.msra.mxu0 0
        %2919 = vmatprep.subr.bf16.mxu0 0
        %2920 = vmatpush1.bf16.msra.mxu0 0
        %2921 = vmatprep.subr.bf16.mxu0 0
        %2922 = vmatpush1.bf16.msra.mxu0 0
        %2923 = vmatprep.subr.bf16.mxu0 0
        %2924 = vmatpush1.bf16.msra.mxu0 0
        %2925 = vmatprep.subr.bf16.mxu0 0
        %2926 = vmatpush1.bf16.msra.mxu0 0
        %2927 = vmatprep.subr.bf16.mxu0 0
        %2928 = vmatpush1.bf16.msra.mxu0 0
        %2929 = vmatprep.subr.bf16.mxu0 0
        %2930 = vmatpush1.bf16.msra.mxu0 %v2913
        %2931 = vmatprep.subr.bf16.mxu0 0
        %2932 = vmatpush2.bf16.msra.mxu0 0
        %2933 = vmatprep.subr.bf16.mxu0 0
        %2934 = vmatpush2.bf16.msra.mxu0 0
        %2935 = vmatprep.subr.bf16.mxu0 0
        %2936 = vmatpush2.bf16.msra.mxu0 0
        %2937 = vmatprep.subr.bf16.mxu0 0
        %2938 = vmatpush2.bf16.msra.mxu0 0
        %2939 = vmatprep.subr.bf16.mxu0 0
        %2940 = vmatpush2.bf16.msra.mxu0 0
        %2941 = vmatprep.subr.bf16.mxu0 0
        %2942 = vmatpush2.bf16.msra.mxu0 0
        %2943 = vmatprep.subr.bf16.mxu0 0
        %2944 = vmatpush2.bf16.msra.mxu0 0
        %2945 = vmatprep.subr.bf16.mxu0 0
        %2946 = vmatpush2.bf16.msra.mxu0 0
        %2947 = vmatprep.mubr.bf16.mxu0 0
        %2948 = vmatmul.mubr.bf16.gmra.mxu0 %v2910
        %v2949 = vpop.f32.mrf.mxu0
        %v2950 = vadd.f32 0.0, %v2949
        %v2951 = vpop.f32.mrf.mxu0
        %v2952 = vpop.f32.mrf.mxu0
        %v2953 = vpop.f32.mrf.mxu0
        %2954 = vdwg.mxu0
        %2955 = vrot.lane.b32.xlu0 %v2612, 64
        %v2956 = vpop.permute.xlu0 %2955
        %v2958 = vsel %vm759, %v2856, 0
        %v2961 = vsel %vm2863, %v2956, 0
        %2963 = vmatprep.subr.bf16.mxu0 0
        %2964 = vmatpush1.bf16.msra.mxu0 0
        %2965 = vmatprep.subr.bf16.mxu0 0
        %2966 = vmatpush1.bf16.msra.mxu0 0
        %2967 = vmatprep.subr.bf16.mxu0 0
        %2968 = vmatpush1.bf16.msra.mxu0 0
        %2969 = vmatprep.subr.bf16.mxu0 0
        %2970 = vmatpush1.bf16.msra.mxu0 0
        %2971 = vmatprep.subr.bf16.mxu0 0
        %2972 = vmatpush1.bf16.msra.mxu0 0
        %2973 = vmatprep.subr.bf16.mxu0 0
        %2974 = vmatpush1.bf16.msra.mxu0 0
        %2975 = vmatprep.subr.bf16.mxu0 0
        %2976 = vmatpush1.bf16.msra.mxu0 0
        %2977 = vmatprep.subr.bf16.mxu0 0
        %2978 = vmatpush1.bf16.msra.mxu0 %v2961
        %2979 = vmatprep.subr.bf16.mxu0 0
        %2980 = vmatpush2.bf16.msra.mxu0 0
        %2981 = vmatprep.subr.bf16.mxu0 0
        %2982 = vmatpush2.bf16.msra.mxu0 0
        %2983 = vmatprep.subr.bf16.mxu0 0
        %2984 = vmatpush2.bf16.msra.mxu0 0
        %2985 = vmatprep.subr.bf16.mxu0 0
        %2986 = vmatpush2.bf16.msra.mxu0 0
        %2987 = vmatprep.subr.bf16.mxu0 0
        %2988 = vmatpush2.bf16.msra.mxu0 0
        %2989 = vmatprep.subr.bf16.mxu0 0
        %2990 = vmatpush2.bf16.msra.mxu0 0
        %2991 = vmatprep.subr.bf16.mxu0 0
        %2992 = vmatpush2.bf16.msra.mxu0 0
        %2993 = vmatprep.subr.bf16.mxu0 0
        %2994 = vmatpush2.bf16.msra.mxu0 0
        %2995 = vmatprep.mubr.bf16.mxu0 0
        %2996 = vmatmul.mubr.bf16.gmra.mxu0 %v2958
        %v2997 = vpop.f32.mrf.mxu0
        %v2998 = vadd.f32 0.0, %v2997
        %v2999 = vpop.f32.mrf.mxu0
        %v3000 = vpop.f32.mrf.mxu0
        %v3001 = vpop.f32.mrf.mxu0
        %3002 = vdwg.mxu0
        %3003 = vrot.lane.b32.xlu0 %v2613, 64
        %v3004 = vpop.permute.xlu0 %3003
        %v3006 = vsel %vm759, %v2857, 0
        %v3009 = vsel %vm2863, %v3004, 0
        %3011 = vmatprep.subr.bf16.mxu0 0
        %3012 = vmatpush1.bf16.msra.mxu0 0
        %3013 = vmatprep.subr.bf16.mxu0 0
        %3014 = vmatpush1.bf16.msra.mxu0 0
        %3015 = vmatprep.subr.bf16.mxu0 0
        %3016 = vmatpush1.bf16.msra.mxu0 0
        %3017 = vmatprep.subr.bf16.mxu0 0
        %3018 = vmatpush1.bf16.msra.mxu0 0
        %3019 = vmatprep.subr.bf16.mxu0 0
        %3020 = vmatpush1.bf16.msra.mxu0 0
        %3021 = vmatprep.subr.bf16.mxu0 0
        %3022 = vmatpush1.bf16.msra.mxu0 0
        %3023 = vmatprep.subr.bf16.mxu0 0
        %3024 = vmatpush1.bf16.msra.mxu0 0
        %3025 = vmatprep.subr.bf16.mxu0 0
        %3026 = vmatpush1.bf16.msra.mxu0 %v3009
        %3027 = vmatprep.subr.bf16.mxu0 0
        %3028 = vmatpush2.bf16.msra.mxu0 0
        %3029 = vmatprep.subr.bf16.mxu0 0
        %3030 = vmatpush2.bf16.msra.mxu0 0
        %3031 = vmatprep.subr.bf16.mxu0 0
        %3032 = vmatpush2.bf16.msra.mxu0 0
        %3033 = vmatprep.subr.bf16.mxu0 0
        %3034 = vmatpush2.bf16.msra.mxu0 0
        %3035 = vmatprep.subr.bf16.mxu0 0
        %3036 = vmatpush2.bf16.msra.mxu0 0
        %3037 = vmatprep.subr.bf16.mxu0 0
        %3038 = vmatpush2.bf16.msra.mxu0 0
        %3039 = vmatprep.subr.bf16.mxu0 0
        %3040 = vmatpush2.bf16.msra.mxu0 0
        %3041 = vmatprep.subr.bf16.mxu0 0
        %3042 = vmatpush2.bf16.msra.mxu0 0
        %3043 = vmatprep.mubr.bf16.mxu0 0
        %3044 = vmatmul.mubr.bf16.gmra.mxu0 %v3006
        %v3045 = vpop.f32.mrf.mxu0
        %v3046 = vadd.f32 0.0, %v3045
        %v3047 = vpop.f32.mrf.mxu0
        %v3048 = vpop.f32.mrf.mxu0
        %v3049 = vpop.f32.mrf.mxu0
        %3050 = vdwg.mxu0
        %v3051 = vrcp.pop %v2844
        %v3052 = vrcp.pop %v2847
        %v3053 = vrcp.pop %v2850
        %v3054 = vrcp.pop %v2853
        %v3055 = vmul.f32 %v2902, %v3051
        %v3056 = vmul.f32 %v2950, %v3052
        %v3057 = vmul.f32 %v2998, %v3053
        %v3058 = vmul.f32 %v3046, %v3054
        %3060 = vrot.lane.b32.xlu0 %v3056, 8
        %v3061 = vpop.permute.xlu0 %3060
        %3064 = vrot.lane.b32.xlu0 %v3057, 16
        %v3065 = vpop.permute.xlu0 %3064
        %3068 = vrot.lane.b32.xlu0 %v3058, 24
        %v3069 = vpop.permute.xlu0 %3068
        %v3071 = vsel %vm759, %v3055, %v3061
        %v3072 = vsel %vm1282, %v3071, %v3065
        %v3073 = vsel %vm1285, %v3072, %v3069
        %v3074 = vpack.c.bf16 %v3073, %v3073
        %v3075 = vlaneseq
        %v3076 = vshrl.u32 %v3075, 7
        %v3077 = vsub.s32 1, %v3076
        %v3078 = vrot.slane %v2515, %v3077
        %3079 = vrot.lane.b32.xlu0 %v2553, 32
        %v3080 = vpop.permute.xlu0 %3079
        %3081 = vrot.lane.b32.xlu0 %v2554, 32
        %v3082 = vpop.permute.xlu0 %3081
        %v3086 = vsel %vm630, %v3074, 0
        %3088 = vmatprep.subr.bf16.mxu0 0
        %3089 = vmatpush1.bf16.msra.mxu0 0
        %3090 = vmatprep.subr.bf16.mxu0 0
        %3091 = vmatpush1.bf16.msra.mxu0 0
        %3092 = vmatprep.subr.bf16.mxu0 0
        %3093 = vmatpush1.bf16.msra.mxu0 0
        %3094 = vmatprep.subr.bf16.mxu0 0
        %3095 = vmatpush1.bf16.msra.mxu0 0
        %3096 = vmatprep.subr.bf16.mxu0 0
        %3097 = vmatpush1.bf16.msra.mxu0 0
        %3098 = vmatprep.subr.bf16.mxu0 0
        %3099 = vmatpush1.bf16.msra.mxu0 0
        %3100 = vmatprep.subr.bf16.mxu0 0
        %3101 = vmatpush1.bf16.msra.mxu0 %v3082
        %3102 = vmatprep.subr.bf16.mxu0 0
        %3103 = vmatpush1.bf16.msra.mxu0 %v3080
        %3104 = vmatprep.subr.bf16.mxu0 0
        %3105 = vmatpush2.bf16.msra.mxu0 0
        %3106 = vmatprep.subr.bf16.mxu0 0
        %3107 = vmatpush2.bf16.msra.mxu0 0
        %3108 = vmatprep.subr.bf16.mxu0 0
        %3109 = vmatpush2.bf16.msra.mxu0 0
        %3110 = vmatprep.subr.bf16.mxu0 0
        %3111 = vmatpush2.bf16.msra.mxu0 0
        %3112 = vmatprep.subr.bf16.mxu0 0
        %3113 = vmatpush2.bf16.msra.mxu0 0
        %3114 = vmatprep.subr.bf16.mxu0 0
        %3115 = vmatpush2.bf16.msra.mxu0 0
        %3116 = vmatprep.subr.bf16.mxu0 0
        %3117 = vmatpush2.bf16.msra.mxu0 0
        %3118 = vmatprep.subr.bf16.mxu0 0
        %3119 = vmatpush2.bf16.msra.mxu0 0
        %3120 = vmatprep.mubr.bf16.mxu0 0
        %3121 = vmatmul.mubr.bf16.gmra.mxu0 %v3086
        %v3122 = vpop.f32.mrf.mxu0
        %v3123 = vadd.f32 %v3078, %v3122
        %v3124 = vpop.f32.mrf.mxu0
        %v3125 = vpop.f32.mrf.mxu0
        %v3126 = vpop.f32.mrf.mxu0
        %3127 = vdwg.mxu0
        %v3128 = vadd.f32 %v2490, %v3123
        %v3129 = vsel %vm630, %v3128, 0.0
        %3130 = vadd.xlane.f32.xlu0 %v3129
        %v3131 = vpop.xlane.xlu0 %3130
        %v3132 = vmul.f32 %v3131, %v638
        %v3133 = vsub.f32 %v3128, %v3132
        %v3134 = vmul.f32 %v3133, %v3133
        %v3135 = vsel %vm630, %v3134, 0.0
        %3136 = vadd.xlane.f32.xlu0 %v3135
        %v3137 = vpop.xlane.xlu0 %3136
        %v3138 = vmul.f32 %v3137, %v638
        %v3139 = vadd.f32 %v3138, 1e-05
        %v3140 = vrsqrt.pop %v3139
        %v3141 = vmul.f32 %v3133, %v3140
        %v3142 = vlaneseq
        %v3143 = vshrl.u32 %v3142, 7
        %v3144 = vsub.s32 7, %v3143
        %v3145 = vrot.slane %v2515, %v3144
        %v3146 = vmul.f32 %v3141, %v3145
        %v3147 = vlaneseq
        %v3148 = vshrl.u32 %v3147, 7
        %v3149 = vsub.s32 0, %v3148
        %v3150 = vrot.slane %v2516, %v3149
        %v3151 = vadd.f32 %v3146, %v3150
        %v3152 = vpack.c.bf16 %v3151, %v3151
        %v3153 = vlaneseq
        %v3154 = vshrl.u32 %v3153, 7
        %v3155 = vsub.s32 2, %v3154
        %v3156 = vrot.slane %v2515, %v3155
        %v3157 = vunpack.c.h.b16 %v2507
        %v3158 = vunpack.c.h.b16 %v2509
        %v3159 = vunpack.c.h.b16 %v2511
        %v3160 = vunpack.c.h.b16 %v2513
        %v3161 = vpack.c.b16 %v3158, %v3157
        %v3162 = vpack.c.b16 %v3160, %v3159
        %v3166 = vsel %vm630, %v3152, 0
        %3168 = vmatprep.subr.bf16.mxu0 0
        %3169 = vmatpush1.bf16.msra.mxu0 0
        %3170 = vmatprep.subr.bf16.mxu0 0
        %3171 = vmatpush1.bf16.msra.mxu0 0
        %3172 = vmatprep.subr.bf16.mxu0 0
        %3173 = vmatpush1.bf16.msra.mxu0 0
        %3174 = vmatprep.subr.bf16.mxu0 0
        %3175 = vmatpush1.bf16.msra.mxu0 0
        %3176 = vmatprep.subr.bf16.mxu0 0
        %3177 = vmatpush1.bf16.msra.mxu0 0
        %3178 = vmatprep.subr.bf16.mxu0 0
        %3179 = vmatpush1.bf16.msra.mxu0 0
        %3180 = vmatprep.subr.bf16.mxu0 0
        %3181 = vmatpush1.bf16.msra.mxu0 %v3162
        %3182 = vmatprep.subr.bf16.mxu0 0
        %3183 = vmatpush1.bf16.msra.mxu0 %v3161
        %3184 = vmatprep.subr.bf16.mxu0 0
        %3185 = vmatpush2.bf16.msra.mxu0 0
        %3186 = vmatprep.subr.bf16.mxu0 0
        %3187 = vmatpush2.bf16.msra.mxu0 0
        %3188 = vmatprep.subr.bf16.mxu0 0
        %3189 = vmatpush2.bf16.msra.mxu0 0
        %3190 = vmatprep.subr.bf16.mxu0 0
        %3191 = vmatpush2.bf16.msra.mxu0 0
        %3192 = vmatprep.subr.bf16.mxu0 0
        %3193 = vmatpush2.bf16.msra.mxu0 0
        %3194 = vmatprep.subr.bf16.mxu0 0
        %3195 = vmatpush2.bf16.msra.mxu0 0
        %3196 = vmatprep.subr.bf16.mxu0 0
        %3197 = vmatpush2.bf16.msra.mxu0 0
        %3198 = vmatprep.subr.bf16.mxu0 0
        %3199 = vmatpush2.bf16.msra.mxu0 0
        %3200 = vmatprep.mubr.bf16.mxu0 0
        %3201 = vmatmul.mubr.bf16.gmra.mxu0 %v3166
        %v3202 = vpop.f32.mrf.mxu0
        %v3203 = vadd.f32 %v3156, %v3202
        %v3204 = vpop.f32.mrf.mxu0
        %v3205 = vpop.f32.mrf.mxu0
        %v3206 = vpop.f32.mrf.mxu0
        %3207 = vdwg.mxu0
        %v3208 = vpack.c.bf16 %v2489, %v2488
        %v3209 = vlaneseq
        %v3210 = vshrl.u32 %v3209, 7
        %v3211 = vsub.s32 3, %v3210
        %v3212 = vrot.slane %v2515, %v3211
        %3213 = vrot.lane.b32.xlu0 %v3161, 96
        %v3214 = vpop.permute.xlu0 %3213
        %3215 = vrot.lane.b32.xlu0 %v3162, 96
        %v3216 = vpop.permute.xlu0 %3215
        %v3220 = vsel %vm630, %v3208, 0
        %3222 = vmatprep.subr.bf16.mxu0 0
        %3223 = vmatpush1.bf16.msra.mxu0 0
        %3224 = vmatprep.subr.bf16.mxu0 0
        %3225 = vmatpush1.bf16.msra.mxu0 0
        %3226 = vmatprep.subr.bf16.mxu0 0
        %3227 = vmatpush1.bf16.msra.mxu0 0
        %3228 = vmatprep.subr.bf16.mxu0 0
        %3229 = vmatpush1.bf16.msra.mxu0 0
        %3230 = vmatprep.subr.bf16.mxu0 0
        %3231 = vmatpush1.bf16.msra.mxu0 0
        %3232 = vmatprep.subr.bf16.mxu0 0
        %3233 = vmatpush1.bf16.msra.mxu0 0
        %3234 = vmatprep.subr.bf16.mxu0 0
        %3235 = vmatpush1.bf16.msra.mxu0 %v3216
        %3236 = vmatprep.subr.bf16.mxu0 0
        %3237 = vmatpush1.bf16.msra.mxu0 %v3214
        %3238 = vmatprep.subr.bf16.mxu0 0
        %3239 = vmatpush2.bf16.msra.mxu0 0
        %3240 = vmatprep.subr.bf16.mxu0 0
        %3241 = vmatpush2.bf16.msra.mxu0 0
        %3242 = vmatprep.subr.bf16.mxu0 0
        %3243 = vmatpush2.bf16.msra.mxu0 0
        %3244 = vmatprep.subr.bf16.mxu0 0
        %3245 = vmatpush2.bf16.msra.mxu0 0
        %3246 = vmatprep.subr.bf16.mxu0 0
        %3247 = vmatpush2.bf16.msra.mxu0 0
        %3248 = vmatprep.subr.bf16.mxu0 0
        %3249 = vmatpush2.bf16.msra.mxu0 0
        %3250 = vmatprep.subr.bf16.mxu0 0
        %3251 = vmatpush2.bf16.msra.mxu0 0
        %3252 = vmatprep.subr.bf16.mxu0 0
        %3253 = vmatpush2.bf16.msra.mxu0 0
        %3254 = vmatprep.mubr.bf16.mxu0 0
        %3255 = vmatmul.mubr.bf16.gmra.mxu0 %v3220
        %v3256 = vpop.f32.mrf.mxu0
        %v3257 = vadd.f32 %v3212, %v3256
        %v3258 = vpop.f32.mrf.mxu0
        %v3259 = vpop.f32.mrf.mxu0
        %v3260 = vadd.f32 %v3212, %v3259
        %v3261 = vpop.f32.mrf.mxu0
        %3262 = vdwg.mxu0
        %3264 = vrot.lane.b32.xlu0 %v3203, 120
        %v3265 = vpop.permute.xlu0 %3264
        %3267 = vrot.lane.b32.xlu0 %v3203, 112
        %v3268 = vpop.permute.xlu0 %3267
        %3270 = vrot.lane.b32.xlu0 %v3203, 104
        %v3271 = vpop.permute.xlu0 %3270
        %3275 = vrot.lane.b32.xlu0 %v3257, 120
        %v3276 = vpop.permute.xlu0 %3275
        %3277 = vrot.lane.b32.xlu0 %v3260, 120
        %v3278 = vpop.permute.xlu0 %3277
        %3281 = vrot.lane.b32.xlu0 %v3257, 112
        %v3282 = vpop.permute.xlu0 %3281
        %3283 = vrot.lane.b32.xlu0 %v3260, 112
        %v3284 = vpop.permute.xlu0 %3283
        %3287 = vrot.lane.b32.xlu0 %v3257, 104
        %v3288 = vpop.permute.xlu0 %3287
        %3289 = vrot.lane.b32.xlu0 %v3260, 104
        %v3290 = vpop.permute.xlu0 %3289
        %v3293 = vpack.c.bf16 %v3203, %v3203
        %v3294 = vpack.c.bf16 %v3265, %v3265
        %v3295 = vpack.c.bf16 %v3268, %v3268
        %v3296 = vpack.c.bf16 %v3271, %v3271
        %v3297 = vpack.c.bf16 %v3260, %v3257
        %v3298 = vpack.c.bf16 %v3278, %v3276
        %v3299 = vpack.c.bf16 %v3284, %v3282
        %v3300 = vpack.c.bf16 %v3290, %v3288
        %v3302 = vsel %vm759, %v3293, 0
        %v3305 = vsel %vm759, %v3297, 0
        %3307 = vmatprep.subr.bf16.mxu0 0
        %3308 = vmatpush1.bf16.xpose.msra.mxu0 0
        %3309 = vmatprep.subr.bf16.mxu0 0
        %3310 = vmatpush1.bf16.xpose.msra.mxu0 0
        %3311 = vmatprep.subr.bf16.mxu0 0
        %3312 = vmatpush1.bf16.xpose.msra.mxu0 0
        %3313 = vmatprep.subr.bf16.mxu0 0
        %3314 = vmatpush1.bf16.xpose.msra.mxu0 0
        %3315 = vmatprep.subr.bf16.mxu0 0
        %3316 = vmatpush1.bf16.xpose.msra.mxu0 0
        %3317 = vmatprep.subr.bf16.mxu0 0
        %3318 = vmatpush1.bf16.xpose.msra.mxu0 0
        %3319 = vmatprep.subr.bf16.mxu0 0
        %3320 = vmatpush1.bf16.xpose.msra.mxu0 0
        %3321 = vmatprep.subr.bf16.mxu0 0
        %3322 = vmatpush1.bf16.xpose.msra.mxu0 %v3305
        %3323 = vmatprep.subr.bf16.mxu0 0
        %3324 = vmatpush2.bf16.xpose.msra.mxu0 0
        %3325 = vmatprep.subr.bf16.mxu0 0
        %3326 = vmatpush2.bf16.xpose.msra.mxu0 0
        %3327 = vmatprep.subr.bf16.mxu0 0
        %3328 = vmatpush2.bf16.xpose.msra.mxu0 0
        %3329 = vmatprep.subr.bf16.mxu0 0
        %3330 = vmatpush2.bf16.xpose.msra.mxu0 0
        %3331 = vmatprep.subr.bf16.mxu0 0
        %3332 = vmatpush2.bf16.xpose.msra.mxu0 0
        %3333 = vmatprep.subr.bf16.mxu0 0
        %3334 = vmatpush2.bf16.xpose.msra.mxu0 0
        %3335 = vmatprep.subr.bf16.mxu0 0
        %3336 = vmatpush2.bf16.xpose.msra.mxu0 0
        %3337 = vmatprep.subr.bf16.mxu0 0
        %3338 = vmatpush2.bf16.xpose.msra.mxu0 0
        %3339 = vmatprep.mubr.bf16.mxu0 0
        %3340 = vmatmul.mubr.bf16.gmra.mxu0 %v3302
        %v3341 = vpop.f32.mrf.mxu0
        %v3342 = vadd.f32 0.0, %v3341
        %v3343 = vpop.f32.mrf.mxu0
        %v3344 = vpop.f32.mrf.mxu0
        %v3345 = vpop.f32.mrf.mxu0
        %3346 = vdwg.mxu0
        %v3348 = vsel %vm759, %v3294, 0
        %v3351 = vsel %vm759, %v3298, 0
        %3353 = vmatprep.subr.bf16.mxu0 0
        %3354 = vmatpush1.bf16.xpose.msra.mxu0 0
        %3355 = vmatprep.subr.bf16.mxu0 0
        %3356 = vmatpush1.bf16.xpose.msra.mxu0 0
        %3357 = vmatprep.subr.bf16.mxu0 0
        %3358 = vmatpush1.bf16.xpose.msra.mxu0 0
        %3359 = vmatprep.subr.bf16.mxu0 0
        %3360 = vmatpush1.bf16.xpose.msra.mxu0 0
        %3361 = vmatprep.subr.bf16.mxu0 0
        %3362 = vmatpush1.bf16.xpose.msra.mxu0 0
        %3363 = vmatprep.subr.bf16.mxu0 0
        %3364 = vmatpush1.bf16.xpose.msra.mxu0 0
        %3365 = vmatprep.subr.bf16.mxu0 0
        %3366 = vmatpush1.bf16.xpose.msra.mxu0 0
        %3367 = vmatprep.subr.bf16.mxu0 0
        %3368 = vmatpush1.bf16.xpose.msra.mxu0 %v3351
        %3369 = vmatprep.subr.bf16.mxu0 0
        %3370 = vmatpush2.bf16.xpose.msra.mxu0 0
        %3371 = vmatprep.subr.bf16.mxu0 0
        %3372 = vmatpush2.bf16.xpose.msra.mxu0 0
        %3373 = vmatprep.subr.bf16.mxu0 0
        %3374 = vmatpush2.bf16.xpose.msra.mxu0 0
        %3375 = vmatprep.subr.bf16.mxu0 0
        %3376 = vmatpush2.bf16.xpose.msra.mxu0 0
        %3377 = vmatprep.subr.bf16.mxu0 0
        %3378 = vmatpush2.bf16.xpose.msra.mxu0 0
        %3379 = vmatprep.subr.bf16.mxu0 0
        %3380 = vmatpush2.bf16.xpose.msra.mxu0 0
        %3381 = vmatprep.subr.bf16.mxu0 0
        %3382 = vmatpush2.bf16.xpose.msra.mxu0 0
        %3383 = vmatprep.subr.bf16.mxu0 0
        %3384 = vmatpush2.bf16.xpose.msra.mxu0 0
        %3385 = vmatprep.mubr.bf16.mxu0 0
        %3386 = vmatmul.mubr.bf16.gmra.mxu0 %v3348
        %v3387 = vpop.f32.mrf.mxu0
        %v3388 = vadd.f32 0.0, %v3387
        %v3389 = vpop.f32.mrf.mxu0
        %v3390 = vpop.f32.mrf.mxu0
        %v3391 = vpop.f32.mrf.mxu0
        %3392 = vdwg.mxu0
        %v3394 = vsel %vm759, %v3295, 0
        %v3397 = vsel %vm759, %v3299, 0
        %3399 = vmatprep.subr.bf16.mxu0 0
        %3400 = vmatpush1.bf16.xpose.msra.mxu0 0
        %3401 = vmatprep.subr.bf16.mxu0 0
        %3402 = vmatpush1.bf16.xpose.msra.mxu0 0
        %3403 = vmatprep.subr.bf16.mxu0 0
        %3404 = vmatpush1.bf16.xpose.msra.mxu0 0
        %3405 = vmatprep.subr.bf16.mxu0 0
        %3406 = vmatpush1.bf16.xpose.msra.mxu0 0
        %3407 = vmatprep.subr.bf16.mxu0 0
        %3408 = vmatpush1.bf16.xpose.msra.mxu0 0
        %3409 = vmatprep.subr.bf16.mxu0 0
        %3410 = vmatpush1.bf16.xpose.msra.mxu0 0
        %3411 = vmatprep.subr.bf16.mxu0 0
        %3412 = vmatpush1.bf16.xpose.msra.mxu0 0
        %3413 = vmatprep.subr.bf16.mxu0 0
        %3414 = vmatpush1.bf16.xpose.msra.mxu0 %v3397
        %3415 = vmatprep.subr.bf16.mxu0 0
        %3416 = vmatpush2.bf16.xpose.msra.mxu0 0
        %3417 = vmatprep.subr.bf16.mxu0 0
        %3418 = vmatpush2.bf16.xpose.msra.mxu0 0
        %3419 = vmatprep.subr.bf16.mxu0 0
        %3420 = vmatpush2.bf16.xpose.msra.mxu0 0
        %3421 = vmatprep.subr.bf16.mxu0 0
        %3422 = vmatpush2.bf16.xpose.msra.mxu0 0
        %3423 = vmatprep.subr.bf16.mxu0 0
        %3424 = vmatpush2.bf16.xpose.msra.mxu0 0
        %3425 = vmatprep.subr.bf16.mxu0 0
        %3426 = vmatpush2.bf16.xpose.msra.mxu0 0
        %3427 = vmatprep.subr.bf16.mxu0 0
        %3428 = vmatpush2.bf16.xpose.msra.mxu0 0
        %3429 = vmatprep.subr.bf16.mxu0 0
        %3430 = vmatpush2.bf16.xpose.msra.mxu0 0
        %3431 = vmatprep.mubr.bf16.mxu0 0
        %3432 = vmatmul.mubr.bf16.gmra.mxu0 %v3394
        %v3433 = vpop.f32.mrf.mxu0
        %v3434 = vadd.f32 0.0, %v3433
        %v3435 = vpop.f32.mrf.mxu0
        %v3436 = vpop.f32.mrf.mxu0
        %v3437 = vpop.f32.mrf.mxu0
        %3438 = vdwg.mxu0
        %v3440 = vsel %vm759, %v3296, 0
        %v3443 = vsel %vm759, %v3300, 0
        %3445 = vmatprep.subr.bf16.mxu0 0
        %3446 = vmatpush1.bf16.xpose.msra.mxu0 0
        %3447 = vmatprep.subr.bf16.mxu0 0
        %3448 = vmatpush1.bf16.xpose.msra.mxu0 0
        %3449 = vmatprep.subr.bf16.mxu0 0
        %3450 = vmatpush1.bf16.xpose.msra.mxu0 0
        %3451 = vmatprep.subr.bf16.mxu0 0
        %3452 = vmatpush1.bf16.xpose.msra.mxu0 0
        %3453 = vmatprep.subr.bf16.mxu0 0
        %3454 = vmatpush1.bf16.xpose.msra.mxu0 0
        %3455 = vmatprep.subr.bf16.mxu0 0
        %3456 = vmatpush1.bf16.xpose.msra.mxu0 0
        %3457 = vmatprep.subr.bf16.mxu0 0
        %3458 = vmatpush1.bf16.xpose.msra.mxu0 0
        %3459 = vmatprep.subr.bf16.mxu0 0
        %3460 = vmatpush1.bf16.xpose.msra.mxu0 %v3443
        %3461 = vmatprep.subr.bf16.mxu0 0
        %3462 = vmatpush2.bf16.xpose.msra.mxu0 0
        %3463 = vmatprep.subr.bf16.mxu0 0
        %3464 = vmatpush2.bf16.xpose.msra.mxu0 0
        %3465 = vmatprep.subr.bf16.mxu0 0
        %3466 = vmatpush2.bf16.xpose.msra.mxu0 0
        %3467 = vmatprep.subr.bf16.mxu0 0
        %3468 = vmatpush2.bf16.xpose.msra.mxu0 0
        %3469 = vmatprep.subr.bf16.mxu0 0
        %3470 = vmatpush2.bf16.xpose.msra.mxu0 0
        %3471 = vmatprep.subr.bf16.mxu0 0
        %3472 = vmatpush2.bf16.xpose.msra.mxu0 0
        %3473 = vmatprep.subr.bf16.mxu0 0
        %3474 = vmatpush2.bf16.xpose.msra.mxu0 0
        %3475 = vmatprep.subr.bf16.mxu0 0
        %3476 = vmatpush2.bf16.xpose.msra.mxu0 0
        %3477 = vmatprep.mubr.bf16.mxu0 0
        %3478 = vmatmul.mubr.bf16.gmra.mxu0 %v3440
        %v3479 = vpop.f32.mrf.mxu0
        %v3480 = vadd.f32 0.0, %v3479
        %v3481 = vpop.f32.mrf.mxu0
        %v3482 = vpop.f32.mrf.mxu0
        %v3483 = vpop.f32.mrf.mxu0
        %3484 = vdwg.mxu0
        %v3485 = vmul.f32 %v3342, 0.35355338
        %v3486 = vmul.f32 %v3388, 0.35355338
        %v3487 = vmul.f32 %v3434, 0.35355338
        %v3488 = vmul.f32 %v3480, 0.35355338
        %v3489 = vsel %vm965, %v3485, -inf
        %3490 = vmax.xlane.f32.xlu0 %v3489
        %v3491 = vpop.xlane.xlu0 %3490
        %v3492 = vsel %vm965, %v3486, -inf
        %3493 = vmax.xlane.f32.xlu0 %v3492
        %v3494 = vpop.xlane.xlu0 %3493
        %v3495 = vsel %vm965, %v3487, -inf
        %3496 = vmax.xlane.f32.xlu0 %v3495
        %v3497 = vpop.xlane.xlu0 %3496
        %v3498 = vsel %vm965, %v3488, -inf
        %3499 = vmax.xlane.f32.xlu0 %v3498
        %v3500 = vpop.xlane.xlu0 %3499
        %v3501 = vsub.f32 %v3485, %v3491
        %v3502 = vsub.f32 %v3486, %v3494
        %v3503 = vsub.f32 %v3487, %v3497
        %v3504 = vsub.f32 %v3488, %v3500
        %v3505 = vmul.f32 %v3501, 1.442695
        %v3506 = vpow.pop %v3505
        %v3507 = vmul.f32 %v3502, 1.442695
        %v3508 = vpow.pop %v3507
        %v3509 = vmul.f32 %v3503, 1.442695
        %v3510 = vpow.pop %v3509
        %v3511 = vmul.f32 %v3504, 1.442695
        %v3512 = vpow.pop %v3511
        %v3513 = vsel %vm965, %v3506, 0.0
        %3514 = vadd.xlane.f32.xlu0 %v3513
        %v3515 = vpop.xlane.xlu0 %3514
        %v3516 = vsel %vm965, %v3508, 0.0
        %3517 = vadd.xlane.f32.xlu0 %v3516
        %v3518 = vpop.xlane.xlu0 %3517
        %v3519 = vsel %vm965, %v3510, 0.0
        %3520 = vadd.xlane.f32.xlu0 %v3519
        %v3521 = vpop.xlane.xlu0 %3520
        %v3522 = vsel %vm965, %v3512, 0.0
        %3523 = vadd.xlane.f32.xlu0 %v3522
        %v3524 = vpop.xlane.xlu0 %3523
        %v3525 = vpack.c.bf16 %v3506, %v3506
        %v3526 = vpack.c.bf16 %v3508, %v3508
        %v3527 = vpack.c.bf16 %v3510, %v3510
        %v3528 = vpack.c.bf16 %v3512, %v3512
        %3530 = vrot.lane.b32.xlu0 %v3297, 96
        %v3531 = vpop.permute.xlu0 %3530
        %v3533 = vsel %vm965, %v3525, 0
        %v3536 = vsel %vm1048, %v3531, 0
        %3538 = vmatprep.subr.bf16.mxu0 0
        %3539 = vmatpush1.bf16.msra.mxu0 0
        %3540 = vmatprep.subr.bf16.mxu0 0
        %3541 = vmatpush1.bf16.msra.mxu0 0
        %3542 = vmatprep.subr.bf16.mxu0 0
        %3543 = vmatpush1.bf16.msra.mxu0 0
        %3544 = vmatprep.subr.bf16.mxu0 0
        %3545 = vmatpush1.bf16.msra.mxu0 0
        %3546 = vmatprep.subr.bf16.mxu0 0
        %3547 = vmatpush1.bf16.msra.mxu0 0
        %3548 = vmatprep.subr.bf16.mxu0 0
        %3549 = vmatpush1.bf16.msra.mxu0 0
        %3550 = vmatprep.subr.bf16.mxu0 0
        %3551 = vmatpush1.bf16.msra.mxu0 0
        %3552 = vmatprep.subr.bf16.mxu0 0
        %3553 = vmatpush1.bf16.msra.mxu0 %v3536
        %3554 = vmatprep.subr.bf16.mxu0 0
        %3555 = vmatpush2.bf16.msra.mxu0 0
        %3556 = vmatprep.subr.bf16.mxu0 0
        %3557 = vmatpush2.bf16.msra.mxu0 0
        %3558 = vmatprep.subr.bf16.mxu0 0
        %3559 = vmatpush2.bf16.msra.mxu0 0
        %3560 = vmatprep.subr.bf16.mxu0 0
        %3561 = vmatpush2.bf16.msra.mxu0 0
        %3562 = vmatprep.subr.bf16.mxu0 0
        %3563 = vmatpush2.bf16.msra.mxu0 0
        %3564 = vmatprep.subr.bf16.mxu0 0
        %3565 = vmatpush2.bf16.msra.mxu0 0
        %3566 = vmatprep.subr.bf16.mxu0 0
        %3567 = vmatpush2.bf16.msra.mxu0 0
        %3568 = vmatprep.subr.bf16.mxu0 0
        %3569 = vmatpush2.bf16.msra.mxu0 0
        %3570 = vmatprep.mubr.bf16.mxu0 0
        %3571 = vmatmul.mubr.bf16.gmra.mxu0 %v3533
        %v3572 = vpop.f32.mrf.mxu0
        %v3573 = vadd.f32 0.0, %v3572
        %v3574 = vpop.f32.mrf.mxu0
        %v3575 = vpop.f32.mrf.mxu0
        %v3576 = vpop.f32.mrf.mxu0
        %3577 = vdwg.mxu0
        %3579 = vrot.lane.b32.xlu0 %v3298, 96
        %v3580 = vpop.permute.xlu0 %3579
        %v3582 = vsel %vm965, %v3526, 0
        %v3585 = vsel %vm1048, %v3580, 0
        %3587 = vmatprep.subr.bf16.mxu0 0
        %3588 = vmatpush1.bf16.msra.mxu0 0
        %3589 = vmatprep.subr.bf16.mxu0 0
        %3590 = vmatpush1.bf16.msra.mxu0 0
        %3591 = vmatprep.subr.bf16.mxu0 0
        %3592 = vmatpush1.bf16.msra.mxu0 0
        %3593 = vmatprep.subr.bf16.mxu0 0
        %3594 = vmatpush1.bf16.msra.mxu0 0
        %3595 = vmatprep.subr.bf16.mxu0 0
        %3596 = vmatpush1.bf16.msra.mxu0 0
        %3597 = vmatprep.subr.bf16.mxu0 0
        %3598 = vmatpush1.bf16.msra.mxu0 0
        %3599 = vmatprep.subr.bf16.mxu0 0
        %3600 = vmatpush1.bf16.msra.mxu0 0
        %3601 = vmatprep.subr.bf16.mxu0 0
        %3602 = vmatpush1.bf16.msra.mxu0 %v3585
        %3603 = vmatprep.subr.bf16.mxu0 0
        %3604 = vmatpush2.bf16.msra.mxu0 0
        %3605 = vmatprep.subr.bf16.mxu0 0
        %3606 = vmatpush2.bf16.msra.mxu0 0
        %3607 = vmatprep.subr.bf16.mxu0 0
        %3608 = vmatpush2.bf16.msra.mxu0 0
        %3609 = vmatprep.subr.bf16.mxu0 0
        %3610 = vmatpush2.bf16.msra.mxu0 0
        %3611 = vmatprep.subr.bf16.mxu0 0
        %3612 = vmatpush2.bf16.msra.mxu0 0
        %3613 = vmatprep.subr.bf16.mxu0 0
        %3614 = vmatpush2.bf16.msra.mxu0 0
        %3615 = vmatprep.subr.bf16.mxu0 0
        %3616 = vmatpush2.bf16.msra.mxu0 0
        %3617 = vmatprep.subr.bf16.mxu0 0
        %3618 = vmatpush2.bf16.msra.mxu0 0
        %3619 = vmatprep.mubr.bf16.mxu0 0
        %3620 = vmatmul.mubr.bf16.gmra.mxu0 %v3582
        %v3621 = vpop.f32.mrf.mxu0
        %v3622 = vadd.f32 0.0, %v3621
        %v3623 = vpop.f32.mrf.mxu0
        %v3624 = vpop.f32.mrf.mxu0
        %v3625 = vpop.f32.mrf.mxu0
        %3626 = vdwg.mxu0
        %3628 = vrot.lane.b32.xlu0 %v3299, 96
        %v3629 = vpop.permute.xlu0 %3628
        %v3631 = vsel %vm965, %v3527, 0
        %v3634 = vsel %vm1048, %v3629, 0
        %3636 = vmatprep.subr.bf16.mxu0 0
        %3637 = vmatpush1.bf16.msra.mxu0 0
        %3638 = vmatprep.subr.bf16.mxu0 0
        %3639 = vmatpush1.bf16.msra.mxu0 0
        %3640 = vmatprep.subr.bf16.mxu0 0
        %3641 = vmatpush1.bf16.msra.mxu0 0
        %3642 = vmatprep.subr.bf16.mxu0 0
        %3643 = vmatpush1.bf16.msra.mxu0 0
        %3644 = vmatprep.subr.bf16.mxu0 0
        %3645 = vmatpush1.bf16.msra.mxu0 0
        %3646 = vmatprep.subr.bf16.mxu0 0
        %3647 = vmatpush1.bf16.msra.mxu0 0
        %3648 = vmatprep.subr.bf16.mxu0 0
        %3649 = vmatpush1.bf16.msra.mxu0 0
        %3650 = vmatprep.subr.bf16.mxu0 0
        %3651 = vmatpush1.bf16.msra.mxu0 %v3634
        %3652 = vmatprep.subr.bf16.mxu0 0
        %3653 = vmatpush2.bf16.msra.mxu0 0
        %3654 = vmatprep.subr.bf16.mxu0 0
        %3655 = vmatpush2.bf16.msra.mxu0 0
        %3656 = vmatprep.subr.bf16.mxu0 0
        %3657 = vmatpush2.bf16.msra.mxu0 0
        %3658 = vmatprep.subr.bf16.mxu0 0
        %3659 = vmatpush2.bf16.msra.mxu0 0
        %3660 = vmatprep.subr.bf16.mxu0 0
        %3661 = vmatpush2.bf16.msra.mxu0 0
        %3662 = vmatprep.subr.bf16.mxu0 0
        %3663 = vmatpush2.bf16.msra.mxu0 0
        %3664 = vmatprep.subr.bf16.mxu0 0
        %3665 = vmatpush2.bf16.msra.mxu0 0
        %3666 = vmatprep.subr.bf16.mxu0 0
        %3667 = vmatpush2.bf16.msra.mxu0 0
        %3668 = vmatprep.mubr.bf16.mxu0 0
        %3669 = vmatmul.mubr.bf16.gmra.mxu0 %v3631
        %v3670 = vpop.f32.mrf.mxu0
        %v3671 = vadd.f32 0.0, %v3670
        %v3672 = vpop.f32.mrf.mxu0
        %v3673 = vpop.f32.mrf.mxu0
        %v3674 = vpop.f32.mrf.mxu0
        %3675 = vdwg.mxu0
        %3677 = vrot.lane.b32.xlu0 %v3300, 96
        %v3678 = vpop.permute.xlu0 %3677
        %v3680 = vsel %vm965, %v3528, 0
        %v3683 = vsel %vm1048, %v3678, 0
        %3685 = vmatprep.subr.bf16.mxu0 0
        %3686 = vmatpush1.bf16.msra.mxu0 0
        %3687 = vmatprep.subr.bf16.mxu0 0
        %3688 = vmatpush1.bf16.msra.mxu0 0
        %3689 = vmatprep.subr.bf16.mxu0 0
        %3690 = vmatpush1.bf16.msra.mxu0 0
        %3691 = vmatprep.subr.bf16.mxu0 0
        %3692 = vmatpush1.bf16.msra.mxu0 0
        %3693 = vmatprep.subr.bf16.mxu0 0
        %3694 = vmatpush1.bf16.msra.mxu0 0
        %3695 = vmatprep.subr.bf16.mxu0 0
        %3696 = vmatpush1.bf16.msra.mxu0 0
        %3697 = vmatprep.subr.bf16.mxu0 0
        %3698 = vmatpush1.bf16.msra.mxu0 0
        %3699 = vmatprep.subr.bf16.mxu0 0
        %3700 = vmatpush1.bf16.msra.mxu0 %v3683
        %3701 = vmatprep.subr.bf16.mxu0 0
        %3702 = vmatpush2.bf16.msra.mxu0 0
        %3703 = vmatprep.subr.bf16.mxu0 0
        %3704 = vmatpush2.bf16.msra.mxu0 0
        %3705 = vmatprep.subr.bf16.mxu0 0
        %3706 = vmatpush2.bf16.msra.mxu0 0
        %3707 = vmatprep.subr.bf16.mxu0 0
        %3708 = vmatpush2.bf16.msra.mxu0 0
        %3709 = vmatprep.subr.bf16.mxu0 0
        %3710 = vmatpush2.bf16.msra.mxu0 0
        %3711 = vmatprep.subr.bf16.mxu0 0
        %3712 = vmatpush2.bf16.msra.mxu0 0
        %3713 = vmatprep.subr.bf16.mxu0 0
        %3714 = vmatpush2.bf16.msra.mxu0 0
        %3715 = vmatprep.subr.bf16.mxu0 0
        %3716 = vmatpush2.bf16.msra.mxu0 0
        %3717 = vmatprep.mubr.bf16.mxu0 0
        %3718 = vmatmul.mubr.bf16.gmra.mxu0 %v3680
        %v3719 = vpop.f32.mrf.mxu0
        %v3720 = vadd.f32 0.0, %v3719
        %v3721 = vpop.f32.mrf.mxu0
        %v3722 = vpop.f32.mrf.mxu0
        %v3723 = vpop.f32.mrf.mxu0
        %3724 = vdwg.mxu0
        %v3725 = vrcp.pop %v3515
        %v3726 = vrcp.pop %v3518
        %v3727 = vrcp.pop %v3521
        %v3728 = vrcp.pop %v3524
        %v3729 = vmul.f32 %v3573, %v3725
        %v3730 = vmul.f32 %v3622, %v3726
        %v3731 = vmul.f32 %v3671, %v3727
        %v3732 = vmul.f32 %v3720, %v3728
        %3734 = vrot.lane.b32.xlu0 %v3730, 8
        %v3735 = vpop.permute.xlu0 %3734
        %3738 = vrot.lane.b32.xlu0 %v3731, 16
        %v3739 = vpop.permute.xlu0 %3738
        %3742 = vrot.lane.b32.xlu0 %v3732, 24
        %v3743 = vpop.permute.xlu0 %3742
        %v3745 = vsel %vm759, %v3729, %v3735
        %v3746 = vsel %vm1282, %v3745, %v3739
        %v3747 = vsel %vm1285, %v3746, %v3743
        %v3748 = vpack.c.bf16 %v3747, %v3747
        %v3749 = vlaneseq
        %v3750 = vshrl.u32 %v3749, 7
        %v3751 = vsub.s32 4, %v3750
        %v3752 = vrot.slane %v2515, %v3751
        %3753 = vrot.lane.b32.xlu0 %v3161, 32
        %v3754 = vpop.permute.xlu0 %3753
        %3755 = vrot.lane.b32.xlu0 %v3162, 32
        %v3756 = vpop.permute.xlu0 %3755
        %v3760 = vsel %vm630, %v3748, 0
        %3762 = vmatprep.subr.bf16.mxu0 0
        %3763 = vmatpush1.bf16.msra.mxu0 0
        %3764 = vmatprep.subr.bf16.mxu0 0
        %3765 = vmatpush1.bf16.msra.mxu0 0
        %3766 = vmatprep.subr.bf16.mxu0 0
        %3767 = vmatpush1.bf16.msra.mxu0 0
        %3768 = vmatprep.subr.bf16.mxu0 0
        %3769 = vmatpush1.bf16.msra.mxu0 0
        %3770 = vmatprep.subr.bf16.mxu0 0
        %3771 = vmatpush1.bf16.msra.mxu0 0
        %3772 = vmatprep.subr.bf16.mxu0 0
        %3773 = vmatpush1.bf16.msra.mxu0 0
        %3774 = vmatprep.subr.bf16.mxu0 0
        %3775 = vmatpush1.bf16.msra.mxu0 %v3756
        %3776 = vmatprep.subr.bf16.mxu0 0
        %3777 = vmatpush1.bf16.msra.mxu0 %v3754
        %3778 = vmatprep.subr.bf16.mxu0 0
        %3779 = vmatpush2.bf16.msra.mxu0 0
        %3780 = vmatprep.subr.bf16.mxu0 0
        %3781 = vmatpush2.bf16.msra.mxu0 0
        %3782 = vmatprep.subr.bf16.mxu0 0
        %3783 = vmatpush2.bf16.msra.mxu0 0
        %3784 = vmatprep.subr.bf16.mxu0 0
        %3785 = vmatpush2.bf16.msra.mxu0 0
        %3786 = vmatprep.subr.bf16.mxu0 0
        %3787 = vmatpush2.bf16.msra.mxu0 0
        %3788 = vmatprep.subr.bf16.mxu0 0
        %3789 = vmatpush2.bf16.msra.mxu0 0
        %3790 = vmatprep.subr.bf16.mxu0 0
        %3791 = vmatpush2.bf16.msra.mxu0 0
        %3792 = vmatprep.subr.bf16.mxu0 0
        %3793 = vmatpush2.bf16.msra.mxu0 0
        %3794 = vmatprep.mubr.bf16.mxu0 0
        %3795 = vmatmul.mubr.bf16.gmra.mxu0 %v3760
        %v3796 = vpop.f32.mrf.mxu0
        %v3797 = vadd.f32 %v3752, %v3796
        %v3798 = vpop.f32.mrf.mxu0
        %v3799 = vpop.f32.mrf.mxu0
        %v3800 = vpop.f32.mrf.mxu0
        %3801 = vdwg.mxu0
        %v3802 = vadd.f32 %v3128, %v3797
        %v3803 = vsel %vm630, %v3802, 0.0
        %3804 = vadd.xlane.f32.xlu0 %v3803
        %v3805 = vpop.xlane.xlu0 %3804
        %v3806 = vmul.f32 %v3805, %v638
        %v3807 = vsub.f32 %v3802, %v3806
        %v3808 = vmul.f32 %v3807, %v3807
        %v3809 = vsel %vm630, %v3808, 0.0
        %3810 = vadd.xlane.f32.xlu0 %v3809
        %v3811 = vpop.xlane.xlu0 %3810
        %v3812 = vmul.f32 %v3811, %v638
        %v3813 = vadd.f32 %v3812, 1e-05
        %v3814 = vrsqrt.pop %v3813
        %v3815 = vmul.f32 %v3807, %v3814
        %v3816 = vlaneseq
        %v3817 = vshrl.u32 %v3816, 7
        %v3818 = vsub.s32 1, %v3817
        %v3819 = vrot.slane %v2516, %v3818
        %v3820 = vmul.f32 %v3815, %v3819
        %v3821 = vlaneseq
        %v3822 = vshrl.u32 %v3821, 7
        %v3823 = vsub.s32 2, %v3822
        %v3824 = vrot.slane %v2516, %v3823
        %v3825 = vadd.f32 %v3820, %v3824
        %v3826 = vld [vmem:[%s9] sm:$0xf]
        %v3827 = vld [vmem:[%s9 + $0x4] sm:$0xf]
        %v3828 = vld [vmem:[%s9 + $0x8] sm:$0xf]
        %v3829 = vld [vmem:[%s9 + $0xc] sm:$0xf]
        %v3830 = vld [vmem:[%s9 + $0x10] sm:$0xf]
        %v3831 = vld [vmem:[%s9 + $0x14] sm:$0xf]
        %v3832 = vld [vmem:[%s9 + $0x18] sm:$0xf]
        %v3833 = vld [vmem:[%s9 + $0x1c] sm:$0xf]
        %v3834 = vpack.c.bf16 %v3825, %v3825
        %v3835 = vlaneseq
        %v3836 = vshrl.u32 %v3835, 7
        %v3837 = vsub.s32 3, %v3836
        %v3838 = vrot.slane %v2516, %v3837
        %v3843 = vunpack.c.l.b16 %v2508
        %v3844 = vunpack.c.l.b16 %v2510
        %v3845 = vunpack.c.l.b16 %v2512
        %v3846 = vunpack.c.l.b16 %v2514
        %v3847 = vpack.c.b16 %v3844, %v3843
        %v3848 = vpack.c.b16 %v3846, %v3845
        %v3852 = vsel %vm630, %v3834, 0
        %3854 = vmatprep.subr.bf16.mxu0 0
        %3855 = vmatpush1.bf16.msra.mxu0 0
        %3856 = vmatprep.subr.bf16.mxu0 0
        %3857 = vmatpush1.bf16.msra.mxu0 0
        %3858 = vmatprep.subr.bf16.mxu0 0
        %3859 = vmatpush1.bf16.msra.mxu0 0
        %3860 = vmatprep.subr.bf16.mxu0 0
        %3861 = vmatpush1.bf16.msra.mxu0 0
        %3862 = vmatprep.subr.bf16.mxu0 0
        %3863 = vmatpush1.bf16.msra.mxu0 0
        %3864 = vmatprep.subr.bf16.mxu0 0
        %3865 = vmatpush1.bf16.msra.mxu0 0
        %3866 = vmatprep.subr.bf16.mxu0 0
        %3867 = vmatpush1.bf16.msra.mxu0 %v3848
        %3868 = vmatprep.subr.bf16.mxu0 0
        %3869 = vmatpush1.bf16.msra.mxu0 %v3847
        %3870 = vmatprep.subr.bf16.mxu0 0
        %3871 = vmatpush2.bf16.msra.mxu0 0
        %3872 = vmatprep.subr.bf16.mxu0 0
        %3873 = vmatpush2.bf16.msra.mxu0 0
        %3874 = vmatprep.subr.bf16.mxu0 0
        %3875 = vmatpush2.bf16.msra.mxu0 0
        %3876 = vmatprep.subr.bf16.mxu0 0
        %3877 = vmatpush2.bf16.msra.mxu0 0
        %3878 = vmatprep.subr.bf16.mxu0 0
        %3879 = vmatpush2.bf16.msra.mxu0 0
        %3880 = vmatprep.subr.bf16.mxu0 0
        %3881 = vmatpush2.bf16.msra.mxu0 0
        %3882 = vmatprep.subr.bf16.mxu0 0
        %3883 = vmatpush2.bf16.msra.mxu0 0
        %3884 = vmatprep.subr.bf16.mxu0 0
        %3885 = vmatpush2.bf16.msra.mxu0 0
        %3886 = vmatprep.mubr.bf16.mxu0 0
        %3887 = vmatmul.mubr.bf16.gmra.mxu0 %v3852
        %v3888 = vpop.f32.mrf.mxu0
        %v3889 = vadd.f32 %v3838, %v3888
        %v3890 = vpop.f32.mrf.mxu0
        %v3891 = vpop.f32.mrf.mxu0
        %v3892 = vpop.f32.mrf.mxu0
        %3893 = vdwg.mxu0
        %v3894 = vmul.f32 %v3889, 0.5
        %v3895 = vmul.f32 %v3889, 0.044715
        %v3896 = vmul.f32 %v3895, %v3889
        %v3897 = vmul.f32 %v3896, %v3889
        %v3898 = vadd.f32 %v3889, %v3897
        %v3899 = vmul.f32 %v3898, 0.7978846
        %v3900 = vtanh.pop %v3899
        %v3901 = vadd.f32 %v3900, 1.0
        %v3902 = vmul.f32 %v3894, %v3901
        %v3903 = vpack.c.bf16 %v3902, %v3902
        %v3904 = vlaneseq
        %v3905 = vshrl.u32 %v3904, 7
        %v3906 = vsub.s32 4, %v3905
        %v3907 = vrot.slane %v2516, %v3906
        %v3916 = vunpack.c.l.b16 %v3826
        %v3917 = vunpack.c.l.b16 %v3827
        %v3918 = vunpack.c.l.b16 %v3828
        %v3919 = vunpack.c.l.b16 %v3829
        %v3920 = vunpack.c.l.b16 %v3830
        %v3921 = vunpack.c.l.b16 %v3831
        %v3922 = vunpack.c.l.b16 %v3832
        %v3923 = vunpack.c.l.b16 %v3833
        %v3924 = vpack.c.b16 %v3917, %v3916
        %v3925 = vpack.c.b16 %v3919, %v3918
        %v3926 = vpack.c.b16 %v3921, %v3920
        %v3927 = vpack.c.b16 %v3923, %v3922
        %v3933 = vsel %vm580, %v3903, 0
        %3935 = vmatprep.subr.bf16.mxu0 0
        %3936 = vmatpush1.bf16.msra.mxu0 0
        %3937 = vmatprep.subr.bf16.mxu0 0
        %3938 = vmatpush1.bf16.msra.mxu0 0
        %3939 = vmatprep.subr.bf16.mxu0 0
        %3940 = vmatpush1.bf16.msra.mxu0 0
        %3941 = vmatprep.subr.bf16.mxu0 0
        %3942 = vmatpush1.bf16.msra.mxu0 0
        %3943 = vmatprep.subr.bf16.mxu0 0
        %3944 = vmatpush1.bf16.msra.mxu0 %v3927
        %3945 = vmatprep.subr.bf16.mxu0 0
        %3946 = vmatpush1.bf16.msra.mxu0 %v3926
        %3947 = vmatprep.subr.bf16.mxu0 0
        %3948 = vmatpush1.bf16.msra.mxu0 %v3925
        %3949 = vmatprep.subr.bf16.mxu0 0
        %3950 = vmatpush1.bf16.msra.mxu0 %v3924
        %3951 = vmatprep.subr.bf16.mxu0 0
        %3952 = vmatpush2.bf16.msra.mxu0 0
        %3953 = vmatprep.subr.bf16.mxu0 0
        %3954 = vmatpush2.bf16.msra.mxu0 0
        %3955 = vmatprep.subr.bf16.mxu0 0
        %3956 = vmatpush2.bf16.msra.mxu0 0
        %3957 = vmatprep.subr.bf16.mxu0 0
        %3958 = vmatpush2.bf16.msra.mxu0 0
        %3959 = vmatprep.subr.bf16.mxu0 0
        %3960 = vmatpush2.bf16.msra.mxu0 0
        %3961 = vmatprep.subr.bf16.mxu0 0
        %3962 = vmatpush2.bf16.msra.mxu0 0
        %3963 = vmatprep.subr.bf16.mxu0 0
        %3964 = vmatpush2.bf16.msra.mxu0 0
        %3965 = vmatprep.subr.bf16.mxu0 0
        %3966 = vmatpush2.bf16.msra.mxu0 0
        %3967 = vmatprep.mubr.bf16.mxu0 0
        %3968 = vmatmul.mubr.bf16.gmra.mxu0 %v3933
        %v3969 = vpop.f32.mrf.mxu0
        %v3970 = vadd.f32 %v3907, %v3969
        %v3971 = vpop.f32.mrf.mxu0
        %v3972 = vpop.f32.mrf.mxu0
        %v3973 = vpop.f32.mrf.mxu0
        %3974 = vdwg.mxu0
        %v3975 = vadd.f32 %v3802, %v3970
        %s3976 = scalar_lea.vmem %s8, 48
        %v3977 = vld [vmem:[%s3976] sm:$0xff]
        %v3978 = vld [vmem:[%s3976 + $0x8] sm:$0xf]
        %v3979 = vld [vmem:[%s3976 + $0xc] sm:$0xff]
        %v3980 = vld [vmem:[%s3976 + $0x14] sm:$0xf]
        %v3981 = vld [vmem:[%s3976 + $0x18] sm:$0xff]
        %v3982 = vld [vmem:[%s3976 + $0x20] sm:$0xf]
        %v3983 = vld [vmem:[%s3976 + $0x24] sm:$0xff]
        %v3984 = vld [vmem:[%s3976 + $0x2c] sm:$0xf]
        %s3985 = scalar_lea.vmem %s10, 16
        %v3986 = vld [vmem:[%s3985] sm:$0xff]
        %v3987 = vld [vmem:[%s3985 + $0x8] sm:$0x1f]
        %v3988 = vsel %vm630, %v3975, 0.0
        %3989 = vadd.xlane.f32.xlu0 %v3988
        %v3990 = vpop.xlane.xlu0 %3989
        %v3991 = vmul.f32 %v3990, %v638
        %v3992 = vsub.f32 %v3975, %v3991
        %v3993 = vmul.f32 %v3992, %v3992
        %v3994 = vsel %vm630, %v3993, 0.0
        %3995 = vadd.xlane.f32.xlu0 %v3994
        %v3996 = vpop.xlane.xlu0 %3995
        %v3997 = vmul.f32 %v3996, %v638
        %v3998 = vadd.f32 %v3997, 1e-05
        %v3999 = vrsqrt.pop %v3998
        %v4000 = vmul.f32 %v3992, %v3999
        %v4001 = vlaneseq
        %v4002 = vshrl.u32 %v4001, 7
        %v4003 = vsub.s32 5, %v4002
        %v4004 = vrot.slane %v3986, %v4003
        %v4005 = vmul.f32 %v4000, %v4004
        %v4006 = vlaneseq
        %v4007 = vshrl.u32 %v4006, 7
        %v4008 = vsub.s32 6, %v4007
        %v4009 = vrot.slane %v3986, %v4008
        %v4010 = vadd.f32 %v4005, %v4009
        %v4011 = vpack.c.bf16 %v4010, %v4010
        %v4012 = vlaneseq
        %v4013 = vshrl.u32 %v4012, 7
        %v4014 = vsub.s32 0, %v4013
        %v4015 = vrot.slane %v3986, %v4014
        %v4020 = vunpack.c.l.b16 %v3977
        %v4021 = vunpack.c.l.b16 %v3979
        %v4022 = vunpack.c.l.b16 %v3981
        %v4023 = vunpack.c.l.b16 %v3983
        %v4024 = vpack.c.b16 %v4021, %v4020
        %v4025 = vpack.c.b16 %v4023, %v4022
        %v4029 = vsel %vm630, %v4011, 0
        %4031 = vmatprep.subr.bf16.mxu0 0
        %4032 = vmatpush1.bf16.msra.mxu0 0
        %4033 = vmatprep.subr.bf16.mxu0 0
        %4034 = vmatpush1.bf16.msra.mxu0 0
        %4035 = vmatprep.subr.bf16.mxu0 0
        %4036 = vmatpush1.bf16.msra.mxu0 0
        %4037 = vmatprep.subr.bf16.mxu0 0
        %4038 = vmatpush1.bf16.msra.mxu0 0
        %4039 = vmatprep.subr.bf16.mxu0 0
        %4040 = vmatpush1.bf16.msra.mxu0 0
        %4041 = vmatprep.subr.bf16.mxu0 0
        %4042 = vmatpush1.bf16.msra.mxu0 0
        %4043 = vmatprep.subr.bf16.mxu0 0
        %4044 = vmatpush1.bf16.msra.mxu0 %v4025
        %4045 = vmatprep.subr.bf16.mxu0 0
        %4046 = vmatpush1.bf16.msra.mxu0 %v4024
        %4047 = vmatprep.subr.bf16.mxu0 0
        %4048 = vmatpush2.bf16.msra.mxu0 0
        %4049 = vmatprep.subr.bf16.mxu0 0
        %4050 = vmatpush2.bf16.msra.mxu0 0
        %4051 = vmatprep.subr.bf16.mxu0 0
        %4052 = vmatpush2.bf16.msra.mxu0 0
        %4053 = vmatprep.subr.bf16.mxu0 0
        %4054 = vmatpush2.bf16.msra.mxu0 0
        %4055 = vmatprep.subr.bf16.mxu0 0
        %4056 = vmatpush2.bf16.msra.mxu0 0
        %4057 = vmatprep.subr.bf16.mxu0 0
        %4058 = vmatpush2.bf16.msra.mxu0 0
        %4059 = vmatprep.subr.bf16.mxu0 0
        %4060 = vmatpush2.bf16.msra.mxu0 0
        %4061 = vmatprep.subr.bf16.mxu0 0
        %4062 = vmatpush2.bf16.msra.mxu0 0
        %4063 = vmatprep.mubr.bf16.mxu0 0
        %4064 = vmatmul.mubr.bf16.gmra.mxu0 %v4029
        %v4065 = vpop.f32.mrf.mxu0
        %v4066 = vadd.f32 %v4015, %v4065
        %v4067 = vpop.f32.mrf.mxu0
        %v4068 = vpop.f32.mrf.mxu0
        %v4069 = vpop.f32.mrf.mxu0
        %4070 = vdwg.mxu0
        %4072 = vrot.lane.b32.xlu0 %v4066, 120
        %v4073 = vpop.permute.xlu0 %4072
        %4075 = vrot.lane.b32.xlu0 %v4066, 112
        %v4076 = vpop.permute.xlu0 %4075
        %4078 = vrot.lane.b32.xlu0 %v4066, 104
        %v4079 = vpop.permute.xlu0 %4078
        %v4081 = vpack.c.bf16 %v4066, %v4066
        %v4082 = vpack.c.bf16 %v4073, %v4073
        %v4083 = vpack.c.bf16 %v4076, %v4076
        %v4084 = vpack.c.bf16 %v4079, %v4079
        %4086 = vrot.lane.b32.xlu0 %v4081, 96
        %v4087 = vpop.permute.xlu0 %4086
        %v4089 = vsel %vm759, %v4081, 0
        %v4092 = vsel %vm759, %v4087, 0
        %4094 = vmatprep.subr.bf16.mxu0 0
        %4095 = vmatpush1.bf16.xpose.msra.mxu0 0
        %4096 = vmatprep.subr.bf16.mxu0 0
        %4097 = vmatpush1.bf16.xpose.msra.mxu0 0
        %4098 = vmatprep.subr.bf16.mxu0 0
        %4099 = vmatpush1.bf16.xpose.msra.mxu0 0
        %4100 = vmatprep.subr.bf16.mxu0 0
        %4101 = vmatpush1.bf16.xpose.msra.mxu0 0
        %4102 = vmatprep.subr.bf16.mxu0 0
        %4103 = vmatpush1.bf16.xpose.msra.mxu0 0
        %4104 = vmatprep.subr.bf16.mxu0 0
        %4105 = vmatpush1.bf16.xpose.msra.mxu0 0
        %4106 = vmatprep.subr.bf16.mxu0 0
        %4107 = vmatpush1.bf16.xpose.msra.mxu0 0
        %4108 = vmatprep.subr.bf16.mxu0 0
        %4109 = vmatpush1.bf16.xpose.msra.mxu0 %v4092
        %4110 = vmatprep.subr.bf16.mxu0 0
        %4111 = vmatpush2.bf16.xpose.msra.mxu0 0
        %4112 = vmatprep.subr.bf16.mxu0 0
        %4113 = vmatpush2.bf16.xpose.msra.mxu0 0
        %4114 = vmatprep.subr.bf16.mxu0 0
        %4115 = vmatpush2.bf16.xpose.msra.mxu0 0
        %4116 = vmatprep.subr.bf16.mxu0 0
        %4117 = vmatpush2.bf16.xpose.msra.mxu0 0
        %4118 = vmatprep.subr.bf16.mxu0 0
        %4119 = vmatpush2.bf16.xpose.msra.mxu0 0
        %4120 = vmatprep.subr.bf16.mxu0 0
        %4121 = vmatpush2.bf16.xpose.msra.mxu0 0
        %4122 = vmatprep.subr.bf16.mxu0 0
        %4123 = vmatpush2.bf16.xpose.msra.mxu0 0
        %4124 = vmatprep.subr.bf16.mxu0 0
        %4125 = vmatpush2.bf16.xpose.msra.mxu0 0
        %4126 = vmatprep.mubr.bf16.mxu0 0
        %4127 = vmatmul.mubr.bf16.gmra.mxu0 %v4089
        %v4128 = vpop.f32.mrf.mxu0
        %v4129 = vadd.f32 0.0, %v4128
        %v4130 = vpop.f32.mrf.mxu0
        %v4131 = vpop.f32.mrf.mxu0
        %v4132 = vpop.f32.mrf.mxu0
        %4133 = vdwg.mxu0
        %4135 = vrot.lane.b32.xlu0 %v4082, 96
        %v4136 = vpop.permute.xlu0 %4135
        %v4138 = vsel %vm759, %v4082, 0
        %v4141 = vsel %vm759, %v4136, 0
        %4143 = vmatprep.subr.bf16.mxu0 0
        %4144 = vmatpush1.bf16.xpose.msra.mxu0 0
        %4145 = vmatprep.subr.bf16.mxu0 0
        %4146 = vmatpush1.bf16.xpose.msra.mxu0 0
        %4147 = vmatprep.subr.bf16.mxu0 0
        %4148 = vmatpush1.bf16.xpose.msra.mxu0 0
        %4149 = vmatprep.subr.bf16.mxu0 0
        %4150 = vmatpush1.bf16.xpose.msra.mxu0 0
        %4151 = vmatprep.subr.bf16.mxu0 0
        %4152 = vmatpush1.bf16.xpose.msra.mxu0 0
        %4153 = vmatprep.subr.bf16.mxu0 0
        %4154 = vmatpush1.bf16.xpose.msra.mxu0 0
        %4155 = vmatprep.subr.bf16.mxu0 0
        %4156 = vmatpush1.bf16.xpose.msra.mxu0 0
        %4157 = vmatprep.subr.bf16.mxu0 0
        %4158 = vmatpush1.bf16.xpose.msra.mxu0 %v4141
        %4159 = vmatprep.subr.bf16.mxu0 0
        %4160 = vmatpush2.bf16.xpose.msra.mxu0 0
        %4161 = vmatprep.subr.bf16.mxu0 0
        %4162 = vmatpush2.bf16.xpose.msra.mxu0 0
        %4163 = vmatprep.subr.bf16.mxu0 0
        %4164 = vmatpush2.bf16.xpose.msra.mxu0 0
        %4165 = vmatprep.subr.bf16.mxu0 0
        %4166 = vmatpush2.bf16.xpose.msra.mxu0 0
        %4167 = vmatprep.subr.bf16.mxu0 0
        %4168 = vmatpush2.bf16.xpose.msra.mxu0 0
        %4169 = vmatprep.subr.bf16.mxu0 0
        %4170 = vmatpush2.bf16.xpose.msra.mxu0 0
        %4171 = vmatprep.subr.bf16.mxu0 0
        %4172 = vmatpush2.bf16.xpose.msra.mxu0 0
        %4173 = vmatprep.subr.bf16.mxu0 0
        %4174 = vmatpush2.bf16.xpose.msra.mxu0 0
        %4175 = vmatprep.mubr.bf16.mxu0 0
        %4176 = vmatmul.mubr.bf16.gmra.mxu0 %v4138
        %v4177 = vpop.f32.mrf.mxu0
        %v4178 = vadd.f32 0.0, %v4177
        %v4179 = vpop.f32.mrf.mxu0
        %v4180 = vpop.f32.mrf.mxu0
        %v4181 = vpop.f32.mrf.mxu0
        %4182 = vdwg.mxu0
        %4184 = vrot.lane.b32.xlu0 %v4083, 96
        %v4185 = vpop.permute.xlu0 %4184
        %v4187 = vsel %vm759, %v4083, 0
        %v4190 = vsel %vm759, %v4185, 0
        %4192 = vmatprep.subr.bf16.mxu0 0
        %4193 = vmatpush1.bf16.xpose.msra.mxu0 0
        %4194 = vmatprep.subr.bf16.mxu0 0
        %4195 = vmatpush1.bf16.xpose.msra.mxu0 0
        %4196 = vmatprep.subr.bf16.mxu0 0
        %4197 = vmatpush1.bf16.xpose.msra.mxu0 0
        %4198 = vmatprep.subr.bf16.mxu0 0
        %4199 = vmatpush1.bf16.xpose.msra.mxu0 0
        %4200 = vmatprep.subr.bf16.mxu0 0
        %4201 = vmatpush1.bf16.xpose.msra.mxu0 0
        %4202 = vmatprep.subr.bf16.mxu0 0
        %4203 = vmatpush1.bf16.xpose.msra.mxu0 0
        %4204 = vmatprep.subr.bf16.mxu0 0
        %4205 = vmatpush1.bf16.xpose.msra.mxu0 0
        %4206 = vmatprep.subr.bf16.mxu0 0
        %4207 = vmatpush1.bf16.xpose.msra.mxu0 %v4190
        %4208 = vmatprep.subr.bf16.mxu0 0
        %4209 = vmatpush2.bf16.xpose.msra.mxu0 0
        %4210 = vmatprep.subr.bf16.mxu0 0
        %4211 = vmatpush2.bf16.xpose.msra.mxu0 0
        %4212 = vmatprep.subr.bf16.mxu0 0
        %4213 = vmatpush2.bf16.xpose.msra.mxu0 0
        %4214 = vmatprep.subr.bf16.mxu0 0
        %4215 = vmatpush2.bf16.xpose.msra.mxu0 0
        %4216 = vmatprep.subr.bf16.mxu0 0
        %4217 = vmatpush2.bf16.xpose.msra.mxu0 0
        %4218 = vmatprep.subr.bf16.mxu0 0
        %4219 = vmatpush2.bf16.xpose.msra.mxu0 0
        %4220 = vmatprep.subr.bf16.mxu0 0
        %4221 = vmatpush2.bf16.xpose.msra.mxu0 0
        %4222 = vmatprep.subr.bf16.mxu0 0
        %4223 = vmatpush2.bf16.xpose.msra.mxu0 0
        %4224 = vmatprep.mubr.bf16.mxu0 0
        %4225 = vmatmul.mubr.bf16.gmra.mxu0 %v4187
        %v4226 = vpop.f32.mrf.mxu0
        %v4227 = vadd.f32 0.0, %v4226
        %v4228 = vpop.f32.mrf.mxu0
        %v4229 = vpop.f32.mrf.mxu0
        %v4230 = vpop.f32.mrf.mxu0
        %4231 = vdwg.mxu0
        %4233 = vrot.lane.b32.xlu0 %v4084, 96
        %v4234 = vpop.permute.xlu0 %4233
        %v4236 = vsel %vm759, %v4084, 0
        %v4239 = vsel %vm759, %v4234, 0
        %4241 = vmatprep.subr.bf16.mxu0 0
        %4242 = vmatpush1.bf16.xpose.msra.mxu0 0
        %4243 = vmatprep.subr.bf16.mxu0 0
        %4244 = vmatpush1.bf16.xpose.msra.mxu0 0
        %4245 = vmatprep.subr.bf16.mxu0 0
        %4246 = vmatpush1.bf16.xpose.msra.mxu0 0
        %4247 = vmatprep.subr.bf16.mxu0 0
        %4248 = vmatpush1.bf16.xpose.msra.mxu0 0
        %4249 = vmatprep.subr.bf16.mxu0 0
        %4250 = vmatpush1.bf16.xpose.msra.mxu0 0
        %4251 = vmatprep.subr.bf16.mxu0 0
        %4252 = vmatpush1.bf16.xpose.msra.mxu0 0
        %4253 = vmatprep.subr.bf16.mxu0 0
        %4254 = vmatpush1.bf16.xpose.msra.mxu0 0
        %4255 = vmatprep.subr.bf16.mxu0 0
        %4256 = vmatpush1.bf16.xpose.msra.mxu0 %v4239
        %4257 = vmatprep.subr.bf16.mxu0 0
        %4258 = vmatpush2.bf16.xpose.msra.mxu0 0
        %4259 = vmatprep.subr.bf16.mxu0 0
        %4260 = vmatpush2.bf16.xpose.msra.mxu0 0
        %4261 = vmatprep.subr.bf16.mxu0 0
        %4262 = vmatpush2.bf16.xpose.msra.mxu0 0
        %4263 = vmatprep.subr.bf16.mxu0 0
        %4264 = vmatpush2.bf16.xpose.msra.mxu0 0
        %4265 = vmatprep.subr.bf16.mxu0 0
        %4266 = vmatpush2.bf16.xpose.msra.mxu0 0
        %4267 = vmatprep.subr.bf16.mxu0 0
        %4268 = vmatpush2.bf16.xpose.msra.mxu0 0
        %4269 = vmatprep.subr.bf16.mxu0 0
        %4270 = vmatpush2.bf16.xpose.msra.mxu0 0
        %4271 = vmatprep.subr.bf16.mxu0 0
        %4272 = vmatpush2.bf16.xpose.msra.mxu0 0
        %4273 = vmatprep.mubr.bf16.mxu0 0
        %4274 = vmatmul.mubr.bf16.gmra.mxu0 %v4236
        %v4275 = vpop.f32.mrf.mxu0
        %v4276 = vadd.f32 0.0, %v4275
        %v4277 = vpop.f32.mrf.mxu0
        %v4278 = vpop.f32.mrf.mxu0
        %v4279 = vpop.f32.mrf.mxu0
        %4280 = vdwg.mxu0
        %v4281 = vmul.f32 %v4129, 0.35355338
        %v4282 = vmul.f32 %v4178, 0.35355338
        %v4283 = vmul.f32 %v4227, 0.35355338
        %v4284 = vmul.f32 %v4276, 0.35355338
        %v4285 = vadd.f32 %v4281, %v2506
        %v4286 = vadd.f32 %v4282, %v2506
        %v4287 = vadd.f32 %v4283, %v2506
        %v4288 = vadd.f32 %v4284, %v2506
        %v4289 = vsel %vm759, %v4285, -inf
        %4290 = vmax.xlane.f32.xlu0 %v4289
        %v4291 = vpop.xlane.xlu0 %4290
        %v4292 = vsel %vm759, %v4286, -inf
        %4293 = vmax.xlane.f32.xlu0 %v4292
        %v4294 = vpop.xlane.xlu0 %4293
        %v4295 = vsel %vm759, %v4287, -inf
        %4296 = vmax.xlane.f32.xlu0 %v4295
        %v4297 = vpop.xlane.xlu0 %4296
        %v4298 = vsel %vm759, %v4288, -inf
        %4299 = vmax.xlane.f32.xlu0 %v4298
        %v4300 = vpop.xlane.xlu0 %4299
        %v4301 = vsub.f32 %v4285, %v4291
        %v4302 = vsub.f32 %v4286, %v4294
        %v4303 = vsub.f32 %v4287, %v4297
        %v4304 = vsub.f32 %v4288, %v4300
        %v4305 = vmul.f32 %v4301, 1.442695
        %v4306 = vpow.pop %v4305
        %v4307 = vmul.f32 %v4302, 1.442695
        %v4308 = vpow.pop %v4307
        %v4309 = vmul.f32 %v4303, 1.442695
        %v4310 = vpow.pop %v4309
        %v4311 = vmul.f32 %v4304, 1.442695
        %v4312 = vpow.pop %v4311
        %v4313 = vsel %vm759, %v4306, 0.0
        %4314 = vadd.xlane.f32.xlu0 %v4313
        %v4315 = vpop.xlane.xlu0 %4314
        %v4316 = vsel %vm759, %v4308, 0.0
        %4317 = vadd.xlane.f32.xlu0 %v4316
        %v4318 = vpop.xlane.xlu0 %4317
        %v4319 = vsel %vm759, %v4310, 0.0
        %4320 = vadd.xlane.f32.xlu0 %v4319
        %v4321 = vpop.xlane.xlu0 %4320
        %v4322 = vsel %vm759, %v4312, 0.0
        %4323 = vadd.xlane.f32.xlu0 %v4322
        %v4324 = vpop.xlane.xlu0 %4323
        %v4325 = vpack.c.bf16 %v4306, %v4306
        %v4326 = vpack.c.bf16 %v4308, %v4308
        %v4327 = vpack.c.bf16 %v4310, %v4310
        %v4328 = vpack.c.bf16 %v4312, %v4312
        %4329 = vrot.lane.b32.xlu0 %v4081, 64
        %v4330 = vpop.permute.xlu0 %4329
        %v4332 = vsel %vm759, %v4325, 0
        %v4335 = vsel %vm2863, %v4330, 0
        %4337 = vmatprep.subr.bf16.mxu0 0
        %4338 = vmatpush1.bf16.msra.mxu0 0
        %4339 = vmatprep.subr.bf16.mxu0 0
        %4340 = vmatpush1.bf16.msra.mxu0 0
        %4341 = vmatprep.subr.bf16.mxu0 0
        %4342 = vmatpush1.bf16.msra.mxu0 0
        %4343 = vmatprep.subr.bf16.mxu0 0
        %4344 = vmatpush1.bf16.msra.mxu0 0
        %4345 = vmatprep.subr.bf16.mxu0 0
        %4346 = vmatpush1.bf16.msra.mxu0 0
        %4347 = vmatprep.subr.bf16.mxu0 0
        %4348 = vmatpush1.bf16.msra.mxu0 0
        %4349 = vmatprep.subr.bf16.mxu0 0
        %4350 = vmatpush1.bf16.msra.mxu0 0
        %4351 = vmatprep.subr.bf16.mxu0 0
        %4352 = vmatpush1.bf16.msra.mxu0 %v4335
        %4353 = vmatprep.subr.bf16.mxu0 0
        %4354 = vmatpush2.bf16.msra.mxu0 0
        %4355 = vmatprep.subr.bf16.mxu0 0
        %4356 = vmatpush2.bf16.msra.mxu0 0
        %4357 = vmatprep.subr.bf16.mxu0 0
        %4358 = vmatpush2.bf16.msra.mxu0 0
        %4359 = vmatprep.subr.bf16.mxu0 0
        %4360 = vmatpush2.bf16.msra.mxu0 0
        %4361 = vmatprep.subr.bf16.mxu0 0
        %4362 = vmatpush2.bf16.msra.mxu0 0
        %4363 = vmatprep.subr.bf16.mxu0 0
        %4364 = vmatpush2.bf16.msra.mxu0 0
        %4365 = vmatprep.subr.bf16.mxu0 0
        %4366 = vmatpush2.bf16.msra.mxu0 0
        %4367 = vmatprep.subr.bf16.mxu0 0
        %4368 = vmatpush2.bf16.msra.mxu0 0
        %4369 = vmatprep.mubr.bf16.mxu0 0
        %4370 = vmatmul.mubr.bf16.gmra.mxu0 %v4332
        %v4371 = vpop.f32.mrf.mxu0
        %v4372 = vadd.f32 0.0, %v4371
        %v4373 = vpop.f32.mrf.mxu0
        %v4374 = vpop.f32.mrf.mxu0
        %v4375 = vpop.f32.mrf.mxu0
        %4376 = vdwg.mxu0
        %4377 = vrot.lane.b32.xlu0 %v4082, 64
        %v4378 = vpop.permute.xlu0 %4377
        %v4380 = vsel %vm759, %v4326, 0
        %v4383 = vsel %vm2863, %v4378, 0
        %4385 = vmatprep.subr.bf16.mxu0 0
        %4386 = vmatpush1.bf16.msra.mxu0 0
        %4387 = vmatprep.subr.bf16.mxu0 0
        %4388 = vmatpush1.bf16.msra.mxu0 0
        %4389 = vmatprep.subr.bf16.mxu0 0
        %4390 = vmatpush1.bf16.msra.mxu0 0
        %4391 = vmatprep.subr.bf16.mxu0 0
        %4392 = vmatpush1.bf16.msra.mxu0 0
        %4393 = vmatprep.subr.bf16.mxu0 0
        %4394 = vmatpush1.bf16.msra.mxu0 0
        %4395 = vmatprep.subr.bf16.mxu0 0
        %4396 = vmatpush1.bf16.msra.mxu0 0
        %4397 = vmatprep.subr.bf16.mxu0 0
        %4398 = vmatpush1.bf16.msra.mxu0 0
        %4399 = vmatprep.subr.bf16.mxu0 0
        %4400 = vmatpush1.bf16.msra.mxu0 %v4383
        %4401 = vmatprep.subr.bf16.mxu0 0
        %4402 = vmatpush2.bf16.msra.mxu0 0
        %4403 = vmatprep.subr.bf16.mxu0 0
        %4404 = vmatpush2.bf16.msra.mxu0 0
        %4405 = vmatprep.subr.bf16.mxu0 0
        %4406 = vmatpush2.bf16.msra.mxu0 0
        %4407 = vmatprep.subr.bf16.mxu0 0
        %4408 = vmatpush2.bf16.msra.mxu0 0
        %4409 = vmatprep.subr.bf16.mxu0 0
        %4410 = vmatpush2.bf16.msra.mxu0 0
        %4411 = vmatprep.subr.bf16.mxu0 0
        %4412 = vmatpush2.bf16.msra.mxu0 0
        %4413 = vmatprep.subr.bf16.mxu0 0
        %4414 = vmatpush2.bf16.msra.mxu0 0
        %4415 = vmatprep.subr.bf16.mxu0 0
        %4416 = vmatpush2.bf16.msra.mxu0 0
        %4417 = vmatprep.mubr.bf16.mxu0 0
        %4418 = vmatmul.mubr.bf16.gmra.mxu0 %v4380
        %v4419 = vpop.f32.mrf.mxu0
        %v4420 = vadd.f32 0.0, %v4419
        %v4421 = vpop.f32.mrf.mxu0
        %v4422 = vpop.f32.mrf.mxu0
        %v4423 = vpop.f32.mrf.mxu0
        %4424 = vdwg.mxu0
        %4425 = vrot.lane.b32.xlu0 %v4083, 64
        %v4426 = vpop.permute.xlu0 %4425
        %v4428 = vsel %vm759, %v4327, 0
        %v4431 = vsel %vm2863, %v4426, 0
        %4433 = vmatprep.subr.bf16.mxu0 0
        %4434 = vmatpush1.bf16.msra.mxu0 0
        %4435 = vmatprep.subr.bf16.mxu0 0
        %4436 = vmatpush1.bf16.msra.mxu0 0
        %4437 = vmatprep.subr.bf16.mxu0 0
        %4438 = vmatpush1.bf16.msra.mxu0 0
        %4439 = vmatprep.subr.bf16.mxu0 0
        %4440 = vmatpush1.bf16.msra.mxu0 0
        %4441 = vmatprep.subr.bf16.mxu0 0
        %4442 = vmatpush1.bf16.msra.mxu0 0
        %4443 = vmatprep.subr.bf16.mxu0 0
        %4444 = vmatpush1.bf16.msra.mxu0 0
        %4445 = vmatprep.subr.bf16.mxu0 0
        %4446 = vmatpush1.bf16.msra.mxu0 0
        %4447 = vmatprep.subr.bf16.mxu0 0
        %4448 = vmatpush1.bf16.msra.mxu0 %v4431
        %4449 = vmatprep.subr.bf16.mxu0 0
        %4450 = vmatpush2.bf16.msra.mxu0 0
        %4451 = vmatprep.subr.bf16.mxu0 0
        %4452 = vmatpush2.bf16.msra.mxu0 0
        %4453 = vmatprep.subr.bf16.mxu0 0
        %4454 = vmatpush2.bf16.msra.mxu0 0
        %4455 = vmatprep.subr.bf16.mxu0 0
        %4456 = vmatpush2.bf16.msra.mxu0 0
        %4457 = vmatprep.subr.bf16.mxu0 0
        %4458 = vmatpush2.bf16.msra.mxu0 0
        %4459 = vmatprep.subr.bf16.mxu0 0
        %4460 = vmatpush2.bf16.msra.mxu0 0
        %4461 = vmatprep.subr.bf16.mxu0 0
        %4462 = vmatpush2.bf16.msra.mxu0 0
        %4463 = vmatprep.subr.bf16.mxu0 0
        %4464 = vmatpush2.bf16.msra.mxu0 0
        %4465 = vmatprep.mubr.bf16.mxu0 0
        %4466 = vmatmul.mubr.bf16.gmra.mxu0 %v4428
        %v4467 = vpop.f32.mrf.mxu0
        %v4468 = vadd.f32 0.0, %v4467
        %v4469 = vpop.f32.mrf.mxu0
        %v4470 = vpop.f32.mrf.mxu0
        %v4471 = vpop.f32.mrf.mxu0
        %4472 = vdwg.mxu0
        %4473 = vrot.lane.b32.xlu0 %v4084, 64
        %v4474 = vpop.permute.xlu0 %4473
        %v4476 = vsel %vm759, %v4328, 0
        %v4479 = vsel %vm2863, %v4474, 0
        %4481 = vmatprep.subr.bf16.mxu0 0
        %4482 = vmatpush1.bf16.msra.mxu0 0
        %4483 = vmatprep.subr.bf16.mxu0 0
        %4484 = vmatpush1.bf16.msra.mxu0 0
        %4485 = vmatprep.subr.bf16.mxu0 0
        %4486 = vmatpush1.bf16.msra.mxu0 0
        %4487 = vmatprep.subr.bf16.mxu0 0
        %4488 = vmatpush1.bf16.msra.mxu0 0
        %4489 = vmatprep.subr.bf16.mxu0 0
        %4490 = vmatpush1.bf16.msra.mxu0 0
        %4491 = vmatprep.subr.bf16.mxu0 0
        %4492 = vmatpush1.bf16.msra.mxu0 0
        %4493 = vmatprep.subr.bf16.mxu0 0
        %4494 = vmatpush1.bf16.msra.mxu0 0
        %4495 = vmatprep.subr.bf16.mxu0 0
        %4496 = vmatpush1.bf16.msra.mxu0 %v4479
        %4497 = vmatprep.subr.bf16.mxu0 0
        %4498 = vmatpush2.bf16.msra.mxu0 0
        %4499 = vmatprep.subr.bf16.mxu0 0
        %4500 = vmatpush2.bf16.msra.mxu0 0
        %4501 = vmatprep.subr.bf16.mxu0 0
        %4502 = vmatpush2.bf16.msra.mxu0 0
        %4503 = vmatprep.subr.bf16.mxu0 0
        %4504 = vmatpush2.bf16.msra.mxu0 0
        %4505 = vmatprep.subr.bf16.mxu0 0
        %4506 = vmatpush2.bf16.msra.mxu0 0
        %4507 = vmatprep.subr.bf16.mxu0 0
        %4508 = vmatpush2.bf16.msra.mxu0 0
        %4509 = vmatprep.subr.bf16.mxu0 0
        %4510 = vmatpush2.bf16.msra.mxu0 0
        %4511 = vmatprep.subr.bf16.mxu0 0
        %4512 = vmatpush2.bf16.msra.mxu0 0
        %4513 = vmatprep.mubr.bf16.mxu0 0
        %4514 = vmatmul.mubr.bf16.gmra.mxu0 %v4476
        %v4515 = vpop.f32.mrf.mxu0
        %v4516 = vadd.f32 0.0, %v4515
        %v4517 = vpop.f32.mrf.mxu0
        %v4518 = vpop.f32.mrf.mxu0
        %v4519 = vpop.f32.mrf.mxu0
        %4520 = vdwg.mxu0
        %v4521 = vrcp.pop %v4315
        %v4522 = vrcp.pop %v4318
        %v4523 = vrcp.pop %v4321
        %v4524 = vrcp.pop %v4324
        %v4525 = vmul.f32 %v4372, %v4521
        %v4526 = vmul.f32 %v4420, %v4522
        %v4527 = vmul.f32 %v4468, %v4523
        %v4528 = vmul.f32 %v4516, %v4524
        %4530 = vrot.lane.b32.xlu0 %v4526, 8
        %v4531 = vpop.permute.xlu0 %4530
        %4534 = vrot.lane.b32.xlu0 %v4527, 16
        %v4535 = vpop.permute.xlu0 %4534
        %4538 = vrot.lane.b32.xlu0 %v4528, 24
        %v4539 = vpop.permute.xlu0 %4538
        %v4541 = vsel %vm759, %v4525, %v4531
        %v4542 = vsel %vm1282, %v4541, %v4535
        %v4543 = vsel %vm1285, %v4542, %v4539
        %v4544 = vpack.c.bf16 %v4543, %v4543
        %v4545 = vlaneseq
        %v4546 = vshrl.u32 %v4545, 7
        %v4547 = vsub.s32 1, %v4546
        %v4548 = vrot.slane %v3986, %v4547
        %4549 = vrot.lane.b32.xlu0 %v4024, 32
        %v4550 = vpop.permute.xlu0 %4549
        %4551 = vrot.lane.b32.xlu0 %v4025, 32
        %v4552 = vpop.permute.xlu0 %4551
        %v4556 = vsel %vm630, %v4544, 0
        %4558 = vmatprep.subr.bf16.mxu0 0
        %4559 = vmatpush1.bf16.msra.mxu0 0
        %4560 = vmatprep.subr.bf16.mxu0 0
        %4561 = vmatpush1.bf16.msra.mxu0 0
        %4562 = vmatprep.subr.bf16.mxu0 0
        %4563 = vmatpush1.bf16.msra.mxu0 0
        %4564 = vmatprep.subr.bf16.mxu0 0
        %4565 = vmatpush1.bf16.msra.mxu0 0
        %4566 = vmatprep.subr.bf16.mxu0 0
        %4567 = vmatpush1.bf16.msra.mxu0 0
        %4568 = vmatprep.subr.bf16.mxu0 0
        %4569 = vmatpush1.bf16.msra.mxu0 0
        %4570 = vmatprep.subr.bf16.mxu0 0
        %4571 = vmatpush1.bf16.msra.mxu0 %v4552
        %4572 = vmatprep.subr.bf16.mxu0 0
        %4573 = vmatpush1.bf16.msra.mxu0 %v4550
        %4574 = vmatprep.subr.bf16.mxu0 0
        %4575 = vmatpush2.bf16.msra.mxu0 0
        %4576 = vmatprep.subr.bf16.mxu0 0
        %4577 = vmatpush2.bf16.msra.mxu0 0
        %4578 = vmatprep.subr.bf16.mxu0 0
        %4579 = vmatpush2.bf16.msra.mxu0 0
        %4580 = vmatprep.subr.bf16.mxu0 0
        %4581 = vmatpush2.bf16.msra.mxu0 0
        %4582 = vmatprep.subr.bf16.mxu0 0
        %4583 = vmatpush2.bf16.msra.mxu0 0
        %4584 = vmatprep.subr.bf16.mxu0 0
        %4585 = vmatpush2.bf16.msra.mxu0 0
        %4586 = vmatprep.subr.bf16.mxu0 0
        %4587 = vmatpush2.bf16.msra.mxu0 0
        %4588 = vmatprep.subr.bf16.mxu0 0
        %4589 = vmatpush2.bf16.msra.mxu0 0
        %4590 = vmatprep.mubr.bf16.mxu0 0
        %4591 = vmatmul.mubr.bf16.gmra.mxu0 %v4556
        %v4592 = vpop.f32.mrf.mxu0
        %v4593 = vadd.f32 %v4548, %v4592
        %v4594 = vpop.f32.mrf.mxu0
        %v4595 = vpop.f32.mrf.mxu0
        %v4596 = vpop.f32.mrf.mxu0
        %4597 = vdwg.mxu0
        %v4598 = vadd.f32 %v3975, %v4593
        %v4599 = vsel %vm630, %v4598, 0.0
        %4600 = vadd.xlane.f32.xlu0 %v4599
        %v4601 = vpop.xlane.xlu0 %4600
        %v4602 = vmul.f32 %v4601, %v638
        %v4603 = vsub.f32 %v4598, %v4602
        %v4604 = vmul.f32 %v4603, %v4603
        %v4605 = vsel %vm630, %v4604, 0.0
        %4606 = vadd.xlane.f32.xlu0 %v4605
        %v4607 = vpop.xlane.xlu0 %4606
        %v4608 = vmul.f32 %v4607, %v638
        %v4609 = vadd.f32 %v4608, 1e-05
        %v4610 = vrsqrt.pop %v4609
        %v4611 = vmul.f32 %v4603, %v4610
        %v4612 = vlaneseq
        %v4613 = vshrl.u32 %v4612, 7
        %v4614 = vsub.s32 7, %v4613
        %v4615 = vrot.slane %v3986, %v4614
        %v4616 = vmul.f32 %v4611, %v4615
        %v4617 = vlaneseq
        %v4618 = vshrl.u32 %v4617, 7
        %v4619 = vsub.s32 0, %v4618
        %v4620 = vrot.slane %v3987, %v4619
        %v4621 = vadd.f32 %v4616, %v4620
        %v4622 = vpack.c.bf16 %v4621, %v4621
        %v4623 = vlaneseq
        %v4624 = vshrl.u32 %v4623, 7
        %v4625 = vsub.s32 2, %v4624
        %v4626 = vrot.slane %v3986, %v4625
        %v4627 = vunpack.c.h.b16 %v3977
        %v4628 = vunpack.c.h.b16 %v3979
        %v4629 = vunpack.c.h.b16 %v3981
        %v4630 = vunpack.c.h.b16 %v3983
        %v4631 = vpack.c.b16 %v4628, %v4627
        %v4632 = vpack.c.b16 %v4630, %v4629
        %v4636 = vsel %vm630, %v4622, 0
        %4638 = vmatprep.subr.bf16.mxu0 0
        %4639 = vmatpush1.bf16.msra.mxu0 0
        %4640 = vmatprep.subr.bf16.mxu0 0
        %4641 = vmatpush1.bf16.msra.mxu0 0
        %4642 = vmatprep.subr.bf16.mxu0 0
        %4643 = vmatpush1.bf16.msra.mxu0 0
        %4644 = vmatprep.subr.bf16.mxu0 0
        %4645 = vmatpush1.bf16.msra.mxu0 0
        %4646 = vmatprep.subr.bf16.mxu0 0
        %4647 = vmatpush1.bf16.msra.mxu0 0
        %4648 = vmatprep.subr.bf16.mxu0 0
        %4649 = vmatpush1.bf16.msra.mxu0 0
        %4650 = vmatprep.subr.bf16.mxu0 0
        %4651 = vmatpush1.bf16.msra.mxu0 %v4632
        %4652 = vmatprep.subr.bf16.mxu0 0
        %4653 = vmatpush1.bf16.msra.mxu0 %v4631
        %4654 = vmatprep.subr.bf16.mxu0 0
        %4655 = vmatpush2.bf16.msra.mxu0 0
        %4656 = vmatprep.subr.bf16.mxu0 0
        %4657 = vmatpush2.bf16.msra.mxu0 0
        %4658 = vmatprep.subr.bf16.mxu0 0
        %4659 = vmatpush2.bf16.msra.mxu0 0
        %4660 = vmatprep.subr.bf16.mxu0 0
        %4661 = vmatpush2.bf16.msra.mxu0 0
        %4662 = vmatprep.subr.bf16.mxu0 0
        %4663 = vmatpush2.bf16.msra.mxu0 0
        %4664 = vmatprep.subr.bf16.mxu0 0
        %4665 = vmatpush2.bf16.msra.mxu0 0
        %4666 = vmatprep.subr.bf16.mxu0 0
        %4667 = vmatpush2.bf16.msra.mxu0 0
        %4668 = vmatprep.subr.bf16.mxu0 0
        %4669 = vmatpush2.bf16.msra.mxu0 0
        %4670 = vmatprep.mubr.bf16.mxu0 0
        %4671 = vmatmul.mubr.bf16.gmra.mxu0 %v4636
        %v4672 = vpop.f32.mrf.mxu0
        %v4673 = vadd.f32 %v4626, %v4672
        %v4674 = vpop.f32.mrf.mxu0
        %v4675 = vpop.f32.mrf.mxu0
        %v4676 = vpop.f32.mrf.mxu0
        %4677 = vdwg.mxu0
        %v4678 = vlaneseq
        %v4679 = vshrl.u32 %v4678, 7
        %v4680 = vsub.s32 3, %v4679
        %v4681 = vrot.slane %v3986, %v4680
        %4682 = vrot.lane.b32.xlu0 %v4631, 96
        %v4683 = vpop.permute.xlu0 %4682
        %4684 = vrot.lane.b32.xlu0 %v4632, 96
        %v4685 = vpop.permute.xlu0 %4684
        %4688 = vmatprep.subr.bf16.mxu0 0
        %4689 = vmatpush1.bf16.msra.mxu0 0
        %4690 = vmatprep.subr.bf16.mxu0 0
        %4691 = vmatpush1.bf16.msra.mxu0 0
        %4692 = vmatprep.subr.bf16.mxu0 0
        %4693 = vmatpush1.bf16.msra.mxu0 0
        %4694 = vmatprep.subr.bf16.mxu0 0
        %4695 = vmatpush1.bf16.msra.mxu0 0
        %4696 = vmatprep.subr.bf16.mxu0 0
        %4697 = vmatpush1.bf16.msra.mxu0 0
        %4698 = vmatprep.subr.bf16.mxu0 0
        %4699 = vmatpush1.bf16.msra.mxu0 0
        %4700 = vmatprep.subr.bf16.mxu0 0
        %4701 = vmatpush1.bf16.msra.mxu0 %v4685
        %4702 = vmatprep.subr.bf16.mxu0 0
        %4703 = vmatpush1.bf16.msra.mxu0 %v4683
        %4704 = vmatprep.subr.bf16.mxu0 0
        %4705 = vmatpush2.bf16.msra.mxu0 0
        %4706 = vmatprep.subr.bf16.mxu0 0
        %4707 = vmatpush2.bf16.msra.mxu0 0
        %4708 = vmatprep.subr.bf16.mxu0 0
        %4709 = vmatpush2.bf16.msra.mxu0 0
        %4710 = vmatprep.subr.bf16.mxu0 0
        %4711 = vmatpush2.bf16.msra.mxu0 0
        %4712 = vmatprep.subr.bf16.mxu0 0
        %4713 = vmatpush2.bf16.msra.mxu0 0
        %4714 = vmatprep.subr.bf16.mxu0 0
        %4715 = vmatpush2.bf16.msra.mxu0 0
        %4716 = vmatprep.subr.bf16.mxu0 0
        %4717 = vmatpush2.bf16.msra.mxu0 0
        %4718 = vmatprep.subr.bf16.mxu0 0
        %4719 = vmatpush2.bf16.msra.mxu0 0
        %4720 = vmatprep.mubr.bf16.mxu0 0
        %4721 = vmatmul.mubr.bf16.gmra.mxu0 %v3220
        %v4722 = vpop.f32.mrf.mxu0
        %v4723 = vadd.f32 %v4681, %v4722
        %v4724 = vpop.f32.mrf.mxu0
        %v4725 = vpop.f32.mrf.mxu0
        %v4726 = vadd.f32 %v4681, %v4725
        %v4727 = vpop.f32.mrf.mxu0
        %4728 = vdwg.mxu0
        %4730 = vrot.lane.b32.xlu0 %v4673, 120
        %v4731 = vpop.permute.xlu0 %4730
        %4733 = vrot.lane.b32.xlu0 %v4673, 112
        %v4734 = vpop.permute.xlu0 %4733
        %4736 = vrot.lane.b32.xlu0 %v4673, 104
        %v4737 = vpop.permute.xlu0 %4736
        %4741 = vrot.lane.b32.xlu0 %v4723, 120
        %v4742 = vpop.permute.xlu0 %4741
        %4743 = vrot.lane.b32.xlu0 %v4726, 120
        %v4744 = vpop.permute.xlu0 %4743
        %4747 = vrot.lane.b32.xlu0 %v4723, 112
        %v4748 = vpop.permute.xlu0 %4747
        %4749 = vrot.lane.b32.xlu0 %v4726, 112
        %v4750 = vpop.permute.xlu0 %4749
        %4753 = vrot.lane.b32.xlu0 %v4723, 104
        %v4754 = vpop.permute.xlu0 %4753
        %4755 = vrot.lane.b32.xlu0 %v4726, 104
        %v4756 = vpop.permute.xlu0 %4755
        %v4759 = vpack.c.bf16 %v4673, %v4673
        %v4760 = vpack.c.bf16 %v4731, %v4731
        %v4761 = vpack.c.bf16 %v4734, %v4734
        %v4762 = vpack.c.bf16 %v4737, %v4737
        %v4763 = vpack.c.bf16 %v4726, %v4723
        %v4764 = vpack.c.bf16 %v4744, %v4742
        %v4765 = vpack.c.bf16 %v4750, %v4748
        %v4766 = vpack.c.bf16 %v4756, %v4754
        %v4768 = vsel %vm759, %v4759, 0
        %v4771 = vsel %vm759, %v4763, 0
        %4773 = vmatprep.subr.bf16.mxu0 0
        %4774 = vmatpush1.bf16.xpose.msra.mxu0 0
        %4775 = vmatprep.subr.bf16.mxu0 0
        %4776 = vmatpush1.bf16.xpose.msra.mxu0 0
        %4777 = vmatprep.subr.bf16.mxu0 0
        %4778 = vmatpush1.bf16.xpose.msra.mxu0 0
        %4779 = vmatprep.subr.bf16.mxu0 0
        %4780 = vmatpush1.bf16.xpose.msra.mxu0 0
        %4781 = vmatprep.subr.bf16.mxu0 0
        %4782 = vmatpush1.bf16.xpose.msra.mxu0 0
        %4783 = vmatprep.subr.bf16.mxu0 0
        %4784 = vmatpush1.bf16.xpose.msra.mxu0 0
        %4785 = vmatprep.subr.bf16.mxu0 0
        %4786 = vmatpush1.bf16.xpose.msra.mxu0 0
        %4787 = vmatprep.subr.bf16.mxu0 0
        %4788 = vmatpush1.bf16.xpose.msra.mxu0 %v4771
        %4789 = vmatprep.subr.bf16.mxu0 0
        %4790 = vmatpush2.bf16.xpose.msra.mxu0 0
        %4791 = vmatprep.subr.bf16.mxu0 0
        %4792 = vmatpush2.bf16.xpose.msra.mxu0 0
        %4793 = vmatprep.subr.bf16.mxu0 0
        %4794 = vmatpush2.bf16.xpose.msra.mxu0 0
        %4795 = vmatprep.subr.bf16.mxu0 0
        %4796 = vmatpush2.bf16.xpose.msra.mxu0 0
        %4797 = vmatprep.subr.bf16.mxu0 0
        %4798 = vmatpush2.bf16.xpose.msra.mxu0 0
        %4799 = vmatprep.subr.bf16.mxu0 0
        %4800 = vmatpush2.bf16.xpose.msra.mxu0 0
        %4801 = vmatprep.subr.bf16.mxu0 0
        %4802 = vmatpush2.bf16.xpose.msra.mxu0 0
        %4803 = vmatprep.subr.bf16.mxu0 0
        %4804 = vmatpush2.bf16.xpose.msra.mxu0 0
        %4805 = vmatprep.mubr.bf16.mxu0 0
        %4806 = vmatmul.mubr.bf16.gmra.mxu0 %v4768
        %v4807 = vpop.f32.mrf.mxu0
        %v4808 = vadd.f32 0.0, %v4807
        %v4809 = vpop.f32.mrf.mxu0
        %v4810 = vpop.f32.mrf.mxu0
        %v4811 = vpop.f32.mrf.mxu0
        %4812 = vdwg.mxu0
        %v4814 = vsel %vm759, %v4760, 0
        %v4817 = vsel %vm759, %v4764, 0
        %4819 = vmatprep.subr.bf16.mxu0 0
        %4820 = vmatpush1.bf16.xpose.msra.mxu0 0
        %4821 = vmatprep.subr.bf16.mxu0 0
        %4822 = vmatpush1.bf16.xpose.msra.mxu0 0
        %4823 = vmatprep.subr.bf16.mxu0 0
        %4824 = vmatpush1.bf16.xpose.msra.mxu0 0
        %4825 = vmatprep.subr.bf16.mxu0 0
        %4826 = vmatpush1.bf16.xpose.msra.mxu0 0
        %4827 = vmatprep.subr.bf16.mxu0 0
        %4828 = vmatpush1.bf16.xpose.msra.mxu0 0
        %4829 = vmatprep.subr.bf16.mxu0 0
        %4830 = vmatpush1.bf16.xpose.msra.mxu0 0
        %4831 = vmatprep.subr.bf16.mxu0 0
        %4832 = vmatpush1.bf16.xpose.msra.mxu0 0
        %4833 = vmatprep.subr.bf16.mxu0 0
        %4834 = vmatpush1.bf16.xpose.msra.mxu0 %v4817
        %4835 = vmatprep.subr.bf16.mxu0 0
        %4836 = vmatpush2.bf16.xpose.msra.mxu0 0
        %4837 = vmatprep.subr.bf16.mxu0 0
        %4838 = vmatpush2.bf16.xpose.msra.mxu0 0
        %4839 = vmatprep.subr.bf16.mxu0 0
        %4840 = vmatpush2.bf16.xpose.msra.mxu0 0
        %4841 = vmatprep.subr.bf16.mxu0 0
        %4842 = vmatpush2.bf16.xpose.msra.mxu0 0
        %4843 = vmatprep.subr.bf16.mxu0 0
        %4844 = vmatpush2.bf16.xpose.msra.mxu0 0
        %4845 = vmatprep.subr.bf16.mxu0 0
        %4846 = vmatpush2.bf16.xpose.msra.mxu0 0
        %4847 = vmatprep.subr.bf16.mxu0 0
        %4848 = vmatpush2.bf16.xpose.msra.mxu0 0
        %4849 = vmatprep.subr.bf16.mxu0 0
        %4850 = vmatpush2.bf16.xpose.msra.mxu0 0
        %4851 = vmatprep.mubr.bf16.mxu0 0
        %4852 = vmatmul.mubr.bf16.gmra.mxu0 %v4814
        %v4853 = vpop.f32.mrf.mxu0
        %v4854 = vadd.f32 0.0, %v4853
        %v4855 = vpop.f32.mrf.mxu0
        %v4856 = vpop.f32.mrf.mxu0
        %v4857 = vpop.f32.mrf.mxu0
        %4858 = vdwg.mxu0
        %v4860 = vsel %vm759, %v4761, 0
        %v4863 = vsel %vm759, %v4765, 0
        %4865 = vmatprep.subr.bf16.mxu0 0
        %4866 = vmatpush1.bf16.xpose.msra.mxu0 0
        %4867 = vmatprep.subr.bf16.mxu0 0
        %4868 = vmatpush1.bf16.xpose.msra.mxu0 0
        %4869 = vmatprep.subr.bf16.mxu0 0
        %4870 = vmatpush1.bf16.xpose.msra.mxu0 0
        %4871 = vmatprep.subr.bf16.mxu0 0
        %4872 = vmatpush1.bf16.xpose.msra.mxu0 0
        %4873 = vmatprep.subr.bf16.mxu0 0
        %4874 = vmatpush1.bf16.xpose.msra.mxu0 0
        %4875 = vmatprep.subr.bf16.mxu0 0
        %4876 = vmatpush1.bf16.xpose.msra.mxu0 0
        %4877 = vmatprep.subr.bf16.mxu0 0
        %4878 = vmatpush1.bf16.xpose.msra.mxu0 0
        %4879 = vmatprep.subr.bf16.mxu0 0
        %4880 = vmatpush1.bf16.xpose.msra.mxu0 %v4863
        %4881 = vmatprep.subr.bf16.mxu0 0
        %4882 = vmatpush2.bf16.xpose.msra.mxu0 0
        %4883 = vmatprep.subr.bf16.mxu0 0
        %4884 = vmatpush2.bf16.xpose.msra.mxu0 0
        %4885 = vmatprep.subr.bf16.mxu0 0
        %4886 = vmatpush2.bf16.xpose.msra.mxu0 0
        %4887 = vmatprep.subr.bf16.mxu0 0
        %4888 = vmatpush2.bf16.xpose.msra.mxu0 0
        %4889 = vmatprep.subr.bf16.mxu0 0
        %4890 = vmatpush2.bf16.xpose.msra.mxu0 0
        %4891 = vmatprep.subr.bf16.mxu0 0
        %4892 = vmatpush2.bf16.xpose.msra.mxu0 0
        %4893 = vmatprep.subr.bf16.mxu0 0
        %4894 = vmatpush2.bf16.xpose.msra.mxu0 0
        %4895 = vmatprep.subr.bf16.mxu0 0
        %4896 = vmatpush2.bf16.xpose.msra.mxu0 0
        %4897 = vmatprep.mubr.bf16.mxu0 0
        %4898 = vmatmul.mubr.bf16.gmra.mxu0 %v4860
        %v4899 = vpop.f32.mrf.mxu0
        %v4900 = vadd.f32 0.0, %v4899
        %v4901 = vpop.f32.mrf.mxu0
        %v4902 = vpop.f32.mrf.mxu0
        %v4903 = vpop.f32.mrf.mxu0
        %4904 = vdwg.mxu0
        %v4906 = vsel %vm759, %v4762, 0
        %v4909 = vsel %vm759, %v4766, 0
        %4911 = vmatprep.subr.bf16.mxu0 0
        %4912 = vmatpush1.bf16.xpose.msra.mxu0 0
        %4913 = vmatprep.subr.bf16.mxu0 0
        %4914 = vmatpush1.bf16.xpose.msra.mxu0 0
        %4915 = vmatprep.subr.bf16.mxu0 0
        %4916 = vmatpush1.bf16.xpose.msra.mxu0 0
        %4917 = vmatprep.subr.bf16.mxu0 0
        %4918 = vmatpush1.bf16.xpose.msra.mxu0 0
        %4919 = vmatprep.subr.bf16.mxu0 0
        %4920 = vmatpush1.bf16.xpose.msra.mxu0 0
        %4921 = vmatprep.subr.bf16.mxu0 0
        %4922 = vmatpush1.bf16.xpose.msra.mxu0 0
        %4923 = vmatprep.subr.bf16.mxu0 0
        %4924 = vmatpush1.bf16.xpose.msra.mxu0 0
        %4925 = vmatprep.subr.bf16.mxu0 0
        %4926 = vmatpush1.bf16.xpose.msra.mxu0 %v4909
        %4927 = vmatprep.subr.bf16.mxu0 0
        %4928 = vmatpush2.bf16.xpose.msra.mxu0 0
        %4929 = vmatprep.subr.bf16.mxu0 0
        %4930 = vmatpush2.bf16.xpose.msra.mxu0 0
        %4931 = vmatprep.subr.bf16.mxu0 0
        %4932 = vmatpush2.bf16.xpose.msra.mxu0 0
        %4933 = vmatprep.subr.bf16.mxu0 0
        %4934 = vmatpush2.bf16.xpose.msra.mxu0 0
        %4935 = vmatprep.subr.bf16.mxu0 0
        %4936 = vmatpush2.bf16.xpose.msra.mxu0 0
        %4937 = vmatprep.subr.bf16.mxu0 0
        %4938 = vmatpush2.bf16.xpose.msra.mxu0 0
        %4939 = vmatprep.subr.bf16.mxu0 0
        %4940 = vmatpush2.bf16.xpose.msra.mxu0 0
        %4941 = vmatprep.subr.bf16.mxu0 0
        %4942 = vmatpush2.bf16.xpose.msra.mxu0 0
        %4943 = vmatprep.mubr.bf16.mxu0 0
        %4944 = vmatmul.mubr.bf16.gmra.mxu0 %v4906
        %v4945 = vpop.f32.mrf.mxu0
        %v4946 = vadd.f32 0.0, %v4945
        %v4947 = vpop.f32.mrf.mxu0
        %v4948 = vpop.f32.mrf.mxu0
        %v4949 = vpop.f32.mrf.mxu0
        %4950 = vdwg.mxu0
        %v4951 = vmul.f32 %v4808, 0.35355338
        %v4952 = vmul.f32 %v4854, 0.35355338
        %v4953 = vmul.f32 %v4900, 0.35355338
        %v4954 = vmul.f32 %v4946, 0.35355338
        %v4955 = vsel %vm965, %v4951, -inf
        %4956 = vmax.xlane.f32.xlu0 %v4955
        %v4957 = vpop.xlane.xlu0 %4956
        %v4958 = vsel %vm965, %v4952, -inf
        %4959 = vmax.xlane.f32.xlu0 %v4958
        %v4960 = vpop.xlane.xlu0 %4959
        %v4961 = vsel %vm965, %v4953, -inf
        %4962 = vmax.xlane.f32.xlu0 %v4961
        %v4963 = vpop.xlane.xlu0 %4962
        %v4964 = vsel %vm965, %v4954, -inf
        %4965 = vmax.xlane.f32.xlu0 %v4964
        %v4966 = vpop.xlane.xlu0 %4965
        %v4967 = vsub.f32 %v4951, %v4957
        %v4968 = vsub.f32 %v4952, %v4960
        %v4969 = vsub.f32 %v4953, %v4963
        %v4970 = vsub.f32 %v4954, %v4966
        %v4971 = vmul.f32 %v4967, 1.442695
        %v4972 = vpow.pop %v4971
        %v4973 = vmul.f32 %v4968, 1.442695
        %v4974 = vpow.pop %v4973
        %v4975 = vmul.f32 %v4969, 1.442695
        %v4976 = vpow.pop %v4975
        %v4977 = vmul.f32 %v4970, 1.442695
        %v4978 = vpow.pop %v4977
        %v4979 = vsel %vm965, %v4972, 0.0
        %4980 = vadd.xlane.f32.xlu0 %v4979
        %v4981 = vpop.xlane.xlu0 %4980
        %v4982 = vsel %vm965, %v4974, 0.0
        %4983 = vadd.xlane.f32.xlu0 %v4982
        %v4984 = vpop.xlane.xlu0 %4983
        %v4985 = vsel %vm965, %v4976, 0.0
        %4986 = vadd.xlane.f32.xlu0 %v4985
        %v4987 = vpop.xlane.xlu0 %4986
        %v4988 = vsel %vm965, %v4978, 0.0
        %4989 = vadd.xlane.f32.xlu0 %v4988
        %v4990 = vpop.xlane.xlu0 %4989
        %v4991 = vpack.c.bf16 %v4972, %v4972
        %v4992 = vpack.c.bf16 %v4974, %v4974
        %v4993 = vpack.c.bf16 %v4976, %v4976
        %v4994 = vpack.c.bf16 %v4978, %v4978
        %4996 = vrot.lane.b32.xlu0 %v4763, 96
        %v4997 = vpop.permute.xlu0 %4996
        %v4999 = vsel %vm965, %v4991, 0
        %v5002 = vsel %vm1048, %v4997, 0
        %5004 = vmatprep.subr.bf16.mxu0 0
        %5005 = vmatpush1.bf16.msra.mxu0 0
        %5006 = vmatprep.subr.bf16.mxu0 0
        %5007 = vmatpush1.bf16.msra.mxu0 0
        %5008 = vmatprep.subr.bf16.mxu0 0
        %5009 = vmatpush1.bf16.msra.mxu0 0
        %5010 = vmatprep.subr.bf16.mxu0 0
        %5011 = vmatpush1.bf16.msra.mxu0 0
        %5012 = vmatprep.subr.bf16.mxu0 0
        %5013 = vmatpush1.bf16.msra.mxu0 0
        %5014 = vmatprep.subr.bf16.mxu0 0
        %5015 = vmatpush1.bf16.msra.mxu0 0
        %5016 = vmatprep.subr.bf16.mxu0 0
        %5017 = vmatpush1.bf16.msra.mxu0 0
        %5018 = vmatprep.subr.bf16.mxu0 0
        %5019 = vmatpush1.bf16.msra.mxu0 %v5002
        %5020 = vmatprep.subr.bf16.mxu0 0
        %5021 = vmatpush2.bf16.msra.mxu0 0
        %5022 = vmatprep.subr.bf16.mxu0 0
        %5023 = vmatpush2.bf16.msra.mxu0 0
        %5024 = vmatprep.subr.bf16.mxu0 0
        %5025 = vmatpush2.bf16.msra.mxu0 0
        %5026 = vmatprep.subr.bf16.mxu0 0
        %5027 = vmatpush2.bf16.msra.mxu0 0
        %5028 = vmatprep.subr.bf16.mxu0 0
        %5029 = vmatpush2.bf16.msra.mxu0 0
        %5030 = vmatprep.subr.bf16.mxu0 0
        %5031 = vmatpush2.bf16.msra.mxu0 0
        %5032 = vmatprep.subr.bf16.mxu0 0
        %5033 = vmatpush2.bf16.msra.mxu0 0
        %5034 = vmatprep.subr.bf16.mxu0 0
        %5035 = vmatpush2.bf16.msra.mxu0 0
        %5036 = vmatprep.mubr.bf16.mxu0 0
        %5037 = vmatmul.mubr.bf16.gmra.mxu0 %v4999
        %v5038 = vpop.f32.mrf.mxu0
        %v5039 = vadd.f32 0.0, %v5038
        %v5040 = vpop.f32.mrf.mxu0
        %v5041 = vpop.f32.mrf.mxu0
        %v5042 = vpop.f32.mrf.mxu0
        %5043 = vdwg.mxu0
        %5045 = vrot.lane.b32.xlu0 %v4764, 96
        %v5046 = vpop.permute.xlu0 %5045
        %v5048 = vsel %vm965, %v4992, 0
        %v5051 = vsel %vm1048, %v5046, 0
        %5053 = vmatprep.subr.bf16.mxu0 0
        %5054 = vmatpush1.bf16.msra.mxu0 0
        %5055 = vmatprep.subr.bf16.mxu0 0
        %5056 = vmatpush1.bf16.msra.mxu0 0
        %5057 = vmatprep.subr.bf16.mxu0 0
        %5058 = vmatpush1.bf16.msra.mxu0 0
        %5059 = vmatprep.subr.bf16.mxu0 0
        %5060 = vmatpush1.bf16.msra.mxu0 0
        %5061 = vmatprep.subr.bf16.mxu0 0
        %5062 = vmatpush1.bf16.msra.mxu0 0
        %5063 = vmatprep.subr.bf16.mxu0 0
        %5064 = vmatpush1.bf16.msra.mxu0 0
        %5065 = vmatprep.subr.bf16.mxu0 0
        %5066 = vmatpush1.bf16.msra.mxu0 0
        %5067 = vmatprep.subr.bf16.mxu0 0
        %5068 = vmatpush1.bf16.msra.mxu0 %v5051
        %5069 = vmatprep.subr.bf16.mxu0 0
        %5070 = vmatpush2.bf16.msra.mxu0 0
        %5071 = vmatprep.subr.bf16.mxu0 0
        %5072 = vmatpush2.bf16.msra.mxu0 0
        %5073 = vmatprep.subr.bf16.mxu0 0
        %5074 = vmatpush2.bf16.msra.mxu0 0
        %5075 = vmatprep.subr.bf16.mxu0 0
        %5076 = vmatpush2.bf16.msra.mxu0 0
        %5077 = vmatprep.subr.bf16.mxu0 0
        %5078 = vmatpush2.bf16.msra.mxu0 0
        %5079 = vmatprep.subr.bf16.mxu0 0
        %5080 = vmatpush2.bf16.msra.mxu0 0
        %5081 = vmatprep.subr.bf16.mxu0 0
        %5082 = vmatpush2.bf16.msra.mxu0 0
        %5083 = vmatprep.subr.bf16.mxu0 0
        %5084 = vmatpush2.bf16.msra.mxu0 0
        %5085 = vmatprep.mubr.bf16.mxu0 0
        %5086 = vmatmul.mubr.bf16.gmra.mxu0 %v5048
        %v5087 = vpop.f32.mrf.mxu0
        %v5088 = vadd.f32 0.0, %v5087
        %v5089 = vpop.f32.mrf.mxu0
        %v5090 = vpop.f32.mrf.mxu0
        %v5091 = vpop.f32.mrf.mxu0
        %5092 = vdwg.mxu0
        %5094 = vrot.lane.b32.xlu0 %v4765, 96
        %v5095 = vpop.permute.xlu0 %5094
        %v5097 = vsel %vm965, %v4993, 0
        %v5100 = vsel %vm1048, %v5095, 0
        %5102 = vmatprep.subr.bf16.mxu0 0
        %5103 = vmatpush1.bf16.msra.mxu0 0
        %5104 = vmatprep.subr.bf16.mxu0 0
        %5105 = vmatpush1.bf16.msra.mxu0 0
        %5106 = vmatprep.subr.bf16.mxu0 0
        %5107 = vmatpush1.bf16.msra.mxu0 0
        %5108 = vmatprep.subr.bf16.mxu0 0
        %5109 = vmatpush1.bf16.msra.mxu0 0
        %5110 = vmatprep.subr.bf16.mxu0 0
        %5111 = vmatpush1.bf16.msra.mxu0 0
        %5112 = vmatprep.subr.bf16.mxu0 0
        %5113 = vmatpush1.bf16.msra.mxu0 0
        %5114 = vmatprep.subr.bf16.mxu0 0
        %5115 = vmatpush1.bf16.msra.mxu0 0
        %5116 = vmatprep.subr.bf16.mxu0 0
        %5117 = vmatpush1.bf16.msra.mxu0 %v5100
        %5118 = vmatprep.subr.bf16.mxu0 0
        %5119 = vmatpush2.bf16.msra.mxu0 0
        %5120 = vmatprep.subr.bf16.mxu0 0
        %5121 = vmatpush2.bf16.msra.mxu0 0
        %5122 = vmatprep.subr.bf16.mxu0 0
        %5123 = vmatpush2.bf16.msra.mxu0 0
        %5124 = vmatprep.subr.bf16.mxu0 0
        %5125 = vmatpush2.bf16.msra.mxu0 0
        %5126 = vmatprep.subr.bf16.mxu0 0
        %5127 = vmatpush2.bf16.msra.mxu0 0
        %5128 = vmatprep.subr.bf16.mxu0 0
        %5129 = vmatpush2.bf16.msra.mxu0 0
        %5130 = vmatprep.subr.bf16.mxu0 0
        %5131 = vmatpush2.bf16.msra.mxu0 0
        %5132 = vmatprep.subr.bf16.mxu0 0
        %5133 = vmatpush2.bf16.msra.mxu0 0
        %5134 = vmatprep.mubr.bf16.mxu0 0
        %5135 = vmatmul.mubr.bf16.gmra.mxu0 %v5097
        %v5136 = vpop.f32.mrf.mxu0
        %v5137 = vadd.f32 0.0, %v5136
        %v5138 = vpop.f32.mrf.mxu0
        %v5139 = vpop.f32.mrf.mxu0
        %v5140 = vpop.f32.mrf.mxu0
        %5141 = vdwg.mxu0
        %5143 = vrot.lane.b32.xlu0 %v4766, 96
        %v5144 = vpop.permute.xlu0 %5143
        %v5146 = vsel %vm965, %v4994, 0
        %v5149 = vsel %vm1048, %v5144, 0
        %5151 = vmatprep.subr.bf16.mxu0 0
        %5152 = vmatpush1.bf16.msra.mxu0 0
        %5153 = vmatprep.subr.bf16.mxu0 0
        %5154 = vmatpush1.bf16.msra.mxu0 0
        %5155 = vmatprep.subr.bf16.mxu0 0
        %5156 = vmatpush1.bf16.msra.mxu0 0
        %5157 = vmatprep.subr.bf16.mxu0 0
        %5158 = vmatpush1.bf16.msra.mxu0 0
        %5159 = vmatprep.subr.bf16.mxu0 0
        %5160 = vmatpush1.bf16.msra.mxu0 0
        %5161 = vmatprep.subr.bf16.mxu0 0
        %5162 = vmatpush1.bf16.msra.mxu0 0
        %5163 = vmatprep.subr.bf16.mxu0 0
        %5164 = vmatpush1.bf16.msra.mxu0 0
        %5165 = vmatprep.subr.bf16.mxu0 0
        %5166 = vmatpush1.bf16.msra.mxu0 %v5149
        %5167 = vmatprep.subr.bf16.mxu0 0
        %5168 = vmatpush2.bf16.msra.mxu0 0
        %5169 = vmatprep.subr.bf16.mxu0 0
        %5170 = vmatpush2.bf16.msra.mxu0 0
        %5171 = vmatprep.subr.bf16.mxu0 0
        %5172 = vmatpush2.bf16.msra.mxu0 0
        %5173 = vmatprep.subr.bf16.mxu0 0
        %5174 = vmatpush2.bf16.msra.mxu0 0
        %5175 = vmatprep.subr.bf16.mxu0 0
        %5176 = vmatpush2.bf16.msra.mxu0 0
        %5177 = vmatprep.subr.bf16.mxu0 0
        %5178 = vmatpush2.bf16.msra.mxu0 0
        %5179 = vmatprep.subr.bf16.mxu0 0
        %5180 = vmatpush2.bf16.msra.mxu0 0
        %5181 = vmatprep.subr.bf16.mxu0 0
        %5182 = vmatpush2.bf16.msra.mxu0 0
        %5183 = vmatprep.mubr.bf16.mxu0 0
        %5184 = vmatmul.mubr.bf16.gmra.mxu0 %v5146
        %v5185 = vpop.f32.mrf.mxu0
        %v5186 = vadd.f32 0.0, %v5185
        %v5187 = vpop.f32.mrf.mxu0
        %v5188 = vpop.f32.mrf.mxu0
        %v5189 = vpop.f32.mrf.mxu0
        %5190 = vdwg.mxu0
        %v5191 = vrcp.pop %v4981
        %v5192 = vrcp.pop %v4984
        %v5193 = vrcp.pop %v4987
        %v5194 = vrcp.pop %v4990
        %v5195 = vmul.f32 %v5039, %v5191
        %v5196 = vmul.f32 %v5088, %v5192
        %v5197 = vmul.f32 %v5137, %v5193
        %v5198 = vmul.f32 %v5186, %v5194
        %5200 = vrot.lane.b32.xlu0 %v5196, 8
        %v5201 = vpop.permute.xlu0 %5200
        %5204 = vrot.lane.b32.xlu0 %v5197, 16
        %v5205 = vpop.permute.xlu0 %5204
        %5208 = vrot.lane.b32.xlu0 %v5198, 24
        %v5209 = vpop.permute.xlu0 %5208
        %v5211 = vsel %vm759, %v5195, %v5201
        %v5212 = vsel %vm1282, %v5211, %v5205
        %v5213 = vsel %vm1285, %v5212, %v5209
        %v5214 = vpack.c.bf16 %v5213, %v5213
        %v5215 = vlaneseq
        %v5216 = vshrl.u32 %v5215, 7
        %v5217 = vsub.s32 4, %v5216
        %v5218 = vrot.slane %v3986, %v5217
        %5219 = vrot.lane.b32.xlu0 %v4631, 32
        %v5220 = vpop.permute.xlu0 %5219
        %5221 = vrot.lane.b32.xlu0 %v4632, 32
        %v5222 = vpop.permute.xlu0 %5221
        %v5226 = vsel %vm630, %v5214, 0
        %5228 = vmatprep.subr.bf16.mxu0 0
        %5229 = vmatpush1.bf16.msra.mxu0 0
        %5230 = vmatprep.subr.bf16.mxu0 0
        %5231 = vmatpush1.bf16.msra.mxu0 0
        %5232 = vmatprep.subr.bf16.mxu0 0
        %5233 = vmatpush1.bf16.msra.mxu0 0
        %5234 = vmatprep.subr.bf16.mxu0 0
        %5235 = vmatpush1.bf16.msra.mxu0 0
        %5236 = vmatprep.subr.bf16.mxu0 0
        %5237 = vmatpush1.bf16.msra.mxu0 0
        %5238 = vmatprep.subr.bf16.mxu0 0
        %5239 = vmatpush1.bf16.msra.mxu0 0
        %5240 = vmatprep.subr.bf16.mxu0 0
        %5241 = vmatpush1.bf16.msra.mxu0 %v5222
        %5242 = vmatprep.subr.bf16.mxu0 0
        %5243 = vmatpush1.bf16.msra.mxu0 %v5220
        %5244 = vmatprep.subr.bf16.mxu0 0
        %5245 = vmatpush2.bf16.msra.mxu0 0
        %5246 = vmatprep.subr.bf16.mxu0 0
        %5247 = vmatpush2.bf16.msra.mxu0 0
        %5248 = vmatprep.subr.bf16.mxu0 0
        %5249 = vmatpush2.bf16.msra.mxu0 0
        %5250 = vmatprep.subr.bf16.mxu0 0
        %5251 = vmatpush2.bf16.msra.mxu0 0
        %5252 = vmatprep.subr.bf16.mxu0 0
        %5253 = vmatpush2.bf16.msra.mxu0 0
        %5254 = vmatprep.subr.bf16.mxu0 0
        %5255 = vmatpush2.bf16.msra.mxu0 0
        %5256 = vmatprep.subr.bf16.mxu0 0
        %5257 = vmatpush2.bf16.msra.mxu0 0
        %5258 = vmatprep.subr.bf16.mxu0 0
        %5259 = vmatpush2.bf16.msra.mxu0 0
        %5260 = vmatprep.mubr.bf16.mxu0 0
        %5261 = vmatmul.mubr.bf16.gmra.mxu0 %v5226
        %v5262 = vpop.f32.mrf.mxu0
        %v5263 = vadd.f32 %v5218, %v5262
        %v5264 = vpop.f32.mrf.mxu0
        %v5265 = vpop.f32.mrf.mxu0
        %v5266 = vpop.f32.mrf.mxu0
        %5267 = vdwg.mxu0
        %v5268 = vadd.f32 %v4598, %v5263
        %v5269 = vsel %vm630, %v5268, 0.0
        %5270 = vadd.xlane.f32.xlu0 %v5269
        %v5271 = vpop.xlane.xlu0 %5270
        %v5272 = vmul.f32 %v5271, %v638
        %v5273 = vsub.f32 %v5268, %v5272
        %v5274 = vmul.f32 %v5273, %v5273
        %v5275 = vsel %vm630, %v5274, 0.0
        %5276 = vadd.xlane.f32.xlu0 %v5275
        %v5277 = vpop.xlane.xlu0 %5276
        %v5278 = vmul.f32 %v5277, %v638
        %v5279 = vadd.f32 %v5278, 1e-05
        %v5280 = vrsqrt.pop %v5279
        %v5281 = vmul.f32 %v5273, %v5280
        %v5282 = vlaneseq
        %v5283 = vshrl.u32 %v5282, 7
        %v5284 = vsub.s32 1, %v5283
        %v5285 = vrot.slane %v3987, %v5284
        %v5286 = vmul.f32 %v5281, %v5285
        %v5287 = vlaneseq
        %v5288 = vshrl.u32 %v5287, 7
        %v5289 = vsub.s32 2, %v5288
        %v5290 = vrot.slane %v3987, %v5289
        %v5291 = vadd.f32 %v5286, %v5290
        %s5292 = scalar_lea.vmem %s9, 32
        %v5293 = vld [vmem:[%s5292] sm:$0xf]
        %v5294 = vld [vmem:[%s5292 + $0x4] sm:$0xf]
        %v5295 = vld [vmem:[%s5292 + $0x8] sm:$0xf]
        %v5296 = vld [vmem:[%s5292 + $0xc] sm:$0xf]
        %v5297 = vld [vmem:[%s5292 + $0x10] sm:$0xf]
        %v5298 = vld [vmem:[%s5292 + $0x14] sm:$0xf]
        %v5299 = vld [vmem:[%s5292 + $0x18] sm:$0xf]
        %v5300 = vld [vmem:[%s5292 + $0x1c] sm:$0xf]
        %v5301 = vpack.c.bf16 %v5291, %v5291
        %v5302 = vlaneseq
        %v5303 = vshrl.u32 %v5302, 7
        %v5304 = vsub.s32 3, %v5303
        %v5305 = vrot.slane %v3987, %v5304
        %v5310 = vunpack.c.l.b16 %v3978
        %v5311 = vunpack.c.l.b16 %v3980
        %v5312 = vunpack.c.l.b16 %v3982
        %v5313 = vunpack.c.l.b16 %v3984
        %v5314 = vpack.c.b16 %v5311, %v5310
        %v5315 = vpack.c.b16 %v5313, %v5312
        %v5319 = vsel %vm630, %v5301, 0
        %5321 = vmatprep.subr.bf16.mxu0 0
        %5322 = vmatpush1.bf16.msra.mxu0 0
        %5323 = vmatprep.subr.bf16.mxu0 0
        %5324 = vmatpush1.bf16.msra.mxu0 0
        %5325 = vmatprep.subr.bf16.mxu0 0
        %5326 = vmatpush1.bf16.msra.mxu0 0
        %5327 = vmatprep.subr.bf16.mxu0 0
        %5328 = vmatpush1.bf16.msra.mxu0 0
        %5329 = vmatprep.subr.bf16.mxu0 0
        %5330 = vmatpush1.bf16.msra.mxu0 0
        %5331 = vmatprep.subr.bf16.mxu0 0
        %5332 = vmatpush1.bf16.msra.mxu0 0
        %5333 = vmatprep.subr.bf16.mxu0 0
        %5334 = vmatpush1.bf16.msra.mxu0 %v5315
        %5335 = vmatprep.subr.bf16.mxu0 0
        %5336 = vmatpush1.bf16.msra.mxu0 %v5314
        %5337 = vmatprep.subr.bf16.mxu0 0
        %5338 = vmatpush2.bf16.msra.mxu0 0
        %5339 = vmatprep.subr.bf16.mxu0 0
        %5340 = vmatpush2.bf16.msra.mxu0 0
        %5341 = vmatprep.subr.bf16.mxu0 0
        %5342 = vmatpush2.bf16.msra.mxu0 0
        %5343 = vmatprep.subr.bf16.mxu0 0
        %5344 = vmatpush2.bf16.msra.mxu0 0
        %5345 = vmatprep.subr.bf16.mxu0 0
        %5346 = vmatpush2.bf16.msra.mxu0 0
        %5347 = vmatprep.subr.bf16.mxu0 0
        %5348 = vmatpush2.bf16.msra.mxu0 0
        %5349 = vmatprep.subr.bf16.mxu0 0
        %5350 = vmatpush2.bf16.msra.mxu0 0
        %5351 = vmatprep.subr.bf16.mxu0 0
        %5352 = vmatpush2.bf16.msra.mxu0 0
        %5353 = vmatprep.mubr.bf16.mxu0 0
        %5354 = vmatmul.mubr.bf16.gmra.mxu0 %v5319
        %v5355 = vpop.f32.mrf.mxu0
        %v5356 = vadd.f32 %v5305, %v5355
        %v5357 = vpop.f32.mrf.mxu0
        %v5358 = vpop.f32.mrf.mxu0
        %v5359 = vpop.f32.mrf.mxu0
        %5360 = vdwg.mxu0
        %v5361 = vmul.f32 %v5356, 0.5
        %v5362 = vmul.f32 %v5356, 0.044715
        %v5363 = vmul.f32 %v5362, %v5356
        %v5364 = vmul.f32 %v5363, %v5356
        %v5365 = vadd.f32 %v5356, %v5364
        %v5366 = vmul.f32 %v5365, 0.7978846
        %v5367 = vtanh.pop %v5366
        %v5368 = vadd.f32 %v5367, 1.0
        %v5369 = vmul.f32 %v5361, %v5368
        %v5370 = vpack.c.bf16 %v5369, %v5369
        %v5371 = vlaneseq
        %v5372 = vshrl.u32 %v5371, 7
        %v5373 = vsub.s32 4, %v5372
        %v5374 = vrot.slane %v3987, %v5373
        %v5383 = vunpack.c.l.b16 %v5293
        %v5384 = vunpack.c.l.b16 %v5294
        %v5385 = vunpack.c.l.b16 %v5295
        %v5386 = vunpack.c.l.b16 %v5296
        %v5387 = vunpack.c.l.b16 %v5297
        %v5388 = vunpack.c.l.b16 %v5298
        %v5389 = vunpack.c.l.b16 %v5299
        %v5390 = vunpack.c.l.b16 %v5300
        %v5391 = vpack.c.b16 %v5384, %v5383
        %v5392 = vpack.c.b16 %v5386, %v5385
        %v5393 = vpack.c.b16 %v5388, %v5387
        %v5394 = vpack.c.b16 %v5390, %v5389
        %v5400 = vsel %vm580, %v5370, 0
        %5402 = vmatprep.subr.bf16.mxu0 0
        %5403 = vmatpush1.bf16.msra.mxu0 0
        %5404 = vmatprep.subr.bf16.mxu0 0
        %5405 = vmatpush1.bf16.msra.mxu0 0
        %5406 = vmatprep.subr.bf16.mxu0 0
        %5407 = vmatpush1.bf16.msra.mxu0 0
        %5408 = vmatprep.subr.bf16.mxu0 0
        %5409 = vmatpush1.bf16.msra.mxu0 0
        %5410 = vmatprep.subr.bf16.mxu0 0
        %5411 = vmatpush1.bf16.msra.mxu0 %v5394
        %5412 = vmatprep.subr.bf16.mxu0 0
        %5413 = vmatpush1.bf16.msra.mxu0 %v5393
        %5414 = vmatprep.subr.bf16.mxu0 0
        %5415 = vmatpush1.bf16.msra.mxu0 %v5392
        %5416 = vmatprep.subr.bf16.mxu0 0
        %5417 = vmatpush1.bf16.msra.mxu0 %v5391
        %5418 = vmatprep.subr.bf16.mxu0 0
        %5419 = vmatpush2.bf16.msra.mxu0 0
        %5420 = vmatprep.subr.bf16.mxu0 0
        %5421 = vmatpush2.bf16.msra.mxu0 0
        %5422 = vmatprep.subr.bf16.mxu0 0
        %5423 = vmatpush2.bf16.msra.mxu0 0
        %5424 = vmatprep.subr.bf16.mxu0 0
        %5425 = vmatpush2.bf16.msra.mxu0 0
        %5426 = vmatprep.subr.bf16.mxu0 0
        %5427 = vmatpush2.bf16.msra.mxu0 0
        %5428 = vmatprep.subr.bf16.mxu0 0
        %5429 = vmatpush2.bf16.msra.mxu0 0
        %5430 = vmatprep.subr.bf16.mxu0 0
        %5431 = vmatpush2.bf16.msra.mxu0 0
        %5432 = vmatprep.subr.bf16.mxu0 0
        %5433 = vmatpush2.bf16.msra.mxu0 0
        %5434 = vmatprep.mubr.bf16.mxu0 0
        %5435 = vmatmul.mubr.bf16.gmra.mxu0 %v5400
        %v5436 = vpop.f32.mrf.mxu0
        %v5437 = vadd.f32 %v5374, %v5436
        %v5438 = vpop.f32.mrf.mxu0
        %v5439 = vpop.f32.mrf.mxu0
        %v5440 = vpop.f32.mrf.mxu0
        %5441 = vdwg.mxu0
        %v5442 = vadd.f32 %v5268, %v5437
        %v5443 = vsel %vm630, %v5442, 0.0
        %5444 = vadd.xlane.f32.xlu0 %v5443
        %v5445 = vpop.xlane.xlu0 %5444
        %v5446 = vmul.f32 %v5445, %v638
        %v5447 = vsub.f32 %v5442, %v5446
        %v5448 = vmul.f32 %v5447, %v5447
        %v5449 = vsel %vm630, %v5448, 0.0
        %5450 = vadd.xlane.f32.xlu0 %v5449
        %v5451 = vpop.xlane.xlu0 %5450
        %v5452 = vmul.f32 %v5451, %v638
        %v5453 = vadd.f32 %v5452, 1e-05
        %v5454 = vrsqrt.pop %v5453
        %v5455 = vmul.f32 %v5447, %v5454
        %v5456 = vlaneseq
        %v5457 = vshrl.u32 %v5456, 7
        %v5458 = vsub.s32 2, %v5457
        %v5459 = vrot.slane %v2451, %v5458
        %v5460 = vmul.f32 %v5455, %v5459
        %v5461 = vlaneseq
        %v5462 = vshrl.u32 %v5461, 7
        %v5463 = vsub.s32 3, %v5462
        %v5464 = vrot.slane %v2451, %v5463
        %v5465 = vadd.f32 %v5460, %v5464
        %v5466 = vld [vmem:[%s12] sm:$0xf]
        %v5467 = vld [vmem:[%s12 + $0x4] sm:$0xf]
        %v5468 = vld [vmem:[%s12 + $0x8] sm:$0xf]
        %v5469 = vld [vmem:[%s12 + $0xc] sm:$0xf]
        %v5470 = vpack.c.bf16 %v5465, %v5465
        %v5471 = vlaneseq
        %v5472 = vshrl.u32 %v5471, 7
        %v5473 = vsub.s32 4, %v5472
        %v5474 = vrot.slane %v2451, %v5473
        %v5479 = vunpack.c.l.b16 %v5466
        %v5480 = vunpack.c.l.b16 %v5467
        %v5481 = vunpack.c.l.b16 %v5468
        %v5482 = vunpack.c.l.b16 %v5469
        %v5483 = vpack.c.b16 %v5480, %v5479
        %v5484 = vpack.c.b16 %v5482, %v5481
        %v5488 = vsel %vm630, %v5470, 0
        %5490 = vmatprep.subr.bf16.mxu0 0
        %5491 = vmatpush1.bf16.msra.mxu0 0
        %5492 = vmatprep.subr.bf16.mxu0 0
        %5493 = vmatpush1.bf16.msra.mxu0 0
        %5494 = vmatprep.subr.bf16.mxu0 0
        %5495 = vmatpush1.bf16.msra.mxu0 0
        %5496 = vmatprep.subr.bf16.mxu0 0
        %5497 = vmatpush1.bf16.msra.mxu0 0
        %5498 = vmatprep.subr.bf16.mxu0 0
        %5499 = vmatpush1.bf16.msra.mxu0 0
        %5500 = vmatprep.subr.bf16.mxu0 0
        %5501 = vmatpush1.bf16.msra.mxu0 0
        %5502 = vmatprep.subr.bf16.mxu0 0
        %5503 = vmatpush1.bf16.msra.mxu0 %v5484
        %5504 = vmatprep.subr.bf16.mxu0 0
        %5505 = vmatpush1.bf16.msra.mxu0 %v5483
        %5506 = vmatprep.subr.bf16.mxu0 0
        %5507 = vmatpush2.bf16.msra.mxu0 0
        %5508 = vmatprep.subr.bf16.mxu0 0
        %5509 = vmatpush2.bf16.msra.mxu0 0
        %5510 = vmatprep.subr.bf16.mxu0 0
        %5511 = vmatpush2.bf16.msra.mxu0 0
        %5512 = vmatprep.subr.bf16.mxu0 0
        %5513 = vmatpush2.bf16.msra.mxu0 0
        %5514 = vmatprep.subr.bf16.mxu0 0
        %5515 = vmatpush2.bf16.msra.mxu0 0
        %5516 = vmatprep.subr.bf16.mxu0 0
        %5517 = vmatpush2.bf16.msra.mxu0 0
        %5518 = vmatprep.subr.bf16.mxu0 0
        %5519 = vmatpush2.bf16.msra.mxu0 0
        %5520 = vmatprep.subr.bf16.mxu0 0
        %5521 = vmatpush2.bf16.msra.mxu0 0
        %5522 = vmatprep.mubr.bf16.mxu0 0
        %5523 = vmatmul.mubr.bf16.gmra.mxu0 %v5488
        %v5524 = vpop.f32.mrf.mxu0
        %v5525 = vadd.f32 %v5474, %v5524
        %v5526 = vpop.f32.mrf.mxu0
        %v5527 = vpop.f32.mrf.mxu0
        %v5528 = vpop.f32.mrf.mxu0
        %5529 = vdwg.mxu0
        %5530 = vst [vmem:[%s457] sm:$0xff] %v5525
        %s5531 = sand.u32 %s323, 1
        %s5532 = scalar_lea.sflag [#allocation3], %s5531
        %s5533 = sand.u32 %s323, 1
        %s5534 = smul.addr %s5533, 8
        %s5535 = scalar_lea.vmem [#allocation2], %s5534
        // Predicated region
        $region73: #{ofa_forward.1} parent=71 // pred_check
          %p5536 = pneg %p333
        $region74: #{ofa_forward.1} parent=71 // pred_check_branch
          %5538 = sbr.rel (%p5536) target = $region76
        $region75: #{ofa_forward.1} parent=71 // pred_region
          %s5540 = ssub.s32 128, 128
          %5541 = vsyncadd %s5532, %s5540
          %s5542 = smul.addr %s27, 128
          %s5543 = scalar_lea.hbm %s13, %s5542
          %s5545 = sshll.u32 %s5535, 4
          %s5546 = int_to_ptr.vmem [resolvable:$true] %s5545
          %5548 = dma.vmem_to_hbm [thread:$0]  %s5546, 128, %s5543, %s5532
        $region76: #{ofa_forward.1} parent=71 // pred_fallthru
          _
      $region72: #{ofa_forward.1} parent=5 // pred_fallthru
        _
      %p5549 = scmp.le.s32.totalorder 2, %s22
      // Predicated region
      $region77: #{ofa_forward.1} parent=5 // pred_check
        %p5550 = pneg %p5549
      $region78: #{ofa_forward.1} parent=5 // pred_check_branch
        %5552 = sbr.rel (%p5550) target = $region80
      $region79: #{ofa_forward.1} parent=5 // pred_region
        %s5553 = ssub.s32 %s22, 2
        // Predicated region
        $region81: #{ofa_forward.1} parent=79 // pred_check
          %p5554 = pneg %p339
        $region82: #{ofa_forward.1} parent=79 // pred_check_branch
          %5556 = sbr.rel (%p5554) target = $region84
        $region83: #{ofa_forward.1} parent=79 // pred_region
          %s5557 = sand.u32 %s324, 1
          %s5558 = scalar_lea.sflag [#allocation3], %s5557
          %s5559 = sand.u32 %s324, 1
          %s5560 = smul.addr %s5559, 8
          %s5561 = scalar_lea.vmem [#allocation2], %s5560
          %5562 = dma.done %s5558, 128
        $region84: #{ofa_forward.1} parent=79 // pred_fallthru
          _
      $region80: #{ofa_forward.1} parent=5 // pred_fallthru
        _
    $region6: #{ofa_forward.1} parent=1 // loop_footer
      %s26 = sadd.s32 1, %s22
    $region7: #{ofa_forward.1} parent=1 // loop_footer_branch
      %21 = sbr.rel target = $region3
    $region8: #{ofa_forward.1} parent=1 // loop_exit
      _
    %5563 = vsyncpa [#allocation3], 1
    %s5564 = scalar_lea.sflag [#allocation3], 1
    %5565 = vsyncpa %s5564, 1

</llo_original>
